<compile_context>
chip_gen: v7x
topology: tpu7x:2x2x1
jax: 0.10.0
libtpu: 0.0.40
codegen_flags: <defaults>
</compile_context>

<pallas_src>
import jax
import jax.numpy as jnp
from jax import lax
from jax.experimental import pallas as pl
from jax.experimental.pallas import tpu as pltpu

EPS = 1e-5
VMEM_LIMIT = 32 * 1024 * 1024  # explicit scoped-VMEM budget (safe on v5e/v6e/v7x)


def _row_tile(n, target):
    """Largest divisor of n that is <= target (row-tile helper)."""
    t = max(1, min(n, target))
    while n % t:
        t -= 1
    return t


# ---------------------------------------------------------------------------
# Pass A: ConvTranspose2d(Cin -> Cout, k=2, s=2) as two bf16 MXU matmuls whose
# results are written directly in the scattered (2x-upsampled) memory layout:
#     up6[b, i, di, w, dj*Cout + co] == up_nhwc[b, 2i+di, 2w+dj, co]
# (row-major bit-identical).  Also emits BN0 partial statistics for BOTH
# channel groups of the (virtual) concat [x2, up].
# ---------------------------------------------------------------------------
def _upconv_stats_kernel(x1_ref, x2_ref, wup_ref, bup_ref, up_ref, stat_ref):
    _, th, W, Cin = x1_ref.shape
    Cg = x2_ref.shape[3]
    Cout2 = bup_ref.shape[1]            # 2 * Cout  (columns ordered dj*Cout+co)
    Cout = Cout2 // 2

    bias = bup_ref[...]                                          # (1, 2*Cout) f32
    x1f = x1_ref[0].reshape(th * W, Cin).astype(jnp.bfloat16)

    s1u = jnp.zeros((1, Cout2), jnp.float32)
    s2u = jnp.zeros((1, Cout2), jnp.float32)
    for di in range(2):
        # column order (dj, co) == the scattered output layout -> plain store
        y = jnp.dot(x1f, wup_ref[di],
                    preferred_element_type=jnp.float32) + bias    # (th*W, 2*Cout)
        up_ref[0, :, di, :, :] = y.reshape(th, W, Cout2).astype(up_ref.dtype)
        s1u = s1u + jnp.sum(y, axis=0, keepdims=True)
        s2u = s2u + jnp.sum(y * y, axis=0, keepdims=True)
    # fold the dj tap axis of the column layout -> per-channel sums
    s1u = s1u[:, :Cout] + s1u[:, Cout:]
    s2u = s2u[:, :Cout] + s2u[:, Cout:]

    # BN0 statistics of the skip-connection (x2) channel group
    x2f = x2_ref[0].reshape(2 * th * 2 * W, Cg)
    s1x = jnp.sum(x2f, axis=0, keepdims=True)
    s2x = jnp.sum(x2f * x2f, axis=0, keepdims=True)

    stat_ref[0, 0, :, :Cg] = jnp.concatenate([s1x, s2x], axis=0)
    stat_ref[0, 0, :, Cg:] = jnp.concatenate([s1u, s2u], axis=0)


# ---------------------------------------------------------------------------
# Shared pieces of the conv stages.
# ---------------------------------------------------------------------------
def _zero_halo(pad_ref):
    Hp, Wp, C = pad_ref.shape
    z_row = jnp.zeros((1, Wp, C), pad_ref.dtype)
    z_col = jnp.zeros((Hp, 1, C), pad_ref.dtype)
    pad_ref[0:1, :, :] = z_row
    pad_ref[Hp - 1:Hp, :, :] = z_row
    pad_ref[:, 0:1, :] = z_col
    pad_ref[:, Wp - 1:Wp, :] = z_col


def _conv3x3_im2col(pad_ref, col_ref, w_ref, b_ref):
    """3x3 'same' conv of the padded VMEM tile as ONE bf16 matmul (K = 9*Ci)."""
    Hp, Wp, Ci = pad_ref.shape
    H2, W2 = Hp - 2, Wp - 2
    for di in range(3):
        for dj in range(3):
            k = di * 3 + dj
            col_ref[:, :, k * Ci:(k + 1) * Ci] = (
                pad_ref[di:di + H2, dj:dj + W2, :].astype(col_ref.dtype))
    im2col = col_ref[...].reshape(H2 * W2, 9 * Ci)                 # bf16
    return jnp.dot(im2col, w_ref[...],
                   preferred_element_type=jnp.float32) + b_ref[...]


def _finish_stage(acc, o_ref, stat_ref):
    _, H2, W2, Co = o_ref.shape
    # per-tile BN partial statistics for the *next* BatchNorm (f32)
    stat_ref[0] = jnp.concatenate(
        [jnp.sum(acc, axis=0, keepdims=True),
         jnp.sum(acc * acc, axis=0, keepdims=True)], axis=0)
    o_ref[0] = acc.reshape(H2, W2, Co).astype(o_ref.dtype)


def _cat_bn_relu_conv_kernel(x2_ref, up_ref, sc_ref, sh_ref, w_ref, b_ref,
                             o_ref, stat_ref, pad_ref, col_ref):
    """[cat(x2, up)] -> BN0 -> ReLU -> 3x3 conv (+ BN1 partial stats).

    The channel concat is two lane-slice stores into the padded conv scratch —
    the concatenated tensor never exists in HBM."""
    _, H2, W2, Cg = x2_ref.shape
    _zero_halo(pad_ref)
    a = x2_ref[0].astype(jnp.float32)
    pad_ref[1:H2 + 1, 1:W2 + 1, :Cg] = jnp.maximum(
        a * sc_ref[:, :Cg] + sh_ref[:, :Cg], 0.0).astype(pad_ref.dtype)
    u = up_ref[0].astype(jnp.float32)
    pad_ref[1:H2 + 1, 1:W2 + 1, Cg:] = jnp.maximum(
        u * sc_ref[:, Cg:] + sh_ref[:, Cg:], 0.0).astype(pad_ref.dtype)
    acc = _conv3x3_im2col(pad_ref, col_ref, w_ref, b_ref)
    _finish_stage(acc, o_ref, stat_ref)


def _bn_relu_conv_kernel(x_ref, sc_ref, sh_ref, w_ref, b_ref,
                         o_ref, stat_ref, pad_ref, col_ref):
    """BN -> ReLU -> 3x3 conv (+ next-BN partial stats)."""
    _, H2, W2, _ = x_ref.shape
    _zero_halo(pad_ref)
    x = x_ref[0].astype(jnp.float32)
    pad_ref[1:H2 + 1, 1:W2 + 1, :] = jnp.maximum(
        x * sc_ref[...] + sh_ref[...], 0.0).astype(pad_ref.dtype)
    acc = _conv3x3_im2col(pad_ref, col_ref, w_ref, b_ref)
    _finish_stage(acc, o_ref, stat_ref)


def _bn_relu_kernel(x_ref, sc_ref, sh_ref, o_ref):
    """Final BatchNorm (folded scale/shift) + ReLU, elementwise."""
    x = x_ref[...].astype(jnp.float32)
    o_ref[...] = jnp.maximum(x * sc_ref[...] + sh_ref[...], 0.0)


# ---------------------------------------------------------------------------
# pallas_call builders
# ---------------------------------------------------------------------------
def _run_upconv(x1, x2, w_up, b_up, Cout):
    B, H, W, Cin = x1.shape
    Cg = x2.shape[3]
    H2, W2 = 2 * H, 2 * W
    th = _row_tile(H, 8)                 # <= 8 low-res rows (16 output rows) / tile
    nh = H // th
    up6, st0 = pl.pallas_call(
        _upconv_stats_kernel,
        out_shape=(jax.ShapeDtypeStruct((B, H, 2, W, 2 * Cout), jnp.bfloat16),
                   jax.ShapeDtypeStruct((B, nh, 2, Cin), jnp.float32)),
        grid_spec=pltpu.PrefetchScalarGridSpec(
            num_scalar_prefetch=0,
            grid=(B, nh),
            in_specs=[
                pl.BlockSpec((1, th, W, Cin), lambda b, i: (b, i, 0, 0)),
                pl.BlockSpec((1, 2 * th, W2, Cg), lambda b, i: (b, i, 0, 0)),
                pl.BlockSpec((2, Cin, 2 * Cout), lambda b, i: (0, 0, 0)),
                pl.BlockSpec((1, 2 * Cout), lambda b, i: (0, 0)),
            ],
            out_specs=[
                pl.BlockSpec((1, th, 2, W, 2 * Cout),
                             lambda b, i: (b, i, 0, 0, 0)),
                pl.BlockSpec((1, 1, 2, Cin), lambda b, i: (b, i, 0, 0)),
            ],
        ),
        compiler_params=pltpu.CompilerParams(
            dimension_semantics=("parallel", "parallel"),
            vmem_limit_bytes=VMEM_LIMIT,
        ),
    )(x1, x2, w_up, b_up)
    # free reshape: (B, H, 2, W, 2*Cout) row-major == NHWC (B, 2H, 2W, Cout)
    return up6.reshape(B, H2, W2, Cout), st0


def _run_conv_stage(kernel, data, scale, shift, w, b, Ci, Co):
    B, H2, W2 = data[0].shape[0], data[0].shape[1], data[0].shape[2]
    data_specs = [pl.BlockSpec((1, H2, W2, d.shape[3]), lambda i: (i, 0, 0, 0))
                  for d in data]
    small = lambda shape: pl.BlockSpec(shape, lambda i: (0,) * len(shape))
    out, stats = pl.pallas_call(
        kernel,
        out_shape=(jax.ShapeDtypeStruct((B, H2, W2, Co), jnp.bfloat16),
                   jax.ShapeDtypeStruct((B, 2, Co), jnp.float32)),
        grid_spec=pltpu.PrefetchScalarGridSpec(
            num_scalar_prefetch=0,
            grid=(B,),
            in_specs=data_specs + [
                small((1, Ci)),          # folded BN scale
                small((1, Ci)),          # folded BN shift
                small((9 * Ci, Co)),     # conv weight, im2col layout (bf16)
                small((1, Co)),          # conv bias (f32)
            ],
            out_specs=[
                pl.BlockSpec((1, H2, W2, Co), lambda i: (i, 0, 0, 0)),
                pl.BlockSpec((1, 2, Co), lambda i: (i, 0, 0)),
            ],
            scratch_shapes=[
                pltpu.VMEM((H2 + 2, W2 + 2, Ci), jnp.float32),   # padded tile
                pltpu.VMEM((H2, W2, 9 * Ci), jnp.bfloat16),      # im2col buffer
            ],
        ),
        compiler_params=pltpu.CompilerParams(
            dimension_semantics=("parallel",),   # batch -> 2 TensorCores on v7x
            vmem_limit_bytes=VMEM_LIMIT,
        ),
    )(*data, scale, shift, w, b)
    return out, stats


def _run_bn_relu(x, scale, shift):
    B, H2, W2, C = x.shape
    th = _row_tile(H2, 8)
    nh = H2 // th
    return pl.pallas_call(
        _bn_relu_kernel,
        out_shape=jax.ShapeDtypeStruct((B, H2, W2, C), jnp.float32),
        grid_spec=pltpu.PrefetchScalarGridSpec(
            num_scalar_prefetch=0,
            grid=(B, nh),
            in_specs=[
                pl.BlockSpec((1, th, W2, C), lambda b, i: (b, i, 0, 0)),
                pl.BlockSpec((1, C), lambda b, i: (0, 0)),
                pl.BlockSpec((1, C), lambda b, i: (0, 0)),
            ],
            out_specs=pl.BlockSpec((1, th, W2, C), lambda b, i: (b, i, 0, 0)),
        ),
        compiler_params=pltpu.CompilerParams(
            dimension_semantics=("parallel", "parallel")),
    )(x, scale, shift)


def _finalize_bn(partial, gamma, beta, count):
    """Fold batch statistics + affine params into per-channel scale/shift (O(C))."""
    c = partial.shape[-1]
    s = jnp.sum(partial.reshape(-1, 2, c), axis=0)              # (2, C) f32
    mean = s[0] / count
    var = jnp.maximum(s[1] / count - mean * mean, 0.0)          # biased (training)
    scale = gamma.reshape(-1) * lax.rsqrt(var + EPS)
    shift = beta.reshape(-1) - mean * scale
    return (scale.reshape(1, -1).astype(jnp.float32),
            shift.reshape(1, -1).astype(jnp.float32))


# ---------------------------------------------------------------------------
# Forward wrapper (only layout glue + O(C) BN finalization outside Pallas)
# ---------------------------------------------------------------------------
def decoder_block_forward(x1_nchw, x2_nchw, p):
    B, Cin, H, W = x1_nchw.shape
    Cout = p["b1"].shape[-1]
    Cg = Cin - Cout
    H2, W2 = 2 * H, 2 * W
    assert x2_nchw.shape == (B, Cg, H2, W2)

    # NCHW -> NHWC boundary transposes (glue)
    x1 = jnp.transpose(x1_nchw, (0, 2, 3, 1)).astype(jnp.float32)
    x2 = jnp.transpose(x2_nchw, (0, 2, 3, 1)).astype(jnp.float32)

    N = B * H2 * W2

    # A) transposed conv written in scattered layout + BN0 partial stats
    up, st0 = _run_upconv(x1, x2, p["w_up"], p["b_up"], Cout)
    sc0, sh0 = _finalize_bn(st0, p["g0"], p["be0"], N)

    # B) concat-in-VMEM + BN0 + ReLU + conv1  (+ BN1 partial stats)
    h1, st1 = _run_conv_stage(_cat_bn_relu_conv_kernel, [x2, up],
                              sc0, sh0, p["w1"], p["b1"], Cin, Cout)
    sc1, sh1 = _finalize_bn(st1, p["g1"], p["be1"], N)

    # C) BN1 + ReLU + conv2  (+ BN2 partial stats)
    h2, st2 = _run_conv_stage(_bn_relu_conv_kernel, [h1],
                              sc1, sh1, p["w2"], p["b2"], Cout, Cout)
    sc2, sh2 = _finalize_bn(st2, p["g2"], p["be2"], N)

    # D) final BN + ReLU
    out = _run_bn_relu(h2, sc2, sh2)

    # NHWC -> NCHW (PyTorch convention)
    return jnp.transpose(out, (0, 3, 1, 2))


# ---------------------------------------------------------------------------
# Parameter init (random, in the kernel-friendly layouts; matmul weights bf16)
# ---------------------------------------------------------------------------
def init_params(key, in_channels, out_channels):
    Cin, Cout = in_channels, out_channels
    ks = jax.random.split(key, 12)

    def nrm(k, shape, scale):
        return (scale * jax.random.normal(k, shape)).astype(jnp.float32)

    p = {}
    # ConvTranspose2d weight, torch layout (Cin, Cout, 2, 2)
    #   -> (di, Cin, dj*Cout + co): one (Cin, 2*Cout) matmul per output-row parity
    wt = nrm(ks[0], (Cin, Cout, 2, 2), 0.2)
    p["w_up"] = (jnp.transpose(wt, (2, 0, 3, 1))
                 .reshape(2, Cin, 2 * Cout).astype(jnp.bfloat16))
    b_up = nrm(ks[1], (Cout,), 0.1)
    p["b_up"] = jnp.tile(b_up, 2).reshape(1, 2 * Cout)       # col = dj*Cout + co
    # BatchNorm2d(in_channels) affine
    p["g0"] = 1.0 + nrm(ks[2], (1, Cin), 0.1)
    p["be0"] = nrm(ks[3], (1, Cin), 0.1)
    # conv1, torch layout (Cout, Cin, 3, 3) -> im2col layout (9*Cin, Cout)
    w1 = nrm(ks[4], (Cout, Cin, 3, 3), 0.15)
    p["w1"] = (jnp.transpose(w1, (2, 3, 1, 0))
               .reshape(9 * Cin, Cout).astype(jnp.bfloat16))
    p["b1"] = nrm(ks[5], (1, Cout), 0.1)
    p["g1"] = 1.0 + nrm(ks[6], (1, Cout), 0.1)
    p["be1"] = nrm(ks[7], (1, Cout), 0.1)
    # conv2, torch layout (Cout, Cout, 3, 3) -> (9*Cout, Cout)
    w2 = nrm(ks[8], (Cout, Cout, 3, 3), 0.15)
    p["w2"] = (jnp.transpose(w2, (2, 3, 1, 0))
               .reshape(9 * Cout, Cout).astype(jnp.bfloat16))
    p["b2"] = nrm(ks[9], (1, Cout), 0.1)
    p["g2"] = 1.0 + nrm(ks[10], (1, Cout), 0.1)
    p["be2"] = nrm(ks[11], (1, Cout), 0.1)
    return p


if __name__ == "__main__":
    key = jax.random.PRNGKey(0)
    k_p, k_x1, k_x2 = jax.random.split(key, 3)

    in_channels, out_channels = 8, 4
    B, H, W = 2, 8, 8

    params = init_params(k_p, in_channels, out_channels)
    # PyTorch-convention NCHW inputs
    x1 = jax.random.normal(k_x1, (B, in_channels, H, W), jnp.float32)
    x2 = jax.random.normal(k_x2, (B, in_channels - out_channels, 2 * H, 2 * W),
                           jnp.float32)

    fwd = jax.jit(lambda a, b: decoder_block_forward(a, b, params))
    out = fwd(x1, x2)
    jax.block_until_ready(out)

    assert out.shape == (B, out_channels, 2 * H, 2 * W)
    assert bool(jnp.all(jnp.isfinite(out)))
    print("KERNEL_OK")
</pallas_src>

<mosaic_0001>
module attributes {stable_mosaic.version = 11 : i64} {
  func.func @_upconv_stats_kernel(%arg0: i32, %arg1: i32, %arg2: memref<1x8x8x8xf32, #tpu.memory_space<vmem>>, %arg3: memref<1x16x16x4xf32, #tpu.memory_space<vmem>>, %arg4: memref<2x8x8xbf16, #tpu.memory_space<vmem>>, %arg5: memref<1x8xf32, #tpu.memory_space<vmem>>, %arg6: memref<1x8x2x8x8xbf16, #tpu.memory_space<vmem>>, %arg7: memref<1x1x2x8xf32, #tpu.memory_space<vmem>>) attributes {dimension_semantics = [#tpu.dimension_semantics<parallel>, #tpu.dimension_semantics<parallel>], iteration_bounds = array<i64: 2, 1>, scalar_prefetch = 0 : i64, scratch_operands = 0 : i64, tpu.core_type = #tpu.core_type<tc>, window_params = [{transform_indices = @transform_0, window_bounds = array<i64: 1, 8, 8, 8>}, {transform_indices = @transform_1, window_bounds = array<i64: 1, 16, 16, 4>}, {pipeline_mode = #tpu.pipeline_mode<synchronous>, transform_indices = @transform_2, window_bounds = array<i64: 2, 8, 8>}, {pipeline_mode = #tpu.pipeline_mode<synchronous>, transform_indices = @transform_3, window_bounds = array<i64: 1, 8>}, {transform_indices = @transform_4, window_bounds = array<i64: 1, 8, 2, 8, 8>}, {transform_indices = @transform_5, window_bounds = array<i64: 1, 1, 2, 8>}]} {
    %c0 = arith.constant 0 : index
    %c0_0 = arith.constant 0 : index
    %0 = vector.load %arg5[%c0, %c0_0] : memref<1x8xf32, #tpu.memory_space<vmem>>, vector<1x8xf32>
    %c0_1 = arith.constant 0 : index
    %c0_2 = arith.constant 0 : index
    %c0_3 = arith.constant 0 : index
    %c0_4 = arith.constant 0 : index
    %1 = vector.load %arg2[%c0_1, %c0_2, %c0_3, %c0_4] : memref<1x8x8x8xf32, #tpu.memory_space<vmem>>, vector<1x8x8x8xf32>
    %2 = vector.shape_cast %1 : vector<1x8x8x8xf32> to vector<8x8x8xf32>
    %3 = vector.shape_cast %2 : vector<8x8x8xf32> to vector<64x8xf32>
    %4 = arith.truncf %3 : vector<64x8xf32> to vector<64x8xbf16>
    %cst = arith.constant 0.000000e+00 : f32
    %5 = vector.broadcast %cst : f32 to vector<1x8xf32>
    %cst_5 = arith.constant 0.000000e+00 : f32
    %6 = vector.broadcast %cst_5 : f32 to vector<1x8xf32>
    %c0_6 = arith.constant 0 : index
    %c0_7 = arith.constant 0 : index
    %c0_8 = arith.constant 0 : index
    %7 = vector.load %arg4[%c0_6, %c0_7, %c0_8] : memref<2x8x8xbf16, #tpu.memory_space<vmem>>, vector<1x8x8xbf16>
    %8 = vector.shape_cast %7 : vector<1x8x8xbf16> to vector<8x8xbf16>
    %cst_9 = arith.constant dense<0.000000e+00> : vector<64x8xf32>
    %9 = tpu.matmul %4, %8, %cst_9 {dimension_numbers = #tpu.dot_dimension_numbers<[1], [0], [0], [1], [0, 0, 1, 1], [], []>} : vector<64x8xbf16>, vector<8x8xbf16>, vector<64x8xf32> -> vector<64x8xf32>
    %10 = vector.broadcast %0 : vector<1x8xf32> to vector<64x8xf32>
    %11 = arith.addf %9, %10 : vector<64x8xf32>
    %12 = vector.shape_cast %11 : vector<64x8xf32> to vector<8x8x8xf32>
    %13 = arith.truncf %12 : vector<8x8x8xf32> to vector<8x8x8xbf16>
    %c0_10 = arith.constant 0 : index
    %c0_11 = arith.constant 0 : index
    %c0_12 = arith.constant 0 : index
    %c0_13 = arith.constant 0 : index
    %c0_14 = arith.constant 0 : index
    %14 = vector.load %arg6[%c0_10, %c0_11, %c0_12, %c0_13, %c0_14] : memref<1x8x2x8x8xbf16, #tpu.memory_space<vmem>>, vector<1x8x1x8x8xbf16>
    %15 = vector.shape_cast %14 : vector<1x8x1x8x8xbf16> to vector<8x8x8xbf16>
    %16 = vector.shape_cast %13 : vector<8x8x8xbf16> to vector<1x8x1x8x8xbf16>
    tpu.vector_store %arg6[%c0_10, %c0_11, %c0_12, %c0_13, %c0_14], %16 {strides = array<i32>} : memref<1x8x2x8x8xbf16, #tpu.memory_space<vmem>>, vector<1x8x1x8x8xbf16>,
    %cst_15 = arith.constant dense<0.000000e+00> : vector<8xf32>
    %17 = vector.multi_reduction <add>, %11, %cst_15 [0] : vector<64x8xf32> to vector<8xf32>
    %18 = vector.shape_cast %17 : vector<8xf32> to vector<1x8xf32>
    %19 = arith.addf %5, %18 : vector<1x8xf32>
    %20 = arith.mulf %11, %11 : vector<64x8xf32>
    %cst_16 = arith.constant dense<0.000000e+00> : vector<8xf32>
    %21 = vector.multi_reduction <add>, %20, %cst_16 [0] : vector<64x8xf32> to vector<8xf32>
    %22 = vector.shape_cast %21 : vector<8xf32> to vector<1x8xf32>
    %23 = arith.addf %6, %22 : vector<1x8xf32>
    %c1 = arith.constant 1 : index
    %c0_17 = arith.constant 0 : index
    %c0_18 = arith.constant 0 : index
    %24 = vector.load %arg4[%c1, %c0_17, %c0_18] : memref<2x8x8xbf16, #tpu.memory_space<vmem>>, vector<1x8x8xbf16>
    %25 = vector.shape_cast %24 : vector<1x8x8xbf16> to vector<8x8xbf16>
    %cst_19 = arith.constant dense<0.000000e+00> : vector<64x8xf32>
    %26 = tpu.matmul %4, %25, %cst_19 {dimension_numbers = #tpu.dot_dimension_numbers<[1], [0], [0], [1], [0, 0, 1, 1], [], []>} : vector<64x8xbf16>, vector<8x8xbf16>, vector<64x8xf32> -> vector<64x8xf32>
    %27 = vector.broadcast %0 : vector<1x8xf32> to vector<64x8xf32>
    %28 = arith.addf %26, %27 : vector<64x8xf32>
    %29 = vector.shape_cast %28 : vector<64x8xf32> to vector<8x8x8xf32>
    %30 = arith.truncf %29 : vector<8x8x8xf32> to vector<8x8x8xbf16>
    %c0_20 = arith.constant 0 : index
    %c0_21 = arith.constant 0 : index
    %c1_22 = arith.constant 1 : index
    %c0_23 = arith.constant 0 : index
    %c0_24 = arith.constant 0 : index
    %31 = vector.load %arg6[%c0_20, %c0_21, %c1_22, %c0_23, %c0_24] : memref<1x8x2x8x8xbf16, #tpu.memory_space<vmem>>, vector<1x8x1x8x8xbf16>
    %32 = vector.shape_cast %31 : vector<1x8x1x8x8xbf16> to vector<8x8x8xbf16>
    %33 = vector.shape_cast %30 : vector<8x8x8xbf16> to vector<1x8x1x8x8xbf16>
    tpu.vector_store %arg6[%c0_20, %c0_21, %c1_22, %c0_23, %c0_24], %33 {strides = array<i32>} : memref<1x8x2x8x8xbf16, #tpu.memory_space<vmem>>, vector<1x8x1x8x8xbf16>,
    %cst_25 = arith.constant dense<0.000000e+00> : vector<8xf32>
    %34 = vector.multi_reduction <add>, %28, %cst_25 [0] : vector<64x8xf32> to vector<8xf32>
    %35 = vector.shape_cast %34 : vector<8xf32> to vector<1x8xf32>
    %36 = arith.addf %19, %35 : vector<1x8xf32>
    %37 = arith.mulf %28, %28 : vector<64x8xf32>
    %cst_26 = arith.constant dense<0.000000e+00> : vector<8xf32>
    %38 = vector.multi_reduction <add>, %37, %cst_26 [0] : vector<64x8xf32> to vector<8xf32>
    %39 = vector.shape_cast %38 : vector<8xf32> to vector<1x8xf32>
    %40 = arith.addf %23, %39 : vector<1x8xf32>
    %41 = vector.extract_strided_slice %36 {offsets = [0, 0], sizes = [1, 4], strides = [1, 1]} : vector<1x8xf32> to vector<1x4xf32>
    %42 = vector.extract_strided_slice %36 {offsets = [0, 4], sizes = [1, 4], strides = [1, 1]} : vector<1x8xf32> to vector<1x4xf32>
    %43 = arith.addf %41, %42 : vector<1x4xf32>
    %44 = vector.extract_strided_slice %40 {offsets = [0, 0], sizes = [1, 4], strides = [1, 1]} : vector<1x8xf32> to vector<1x4xf32>
    %45 = vector.extract_strided_slice %40 {offsets = [0, 4], sizes = [1, 4], strides = [1, 1]} : vector<1x8xf32> to vector<1x4xf32>
    %46 = arith.addf %44, %45 : vector<1x4xf32>
    %c0_27 = arith.constant 0 : index
    %c0_28 = arith.constant 0 : index
    %c0_29 = arith.constant 0 : index
    %c0_30 = arith.constant 0 : index
    %47 = vector.load %arg3[%c0_27, %c0_28, %c0_29, %c0_30] : memref<1x16x16x4xf32, #tpu.memory_space<vmem>>, vector<1x16x16x4xf32>
    %48 = vector.shape_cast %47 : vector<1x16x16x4xf32> to vector<16x16x4xf32>
    %49 = vector.shape_cast %48 : vector<16x16x4xf32> to vector<256x4xf32>
    %cst_31 = arith.constant dense<0.000000e+00> : vector<4xf32>
    %50 = vector.multi_reduction <add>, %49, %cst_31 [0] : vector<256x4xf32> to vector<4xf32>
    %51 = vector.shape_cast %50 : vector<4xf32> to vector<1x4xf32>
    %52 = arith.mulf %49, %49 : vector<256x4xf32>
    %cst_32 = arith.constant dense<0.000000e+00> : vector<4xf32>
    %53 = vector.multi_reduction <add>, %52, %cst_32 [0] : vector<256x4xf32> to vector<4xf32>
    %54 = vector.shape_cast %53 : vector<4xf32> to vector<1x4xf32>
    %55 = tpu.concatenate %51, %54 in 0 : vector<1x4xf32>, vector<1x4xf32> -> vector<2x4xf32>
    %c0_33 = arith.constant 0 : index
    %c0_34 = arith.constant 0 : index
    %c0_35 = arith.constant 0 : index
    %c0_36 = arith.constant 0 : index
    %56 = vector.load %arg7[%c0_33, %c0_34, %c0_35, %c0_36] : memref<1x1x2x8xf32, #tpu.memory_space<vmem>>, vector<1x1x2x4xf32>
    %57 = vector.shape_cast %56 : vector<1x1x2x4xf32> to vector<2x4xf32>
    %58 = vector.shape_cast %55 : vector<2x4xf32> to vector<1x1x2x4xf32>
    tpu.vector_store %arg7[%c0_33, %c0_34, %c0_35, %c0_36], %58 {strides = array<i32>} : memref<1x1x2x8xf32, #tpu.memory_space<vmem>>, vector<1x1x2x4xf32>,
    %59 = tpu.concatenate %43, %46 in 0 : vector<1x4xf32>, vector<1x4xf32> -> vector<2x4xf32>
    %c0_37 = arith.constant 0 : index
    %c0_38 = arith.constant 0 : index
    %c0_39 = arith.constant 0 : index
    %c4 = arith.constant 4 : index
    %60 = vector.load %arg7[%c0_37, %c0_38, %c0_39, %c4] : memref<1x1x2x8xf32, #tpu.memory_space<vmem>>, vector<1x1x2x4xf32>
    %61 = vector.shape_cast %60 : vector<1x1x2x4xf32> to vector<2x4xf32>
    %62 = vector.shape_cast %59 : vector<2x4xf32> to vector<1x1x2x4xf32>
    tpu.vector_store %arg7[%c0_37, %c0_38, %c0_39, %c4], %62 {strides = array<i32>} : memref<1x1x2x8xf32, #tpu.memory_space<vmem>>, vector<1x1x2x4xf32>,
    return
  }
  func.func @transform_0(%arg0: i32, %arg1: i32) -> (i32, i32, i32, i32) {
    %c0_i32 = arith.constant 0 : i32
    %c0_i32_0 = arith.constant 0 : i32
    %c0_i32_1 = arith.constant 0 : i32
    return %arg0, %arg1, %c0_i32, %c0_i32_0 : i32, i32, i32, i32
  }
  func.func @transform_1(%arg0: i32, %arg1: i32) -> (i32, i32, i32, i32) {
    %c0_i32 = arith.constant 0 : i32
    %c0_i32_0 = arith.constant 0 : i32
    %c0_i32_1 = arith.constant 0 : i32
    return %arg0, %arg1, %c0_i32, %c0_i32_0 : i32, i32, i32, i32
  }
  func.func @transform_2(%arg0: i32, %arg1: i32) -> (i32, i32, i32) {
    %c0_i32 = arith.constant 0 : i32
    %c0_i32_0 = arith.constant 0 : i32
    %c0_i32_1 = arith.constant 0 : i32
    %c0_i32_2 = arith.constant 0 : i32
    return %c0_i32, %c0_i32_0, %c0_i32_1 : i32, i32, i32
  }
  func.func @transform_3(%arg0: i32, %arg1: i32) -> (i32, i32) {
    %c0_i32 = arith.constant 0 : i32
    %c0_i32_0 = arith.constant 0 : i32
    %c0_i32_1 = arith.constant 0 : i32
    return %c0_i32, %c0_i32_0 : i32, i32
  }
  func.func @transform_4(%arg0: i32, %arg1: i32) -> (i32, i32, i32, i32, i32) {
    %c0_i32 = arith.constant 0 : i32
    %c0_i32_0 = arith.constant 0 : i32
    %c0_i32_1 = arith.constant 0 : i32
    %c0_i32_2 = arith.constant 0 : i32
    return %arg0, %arg1, %c0_i32, %c0_i32_0, %c0_i32_1 : i32, i32, i32, i32, i32
  }
  func.func @transform_5(%arg0: i32, %arg1: i32) -> (i32, i32, i32, i32) {
    %c0_i32 = arith.constant 0 : i32
    %c0_i32_0 = arith.constant 0 : i32
    %c0_i32_1 = arith.constant 0 : i32
    return %arg0, %arg1, %c0_i32, %c0_i32_0 : i32, i32, i32, i32
  }
}

module attributes {stable_mosaic.version = 11 : i64} {
  func.func @_cat_bn_relu_conv_kernel(%arg0: i32, %arg1: memref<1x16x16x4xf32, #tpu.memory_space<vmem>>, %arg2: memref<1x16x16x4xbf16, #tpu.memory_space<vmem>>, %arg3: memref<1x8xf32, #tpu.memory_space<vmem>>, %arg4: memref<1x8xf32, #tpu.memory_space<vmem>>, %arg5: memref<72x4xbf16, #tpu.memory_space<vmem>>, %arg6: memref<1x4xf32, #tpu.memory_space<vmem>>, %arg7: memref<1x16x16x4xbf16, #tpu.memory_space<vmem>>, %arg8: memref<1x2x4xf32, #tpu.memory_space<vmem>>, %arg9: memref<18x18x8xf32, #tpu.memory_space<vmem>>, %arg10: memref<16x16x72xbf16, #tpu.memory_space<vmem>>) attributes {dimension_semantics = [#tpu.dimension_semantics<parallel>], iteration_bounds = array<i64: 2>, scalar_prefetch = 0 : i64, scratch_operands = 2 : i64, tpu.core_type = #tpu.core_type<tc>, window_params = [{transform_indices = @transform_0, window_bounds = array<i64: 1, 16, 16, 4>}, {transform_indices = @transform_1, window_bounds = array<i64: 1, 16, 16, 4>}, {pipeline_mode = #tpu.pipeline_mode<synchronous>, transform_indices = @transform_2, window_bounds = array<i64: 1, 8>}, {pipeline_mode = #tpu.pipeline_mode<synchronous>, transform_indices = @transform_3, window_bounds = array<i64: 1, 8>}, {pipeline_mode = #tpu.pipeline_mode<synchronous>, transform_indices = @transform_4, window_bounds = array<i64: 72, 4>}, {pipeline_mode = #tpu.pipeline_mode<synchronous>, transform_indices = @transform_5, window_bounds = array<i64: 1, 4>}, {transform_indices = @transform_6, window_bounds = array<i64: 1, 16, 16, 4>}, {transform_indices = @transform_7, window_bounds = array<i64: 1, 2, 4>}]} {
    %cst = arith.constant 0.000000e+00 : f32
    %0 = vector.broadcast %cst : f32 to vector<1x18x8xf32>
    %cst_0 = arith.constant 0.000000e+00 : f32
    %1 = vector.broadcast %cst_0 : f32 to vector<18x1x8xf32>
    %c0 = arith.constant 0 : index
    %c0_1 = arith.constant 0 : index
    %c0_2 = arith.constant 0 : index
    %2 = vector.load %arg9[%c0, %c0_1, %c0_2] : memref<18x18x8xf32, #tpu.memory_space<vmem>>, vector<1x18x8xf32>
    tpu.vector_store %arg9[%c0, %c0_1, %c0_2], %0 {strides = array<i32>} : memref<18x18x8xf32, #tpu.memory_space<vmem>>, vector<1x18x8xf32>,
    %c17 = arith.constant 17 : index
    %c0_3 = arith.constant 0 : index
    %c0_4 = arith.constant 0 : index
    %3 = vector.load %arg9[%c17, %c0_3, %c0_4] : memref<18x18x8xf32, #tpu.memory_space<vmem>>, vector<1x18x8xf32>
    tpu.vector_store %arg9[%c17, %c0_3, %c0_4], %0 {strides = array<i32>} : memref<18x18x8xf32, #tpu.memory_space<vmem>>, vector<1x18x8xf32>,
    %c0_5 = arith.constant 0 : index
    %c0_6 = arith.constant 0 : index
    %c0_7 = arith.constant 0 : index
    %4 = vector.load %arg9[%c0_5, %c0_6, %c0_7] : memref<18x18x8xf32, #tpu.memory_space<vmem>>, vector<18x1x8xf32>
    tpu.vector_store %arg9[%c0_5, %c0_6, %c0_7], %1 {strides = array<i32>} : memref<18x18x8xf32, #tpu.memory_space<vmem>>, vector<18x1x8xf32>,
    %c0_8 = arith.constant 0 : index
    %c17_9 = arith.constant 17 : index
    %c0_10 = arith.constant 0 : index
    %5 = vector.load %arg9[%c0_8, %c17_9, %c0_10] : memref<18x18x8xf32, #tpu.memory_space<vmem>>, vector<18x1x8xf32>
    tpu.vector_store %arg9[%c0_8, %c17_9, %c0_10], %1 {strides = array<i32>} : memref<18x18x8xf32, #tpu.memory_space<vmem>>, vector<18x1x8xf32>,
    %c0_11 = arith.constant 0 : index
    %c0_12 = arith.constant 0 : index
    %c0_13 = arith.constant 0 : index
    %c0_14 = arith.constant 0 : index
    %6 = vector.load %arg1[%c0_11, %c0_12, %c0_13, %c0_14] : memref<1x16x16x4xf32, #tpu.memory_space<vmem>>, vector<1x16x16x4xf32>
    %7 = vector.shape_cast %6 : vector<1x16x16x4xf32> to vector<16x16x4xf32>
    %c0_15 = arith.constant 0 : index
    %c0_16 = arith.constant 0 : index
    %8 = vector.load %arg3[%c0_15, %c0_16] : memref<1x8xf32, #tpu.memory_space<vmem>>, vector<1x4xf32>
    %9 = vector.shape_cast %8 : vector<1x4xf32> to vector<1x1x4xf32>
    %10 = vector.broadcast %9 : vector<1x1x4xf32> to vector<16x16x4xf32>
    %11 = arith.mulf %7, %10 : vector<16x16x4xf32>
    %c0_17 = arith.constant 0 : index
    %c0_18 = arith.constant 0 : index
    %12 = vector.load %arg4[%c0_17, %c0_18] : memref<1x8xf32, #tpu.memory_space<vmem>>, vector<1x4xf32>
    %13 = vector.shape_cast %12 : vector<1x4xf32> to vector<1x1x4xf32>
    %14 = vector.broadcast %13 : vector<1x1x4xf32> to vector<16x16x4xf32>
    %15 = arith.addf %11, %14 : vector<16x16x4xf32>
    %cst_19 = arith.constant 0.000000e+00 : f32
    %16 = vector.broadcast %cst_19 : f32 to vector<16x16x4xf32>
    %17 = arith.maximumf %15, %16 : vector<16x16x4xf32>
    %c1 = arith.constant 1 : index
    %c1_20 = arith.constant 1 : index
    %c0_21 = arith.constant 0 : index
    %18 = vector.load %arg9[%c1, %c1_20, %c0_21] : memref<18x18x8xf32, #tpu.memory_space<vmem>>, vector<16x16x4xf32>
    tpu.vector_store %arg9[%c1, %c1_20, %c0_21], %17 {strides = array<i32>} : memref<18x18x8xf32, #tpu.memory_space<vmem>>, vector<16x16x4xf32>,
    %c0_22 = arith.constant 0 : index
    %c0_23 = arith.constant 0 : index
    %c0_24 = arith.constant 0 : index
    %c0_25 = arith.constant 0 : index
    %19 = vector.load %arg2[%c0_22, %c0_23, %c0_24, %c0_25] : memref<1x16x16x4xbf16, #tpu.memory_space<vmem>>, vector<1x16x16x4xbf16>
    %20 = vector.shape_cast %19 : vector<1x16x16x4xbf16> to vector<16x16x4xbf16>
    %21 = arith.extf %20 : vector<16x16x4xbf16> to vector<16x16x4xf32>
    %c0_26 = arith.constant 0 : index
    %c4 = arith.constant 4 : index
    %22 = vector.load %arg3[%c0_26, %c4] : memref<1x8xf32, #tpu.memory_space<vmem>>, vector<1x4xf32>
    %23 = vector.shape_cast %22 : vector<1x4xf32> to vector<1x1x4xf32>
    %24 = vector.broadcast %23 : vector<1x1x4xf32> to vector<16x16x4xf32>
    %25 = arith.mulf %21, %24 : vector<16x16x4xf32>
    %c0_27 = arith.constant 0 : index
    %c4_28 = arith.constant 4 : index
    %26 = vector.load %arg4[%c0_27, %c4_28] : memref<1x8xf32, #tpu.memory_space<vmem>>, vector<1x4xf32>
    %27 = vector.shape_cast %26 : vector<1x4xf32> to vector<1x1x4xf32>
    %28 = vector.broadcast %27 : vector<1x1x4xf32> to vector<16x16x4xf32>
    %29 = arith.addf %25, %28 : vector<16x16x4xf32>
    %cst_29 = arith.constant 0.000000e+00 : f32
    %30 = vector.broadcast %cst_29 : f32 to vector<16x16x4xf32>
    %31 = arith.maximumf %29, %30 : vector<16x16x4xf32>
    %c1_30 = arith.constant 1 : index
    %c1_31 = arith.constant 1 : index
    %c4_32 = arith.constant 4 : index
    %32 = vector.load %arg9[%c1_30, %c1_31, %c4_32] : memref<18x18x8xf32, #tpu.memory_space<vmem>>, vector<16x16x4xf32>
    tpu.vector_store %arg9[%c1_30, %c1_31, %c4_32], %31 {strides = array<i32>} : memref<18x18x8xf32, #tpu.memory_space<vmem>>, vector<16x16x4xf32>,
    %c0_33 = arith.constant 0 : index
    %c0_34 = arith.constant 0 : index
    %c0_35 = arith.constant 0 : index
    %33 = vector.load %arg9[%c0_33, %c0_34, %c0_35] : memref<18x18x8xf32, #tpu.memory_space<vmem>>, vector<16x16x8xf32>
    %34 = arith.truncf %33 : vector<16x16x8xf32> to vector<16x16x8xbf16>
    %c0_36 = arith.constant 0 : index
    %c0_37 = arith.constant 0 : index
    %c0_38 = arith.constant 0 : index
    %35 = vector.load %arg10[%c0_36, %c0_37, %c0_38] : memref<16x16x72xbf16, #tpu.memory_space<vmem>>, vector<16x16x8xbf16>
    tpu.vector_store %arg10[%c0_36, %c0_37, %c0_38], %34 {strides = array<i32>} : memref<16x16x72xbf16, #tpu.memory_space<vmem>>, vector<16x16x8xbf16>,
    %c0_39 = arith.constant 0 : index
    %c1_40 = arith.constant 1 : index
    %c0_41 = arith.constant 0 : index
    %36 = vector.load %arg9[%c0_39, %c1_40, %c0_41] : memref<18x18x8xf32, #tpu.memory_space<vmem>>, vector<16x16x8xf32>
    %37 = arith.truncf %36 : vector<16x16x8xf32> to vector<16x16x8xbf16>
    %c0_42 = arith.constant 0 : index
    %c0_43 = arith.constant 0 : index
    %c8 = arith.constant 8 : index
    %38 = vector.load %arg10[%c0_42, %c0_43, %c8] : memref<16x16x72xbf16, #tpu.memory_space<vmem>>, vector<16x16x8xbf16>
    tpu.vector_store %arg10[%c0_42, %c0_43, %c8], %37 {strides = array<i32>} : memref<16x16x72xbf16, #tpu.memory_space<vmem>>, vector<16x16x8xbf16>,
    %c0_44 = arith.constant 0 : index
    %c2 = arith.constant 2 : index
    %c0_45 = arith.constant 0 : index
    %39 = vector.load %arg9[%c0_44, %c2, %c0_45] : memref<18x18x8xf32, #tpu.memory_space<vmem>>, vector<16x16x8xf32>
    %40 = arith.truncf %39 : vector<16x16x8xf32> to vector<16x16x8xbf16>
    %c0_46 = arith.constant 0 : index
    %c0_47 = arith.constant 0 : index
    %c16 = arith.constant 16 : index
    %41 = vector.load %arg10[%c0_46, %c0_47, %c16] : memref<16x16x72xbf16, #tpu.memory_space<vmem>>, vector<16x16x8xbf16>
    tpu.vector_store %arg10[%c0_46, %c0_47, %c16], %40 {strides = array<i32>} : memref<16x16x72xbf16, #tpu.memory_space<vmem>>, vector<16x16x8xbf16>,
    %c1_48 = arith.constant 1 : index
    %c0_49 = arith.constant 0 : index
    %c0_50 = arith.constant 0 : index
    %42 = vector.load %arg9[%c1_48, %c0_49, %c0_50] : memref<18x18x8xf32, #tpu.memory_space<vmem>>, vector<16x16x8xf32>
    %43 = arith.truncf %42 : vector<16x16x8xf32> to vector<16x16x8xbf16>
    %c0_51 = arith.constant 0 : index
    %c0_52 = arith.constant 0 : index
    %c24 = arith.constant 24 : index
    %44 = vector.load %arg10[%c0_51, %c0_52, %c24] : memref<16x16x72xbf16, #tpu.memory_space<vmem>>, vector<16x16x8xbf16>
    tpu.vector_store %arg10[%c0_51, %c0_52, %c24], %43 {strides = array<i32>} : memref<16x16x72xbf16, #tpu.memory_space<vmem>>, vector<16x16x8xbf16>,
    %c1_53 = arith.constant 1 : index
    %c1_54 = arith.constant 1 : index
    %c0_55 = arith.constant 0 : index
    %45 = vector.load %arg9[%c1_53, %c1_54, %c0_55] : memref<18x18x8xf32, #tpu.memory_space<vmem>>, vector<16x16x8xf32>
    %46 = arith.truncf %45 : vector<16x16x8xf32> to vector<16x16x8xbf16>
    %c0_56 = arith.constant 0 : index
    %c0_57 = arith.constant 0 : index
    %c32 = arith.constant 32 : index
    %47 = vector.load %arg10[%c0_56, %c0_57, %c32] : memref<16x16x72xbf16, #tpu.memory_space<vmem>>, vector<16x16x8xbf16>
    tpu.vector_store %arg10[%c0_56, %c0_57, %c32], %46 {strides = array<i32>} : memref<16x16x72xbf16, #tpu.memory_space<vmem>>, vector<16x16x8xbf16>,
    %c1_58 = arith.constant 1 : index
    %c2_59 = arith.constant 2 : index
    %c0_60 = arith.constant 0 : index
    %48 = vector.load %arg9[%c1_58, %c2_59, %c0_60] : memref<18x18x8xf32, #tpu.memory_space<vmem>>, vector<16x16x8xf32>
    %49 = arith.truncf %48 : vector<16x16x8xf32> to vector<16x16x8xbf16>
    %c0_61 = arith.constant 0 : index
    %c0_62 = arith.constant 0 : index
    %c40 = arith.constant 40 : index
    %50 = vector.load %arg10[%c0_61, %c0_62, %c40] : memref<16x16x72xbf16, #tpu.memory_space<vmem>>, vector<16x16x8xbf16>
    tpu.vector_store %arg10[%c0_61, %c0_62, %c40], %49 {strides = array<i32>} : memref<16x16x72xbf16, #tpu.memory_space<vmem>>, vector<16x16x8xbf16>,
    %c2_63 = arith.constant 2 : index
    %c0_64 = arith.constant 0 : index
    %c0_65 = arith.constant 0 : index
    %51 = vector.load %arg9[%c2_63, %c0_64, %c0_65] : memref<18x18x8xf32, #tpu.memory_space<vmem>>, vector<16x16x8xf32>
    %52 = arith.truncf %51 : vector<16x16x8xf32> to vector<16x16x8xbf16>
    %c0_66 = arith.constant 0 : index
    %c0_67 = arith.constant 0 : index
    %c48 = arith.constant 48 : index
    %53 = vector.load %arg10[%c0_66, %c0_67, %c48] : memref<16x16x72xbf16, #tpu.memory_space<vmem>>, vector<16x16x8xbf16>
    tpu.vector_store %arg10[%c0_66, %c0_67, %c48], %52 {strides = array<i32>} : memref<16x16x72xbf16, #tpu.memory_space<vmem>>, vector<16x16x8xbf16>,
    %c2_68 = arith.constant 2 : index
    %c1_69 = arith.constant 1 : index
    %c0_70 = arith.constant 0 : index
    %54 = vector.load %arg9[%c2_68, %c1_69, %c0_70] : memref<18x18x8xf32, #tpu.memory_space<vmem>>, vector<16x16x8xf32>
    %55 = arith.truncf %54 : vector<16x16x8xf32> to vector<16x16x8xbf16>
    %c0_71 = arith.constant 0 : index
    %c0_72 = arith.constant 0 : index
    %c56 = arith.constant 56 : index
    %56 = vector.load %arg10[%c0_71, %c0_72, %c56] : memref<16x16x72xbf16, #tpu.memory_space<vmem>>, vector<16x16x8xbf16>
    tpu.vector_store %arg10[%c0_71, %c0_72, %c56], %55 {strides = array<i32>} : memref<16x16x72xbf16, #tpu.memory_space<vmem>>, vector<16x16x8xbf16>,
    %c2_73 = arith.constant 2 : index
    %c2_74 = arith.constant 2 : index
    %c0_75 = arith.constant 0 : index
    %57 = vector.load %arg9[%c2_73, %c2_74, %c0_75] : memref<18x18x8xf32, #tpu.memory_space<vmem>>, vector<16x16x8xf32>
    %58 = arith.truncf %57 : vector<16x16x8xf32> to vector<16x16x8xbf16>
    %c0_76 = arith.constant 0 : index
    %c0_77 = arith.constant 0 : index
    %c64 = arith.constant 64 : index
    %59 = vector.load %arg10[%c0_76, %c0_77, %c64] : memref<16x16x72xbf16, #tpu.memory_space<vmem>>, vector<16x16x8xbf16>
    tpu.vector_store %arg10[%c0_76, %c0_77, %c64], %58 {strides = array<i32>} : memref<16x16x72xbf16, #tpu.memory_space<vmem>>, vector<16x16x8xbf16>,
    %c0_78 = arith.constant 0 : index
    %c0_79 = arith.constant 0 : index
    %c0_80 = arith.constant 0 : index
    %60 = vector.load %arg10[%c0_78, %c0_79, %c0_80] : memref<16x16x72xbf16, #tpu.memory_space<vmem>>, vector<16x16x72xbf16>
    %61 = vector.shape_cast %60 : vector<16x16x72xbf16> to vector<256x72xbf16>
    %c0_81 = arith.constant 0 : index
    %c0_82 = arith.constant 0 : index
    %62 = vector.load %arg5[%c0_81, %c0_82] : memref<72x4xbf16, #tpu.memory_space<vmem>>, vector<72x4xbf16>
    %cst_83 = arith.constant dense<0.000000e+00> : vector<256x4xf32>
    %63 = tpu.matmul %61, %62, %cst_83 {dimension_numbers = #tpu.dot_dimension_numbers<[1], [0], [0], [1], [0, 0, 1, 1], [], []>} : vector<256x72xbf16>, vector<72x4xbf16>, vector<256x4xf32> -> vector<256x4xf32>
    %c0_84 = arith.constant 0 : index
    %c0_85 = arith.constant 0 : index
    %64 = vector.load %arg6[%c0_84, %c0_85] : memref<1x4xf32, #tpu.memory_space<vmem>>, vector<1x4xf32>
    %65 = vector.broadcast %64 : vector<1x4xf32> to vector<256x4xf32>
    %66 = arith.addf %63, %65 : vector<256x4xf32>
    %cst_86 = arith.constant dense<0.000000e+00> : vector<4xf32>
    %67 = vector.multi_reduction <add>, %66, %cst_86 [0] : vector<256x4xf32> to vector<4xf32>
    %68 = vector.shape_cast %67 : vector<4xf32> to vector<1x4xf32>
    %69 = arith.mulf %66, %66 : vector<256x4xf32>
    %cst_87 = arith.constant dense<0.000000e+00> : vector<4xf32>
    %70 = vector.multi_reduction <add>, %69, %cst_87 [0] : vector<256x4xf32> to vector<4xf32>
    %71 = vector.shape_cast %70 : vector<4xf32> to vector<1x4xf32>
    %72 = tpu.concatenate %68, %71 in 0 : vector<1x4xf32>, vector<1x4xf32> -> vector<2x4xf32>
    %c0_88 = arith.constant 0 : index
    %c0_89 = arith.constant 0 : index
    %c0_90 = arith.constant 0 : index
    %73 = vector.load %arg8[%c0_88, %c0_89, %c0_90] : memref<1x2x4xf32, #tpu.memory_space<vmem>>, vector<1x2x4xf32>
    %74 = vector.shape_cast %73 : vector<1x2x4xf32> to vector<2x4xf32>
    %75 = vector.shape_cast %72 : vector<2x4xf32> to vector<1x2x4xf32>
    tpu.vector_store %arg8[%c0_88, %c0_89, %c0_90], %75 {strides = array<i32>} : memref<1x2x4xf32, #tpu.memory_space<vmem>>, vector<1x2x4xf32>,
    %76 = vector.shape_cast %66 : vector<256x4xf32> to vector<16x16x4xf32>
    %77 = arith.truncf %76 : vector<16x16x4xf32> to vector<16x16x4xbf16>
    %c0_91 = arith.constant 0 : index
    %c0_92 = arith.constant 0 : index
    %c0_93 = arith.constant 0 : index
    %c0_94 = arith.constant 0 : index
    %78 = vector.load %arg7[%c0_91, %c0_92, %c0_93, %c0_94] : memref<1x16x16x4xbf16, #tpu.memory_space<vmem>>, vector<1x16x16x4xbf16>
    %79 = vector.shape_cast %78 : vector<1x16x16x4xbf16> to vector<16x16x4xbf16>
    %80 = vector.shape_cast %77 : vector<16x16x4xbf16> to vector<1x16x16x4xbf16>
    tpu.vector_store %arg7[%c0_91, %c0_92, %c0_93, %c0_94], %80 {strides = array<i32>} : memref<1x16x16x4xbf16, #tpu.memory_space<vmem>>, vector<1x16x16x4xbf16>,
    return
  }
  func.func @transform_0(%arg0: i32) -> (i32, i32, i32, i32) {
    %c0_i32 = arith.constant 0 : i32
    %c0_i32_0 = arith.constant 0 : i32
    %c0_i32_1 = arith.constant 0 : i32
    %c0_i32_2 = arith.constant 0 : i32
    return %arg0, %c0_i32, %c0_i32_0, %c0_i32_1 : i32, i32, i32, i32
  }
  func.func @transform_1(%arg0: i32) -> (i32, i32, i32, i32) {
    %c0_i32 = arith.constant 0 : i32
    %c0_i32_0 = arith.constant 0 : i32
    %c0_i32_1 = arith.constant 0 : i32
    %c0_i32_2 = arith.constant 0 : i32
    return %arg0, %c0_i32, %c0_i32_0, %c0_i32_1 : i32, i32, i32, i32
  }
  func.func @transform_2(%arg0: i32) -> (i32, i32) {
    %c0_i32 = arith.constant 0 : i32
    %c0_i32_0 = arith.constant 0 : i32
    %c0_i32_1 = arith.constant 0 : i32
    return %c0_i32, %c0_i32_0 : i32, i32
  }
  func.func @transform_3(%arg0: i32) -> (i32, i32) {
    %c0_i32 = arith.constant 0 : i32
    %c0_i32_0 = arith.constant 0 : i32
    %c0_i32_1 = arith.constant 0 : i32
    return %c0_i32, %c0_i32_0 : i32, i32
  }
  func.func @transform_4(%arg0: i32) -> (i32, i32) {
    %c0_i32 = arith.constant 0 : i32
    %c0_i32_0 = arith.constant 0 : i32
    %c0_i32_1 = arith.constant 0 : i32
    return %c0_i32, %c0_i32_0 : i32, i32
  }
  func.func @transform_5(%arg0: i32) -> (i32, i32) {
    %c0_i32 = arith.constant 0 : i32
    %c0_i32_0 = arith.constant 0 : i32
    %c0_i32_1 = arith.constant 0 : i32
    return %c0_i32, %c0_i32_0 : i32, i32
  }
  func.func @transform_6(%arg0: i32) -> (i32, i32, i32, i32) {
    %c0_i32 = arith.constant 0 : i32
    %c0_i32_0 = arith.constant 0 : i32
    %c0_i32_1 = arith.constant 0 : i32
    %c0_i32_2 = arith.constant 0 : i32
    return %arg0, %c0_i32, %c0_i32_0, %c0_i32_1 : i32, i32, i32, i32
  }
  func.func @transform_7(%arg0: i32) -> (i32, i32, i32) {
    %c0_i32 = arith.constant 0 : i32
    %c0_i32_0 = arith.constant 0 : i32
    %c0_i32_1 = arith.constant 0 : i32
    return %arg0, %c0_i32, %c0_i32_0 : i32, i32, i32
  }
}

module attributes {stable_mosaic.version = 11 : i64} {
  func.func @_bn_relu_conv_kernel(%arg0: i32, %arg1: memref<1x16x16x4xbf16, #tpu.memory_space<vmem>>, %arg2: memref<1x4xf32, #tpu.memory_space<vmem>>, %arg3: memref<1x4xf32, #tpu.memory_space<vmem>>, %arg4: memref<36x4xbf16, #tpu.memory_space<vmem>>, %arg5: memref<1x4xf32, #tpu.memory_space<vmem>>, %arg6: memref<1x16x16x4xbf16, #tpu.memory_space<vmem>>, %arg7: memref<1x2x4xf32, #tpu.memory_space<vmem>>, %arg8: memref<18x18x4xf32, #tpu.memory_space<vmem>>, %arg9: memref<16x16x36xbf16, #tpu.memory_space<vmem>>) attributes {dimension_semantics = [#tpu.dimension_semantics<parallel>], iteration_bounds = array<i64: 2>, scalar_prefetch = 0 : i64, scratch_operands = 2 : i64, tpu.core_type = #tpu.core_type<tc>, window_params = [{transform_indices = @transform_0, window_bounds = array<i64: 1, 16, 16, 4>}, {pipeline_mode = #tpu.pipeline_mode<synchronous>, transform_indices = @transform_1, window_bounds = array<i64: 1, 4>}, {pipeline_mode = #tpu.pipeline_mode<synchronous>, transform_indices = @transform_2, window_bounds = array<i64: 1, 4>}, {pipeline_mode = #tpu.pipeline_mode<synchronous>, transform_indices = @transform_3, window_bounds = array<i64: 36, 4>}, {pipeline_mode = #tpu.pipeline_mode<synchronous>, transform_indices = @transform_4, window_bounds = array<i64: 1, 4>}, {transform_indices = @transform_5, window_bounds = array<i64: 1, 16, 16, 4>}, {transform_indices = @transform_6, window_bounds = array<i64: 1, 2, 4>}]} {
    %cst = arith.constant 0.000000e+00 : f32
    %0 = vector.broadcast %cst : f32 to vector<1x18x4xf32>
    %cst_0 = arith.constant 0.000000e+00 : f32
    %1 = vector.broadcast %cst_0 : f32 to vector<18x1x4xf32>
    %c0 = arith.constant 0 : index
    %c0_1 = arith.constant 0 : index
    %c0_2 = arith.constant 0 : index
    %2 = vector.load %arg8[%c0, %c0_1, %c0_2] : memref<18x18x4xf32, #tpu.memory_space<vmem>>, vector<1x18x4xf32>
    tpu.vector_store %arg8[%c0, %c0_1, %c0_2], %0 {strides = array<i32>} : memref<18x18x4xf32, #tpu.memory_space<vmem>>, vector<1x18x4xf32>,
    %c17 = arith.constant 17 : index
    %c0_3 = arith.constant 0 : index
    %c0_4 = arith.constant 0 : index
    %3 = vector.load %arg8[%c17, %c0_3, %c0_4] : memref<18x18x4xf32, #tpu.memory_space<vmem>>, vector<1x18x4xf32>
    tpu.vector_store %arg8[%c17, %c0_3, %c0_4], %0 {strides = array<i32>} : memref<18x18x4xf32, #tpu.memory_space<vmem>>, vector<1x18x4xf32>,
    %c0_5 = arith.constant 0 : index
    %c0_6 = arith.constant 0 : index
    %c0_7 = arith.constant 0 : index
    %4 = vector.load %arg8[%c0_5, %c0_6, %c0_7] : memref<18x18x4xf32, #tpu.memory_space<vmem>>, vector<18x1x4xf32>
    tpu.vector_store %arg8[%c0_5, %c0_6, %c0_7], %1 {strides = array<i32>} : memref<18x18x4xf32, #tpu.memory_space<vmem>>, vector<18x1x4xf32>,
    %c0_8 = arith.constant 0 : index
    %c17_9 = arith.constant 17 : index
    %c0_10 = arith.constant 0 : index
    %5 = vector.load %arg8[%c0_8, %c17_9, %c0_10] : memref<18x18x4xf32, #tpu.memory_space<vmem>>, vector<18x1x4xf32>
    tpu.vector_store %arg8[%c0_8, %c17_9, %c0_10], %1 {strides = array<i32>} : memref<18x18x4xf32, #tpu.memory_space<vmem>>, vector<18x1x4xf32>,
    %c0_11 = arith.constant 0 : index
    %c0_12 = arith.constant 0 : index
    %c0_13 = arith.constant 0 : index
    %c0_14 = arith.constant 0 : index
    %6 = vector.load %arg1[%c0_11, %c0_12, %c0_13, %c0_14] : memref<1x16x16x4xbf16, #tpu.memory_space<vmem>>, vector<1x16x16x4xbf16>
    %7 = vector.shape_cast %6 : vector<1x16x16x4xbf16> to vector<16x16x4xbf16>
    %8 = arith.extf %7 : vector<16x16x4xbf16> to vector<16x16x4xf32>
    %c0_15 = arith.constant 0 : index
    %c0_16 = arith.constant 0 : index
    %9 = vector.load %arg2[%c0_15, %c0_16] : memref<1x4xf32, #tpu.memory_space<vmem>>, vector<1x4xf32>
    %10 = vector.shape_cast %9 : vector<1x4xf32> to vector<1x1x4xf32>
    %11 = vector.broadcast %10 : vector<1x1x4xf32> to vector<16x16x4xf32>
    %12 = arith.mulf %8, %11 : vector<16x16x4xf32>
    %c0_17 = arith.constant 0 : index
    %c0_18 = arith.constant 0 : index
    %13 = vector.load %arg3[%c0_17, %c0_18] : memref<1x4xf32, #tpu.memory_space<vmem>>, vector<1x4xf32>
    %14 = vector.shape_cast %13 : vector<1x4xf32> to vector<1x1x4xf32>
    %15 = vector.broadcast %14 : vector<1x1x4xf32> to vector<16x16x4xf32>
    %16 = arith.addf %12, %15 : vector<16x16x4xf32>
    %cst_19 = arith.constant 0.000000e+00 : f32
    %17 = vector.broadcast %cst_19 : f32 to vector<16x16x4xf32>
    %18 = arith.maximumf %16, %17 : vector<16x16x4xf32>
    %c1 = arith.constant 1 : index
    %c1_20 = arith.constant 1 : index
    %c0_21 = arith.constant 0 : index
    %19 = vector.load %arg8[%c1, %c1_20, %c0_21] : memref<18x18x4xf32, #tpu.memory_space<vmem>>, vector<16x16x4xf32>
    tpu.vector_store %arg8[%c1, %c1_20, %c0_21], %18 {strides = array<i32>} : memref<18x18x4xf32, #tpu.memory_space<vmem>>, vector<16x16x4xf32>,
    %c0_22 = arith.constant 0 : index
    %c0_23 = arith.constant 0 : index
    %c0_24 = arith.constant 0 : index
    %20 = vector.load %arg8[%c0_22, %c0_23, %c0_24] : memref<18x18x4xf32, #tpu.memory_space<vmem>>, vector<16x16x4xf32>
    %21 = arith.truncf %20 : vector<16x16x4xf32> to vector<16x16x4xbf16>
    %c0_25 = arith.constant 0 : index
    %c0_26 = arith.constant 0 : index
    %c0_27 = arith.constant 0 : index
    %22 = vector.load %arg9[%c0_25, %c0_26, %c0_27] : memref<16x16x36xbf16, #tpu.memory_space<vmem>>, vector<16x16x4xbf16>
    tpu.vector_store %arg9[%c0_25, %c0_26, %c0_27], %21 {strides = array<i32>} : memref<16x16x36xbf16, #tpu.memory_space<vmem>>, vector<16x16x4xbf16>,
    %c0_28 = arith.constant 0 : index
    %c1_29 = arith.constant 1 : index
    %c0_30 = arith.constant 0 : index
    %23 = vector.load %arg8[%c0_28, %c1_29, %c0_30] : memref<18x18x4xf32, #tpu.memory_space<vmem>>, vector<16x16x4xf32>
    %24 = arith.truncf %23 : vector<16x16x4xf32> to vector<16x16x4xbf16>
    %c0_31 = arith.constant 0 : index
    %c0_32 = arith.constant 0 : index
    %c4 = arith.constant 4 : index
    %25 = vector.load %arg9[%c0_31, %c0_32, %c4] : memref<16x16x36xbf16, #tpu.memory_space<vmem>>, vector<16x16x4xbf16>
    tpu.vector_store %arg9[%c0_31, %c0_32, %c4], %24 {strides = array<i32>} : memref<16x16x36xbf16, #tpu.memory_space<vmem>>, vector<16x16x4xbf16>,
    %c0_33 = arith.constant 0 : index
    %c2 = arith.constant 2 : index
    %c0_34 = arith.constant 0 : index
    %26 = vector.load %arg8[%c0_33, %c2, %c0_34] : memref<18x18x4xf32, #tpu.memory_space<vmem>>, vector<16x16x4xf32>
    %27 = arith.truncf %26 : vector<16x16x4xf32> to vector<16x16x4xbf16>
    %c0_35 = arith.constant 0 : index
    %c0_36 = arith.constant 0 : index
    %c8 = arith.constant 8 : index
    %28 = vector.load %arg9[%c0_35, %c0_36, %c8] : memref<16x16x36xbf16, #tpu.memory_space<vmem>>, vector<16x16x4xbf16>
    tpu.vector_store %arg9[%c0_35, %c0_36, %c8], %27 {strides = array<i32>} : memref<16x16x36xbf16, #tpu.memory_space<vmem>>, vector<16x16x4xbf16>,
    %c1_37 = arith.constant 1 : index
    %c0_38 = arith.constant 0 : index
    %c0_39 = arith.constant 0 : index
    %29 = vector.load %arg8[%c1_37, %c0_38, %c0_39] : memref<18x18x4xf32, #tpu.memory_space<vmem>>, vector<16x16x4xf32>
    %30 = arith.truncf %29 : vector<16x16x4xf32> to vector<16x16x4xbf16>
    %c0_40 = arith.constant 0 : index
    %c0_41 = arith.constant 0 : index
    %c12 = arith.constant 12 : index
    %31 = vector.load %arg9[%c0_40, %c0_41, %c12] : memref<16x16x36xbf16, #tpu.memory_space<vmem>>, vector<16x16x4xbf16>
    tpu.vector_store %arg9[%c0_40, %c0_41, %c12], %30 {strides = array<i32>} : memref<16x16x36xbf16, #tpu.memory_space<vmem>>, vector<16x16x4xbf16>,
    %c1_42 = arith.constant 1 : index
    %c1_43 = arith.constant 1 : index
    %c0_44 = arith.constant 0 : index
    %32 = vector.load %arg8[%c1_42, %c1_43, %c0_44] : memref<18x18x4xf32, #tpu.memory_space<vmem>>, vector<16x16x4xf32>
    %33 = arith.truncf %32 : vector<16x16x4xf32> to vector<16x16x4xbf16>
    %c0_45 = arith.constant 0 : index
    %c0_46 = arith.constant 0 : index
    %c16 = arith.constant 16 : index
    %34 = vector.load %arg9[%c0_45, %c0_46, %c16] : memref<16x16x36xbf16, #tpu.memory_space<vmem>>, vector<16x16x4xbf16>
    tpu.vector_store %arg9[%c0_45, %c0_46, %c16], %33 {strides = array<i32>} : memref<16x16x36xbf16, #tpu.memory_space<vmem>>, vector<16x16x4xbf16>,
    %c1_47 = arith.constant 1 : index
    %c2_48 = arith.constant 2 : index
    %c0_49 = arith.constant 0 : index
    %35 = vector.load %arg8[%c1_47, %c2_48, %c0_49] : memref<18x18x4xf32, #tpu.memory_space<vmem>>, vector<16x16x4xf32>
    %36 = arith.truncf %35 : vector<16x16x4xf32> to vector<16x16x4xbf16>
    %c0_50 = arith.constant 0 : index
    %c0_51 = arith.constant 0 : index
    %c20 = arith.constant 20 : index
    %37 = vector.load %arg9[%c0_50, %c0_51, %c20] : memref<16x16x36xbf16, #tpu.memory_space<vmem>>, vector<16x16x4xbf16>
    tpu.vector_store %arg9[%c0_50, %c0_51, %c20], %36 {strides = array<i32>} : memref<16x16x36xbf16, #tpu.memory_space<vmem>>, vector<16x16x4xbf16>,
    %c2_52 = arith.constant 2 : index
    %c0_53 = arith.constant 0 : index
    %c0_54 = arith.constant 0 : index
    %38 = vector.load %arg8[%c2_52, %c0_53, %c0_54] : memref<18x18x4xf32, #tpu.memory_space<vmem>>, vector<16x16x4xf32>
    %39 = arith.truncf %38 : vector<16x16x4xf32> to vector<16x16x4xbf16>
    %c0_55 = arith.constant 0 : index
    %c0_56 = arith.constant 0 : index
    %c24 = arith.constant 24 : index
    %40 = vector.load %arg9[%c0_55, %c0_56, %c24] : memref<16x16x36xbf16, #tpu.memory_space<vmem>>, vector<16x16x4xbf16>
    tpu.vector_store %arg9[%c0_55, %c0_56, %c24], %39 {strides = array<i32>} : memref<16x16x36xbf16, #tpu.memory_space<vmem>>, vector<16x16x4xbf16>,
    %c2_57 = arith.constant 2 : index
    %c1_58 = arith.constant 1 : index
    %c0_59 = arith.constant 0 : index
    %41 = vector.load %arg8[%c2_57, %c1_58, %c0_59] : memref<18x18x4xf32, #tpu.memory_space<vmem>>, vector<16x16x4xf32>
    %42 = arith.truncf %41 : vector<16x16x4xf32> to vector<16x16x4xbf16>
    %c0_60 = arith.constant 0 : index
    %c0_61 = arith.constant 0 : index
    %c28 = arith.constant 28 : index
    %43 = vector.load %arg9[%c0_60, %c0_61, %c28] : memref<16x16x36xbf16, #tpu.memory_space<vmem>>, vector<16x16x4xbf16>
    tpu.vector_store %arg9[%c0_60, %c0_61, %c28], %42 {strides = array<i32>} : memref<16x16x36xbf16, #tpu.memory_space<vmem>>, vector<16x16x4xbf16>,
    %c2_62 = arith.constant 2 : index
    %c2_63 = arith.constant 2 : index
    %c0_64 = arith.constant 0 : index
    %44 = vector.load %arg8[%c2_62, %c2_63, %c0_64] : memref<18x18x4xf32, #tpu.memory_space<vmem>>, vector<16x16x4xf32>
    %45 = arith.truncf %44 : vector<16x16x4xf32> to vector<16x16x4xbf16>
    %c0_65 = arith.constant 0 : index
    %c0_66 = arith.constant 0 : index
    %c32 = arith.constant 32 : index
    %46 = vector.load %arg9[%c0_65, %c0_66, %c32] : memref<16x16x36xbf16, #tpu.memory_space<vmem>>, vector<16x16x4xbf16>
    tpu.vector_store %arg9[%c0_65, %c0_66, %c32], %45 {strides = array<i32>} : memref<16x16x36xbf16, #tpu.memory_space<vmem>>, vector<16x16x4xbf16>,
    %c0_67 = arith.constant 0 : index
    %c0_68 = arith.constant 0 : index
    %c0_69 = arith.constant 0 : index
    %47 = vector.load %arg9[%c0_67, %c0_68, %c0_69] : memref<16x16x36xbf16, #tpu.memory_space<vmem>>, vector<16x16x36xbf16>
    %48 = vector.shape_cast %47 : vector<16x16x36xbf16> to vector<256x36xbf16>
    %c0_70 = arith.constant 0 : index
    %c0_71 = arith.constant 0 : index
    %49 = vector.load %arg4[%c0_70, %c0_71] : memref<36x4xbf16, #tpu.memory_space<vmem>>, vector<36x4xbf16>
    %cst_72 = arith.constant dense<0.000000e+00> : vector<256x4xf32>
    %50 = tpu.matmul %48, %49, %cst_72 {dimension_numbers = #tpu.dot_dimension_numbers<[1], [0], [0], [1], [0, 0, 1, 1], [], []>} : vector<256x36xbf16>, vector<36x4xbf16>, vector<256x4xf32> -> vector<256x4xf32>
    %c0_73 = arith.constant 0 : index
    %c0_74 = arith.constant 0 : index
    %51 = vector.load %arg5[%c0_73, %c0_74] : memref<1x4xf32, #tpu.memory_space<vmem>>, vector<1x4xf32>
    %52 = vector.broadcast %51 : vector<1x4xf32> to vector<256x4xf32>
    %53 = arith.addf %50, %52 : vector<256x4xf32>
    %cst_75 = arith.constant dense<0.000000e+00> : vector<4xf32>
    %54 = vector.multi_reduction <add>, %53, %cst_75 [0] : vector<256x4xf32> to vector<4xf32>
    %55 = vector.shape_cast %54 : vector<4xf32> to vector<1x4xf32>
    %56 = arith.mulf %53, %53 : vector<256x4xf32>
    %cst_76 = arith.constant dense<0.000000e+00> : vector<4xf32>
    %57 = vector.multi_reduction <add>, %56, %cst_76 [0] : vector<256x4xf32> to vector<4xf32>
    %58 = vector.shape_cast %57 : vector<4xf32> to vector<1x4xf32>
    %59 = tpu.concatenate %55, %58 in 0 : vector<1x4xf32>, vector<1x4xf32> -> vector<2x4xf32>
    %c0_77 = arith.constant 0 : index
    %c0_78 = arith.constant 0 : index
    %c0_79 = arith.constant 0 : index
    %60 = vector.load %arg7[%c0_77, %c0_78, %c0_79] : memref<1x2x4xf32, #tpu.memory_space<vmem>>, vector<1x2x4xf32>
    %61 = vector.shape_cast %60 : vector<1x2x4xf32> to vector<2x4xf32>
    %62 = vector.shape_cast %59 : vector<2x4xf32> to vector<1x2x4xf32>
    tpu.vector_store %arg7[%c0_77, %c0_78, %c0_79], %62 {strides = array<i32>} : memref<1x2x4xf32, #tpu.memory_space<vmem>>, vector<1x2x4xf32>,
    %63 = vector.shape_cast %53 : vector<256x4xf32> to vector<16x16x4xf32>
    %64 = arith.truncf %63 : vector<16x16x4xf32> to vector<16x16x4xbf16>
    %c0_80 = arith.constant 0 : index
    %c0_81 = arith.constant 0 : index
    %c0_82 = arith.constant 0 : index
    %c0_83 = arith.constant 0 : index
    %65 = vector.load %arg6[%c0_80, %c0_81, %c0_82, %c0_83] : memref<1x16x16x4xbf16, #tpu.memory_space<vmem>>, vector<1x16x16x4xbf16>
    %66 = vector.shape_cast %65 : vector<1x16x16x4xbf16> to vector<16x16x4xbf16>
    %67 = vector.shape_cast %64 : vector<16x16x4xbf16> to vector<1x16x16x4xbf16>
    tpu.vector_store %arg6[%c0_80, %c0_81, %c0_82, %c0_83], %67 {strides = array<i32>} : memref<1x16x16x4xbf16, #tpu.memory_space<vmem>>, vector<1x16x16x4xbf16>,
    return
  }
  func.func @transform_0(%arg0: i32) -> (i32, i32, i32, i32) {
    %c0_i32 = arith.constant 0 : i32
    %c0_i32_0 = arith.constant 0 : i32
    %c0_i32_1 = arith.constant 0 : i32
    %c0_i32_2 = arith.constant 0 : i32
    return %arg0, %c0_i32, %c0_i32_0, %c0_i32_1 : i32, i32, i32, i32
  }
  func.func @transform_1(%arg0: i32) -> (i32, i32) {
    %c0_i32 = arith.constant 0 : i32
    %c0_i32_0 = arith.constant 0 : i32
    %c0_i32_1 = arith.constant 0 : i32
    return %c0_i32, %c0_i32_0 : i32, i32
  }
  func.func @transform_2(%arg0: i32) -> (i32, i32) {
    %c0_i32 = arith.constant 0 : i32
    %c0_i32_0 = arith.constant 0 : i32
    %c0_i32_1 = arith.constant 0 : i32
    return %c0_i32, %c0_i32_0 : i32, i32
  }
  func.func @transform_3(%arg0: i32) -> (i32, i32) {
    %c0_i32 = arith.constant 0 : i32
    %c0_i32_0 = arith.constant 0 : i32
    %c0_i32_1 = arith.constant 0 : i32
    return %c0_i32, %c0_i32_0 : i32, i32
  }
  func.func @transform_4(%arg0: i32) -> (i32, i32) {
    %c0_i32 = arith.constant 0 : i32
    %c0_i32_0 = arith.constant 0 : i32
    %c0_i32_1 = arith.constant 0 : i32
    return %c0_i32, %c0_i32_0 : i32, i32
  }
  func.func @transform_5(%arg0: i32) -> (i32, i32, i32, i32) {
    %c0_i32 = arith.constant 0 : i32
    %c0_i32_0 = arith.constant 0 : i32
    %c0_i32_1 = arith.constant 0 : i32
    %c0_i32_2 = arith.constant 0 : i32
    return %arg0, %c0_i32, %c0_i32_0, %c0_i32_1 : i32, i32, i32, i32
  }
  func.func @transform_6(%arg0: i32) -> (i32, i32, i32) {
    %c0_i32 = arith.constant 0 : i32
    %c0_i32_0 = arith.constant 0 : i32
    %c0_i32_1 = arith.constant 0 : i32
    return %arg0, %c0_i32, %c0_i32_0 : i32, i32, i32
  }
}

module attributes {stable_mosaic.version = 11 : i64} {
  func.func @_bn_relu_kernel(%arg0: i32, %arg1: i32, %arg2: memref<1x8x16x4xbf16, #tpu.memory_space<vmem>>, %arg3: memref<1x4xf32, #tpu.memory_space<vmem>>, %arg4: memref<1x4xf32, #tpu.memory_space<vmem>>, %arg5: memref<1x8x16x4xf32, #tpu.memory_space<vmem>>) attributes {dimension_semantics = [#tpu.dimension_semantics<parallel>, #tpu.dimension_semantics<parallel>], iteration_bounds = array<i64: 2, 2>, scalar_prefetch = 0 : i64, scratch_operands = 0 : i64, tpu.core_type = #tpu.core_type<tc>, window_params = [{transform_indices = @transform_0, window_bounds = array<i64: 1, 8, 16, 4>}, {pipeline_mode = #tpu.pipeline_mode<synchronous>, transform_indices = @transform_1, window_bounds = array<i64: 1, 4>}, {pipeline_mode = #tpu.pipeline_mode<synchronous>, transform_indices = @transform_2, window_bounds = array<i64: 1, 4>}, {transform_indices = @transform_3, window_bounds = array<i64: 1, 8, 16, 4>}]} {
    %c0 = arith.constant 0 : index
    %c0_0 = arith.constant 0 : index
    %c0_1 = arith.constant 0 : index
    %c0_2 = arith.constant 0 : index
    %0 = vector.load %arg2[%c0, %c0_0, %c0_1, %c0_2] : memref<1x8x16x4xbf16, #tpu.memory_space<vmem>>, vector<1x8x16x4xbf16>
    %1 = arith.extf %0 : vector<1x8x16x4xbf16> to vector<1x8x16x4xf32>
    %c0_3 = arith.constant 0 : index
    %c0_4 = arith.constant 0 : index
    %2 = vector.load %arg3[%c0_3, %c0_4] : memref<1x4xf32, #tpu.memory_space<vmem>>, vector<1x4xf32>
    %3 = vector.shape_cast %2 : vector<1x4xf32> to vector<1x1x1x4xf32>
    %4 = vector.broadcast %3 : vector<1x1x1x4xf32> to vector<1x8x16x4xf32>
    %5 = arith.mulf %1, %4 : vector<1x8x16x4xf32>
    %c0_5 = arith.constant 0 : index
    %c0_6 = arith.constant 0 : index
    %6 = vector.load %arg4[%c0_5, %c0_6] : memref<1x4xf32, #tpu.memory_space<vmem>>, vector<1x4xf32>
    %7 = vector.shape_cast %6 : vector<1x4xf32> to vector<1x1x1x4xf32>
    %8 = vector.broadcast %7 : vector<1x1x1x4xf32> to vector<1x8x16x4xf32>
    %9 = arith.addf %5, %8 : vector<1x8x16x4xf32>
    %cst = arith.constant 0.000000e+00 : f32
    %10 = vector.broadcast %cst : f32 to vector<1x8x16x4xf32>
    %11 = arith.maximumf %9, %10 : vector<1x8x16x4xf32>
    %c0_7 = arith.constant 0 : index
    %c0_8 = arith.constant 0 : index
    %c0_9 = arith.constant 0 : index
    %c0_10 = arith.constant 0 : index
    %12 = vector.load %arg5[%c0_7, %c0_8, %c0_9, %c0_10] : memref<1x8x16x4xf32, #tpu.memory_space<vmem>>, vector<1x8x16x4xf32>
    tpu.vector_store %arg5[%c0_7, %c0_8, %c0_9, %c0_10], %11 {strides = array<i32>} : memref<1x8x16x4xf32, #tpu.memory_space<vmem>>, vector<1x8x16x4xf32>,
    return
  }
  func.func @transform_0(%arg0: i32, %arg1: i32) -> (i32, i32, i32, i32) {
    %c0_i32 = arith.constant 0 : i32
    %c0_i32_0 = arith.constant 0 : i32
    %c0_i32_1 = arith.constant 0 : i32
    return %arg0, %arg1, %c0_i32, %c0_i32_0 : i32, i32, i32, i32
  }
  func.func @transform_1(%arg0: i32, %arg1: i32) -> (i32, i32) {
    %c0_i32 = arith.constant 0 : i32
    %c0_i32_0 = arith.constant 0 : i32
    %c0_i32_1 = arith.constant 0 : i32
    return %c0_i32, %c0_i32_0 : i32, i32
  }
  func.func @transform_2(%arg0: i32, %arg1: i32) -> (i32, i32) {
    %c0_i32 = arith.constant 0 : i32
    %c0_i32_0 = arith.constant 0 : i32
    %c0_i32_1 = arith.constant 0 : i32
    return %c0_i32, %c0_i32_0 : i32, i32
  }
  func.func @transform_3(%arg0: i32, %arg1: i32) -> (i32, i32, i32, i32) {
    %c0_i32 = arith.constant 0 : i32
    %c0_i32_0 = arith.constant 0 : i32
    %c0_i32_1 = arith.constant 0 : i32
    return %arg0, %arg1, %c0_i32, %c0_i32_0 : i32, i32, i32, i32
  }
}

</mosaic_0001>

<llo_original>
// kernel: _lambda_.4
$region0: #{_lambda_.4}
  #allocation0 [shape = 'u32[]', space=smem, size = 0x4, offset = 0x4, fixed_abs, tag = 'smem constant byte address 0x4 - core index']
  #allocation1 [shape = 'u32[144,128]{1,0:T(1,128)}', space=vmem, size = 0x12000, scoped, tag = 'internal scratch']
  %s0 = inlined_call_operand.vmem [shape: f32[2,8,8,8], index: 0, kind: input, shape index: {}]
  %s1 = inlined_call_operand.vmem [shape: f32[2,16,16,4], index: 1, kind: input, shape index: {}]
  %s2 = inlined_call_operand.vmem [shape: bf16[2,8,8], index: 2, kind: input, shape index: {}]
  %s3 = inlined_call_operand.vmem [shape: f32[1,8], index: 3, kind: input, shape index: {}]
  %s4 = inlined_call_operand.vmem [shape: bf16[2,8,2,8,8], index: 4, kind: output, shape index: {0}]
  %s5 = inlined_call_operand.vmem [shape: f32[2,1,2,8], index: 5, kind: output, shape index: {1}]
  %6 = xla_tuple %s4, %s5
  %s7 = sld [smem:[#allocation0]]
  $region57: #{_lambda_.4} parent=0
    _
  %s9 = ssub.s32 1, %s7
  %s10 = scalar_select 0, %s9, %s7
  loop: start=0, step=1, limit=4
  $region2: #{_lambda_.4} parent=0 // loop_pre_header
    _
  $region3: #{_lambda_.4} parent=0 // loop_header
    %s12 = sphi 0, %s16
    %p13 = scmp.ge.s32.totalorder %s12, 4
    %s19 = sphi 0, %s31
    %s20 = sphi 0, %s27
    %s21 = sphi 0, %s19
    %s22 = sphi 0, %s20
    %s23 = sphi 0, %s21
    %s24 = sphi 0, %s22
    %s36 = sphi 0, %s38
    %s39 = sphi 0, %s36
    %s40 = sphi 0, %s39
    %s56 = sphi 0, %s40
    %s64 = sphi 0, %s66
    %s67 = sphi 0, %s64
    %s68 = sphi 0, %s67
    %s84 = sphi 0, %s68
    %s88 = sphi 0, %s88
    %s90 = sphi 0, %s88
    %s91 = sphi 0, %s90
    %s105 = sphi 0, %s91
    %s109 = sphi 0, %s109
    %s111 = sphi 0, %s109
    %s112 = sphi 0, %s111
    %s126 = sphi 0, %s112
    %s134 = sphi 0, %s136
    %s137 = sphi 0, %s134
    %s138 = sphi 0, %s137
    %s154 = sphi 0, %s138
    %s162 = sphi 0, %s164
    %s165 = sphi 0, %s162
    %s166 = sphi 0, %s165
    %s182 = sphi 0, %s166
  $region4: #{_lambda_.4} parent=0 // loop_header_branch
    %15 = sbr.rel (%p13) target = $region8
  $region5: #{_lambda_.4} parent=0 // loop_body
    %s17 = ssub.s32 %s12, 1
    %s18 = ssub.s32 %s12, 2
    %s25 = sadd.s32 1, %s20
    %p26 = scmp.ge.s32.totalorder %s25, 1
    %s27 = scalar_select %p26, 0, %s25
    %s28 = sadd.s32 1, %s19
    %s29 = scalar_select %p26, %s28, %s19
    %p30 = scmp.ge.s32.totalorder %s29, 2
    %s31 = scalar_select %p30, 0, %s29
    %s32 = ssub.s32 %s19, %s31
    %s33 = ssub.s32 %s20, %s27
    %s34 = sor.u32 %s32, %s33
    %p35 = scmp.eq.s32.totalorder %s34, 0
    %s37 = sadd.s32 %s36, 1
    %s38 = scalar_select %p35, %s36, %s37
    %p41 = pneg %p35
    %p42 = scmp.eq.s32.totalorder %s12, 1
    %p43 = por %p41, %p42
    %p44 = scmp.ne.s32.totalorder %s36, %s39
    %p45 = scmp.eq.s32.totalorder %s12, 0
    %p46 = por %p44, %p45
    %p47 = scmp.ne.s32.totalorder %s36, %s39
    %p48 = scmp.eq.s32.totalorder %s17, 1
    %p49 = por %p47, %p48
    %p50 = scmp.ne.s32.totalorder %s39, %s40
    %p51 = scmp.eq.s32.totalorder %s17, 0
    %p52 = por %p50, %p51
    %p53 = scmp.ne.s32.totalorder %s39, %s40
    %p54 = scmp.eq.s32.totalorder %s18, 1
    %p55 = por %p53, %p54
    %p57 = scmp.ne.s32.totalorder %s40, %s56
    %p58 = scmp.eq.s32.totalorder %s18, 0
    %p59 = por %p57, %p58
    %s60 = ssub.s32 %s19, %s31
    %s61 = ssub.s32 %s20, %s27
    %s62 = sor.u32 %s60, %s61
    %p63 = scmp.eq.s32.totalorder %s62, 0
    %s65 = sadd.s32 %s64, 1
    %s66 = scalar_select %p63, %s64, %s65
    %p69 = pneg %p63
    %p70 = scmp.eq.s32.totalorder %s12, 1
    %p71 = por %p69, %p70
    %p72 = scmp.ne.s32.totalorder %s64, %s67
    %p73 = scmp.eq.s32.totalorder %s12, 0
    %p74 = por %p72, %p73
    %p75 = scmp.ne.s32.totalorder %s64, %s67
    %p76 = scmp.eq.s32.totalorder %s17, 1
    %p77 = por %p75, %p76
    %p78 = scmp.ne.s32.totalorder %s67, %s68
    %p79 = scmp.eq.s32.totalorder %s17, 0
    %p80 = por %p78, %p79
    %p81 = scmp.ne.s32.totalorder %s67, %s68
    %p82 = scmp.eq.s32.totalorder %s18, 1
    %p83 = por %p81, %p82
    %p85 = scmp.ne.s32.totalorder %s68, %s84
    %p86 = scmp.eq.s32.totalorder %s18, 0
    %p87 = por %p85, %p86
    %s89 = sadd.s32 %s88, 1
    %p92 = scmp.eq.s32.totalorder %s12, 1
    %p93 = scmp.ne.s32.totalorder %s88, %s90
    %p94 = scmp.eq.s32.totalorder %s12, 0
    %p95 = por %p93, %p94
    %p96 = scmp.ne.s32.totalorder %s88, %s90
    %p97 = scmp.eq.s32.totalorder %s17, 1
    %p98 = por %p96, %p97
    %p99 = scmp.ne.s32.totalorder %s90, %s91
    %p100 = scmp.eq.s32.totalorder %s17, 0
    %p101 = por %p99, %p100
    %p102 = scmp.ne.s32.totalorder %s90, %s91
    %p103 = scmp.eq.s32.totalorder %s18, 1
    %p104 = por %p102, %p103
    %p106 = scmp.ne.s32.totalorder %s91, %s105
    %p107 = scmp.eq.s32.totalorder %s18, 0
    %p108 = por %p106, %p107
    %s110 = sadd.s32 %s109, 1
    %p113 = scmp.eq.s32.totalorder %s12, 1
    %p114 = scmp.ne.s32.totalorder %s109, %s111
    %p115 = scmp.eq.s32.totalorder %s12, 0
    %p116 = por %p114, %p115
    %p117 = scmp.ne.s32.totalorder %s109, %s111
    %p118 = scmp.eq.s32.totalorder %s17, 1
    %p119 = por %p117, %p118
    %p120 = scmp.ne.s32.totalorder %s111, %s112
    %p121 = scmp.eq.s32.totalorder %s17, 0
    %p122 = por %p120, %p121
    %p123 = scmp.ne.s32.totalorder %s111, %s112
    %p124 = scmp.eq.s32.totalorder %s18, 1
    %p125 = por %p123, %p124
    %p127 = scmp.ne.s32.totalorder %s112, %s126
    %p128 = scmp.eq.s32.totalorder %s18, 0
    %p129 = por %p127, %p128
    %s130 = ssub.s32 %s19, %s31
    %s131 = ssub.s32 %s20, %s27
    %s132 = sor.u32 %s130, %s131
    %p133 = scmp.eq.s32.totalorder %s132, 0
    %s135 = sadd.s32 %s134, 1
    %s136 = scalar_select %p133, %s134, %s135
    %p139 = pneg %p133
    %p140 = scmp.eq.s32.totalorder %s12, 1
    %p141 = por %p139, %p140
    %p142 = scmp.ne.s32.totalorder %s134, %s137
    %p143 = scmp.eq.s32.totalorder %s12, 0
    %p144 = por %p142, %p143
    %p145 = scmp.ne.s32.totalorder %s134, %s137
    %p146 = scmp.eq.s32.totalorder %s17, 1
    %p147 = por %p145, %p146
    %p148 = scmp.ne.s32.totalorder %s137, %s138
    %p149 = scmp.eq.s32.totalorder %s17, 0
    %p150 = por %p148, %p149
    %p151 = scmp.ne.s32.totalorder %s137, %s138
    %p152 = scmp.eq.s32.totalorder %s18, 1
    %p153 = por %p151, %p152
    %p155 = scmp.ne.s32.totalorder %s138, %s154
    %p156 = scmp.eq.s32.totalorder %s18, 0
    %p157 = por %p155, %p156
    %s158 = ssub.s32 %s19, %s31
    %s159 = ssub.s32 %s20, %s27
    %s160 = sor.u32 %s158, %s159
    %p161 = scmp.eq.s32.totalorder %s160, 0
    %s163 = sadd.s32 %s162, 1
    %s164 = scalar_select %p161, %s162, %s163
    %p167 = pneg %p161
    %p168 = scmp.eq.s32.totalorder %s12, 1
    %p169 = por %p167, %p168
    %p170 = scmp.ne.s32.totalorder %s162, %s165
    %p171 = scmp.eq.s32.totalorder %s12, 0
    %p172 = por %p170, %p171
    %p173 = scmp.ne.s32.totalorder %s162, %s165
    %p174 = scmp.eq.s32.totalorder %s17, 1
    %p175 = por %p173, %p174
    %p176 = scmp.ne.s32.totalorder %s165, %s166
    %p177 = scmp.eq.s32.totalorder %s17, 0
    %p178 = por %p176, %p177
    %p179 = scmp.ne.s32.totalorder %s165, %s166
    %p180 = scmp.eq.s32.totalorder %s18, 1
    %p181 = por %p179, %p180
    %p183 = scmp.ne.s32.totalorder %s166, %s182
    %p184 = scmp.eq.s32.totalorder %s18, 0
    %p185 = por %p183, %p184
    %p186 = scmp.le.s32.totalorder 1, %s12
    %p187 = scmp.lt.s32.totalorder %s12, 3
    %p188 = pnand %p186, %p187
    %p189 = pneg %p188
    // Predicated region
    $region9: #{_lambda_.4} parent=5 // pred_check
      _
    $region10: #{_lambda_.4} parent=5 // pred_check_branch
      %191 = sbr.rel (%p188) target = $region12
    $region11: #{_lambda_.4} parent=5 // pred_region
      %s192 = ssub.s32 %s12, 1
      // Predicated region
      $region13: #{_lambda_.4} parent=11 // pred_check
        %p193 = pneg %p101
      $region14: #{_lambda_.4} parent=11 // pred_check_branch
        %195 = sbr.rel (%p193) target = $region16
      $region15: #{_lambda_.4} parent=11 // pred_region
        _
      $region16: #{_lambda_.4} parent=11 // pred_fallthru
        _
      // Predicated region
      $region17: #{_lambda_.4} parent=11 // pred_check
        %p196 = pneg %p122
      $region18: #{_lambda_.4} parent=11 // pred_check_branch
        %198 = sbr.rel (%p196) target = $region20
      $region19: #{_lambda_.4} parent=11 // pred_region
        _
      $region20: #{_lambda_.4} parent=11 // pred_fallthru
        _
    $region12: #{_lambda_.4} parent=5 // pred_fallthru
      _
    %p199 = scmp.lt.s32.totalorder %s12, 2
    // Predicated region
    $region21: #{_lambda_.4} parent=5 // pred_check
      %p200 = pneg %p199
    $region22: #{_lambda_.4} parent=5 // pred_check_branch
      %202 = sbr.rel (%p200) target = $region24
    $region23: #{_lambda_.4} parent=5 // pred_region
      // Predicated region
      $region25: #{_lambda_.4} parent=23 // pred_check
        %p203 = pneg %p46
      $region26: #{_lambda_.4} parent=23 // pred_check_branch
        %205 = sbr.rel (%p203) target = $region28
      $region27: #{_lambda_.4} parent=23 // pred_region
        %s206 = smul.u32 8, %s20
        %p207 = scmp.lt.s32.totalorder %s19, 1
        %s208 = scalar_select %p207, %s19, 1
        %p209 = scmp.lt.s32.totalorder %s206, 7
        %s210 = scalar_select %p209, %s206, 7
        %s211 = smul.addr %s208, 8
        %s212 = sadd.s32 %s210, %s211
        %s213 = smul.addr %s212, 8
        %s214 = scalar_lea.vmem %s0, %s213
        %s215 = smul.u32 8, %s20
      $region28: #{_lambda_.4} parent=23 // pred_fallthru
        _
      // Predicated region
      $region29: #{_lambda_.4} parent=23 // pred_check
        %p216 = pneg %p74
      $region30: #{_lambda_.4} parent=23 // pred_check_branch
        %218 = sbr.rel (%p216) target = $region32
      $region31: #{_lambda_.4} parent=23 // pred_region
        %s219 = smul.u32 16, %s20
        %p220 = scmp.lt.s32.totalorder %s19, 1
        %s221 = scalar_select %p220, %s19, 1
        %p222 = scmp.lt.s32.totalorder %s219, 15
        %s223 = scalar_select %p222, %s219, 15
        %s224 = smul.addr %s223, 2
        %s225 = smul.addr %s221, 32
        %s226 = sadd.s32 %s224, %s225
        %s227 = smul.addr %s226, 8
        %s228 = scalar_lea.vmem %s1, %s227
        %s229 = smul.u32 16, %s20
      $region32: #{_lambda_.4} parent=23 // pred_fallthru
        _
    $region24: #{_lambda_.4} parent=5 // pred_fallthru
      _
    %p230 = scmp.le.s32.totalorder 1, %s12
    %p231 = scmp.lt.s32.totalorder %s12, 3
    %p232 = pnand %p230, %p231
    %p233 = pneg %p232
    // Predicated region
    $region33: #{_lambda_.4} parent=5 // pred_check
      _
    $region34: #{_lambda_.4} parent=5 // pred_check_branch
      %235 = sbr.rel (%p232) target = $region36
    $region35: #{_lambda_.4} parent=5 // pred_region
      %s236 = ssub.s32 %s12, 1
      %s237 = smul.u32 8, %s22
      %p238 = scmp.lt.s32.totalorder %s21, 1
      %s239 = scalar_select %p238, %s21, 1
      %p240 = scmp.lt.s32.totalorder %s237, 7
      %s241 = scalar_select %p240, %s237, 7
      %s242 = smul.addr %s239, 8
      %s243 = sadd.s32 %s241, %s242
      %s244 = smul.addr %s243, 8
      %s245 = scalar_lea.vmem %s0, %s244
      %p246 = pneg %p52
      %p247 = pneg %p49
      %s248 = smul.u32 16, %s22
      %p249 = scmp.lt.s32.totalorder %s21, 1
      %s250 = scalar_select %p249, %s21, 1
      %p251 = scmp.lt.s32.totalorder %s248, 15
      %s252 = scalar_select %p251, %s248, 15
      %s253 = smul.addr %s252, 2
      %s254 = smul.addr %s250, 32
      %s255 = sadd.s32 %s253, %s254
      %s256 = smul.addr %s255, 8
      %s257 = scalar_lea.vmem %s1, %s256
      %p258 = pneg %p80
      %p259 = pneg %p77
      %p260 = pneg %p101
      %p261 = pneg %p98
      %p262 = pneg %p122
      %p263 = pneg %p119
      %p264 = pneg %p150
      %p265 = pneg %p147
      %s266 = smul.u32 8, %s22
      %p267 = scmp.lt.s32.totalorder %s21, 1
      %s268 = scalar_select %p267, %s21, 1
      %p269 = scmp.lt.s32.totalorder %s266, 7
      %s270 = scalar_select %p269, %s266, 7
      %s271 = smul.addr %s270, 2
      %s272 = smul.addr %s268, 16
      %s273 = sadd.s32 %s271, %s272
      %s274 = smul.addr %s273, 4
      %s275 = scalar_lea.vmem %s4, %s274
      %p276 = pneg %p178
      %p277 = pneg %p175
      %p278 = scmp.lt.s32.totalorder %s21, 1
      %s279 = scalar_select %p278, %s21, 1
      %p280 = scmp.lt.s32.totalorder %s22, 0
      %s281 = scalar_select %p280, %s22, 0
      %s282 = sadd.s32 %s281, %s279
      %s283 = smul.addr %s282, 2
      %s284 = scalar_lea.vmem %s5, %s283
      %s285 = smul.u32 8, %s22
      %p286 = scmp.lt.s32.totalorder %s21, 1
      %s287 = scalar_select %p286, %s21, 1
      %p288 = scmp.lt.s32.totalorder %s285, 7
      %s289 = scalar_select %p288, %s285, 7
      %s290 = smul.addr %s287, 8
      %s291 = sadd.s32 %s289, %s290
      %s292 = smul.addr %s291, 8
      %s293 = scalar_lea.vmem %s0, %s292
      %s294 = smul.u32 8, %s22
      %s295 = smul.u32 16, %s22
      %p296 = scmp.lt.s32.totalorder %s21, 1
      %s297 = scalar_select %p296, %s21, 1
      %p298 = scmp.lt.s32.totalorder %s295, 15
      %s299 = scalar_select %p298, %s295, 15
      %s300 = smul.addr %s299, 2
      %s301 = smul.addr %s297, 32
      %s302 = sadd.s32 %s300, %s301
      %s303 = smul.addr %s302, 8
      %s304 = scalar_lea.vmem %s1, %s303
      %s305 = smul.u32 16, %s22
      %s306 = smul.u32 8, %s22
      %p307 = scmp.lt.s32.totalorder %s21, 1
      %s308 = scalar_select %p307, %s21, 1
      %p309 = scmp.lt.s32.totalorder %s306, 7
      %s310 = scalar_select %p309, %s306, 7
      %s311 = smul.addr %s310, 2
      %s312 = smul.addr %s308, 16
      %s313 = sadd.s32 %s311, %s312
      %s314 = smul.addr %s313, 4
      %s315 = scalar_lea.vmem %s4, %s314
      %s316 = smul.u32 8, %s22
      %p317 = scmp.lt.s32.totalorder %s21, 1
      %s318 = scalar_select %p317, %s21, 1
      %p319 = scmp.lt.s32.totalorder %s22, 0
      %s320 = scalar_select %p319, %s22, 0
      %s321 = sadd.s32 %s320, %s318
      %s322 = smul.addr %s321, 2
      %s323 = scalar_lea.vmem %s5, %s322
      %v325 = vld [vmem:[%s3] sm:$0x1]
      %v326 = vld [vmem:[%s293] sm:$0xff]
      %v327 = vld [vmem:[%s293 + $0x8] sm:$0xff]
      %v328 = vld [vmem:[%s293 + $0x10] sm:$0xff]
      %v329 = vld [vmem:[%s293 + $0x18] sm:$0xff]
      %v330 = vld [vmem:[%s293 + $0x20] sm:$0xff]
      %v331 = vld [vmem:[%s293 + $0x28] sm:$0xff]
      %v332 = vld [vmem:[%s293 + $0x30] sm:$0xff]
      %v333 = vld [vmem:[%s293 + $0x38] sm:$0xff]
      %v334 = vpack.c.bf16 %v327, %v326
      %v335 = vpack.c.bf16 %v329, %v328
      %v336 = vpack.c.bf16 %v331, %v330
      %v337 = vpack.c.bf16 %v333, %v332
      %v338 = vld [vmem:[%s2] sm:$0xf]
      %v340 = vlaneseq
      %v341 = vshrl.u32 %v340, 7
      %v342 = vsub.s32 0, %v341
      %v343 = vrot.slane %v325, %v342
      %vm345 = vcmask 64512
      %v347 = vsel %vm345, %v334, 0
      %v350 = vsel %vm345, %v335, 0
      %v353 = vsel %vm345, %v336, 0
      %v356 = vsel %vm345, %v337, 0
      %vm358 = vcmask 1043456
      %v360 = vsel %vm358, %v338, 0
      %362 = vmatprep.subr.bf16.mxu0 0
      %363 = vmatpush1.bf16.msra.mxu0 %v360
      %364 = vmatprep.subr.bf16.mxu0 0
      %365 = vmatpush1.bf16.msra.mxu0 0
      %366 = vmatprep.subr.bf16.mxu0 0
      %367 = vmatpush1.bf16.msra.mxu0 0
      %368 = vmatprep.subr.bf16.mxu0 0
      %369 = vmatpush1.bf16.msra.mxu0 0
      %370 = vmatprep.subr.bf16.mxu0 0
      %371 = vmatpush1.bf16.msra.mxu0 0
      %372 = vmatprep.subr.bf16.mxu0 0
      %373 = vmatpush1.bf16.msra.mxu0 0
      %374 = vmatprep.subr.bf16.mxu0 0
      %375 = vmatpush1.bf16.msra.mxu0 0
      %376 = vmatprep.subr.bf16.mxu0 0
      %377 = vmatpush1.bf16.msra.mxu0 0
      %378 = vmatprep.subr.bf16.mxu0 0
      %379 = vmatpush1.bf16.msra.mxu0 0
      %380 = vmatprep.subr.bf16.mxu0 0
      %381 = vmatpush1.bf16.msra.mxu0 0
      %382 = vmatprep.subr.bf16.mxu0 0
      %383 = vmatpush1.bf16.msra.mxu0 0
      %384 = vmatprep.subr.bf16.mxu0 0
      %385 = vmatpush1.bf16.msra.mxu0 0
      %386 = vmatprep.subr.bf16.mxu0 0
      %387 = vmatpush1.bf16.msra.mxu0 0
      %388 = vmatprep.subr.bf16.mxu0 0
      %389 = vmatpush1.bf16.msra.mxu0 0
      %390 = vmatprep.subr.bf16.mxu0 0
      %391 = vmatpush1.bf16.msra.mxu0 0
      %392 = vmatprep.subr.bf16.mxu0 0
      %393 = vmatpush1.bf16.msra.mxu0 0
      %394 = vmatprep.mubr.bf16.mxu0 0
      %395 = vmatmul.mubr.bf16.gmra.mrb[0].mxu0 %v347
      %v396 = vpop.f32.mrb[0].mxu0
      %v397 = vadd.f32 %v343, %v396
      %v398 = vpop.f32.mrb[0].mxu0
      %v399 = vpop.f32.mrb[0].mxu0
      %v400 = vadd.f32 %v343, %v399
      %v401 = vpop.f32.mrb[0].mxu0
      %402 = vmatprep.mubr.bf16.mxu0 0
      %403 = vmatmul.mubr.bf16.gmra.mrb[0].mxu0 %v350
      %v404 = vpop.f32.mrb[0].mxu0
      %v405 = vadd.f32 %v343, %v404
      %v406 = vpop.f32.mrb[0].mxu0
      %v407 = vpop.f32.mrb[0].mxu0
      %v408 = vadd.f32 %v343, %v407
      %v409 = vpop.f32.mrb[0].mxu0
      %410 = vmatprep.mubr.bf16.mxu0 0
      %411 = vmatmul.mubr.bf16.gmra.mrb[0].mxu0 %v353
      %v412 = vpop.f32.mrb[0].mxu0
      %v413 = vadd.f32 %v343, %v412
      %v414 = vpop.f32.mrb[0].mxu0
      %v415 = vpop.f32.mrb[0].mxu0
      %v416 = vadd.f32 %v343, %v415
      %v417 = vpop.f32.mrb[0].mxu0
      %418 = vmatprep.mubr.bf16.mxu0 0
      %419 = vmatmul.mubr.bf16.gmra.mrb[0].mxu0 %v356
      %v420 = vpop.f32.mrb[0].mxu0
      %v421 = vadd.f32 %v343, %v420
      %v422 = vpop.f32.mrb[0].mxu0
      %v423 = vpop.f32.mrb[0].mxu0
      %v424 = vadd.f32 %v343, %v423
      %v425 = vpop.f32.mrb[0].mxu0
      %426 = vdwg.mxu0
      %v427 = vpack.c.bf16 %v397, %v397
      %v428 = vpack.c.bf16 %v400, %v400
      %v429 = vpack.c.bf16 %v405, %v405
      %v430 = vpack.c.bf16 %v408, %v408
      %v431 = vpack.c.bf16 %v413, %v413
      %v432 = vpack.c.bf16 %v416, %v416
      %v433 = vpack.c.bf16 %v421, %v421
      %v434 = vpack.c.bf16 %v424, %v424
      %vm435 = vcmask 60416
      %436 = vst.msk [vmem:[%s315] sm:$0xf] %vm435, %v427
      %437 = vst.msk [vmem:[%s315 + $0x8] sm:$0xf] %vm435, %v428
      %438 = vst.msk [vmem:[%s315 + $0x10] sm:$0xf] %vm435, %v429
      %439 = vst.msk [vmem:[%s315 + $0x18] sm:$0xf] %vm435, %v430
      %440 = vst.msk [vmem:[%s315 + $0x20] sm:$0xf] %vm435, %v431
      %441 = vst.msk [vmem:[%s315 + $0x28] sm:$0xf] %vm435, %v432
      %442 = vst.msk [vmem:[%s315 + $0x30] sm:$0xf] %vm435, %v433
      %443 = vst.msk [vmem:[%s315 + $0x38] sm:$0xf] %vm435, %v434
      %v444 = vsel %vm345, %v397, 0.0
      %v445 = vsel %vm345, %v400, 0.0
      %v446 = vadd.f32 %v444, %v445
      %v447 = vsel %vm345, %v405, 0.0
      %v448 = vadd.f32 %v446, %v447
      %v449 = vsel %vm345, %v408, 0.0
      %v450 = vadd.f32 %v448, %v449
      %v451 = vsel %vm345, %v413, 0.0
      %v452 = vadd.f32 %v450, %v451
      %v453 = vsel %vm345, %v416, 0.0
      %v454 = vadd.f32 %v452, %v453
      %v455 = vsel %vm345, %v421, 0.0
      %v456 = vadd.f32 %v454, %v455
      %v457 = vsel %vm345, %v424, 0.0
      %v458 = vadd.f32 %v456, %v457
      %v459 = vrot.slane %v458, 4
      %v460 = vadd.f32 %v458, %v459
      %v461 = vrot.slane %v460, 2
      %v462 = vadd.f32 %v460, %v461
      %v463 = vrot.slane %v462, 1
      %v464 = vadd.f32 %v462, %v463
      %v465 = vadd.f32 %v464, 0.0
      %v466 = vmul.f32 %v397, %v397
      %v467 = vmul.f32 %v400, %v400
      %v468 = vmul.f32 %v405, %v405
      %v469 = vmul.f32 %v408, %v408
      %v470 = vmul.f32 %v413, %v413
      %v471 = vmul.f32 %v416, %v416
      %v472 = vmul.f32 %v421, %v421
      %v473 = vmul.f32 %v424, %v424
      %v474 = vsel %vm345, %v466, 0.0
      %v475 = vsel %vm345, %v467, 0.0
      %v476 = vadd.f32 %v474, %v475
      %v477 = vsel %vm345, %v468, 0.0
      %v478 = vadd.f32 %v476, %v477
      %v479 = vsel %vm345, %v469, 0.0
      %v480 = vadd.f32 %v478, %v479
      %v481 = vsel %vm345, %v470, 0.0
      %v482 = vadd.f32 %v480, %v481
      %v483 = vsel %vm345, %v471, 0.0
      %v484 = vadd.f32 %v482, %v483
      %v485 = vsel %vm345, %v472, 0.0
      %v486 = vadd.f32 %v484, %v485
      %v487 = vsel %vm345, %v473, 0.0
      %v488 = vadd.f32 %v486, %v487
      %v489 = vrot.slane %v488, 4
      %v490 = vadd.f32 %v488, %v489
      %v491 = vrot.slane %v490, 2
      %v492 = vadd.f32 %v490, %v491
      %v493 = vrot.slane %v492, 1
      %v494 = vadd.f32 %v492, %v493
      %v495 = vadd.f32 %v494, 0.0
      %s496 = scalar_lea.vmem %s2, 4
      %v497 = vld [vmem:[%s496] sm:$0xf]
      %v499 = vsel %vm358, %v497, 0
      %501 = vmatprep.subr.bf16.mxu0 0
      %502 = vmatpush1.bf16.msra.mxu0 %v499
      %503 = vmatprep.subr.bf16.mxu0 0
      %504 = vmatpush1.bf16.msra.mxu0 0
      %505 = vmatprep.subr.bf16.mxu0 0
      %506 = vmatpush1.bf16.msra.mxu0 0
      %507 = vmatprep.subr.bf16.mxu0 0
      %508 = vmatpush1.bf16.msra.mxu0 0
      %509 = vmatprep.subr.bf16.mxu0 0
      %510 = vmatpush1.bf16.msra.mxu0 0
      %511 = vmatprep.subr.bf16.mxu0 0
      %512 = vmatpush1.bf16.msra.mxu0 0
      %513 = vmatprep.subr.bf16.mxu0 0
      %514 = vmatpush1.bf16.msra.mxu0 0
      %515 = vmatprep.subr.bf16.mxu0 0
      %516 = vmatpush1.bf16.msra.mxu0 0
      %517 = vmatprep.subr.bf16.mxu0 0
      %518 = vmatpush1.bf16.msra.mxu0 0
      %519 = vmatprep.subr.bf16.mxu0 0
      %520 = vmatpush1.bf16.msra.mxu0 0
      %521 = vmatprep.subr.bf16.mxu0 0
      %522 = vmatpush1.bf16.msra.mxu0 0
      %523 = vmatprep.subr.bf16.mxu0 0
      %524 = vmatpush1.bf16.msra.mxu0 0
      %525 = vmatprep.subr.bf16.mxu0 0
      %526 = vmatpush1.bf16.msra.mxu0 0
      %527 = vmatprep.subr.bf16.mxu0 0
      %528 = vmatpush1.bf16.msra.mxu0 0
      %529 = vmatprep.subr.bf16.mxu0 0
      %530 = vmatpush1.bf16.msra.mxu0 0
      %531 = vmatprep.subr.bf16.mxu0 0
      %532 = vmatpush1.bf16.msra.mxu0 0
      %533 = vmatprep.mubr.bf16.mxu0 0
      %534 = vmatmul.mubr.bf16.gmra.mrb[0].mxu0 %v347
      %v535 = vpop.f32.mrb[0].mxu0
      %v536 = vadd.f32 %v343, %v535
      %v537 = vpop.f32.mrb[0].mxu0
      %v538 = vpop.f32.mrb[0].mxu0
      %v539 = vadd.f32 %v343, %v538
      %v540 = vpop.f32.mrb[0].mxu0
      %541 = vmatprep.mubr.bf16.mxu0 0
      %542 = vmatmul.mubr.bf16.gmra.mrb[0].mxu0 %v350
      %v543 = vpop.f32.mrb[0].mxu0
      %v544 = vadd.f32 %v343, %v543
      %v545 = vpop.f32.mrb[0].mxu0
      %v546 = vpop.f32.mrb[0].mxu0
      %v547 = vadd.f32 %v343, %v546
      %v548 = vpop.f32.mrb[0].mxu0
      %549 = vmatprep.mubr.bf16.mxu0 0
      %550 = vmatmul.mubr.bf16.gmra.mrb[0].mxu0 %v353
      %v551 = vpop.f32.mrb[0].mxu0
      %v552 = vadd.f32 %v343, %v551
      %v553 = vpop.f32.mrb[0].mxu0
      %v554 = vpop.f32.mrb[0].mxu0
      %v555 = vadd.f32 %v343, %v554
      %v556 = vpop.f32.mrb[0].mxu0
      %557 = vmatprep.mubr.bf16.mxu0 0
      %558 = vmatmul.mubr.bf16.gmra.mrb[0].mxu0 %v356
      %v559 = vpop.f32.mrb[0].mxu0
      %v560 = vadd.f32 %v343, %v559
      %v561 = vpop.f32.mrb[0].mxu0
      %v562 = vpop.f32.mrb[0].mxu0
      %v563 = vadd.f32 %v343, %v562
      %v564 = vpop.f32.mrb[0].mxu0
      %565 = vdwg.mxu0
      %v566 = vpack.c.bf16 %v536, %v536
      %v567 = vpack.c.bf16 %v539, %v539
      %v568 = vpack.c.bf16 %v544, %v544
      %v569 = vpack.c.bf16 %v547, %v547
      %v570 = vpack.c.bf16 %v552, %v552
      %v571 = vpack.c.bf16 %v555, %v555
      %v572 = vpack.c.bf16 %v560, %v560
      %v573 = vpack.c.bf16 %v563, %v563
      %s574 = scalar_lea.vmem %s315, 4
      %575 = vst.msk [vmem:[%s574] sm:$0xf] %vm435, %v566
      %576 = vst.msk [vmem:[%s574 + $0x8] sm:$0xf] %vm435, %v567
      %577 = vst.msk [vmem:[%s574 + $0x10] sm:$0xf] %vm435, %v568
      %578 = vst.msk [vmem:[%s574 + $0x18] sm:$0xf] %vm435, %v569
      %579 = vst.msk [vmem:[%s574 + $0x20] sm:$0xf] %vm435, %v570
      %580 = vst.msk [vmem:[%s574 + $0x28] sm:$0xf] %vm435, %v571
      %581 = vst.msk [vmem:[%s574 + $0x30] sm:$0xf] %vm435, %v572
      %582 = vst.msk [vmem:[%s574 + $0x38] sm:$0xf] %vm435, %v573
      %v583 = vsel %vm345, %v536, 0.0
      %v584 = vsel %vm345, %v539, 0.0
      %v585 = vadd.f32 %v583, %v584
      %v586 = vsel %vm345, %v544, 0.0
      %v587 = vadd.f32 %v585, %v586
      %v588 = vsel %vm345, %v547, 0.0
      %v589 = vadd.f32 %v587, %v588
      %v590 = vsel %vm345, %v552, 0.0
      %v591 = vadd.f32 %v589, %v590
      %v592 = vsel %vm345, %v555, 0.0
      %v593 = vadd.f32 %v591, %v592
      %v594 = vsel %vm345, %v560, 0.0
      %v595 = vadd.f32 %v593, %v594
      %v596 = vsel %vm345, %v563, 0.0
      %v597 = vadd.f32 %v595, %v596
      %v598 = vrot.slane %v597, 4
      %v599 = vadd.f32 %v597, %v598
      %v600 = vrot.slane %v599, 2
      %v601 = vadd.f32 %v599, %v600
      %v602 = vrot.slane %v601, 1
      %v603 = vadd.f32 %v601, %v602
      %v604 = vadd.f32 %v465, %v603
      %v605 = vmul.f32 %v536, %v536
      %v606 = vmul.f32 %v539, %v539
      %v607 = vmul.f32 %v544, %v544
      %v608 = vmul.f32 %v547, %v547
      %v609 = vmul.f32 %v552, %v552
      %v610 = vmul.f32 %v555, %v555
      %v611 = vmul.f32 %v560, %v560
      %v612 = vmul.f32 %v563, %v563
      %v613 = vsel %vm345, %v605, 0.0
      %v614 = vsel %vm345, %v606, 0.0
      %v615 = vadd.f32 %v613, %v614
      %v616 = vsel %vm345, %v607, 0.0
      %v617 = vadd.f32 %v615, %v616
      %v618 = vsel %vm345, %v608, 0.0
      %v619 = vadd.f32 %v617, %v618
      %v620 = vsel %vm345, %v609, 0.0
      %v621 = vadd.f32 %v619, %v620
      %v622 = vsel %vm345, %v610, 0.0
      %v623 = vadd.f32 %v621, %v622
      %v624 = vsel %vm345, %v611, 0.0
      %v625 = vadd.f32 %v623, %v624
      %v626 = vsel %vm345, %v612, 0.0
      %v627 = vadd.f32 %v625, %v626
      %v628 = vrot.slane %v627, 4
      %v629 = vadd.f32 %v627, %v628
      %v630 = vrot.slane %v629, 2
      %v631 = vadd.f32 %v629, %v630
      %v632 = vrot.slane %v631, 1
      %v633 = vadd.f32 %v631, %v632
      %v634 = vadd.f32 %v495, %v633
      %636 = vrot.lane.b32.xlu0 %v604, 124
      %v637 = vpop.permute.xlu0 %636
      %v639 = vadd.f32 %v604, %v637
      %641 = vrot.lane.b32.xlu0 %v634, 124
      %v642 = vpop.permute.xlu0 %641
      %v644 = vadd.f32 %v634, %v642
      %v645 = vld [vmem:[%s304] sm:$0xff]
      %v646 = vld [vmem:[%s304 + $0x8] sm:$0xff]
      %v647 = vld [vmem:[%s304 + $0x10] sm:$0xff]
      %v648 = vld [vmem:[%s304 + $0x18] sm:$0xff]
      %v649 = vld [vmem:[%s304 + $0x20] sm:$0xff]
      %v650 = vld [vmem:[%s304 + $0x28] sm:$0xff]
      %v651 = vld [vmem:[%s304 + $0x30] sm:$0xff]
      %v652 = vld [vmem:[%s304 + $0x38] sm:$0xff]
      %v653 = vld [vmem:[%s304 + $0x40] sm:$0xff]
      %v654 = vld [vmem:[%s304 + $0x48] sm:$0xff]
      %v655 = vld [vmem:[%s304 + $0x50] sm:$0xff]
      %v656 = vld [vmem:[%s304 + $0x58] sm:$0xff]
      %v657 = vld [vmem:[%s304 + $0x60] sm:$0xff]
      %v658 = vld [vmem:[%s304 + $0x68] sm:$0xff]
      %v659 = vld [vmem:[%s304 + $0x70] sm:$0xff]
      %v660 = vld [vmem:[%s304 + $0x78] sm:$0xff]
      %v661 = vld [vmem:[%s304 + $0x80] sm:$0xff]
      %v662 = vld [vmem:[%s304 + $0x88] sm:$0xff]
      %v663 = vld [vmem:[%s304 + $0x90] sm:$0xff]
      %v664 = vld [vmem:[%s304 + $0x98] sm:$0xff]
      %v665 = vld [vmem:[%s304 + $0xa0] sm:$0xff]
      %v666 = vld [vmem:[%s304 + $0xa8] sm:$0xff]
      %v667 = vld [vmem:[%s304 + $0xb0] sm:$0xff]
      %v668 = vld [vmem:[%s304 + $0xb8] sm:$0xff]
      %v669 = vld [vmem:[%s304 + $0xc0] sm:$0xff]
      %v670 = vld [vmem:[%s304 + $0xc8] sm:$0xff]
      %v671 = vld [vmem:[%s304 + $0xd0] sm:$0xff]
      %v672 = vld [vmem:[%s304 + $0xd8] sm:$0xff]
      %v673 = vld [vmem:[%s304 + $0xe0] sm:$0xff]
      %v674 = vld [vmem:[%s304 + $0xe8] sm:$0xff]
      %v675 = vld [vmem:[%s304 + $0xf0] sm:$0xff]
      %v676 = vld [vmem:[%s304 + $0xf8] sm:$0xff]
      %vm677 = vcmask 31744
      %v678 = vsel %vm677, %v645, 0.0
      %v679 = vsel %vm677, %v646, 0.0
      %v680 = vadd.f32 %v678, %v679
      %v681 = vsel %vm677, %v647, 0.0
      %v682 = vadd.f32 %v680, %v681
      %v683 = vsel %vm677, %v648, 0.0
      %v684 = vadd.f32 %v682, %v683
      %v685 = vsel %vm677, %v649, 0.0
      %v686 = vadd.f32 %v684, %v685
      %v687 = vsel %vm677, %v650, 0.0
      %v688 = vadd.f32 %v686, %v687
      %v689 = vsel %vm677, %v651, 0.0
      %v690 = vadd.f32 %v688, %v689
      %v691 = vsel %vm677, %v652, 0.0
      %v692 = vadd.f32 %v690, %v691
      %v693 = vsel %vm677, %v653, 0.0
      %v694 = vadd.f32 %v692, %v693
      %v695 = vsel %vm677, %v654, 0.0
      %v696 = vadd.f32 %v694, %v695
      %v697 = vsel %vm677, %v655, 0.0
      %v698 = vadd.f32 %v696, %v697
      %v699 = vsel %vm677, %v656, 0.0
      %v700 = vadd.f32 %v698, %v699
      %v701 = vsel %vm677, %v657, 0.0
      %v702 = vadd.f32 %v700, %v701
      %v703 = vsel %vm677, %v658, 0.0
      %v704 = vadd.f32 %v702, %v703
      %v705 = vsel %vm677, %v659, 0.0
      %v706 = vadd.f32 %v704, %v705
      %v707 = vsel %vm677, %v660, 0.0
      %v708 = vadd.f32 %v706, %v707
      %v709 = vsel %vm677, %v661, 0.0
      %v710 = vadd.f32 %v708, %v709
      %v711 = vsel %vm677, %v662, 0.0
      %v712 = vadd.f32 %v710, %v711
      %v713 = vsel %vm677, %v663, 0.0
      %v714 = vadd.f32 %v712, %v713
      %v715 = vsel %vm677, %v664, 0.0
      %v716 = vadd.f32 %v714, %v715
      %v717 = vsel %vm677, %v665, 0.0
      %v718 = vadd.f32 %v716, %v717
      %v719 = vsel %vm677, %v666, 0.0
      %v720 = vadd.f32 %v718, %v719
      %v721 = vsel %vm677, %v667, 0.0
      %v722 = vadd.f32 %v720, %v721
      %v723 = vsel %vm677, %v668, 0.0
      %v724 = vadd.f32 %v722, %v723
      %v725 = vsel %vm677, %v669, 0.0
      %v726 = vadd.f32 %v724, %v725
      %v727 = vsel %vm677, %v670, 0.0
      %v728 = vadd.f32 %v726, %v727
      %v729 = vsel %vm677, %v671, 0.0
      %v730 = vadd.f32 %v728, %v729
      %v731 = vsel %vm677, %v672, 0.0
      %v732 = vadd.f32 %v730, %v731
      %v733 = vsel %vm677, %v673, 0.0
      %v734 = vadd.f32 %v732, %v733
      %v735 = vsel %vm677, %v674, 0.0
      %v736 = vadd.f32 %v734, %v735
      %v737 = vsel %vm677, %v675, 0.0
      %v738 = vadd.f32 %v736, %v737
      %v739 = vsel %vm677, %v676, 0.0
      %v740 = vadd.f32 %v738, %v739
      %v741 = vrot.slane %v740, 4
      %v742 = vadd.f32 %v740, %v741
      %v743 = vrot.slane %v742, 2
      %v744 = vadd.f32 %v742, %v743
      %v745 = vrot.slane %v744, 1
      %v746 = vadd.f32 %v744, %v745
      %v747 = vmul.f32 %v645, %v645
      %v748 = vmul.f32 %v646, %v646
      %v749 = vmul.f32 %v647, %v647
      %v750 = vmul.f32 %v648, %v648
      %v751 = vmul.f32 %v649, %v649
      %v752 = vmul.f32 %v650, %v650
      %v753 = vmul.f32 %v651, %v651
      %v754 = vmul.f32 %v652, %v652
      %v755 = vmul.f32 %v653, %v653
      %v756 = vmul.f32 %v654, %v654
      %v757 = vmul.f32 %v655, %v655
      %v758 = vmul.f32 %v656, %v656
      %v759 = vmul.f32 %v657, %v657
      %v760 = vmul.f32 %v658, %v658
      %v761 = vmul.f32 %v659, %v659
      %v762 = vmul.f32 %v660, %v660
      %v763 = vmul.f32 %v661, %v661
      %v764 = vmul.f32 %v662, %v662
      %v765 = vmul.f32 %v663, %v663
      %v766 = vmul.f32 %v664, %v664
      %v767 = vmul.f32 %v665, %v665
      %v768 = vmul.f32 %v666, %v666
      %v769 = vmul.f32 %v667, %v667
      %v770 = vmul.f32 %v668, %v668
      %v771 = vmul.f32 %v669, %v669
      %v772 = vmul.f32 %v670, %v670
      %v773 = vmul.f32 %v671, %v671
      %v774 = vmul.f32 %v672, %v672
      %v775 = vmul.f32 %v673, %v673
      %v776 = vmul.f32 %v674, %v674
      %v777 = vmul.f32 %v675, %v675
      %v778 = vmul.f32 %v676, %v676
      %v779 = vsel %vm677, %v747, 0.0
      %v780 = vsel %vm677, %v748, 0.0
      %v781 = vadd.f32 %v779, %v780
      %v782 = vsel %vm677, %v749, 0.0
      %v783 = vadd.f32 %v781, %v782
      %v784 = vsel %vm677, %v750, 0.0
      %v785 = vadd.f32 %v783, %v784
      %v786 = vsel %vm677, %v751, 0.0
      %v787 = vadd.f32 %v785, %v786
      %v788 = vsel %vm677, %v752, 0.0
      %v789 = vadd.f32 %v787, %v788
      %v790 = vsel %vm677, %v753, 0.0
      %v791 = vadd.f32 %v789, %v790
      %v792 = vsel %vm677, %v754, 0.0
      %v793 = vadd.f32 %v791, %v792
      %v794 = vsel %vm677, %v755, 0.0
      %v795 = vadd.f32 %v793, %v794
      %v796 = vsel %vm677, %v756, 0.0
      %v797 = vadd.f32 %v795, %v796
      %v798 = vsel %vm677, %v757, 0.0
      %v799 = vadd.f32 %v797, %v798
      %v800 = vsel %vm677, %v758, 0.0
      %v801 = vadd.f32 %v799, %v800
      %v802 = vsel %vm677, %v759, 0.0
      %v803 = vadd.f32 %v801, %v802
      %v804 = vsel %vm677, %v760, 0.0
      %v805 = vadd.f32 %v803, %v804
      %v806 = vsel %vm677, %v761, 0.0
      %v807 = vadd.f32 %v805, %v806
      %v808 = vsel %vm677, %v762, 0.0
      %v809 = vadd.f32 %v807, %v808
      %v810 = vsel %vm677, %v763, 0.0
      %v811 = vadd.f32 %v809, %v810
      %v812 = vsel %vm677, %v764, 0.0
      %v813 = vadd.f32 %v811, %v812
      %v814 = vsel %vm677, %v765, 0.0
      %v815 = vadd.f32 %v813, %v814
      %v816 = vsel %vm677, %v766, 0.0
      %v817 = vadd.f32 %v815, %v816
      %v818 = vsel %vm677, %v767, 0.0
      %v819 = vadd.f32 %v817, %v818
      %v820 = vsel %vm677, %v768, 0.0
      %v821 = vadd.f32 %v819, %v820
      %v822 = vsel %vm677, %v769, 0.0
      %v823 = vadd.f32 %v821, %v822
      %v824 = vsel %vm677, %v770, 0.0
      %v825 = vadd.f32 %v823, %v824
      %v826 = vsel %vm677, %v771, 0.0
      %v827 = vadd.f32 %v825, %v826
      %v828 = vsel %vm677, %v772, 0.0
      %v829 = vadd.f32 %v827, %v828
      %v830 = vsel %vm677, %v773, 0.0
      %v831 = vadd.f32 %v829, %v830
      %v832 = vsel %vm677, %v774, 0.0
      %v833 = vadd.f32 %v831, %v832
      %v834 = vsel %vm677, %v775, 0.0
      %v835 = vadd.f32 %v833, %v834
      %v836 = vsel %vm677, %v776, 0.0
      %v837 = vadd.f32 %v835, %v836
      %v838 = vsel %vm677, %v777, 0.0
      %v839 = vadd.f32 %v837, %v838
      %v840 = vsel %vm677, %v778, 0.0
      %v841 = vadd.f32 %v839, %v840
      %v842 = vrot.slane %v841, 4
      %v843 = vadd.f32 %v841, %v842
      %v844 = vrot.slane %v843, 2
      %v845 = vadd.f32 %v843, %v844
      %v846 = vrot.slane %v845, 1
      %v847 = vadd.f32 %v845, %v846
      %vm848 = vcmask 1040384
      %v849 = vsel %vm848, %v746, %v847
      %vm850 = vcmask 25600
      %851 = vst.msk [vmem:[%s323] sm:$0x3] %vm850, %v849
      %v853 = vrot.slane %v644, 7
      %v855 = vsel %vm848, %v639, %v853
      %857 = vrot.lane.b32.xlu0 %v855, 4
      %v858 = vpop.permute.xlu0 %857
      %vm860 = vcmask 58400
      %861 = vst.msk [vmem:[%s323] sm:$0x3] %vm860, %v858
      %s862 = smul.u32 8, %s22
      %p863 = scmp.lt.s32.totalorder %s21, 1
      %s864 = scalar_select %p863, %s21, 1
      %p865 = scmp.lt.s32.totalorder %s862, 7
      %s866 = scalar_select %p865, %s862, 7
      %s867 = smul.addr %s866, 2
      %s868 = smul.addr %s864, 16
      %s869 = sadd.s32 %s867, %s868
      %s870 = smul.addr %s869, 4
      %s871 = scalar_lea.vmem %s4, %s870
      %p872 = scmp.lt.s32.totalorder %s21, 1
      %s873 = scalar_select %p872, %s21, 1
      %p874 = scmp.lt.s32.totalorder %s22, 0
      %s875 = scalar_select %p874, %s22, 0
      %s876 = sadd.s32 %s875, %s873
      %s877 = smul.addr %s876, 2
      %s878 = scalar_lea.vmem %s5, %s877
      // Predicated region
      $region37: #{_lambda_.4} parent=35 // pred_check
        %p879 = pneg %p147
      $region38: #{_lambda_.4} parent=35 // pred_check_branch
        %881 = sbr.rel (%p879) target = $region40
      $region39: #{_lambda_.4} parent=35 // pred_region
        %s882 = smul.u32 8, %s22
      $region40: #{_lambda_.4} parent=35 // pred_fallthru
        _
      // Predicated region
      $region41: #{_lambda_.4} parent=35 // pred_check
        %p883 = pneg %p175
      $region42: #{_lambda_.4} parent=35 // pred_check_branch
        %885 = sbr.rel (%p883) target = $region44
      $region43: #{_lambda_.4} parent=35 // pred_region
        _
      $region44: #{_lambda_.4} parent=35 // pred_fallthru
        _
    $region36: #{_lambda_.4} parent=5 // pred_fallthru
      _
    %p886 = scmp.le.s32.totalorder 2, %s12
    // Predicated region
    $region45: #{_lambda_.4} parent=5 // pred_check
      %p887 = pneg %p886
    $region46: #{_lambda_.4} parent=5 // pred_check_branch
      %889 = sbr.rel (%p887) target = $region48
    $region47: #{_lambda_.4} parent=5 // pred_region
      %s890 = ssub.s32 %s12, 2
      // Predicated region
      $region49: #{_lambda_.4} parent=47 // pred_check
        %p891 = pneg %p153
      $region50: #{_lambda_.4} parent=47 // pred_check_branch
        %893 = sbr.rel (%p891) target = $region52
      $region51: #{_lambda_.4} parent=47 // pred_region
        %s894 = smul.u32 8, %s24
        %p895 = scmp.lt.s32.totalorder %s23, 1
        %s896 = scalar_select %p895, %s23, 1
        %p897 = scmp.lt.s32.totalorder %s894, 7
        %s898 = scalar_select %p897, %s894, 7
        %s899 = smul.addr %s898, 2
        %s900 = smul.addr %s896, 16
        %s901 = sadd.s32 %s899, %s900
        %s902 = smul.addr %s901, 4
        %s903 = scalar_lea.vmem %s4, %s902
      $region52: #{_lambda_.4} parent=47 // pred_fallthru
        _
      // Predicated region
      $region53: #{_lambda_.4} parent=47 // pred_check
        %p904 = pneg %p181
      $region54: #{_lambda_.4} parent=47 // pred_check_branch
        %906 = sbr.rel (%p904) target = $region56
      $region55: #{_lambda_.4} parent=47 // pred_region
        %p907 = scmp.lt.s32.totalorder %s23, 1
        %s908 = scalar_select %p907, %s23, 1
        %p909 = scmp.lt.s32.totalorder %s24, 0
        %s910 = scalar_select %p909, %s24, 0
        %s911 = sadd.s32 %s910, %s908
        %s912 = smul.addr %s911, 2
        %s913 = scalar_lea.vmem %s5, %s912
      $region56: #{_lambda_.4} parent=47 // pred_fallthru
        _
    $region48: #{_lambda_.4} parent=5 // pred_fallthru
      _
  $region6: #{_lambda_.4} parent=0 // loop_footer
    %s16 = sadd.s32 1, %s12
  $region7: #{_lambda_.4} parent=0 // loop_footer_branch
    %11 = sbr.rel target = $region3
  $region8: #{_lambda_.4} parent=0 // loop_exit
    _

// kernel: _lambda_.7
$region0: #{_lambda_.7}
  #allocation0 [shape = 'u32[]', space=smem, size = 0x4, offset = 0x4, fixed_abs, tag = 'smem constant byte address 0x4 - core index']
  #allocation1 [shape = 'u32[144,128]{1,0:T(1,128)}', space=vmem, size = 0x12000, scoped, tag = 'internal scratch']
  %s0 = inlined_call_operand.vmem [shape: bf16[2,16,16,4], index: 0, kind: input, shape index: {}]
  %s1 = inlined_call_operand.vmem [shape: f32[1,4], index: 1, kind: input, shape index: {}]
  %s2 = inlined_call_operand.vmem [shape: f32[1,4], index: 2, kind: input, shape index: {}]
  %s3 = inlined_call_operand.vmem [shape: f32[2,16,16,4], index: 3, kind: output, shape index: {}]
  %s4 = sld [smem:[#allocation0]]
  $region45: #{_lambda_.7} parent=0
    _
  %s6 = ssub.s32 1, %s4
  %s7 = scalar_select 0, %s6, %s4
  loop: start=0, step=1, limit=6
  $region2: #{_lambda_.7} parent=0 // loop_pre_header
    _
  $region3: #{_lambda_.7} parent=0 // loop_header
    %s9 = sphi 0, %s13
    %p10 = scmp.ge.s32.totalorder %s9, 6
    %s16 = sphi 0, %s28
    %s17 = sphi 0, %s24
    %s18 = sphi 0, %s16
    %s19 = sphi 0, %s17
    %s20 = sphi 0, %s18
    %s21 = sphi 0, %s19
    %s33 = sphi 0, %s35
    %s36 = sphi 0, %s33
    %s37 = sphi 0, %s36
    %s53 = sphi 0, %s37
    %s57 = sphi 0, %s57
    %s59 = sphi 0, %s57
    %s60 = sphi 0, %s59
    %s74 = sphi 0, %s60
    %s78 = sphi 0, %s78
    %s80 = sphi 0, %s78
    %s81 = sphi 0, %s80
    %s95 = sphi 0, %s81
    %s103 = sphi 0, %s105
    %s106 = sphi 0, %s103
    %s107 = sphi 0, %s106
    %s123 = sphi 0, %s107
  $region4: #{_lambda_.7} parent=0 // loop_header_branch
    %12 = sbr.rel (%p10) target = $region8
  $region5: #{_lambda_.7} parent=0 // loop_body
    %s14 = ssub.s32 %s9, 1
    %s15 = ssub.s32 %s9, 2
    %s22 = sadd.s32 1, %s17
    %p23 = scmp.ge.s32.totalorder %s22, 2
    %s24 = scalar_select %p23, 0, %s22
    %s25 = sadd.s32 1, %s16
    %s26 = scalar_select %p23, %s25, %s16
    %p27 = scmp.ge.s32.totalorder %s26, 2
    %s28 = scalar_select %p27, 0, %s26
    %s29 = ssub.s32 %s16, %s28
    %s30 = ssub.s32 %s17, %s24
    %s31 = sor.u32 %s29, %s30
    %p32 = scmp.eq.s32.totalorder %s31, 0
    %s34 = sadd.s32 %s33, 1
    %s35 = scalar_select %p32, %s33, %s34
    %p38 = pneg %p32
    %p39 = scmp.eq.s32.totalorder %s9, 3
    %p40 = por %p38, %p39
    %p41 = scmp.ne.s32.totalorder %s33, %s36
    %p42 = scmp.eq.s32.totalorder %s9, 0
    %p43 = por %p41, %p42
    %p44 = scmp.ne.s32.totalorder %s33, %s36
    %p45 = scmp.eq.s32.totalorder %s14, 3
    %p46 = por %p44, %p45
    %p47 = scmp.ne.s32.totalorder %s36, %s37
    %p48 = scmp.eq.s32.totalorder %s14, 0
    %p49 = por %p47, %p48
    %p50 = scmp.ne.s32.totalorder %s36, %s37
    %p51 = scmp.eq.s32.totalorder %s15, 3
    %p52 = por %p50, %p51
    %p54 = scmp.ne.s32.totalorder %s37, %s53
    %p55 = scmp.eq.s32.totalorder %s15, 0
    %p56 = por %p54, %p55
    %s58 = sadd.s32 %s57, 1
    %p61 = scmp.eq.s32.totalorder %s9, 3
    %p62 = scmp.ne.s32.totalorder %s57, %s59
    %p63 = scmp.eq.s32.totalorder %s9, 0
    %p64 = por %p62, %p63
    %p65 = scmp.ne.s32.totalorder %s57, %s59
    %p66 = scmp.eq.s32.totalorder %s14, 3
    %p67 = por %p65, %p66
    %p68 = scmp.ne.s32.totalorder %s59, %s60
    %p69 = scmp.eq.s32.totalorder %s14, 0
    %p70 = por %p68, %p69
    %p71 = scmp.ne.s32.totalorder %s59, %s60
    %p72 = scmp.eq.s32.totalorder %s15, 3
    %p73 = por %p71, %p72
    %p75 = scmp.ne.s32.totalorder %s60, %s74
    %p76 = scmp.eq.s32.totalorder %s15, 0
    %p77 = por %p75, %p76
    %s79 = sadd.s32 %s78, 1
    %p82 = scmp.eq.s32.totalorder %s9, 3
    %p83 = scmp.ne.s32.totalorder %s78, %s80
    %p84 = scmp.eq.s32.totalorder %s9, 0
    %p85 = por %p83, %p84
    %p86 = scmp.ne.s32.totalorder %s78, %s80
    %p87 = scmp.eq.s32.totalorder %s14, 3
    %p88 = por %p86, %p87
    %p89 = scmp.ne.s32.totalorder %s80, %s81
    %p90 = scmp.eq.s32.totalorder %s14, 0
    %p91 = por %p89, %p90
    %p92 = scmp.ne.s32.totalorder %s80, %s81
    %p93 = scmp.eq.s32.totalorder %s15, 3
    %p94 = por %p92, %p93
    %p96 = scmp.ne.s32.totalorder %s81, %s95
    %p97 = scmp.eq.s32.totalorder %s15, 0
    %p98 = por %p96, %p97
    %s99 = ssub.s32 %s16, %s28
    %s100 = ssub.s32 %s17, %s24
    %s101 = sor.u32 %s99, %s100
    %p102 = scmp.eq.s32.totalorder %s101, 0
    %s104 = sadd.s32 %s103, 1
    %s105 = scalar_select %p102, %s103, %s104
    %p108 = pneg %p102
    %p109 = scmp.eq.s32.totalorder %s9, 3
    %p110 = por %p108, %p109
    %p111 = scmp.ne.s32.totalorder %s103, %s106
    %p112 = scmp.eq.s32.totalorder %s9, 0
    %p113 = por %p111, %p112
    %p114 = scmp.ne.s32.totalorder %s103, %s106
    %p115 = scmp.eq.s32.totalorder %s14, 3
    %p116 = por %p114, %p115
    %p117 = scmp.ne.s32.totalorder %s106, %s107
    %p118 = scmp.eq.s32.totalorder %s14, 0
    %p119 = por %p117, %p118
    %p120 = scmp.ne.s32.totalorder %s106, %s107
    %p121 = scmp.eq.s32.totalorder %s15, 3
    %p122 = por %p120, %p121
    %p124 = scmp.ne.s32.totalorder %s107, %s123
    %p125 = scmp.eq.s32.totalorder %s15, 0
    %p126 = por %p124, %p125
    %p127 = scmp.le.s32.totalorder 1, %s9
    %p128 = scmp.lt.s32.totalorder %s9, 5
    %p129 = pnand %p127, %p128
    %p130 = pneg %p129
    // Predicated region
    $region9: #{_lambda_.7} parent=5 // pred_check
      _
    $region10: #{_lambda_.7} parent=5 // pred_check_branch
      %132 = sbr.rel (%p129) target = $region12
    $region11: #{_lambda_.7} parent=5 // pred_region
      %s133 = ssub.s32 %s9, 1
      // Predicated region
      $region13: #{_lambda_.7} parent=11 // pred_check
        %p134 = pneg %p70
      $region14: #{_lambda_.7} parent=11 // pred_check_branch
        %136 = sbr.rel (%p134) target = $region16
      $region15: #{_lambda_.7} parent=11 // pred_region
        _
      $region16: #{_lambda_.7} parent=11 // pred_fallthru
        _
      // Predicated region
      $region17: #{_lambda_.7} parent=11 // pred_check
        %p137 = pneg %p91
      $region18: #{_lambda_.7} parent=11 // pred_check_branch
        %139 = sbr.rel (%p137) target = $region20
      $region19: #{_lambda_.7} parent=11 // pred_region
        _
      $region20: #{_lambda_.7} parent=11 // pred_fallthru
        _
    $region12: #{_lambda_.7} parent=5 // pred_fallthru
      _
    %p140 = scmp.lt.s32.totalorder %s9, 4
    // Predicated region
    $region21: #{_lambda_.7} parent=5 // pred_check
      %p141 = pneg %p140
    $region22: #{_lambda_.7} parent=5 // pred_check_branch
      %143 = sbr.rel (%p141) target = $region24
    $region23: #{_lambda_.7} parent=5 // pred_region
      // Predicated region
      $region25: #{_lambda_.7} parent=23 // pred_check
        %p144 = pneg %p43
      $region26: #{_lambda_.7} parent=23 // pred_check_branch
        %146 = sbr.rel (%p144) target = $region28
      $region27: #{_lambda_.7} parent=23 // pred_region
        %s147 = smul.u32 8, %s17
        %p148 = scmp.lt.s32.totalorder %s16, 1
        %s149 = scalar_select %p148, %s16, 1
        %p150 = scmp.lt.s32.totalorder %s147, 15
        %s151 = scalar_select %p150, %s147, 15
        %s152 = smul.addr %s151, 2
        %s153 = smul.addr %s149, 32
        %s154 = sadd.s32 %s152, %s153
        %s155 = smul.addr %s154, 4
        %s156 = scalar_lea.vmem %s0, %s155
        %s157 = smul.u32 8, %s17
      $region28: #{_lambda_.7} parent=23 // pred_fallthru
        _
    $region24: #{_lambda_.7} parent=5 // pred_fallthru
      _
    %p158 = scmp.le.s32.totalorder 1, %s9
    %p159 = scmp.lt.s32.totalorder %s9, 5
    %p160 = pnand %p158, %p159
    %p161 = pneg %p160
    // Predicated region
    $region29: #{_lambda_.7} parent=5 // pred_check
      _
    $region30: #{_lambda_.7} parent=5 // pred_check_branch
      %163 = sbr.rel (%p160) target = $region32
    $region31: #{_lambda_.7} parent=5 // pred_region
      %s164 = ssub.s32 %s9, 1
      %s165 = smul.u32 8, %s19
      %p166 = scmp.lt.s32.totalorder %s18, 1
      %s167 = scalar_select %p166, %s18, 1
      %p168 = scmp.lt.s32.totalorder %s165, 15
      %s169 = scalar_select %p168, %s165, 15
      %s170 = smul.addr %s169, 2
      %s171 = smul.addr %s167, 32
      %s172 = sadd.s32 %s170, %s171
      %s173 = smul.addr %s172, 4
      %s174 = scalar_lea.vmem %s0, %s173
      %p175 = pneg %p49
      %p176 = pneg %p46
      %p177 = pneg %p70
      %p178 = pneg %p67
      %p179 = pneg %p91
      %p180 = pneg %p88
      %p181 = pneg %p119
      %p182 = pneg %p116
      %s183 = smul.u32 8, %s19
      %p184 = scmp.lt.s32.totalorder %s18, 1
      %s185 = scalar_select %p184, %s18, 1
      %p186 = scmp.lt.s32.totalorder %s183, 15
      %s187 = scalar_select %p186, %s183, 15
      %s188 = smul.addr %s187, 2
      %s189 = smul.addr %s185, 32
      %s190 = sadd.s32 %s188, %s189
      %s191 = smul.addr %s190, 8
      %s192 = scalar_lea.vmem %s3, %s191
      %s193 = smul.u32 8, %s19
      %p194 = scmp.lt.s32.totalorder %s18, 1
      %s195 = scalar_select %p194, %s18, 1
      %p196 = scmp.lt.s32.totalorder %s193, 15
      %s197 = scalar_select %p196, %s193, 15
      %s198 = smul.addr %s197, 2
      %s199 = smul.addr %s195, 32
      %s200 = sadd.s32 %s198, %s199
      %s201 = smul.addr %s200, 4
      %s202 = scalar_lea.vmem %s0, %s201
      %s203 = smul.u32 8, %s19
      %s204 = smul.u32 8, %s19
      %p205 = scmp.lt.s32.totalorder %s18, 1
      %s206 = scalar_select %p205, %s18, 1
      %p207 = scmp.lt.s32.totalorder %s204, 15
      %s208 = scalar_select %p207, %s204, 15
      %s209 = smul.addr %s208, 2
      %s210 = smul.addr %s206, 32
      %s211 = sadd.s32 %s209, %s210
      %s212 = smul.addr %s211, 8
      %s213 = scalar_lea.vmem %s3, %s212
      %s214 = smul.u32 8, %s19
      %v215 = vld [vmem:[%s202] sm:$0xf]
      %v216 = vld [vmem:[%s202 + $0x4] sm:$0xf]
      %v217 = vld [vmem:[%s202 + $0x8] sm:$0xf]
      %v218 = vld [vmem:[%s202 + $0xc] sm:$0xf]
      %v219 = vld [vmem:[%s202 + $0x10] sm:$0xf]
      %v220 = vld [vmem:[%s202 + $0x14] sm:$0xf]
      %v221 = vld [vmem:[%s202 + $0x18] sm:$0xf]
      %v222 = vld [vmem:[%s202 + $0x1c] sm:$0xf]
      %v223 = vld [vmem:[%s202 + $0x20] sm:$0xf]
      %v224 = vld [vmem:[%s202 + $0x24] sm:$0xf]
      %v225 = vld [vmem:[%s202 + $0x28] sm:$0xf]
      %v226 = vld [vmem:[%s202 + $0x2c] sm:$0xf]
      %v227 = vld [vmem:[%s202 + $0x30] sm:$0xf]
      %v228 = vld [vmem:[%s202 + $0x34] sm:$0xf]
      %v229 = vld [vmem:[%s202 + $0x38] sm:$0xf]
      %v230 = vld [vmem:[%s202 + $0x3c] sm:$0xf]
      %v231 = vunpack.c.l.bf16 %v215
      %v232 = vunpack.c.l.bf16 %v216
      %v233 = vunpack.c.l.bf16 %v217
      %v234 = vunpack.c.l.bf16 %v218
      %v235 = vunpack.c.l.bf16 %v219
      %v236 = vunpack.c.l.bf16 %v220
      %v237 = vunpack.c.l.bf16 %v221
      %v238 = vunpack.c.l.bf16 %v222
      %v239 = vunpack.c.l.bf16 %v223
      %v240 = vunpack.c.l.bf16 %v224
      %v241 = vunpack.c.l.bf16 %v225
      %v242 = vunpack.c.l.bf16 %v226
      %v243 = vunpack.c.l.bf16 %v227
      %v244 = vunpack.c.l.bf16 %v228
      %v245 = vunpack.c.l.bf16 %v229
      %v246 = vunpack.c.l.bf16 %v230
      %v247 = vld [vmem:[%s1] sm:$0x1]
      %v249 = vlaneseq
      %v250 = vshrl.u32 %v249, 7
      %v251 = vsub.s32 0, %v250
      %v252 = vrot.slane %v247, %v251
      %v254 = vmul.f32 %v231, %v252
      %v255 = vmul.f32 %v232, %v252
      %v256 = vmul.f32 %v233, %v252
      %v257 = vmul.f32 %v234, %v252
      %v258 = vmul.f32 %v235, %v252
      %v259 = vmul.f32 %v236, %v252
      %v260 = vmul.f32 %v237, %v252
      %v261 = vmul.f32 %v238, %v252
      %v262 = vmul.f32 %v239, %v252
      %v263 = vmul.f32 %v240, %v252
      %v264 = vmul.f32 %v241, %v252
      %v265 = vmul.f32 %v242, %v252
      %v266 = vmul.f32 %v243, %v252
      %v267 = vmul.f32 %v244, %v252
      %v268 = vmul.f32 %v245, %v252
      %v269 = vmul.f32 %v246, %v252
      %v270 = vld [vmem:[%s2] sm:$0x1]
      %v272 = vlaneseq
      %v273 = vshrl.u32 %v272, 7
      %v274 = vsub.s32 0, %v273
      %v275 = vrot.slane %v270, %v274
      %v277 = vadd.f32 %v254, %v275
      %v278 = vadd.f32 %v255, %v275
      %v279 = vadd.f32 %v256, %v275
      %v280 = vadd.f32 %v257, %v275
      %v281 = vadd.f32 %v258, %v275
      %v282 = vadd.f32 %v259, %v275
      %v283 = vadd.f32 %v260, %v275
      %v284 = vadd.f32 %v261, %v275
      %v285 = vadd.f32 %v262, %v275
      %v286 = vadd.f32 %v263, %v275
      %v287 = vadd.f32 %v264, %v275
      %v288 = vadd.f32 %v265, %v275
      %v289 = vadd.f32 %v266, %v275
      %v290 = vadd.f32 %v267, %v275
      %v291 = vadd.f32 %v268, %v275
      %v292 = vadd.f32 %v269, %v275
      %v293 = vmax.f32 %v277, 0.0
      %v294 = vmax.f32 %v278, 0.0
      %v295 = vmax.f32 %v279, 0.0
      %v296 = vmax.f32 %v280, 0.0
      %v297 = vmax.f32 %v281, 0.0
      %v298 = vmax.f32 %v282, 0.0
      %v299 = vmax.f32 %v283, 0.0
      %v300 = vmax.f32 %v284, 0.0
      %v301 = vmax.f32 %v285, 0.0
      %v302 = vmax.f32 %v286, 0.0
      %v303 = vmax.f32 %v287, 0.0
      %v304 = vmax.f32 %v288, 0.0
      %v305 = vmax.f32 %v289, 0.0
      %v306 = vmax.f32 %v290, 0.0
      %v307 = vmax.f32 %v291, 0.0
      %v308 = vmax.f32 %v292, 0.0
      %vm309 = vcmask 31744
      %310 = vst.msk [vmem:[%s213] sm:$0xff] %vm309, %v293
      %311 = vst.msk [vmem:[%s213 + $0x8] sm:$0xff] %vm309, %v294
      %312 = vst.msk [vmem:[%s213 + $0x10] sm:$0xff] %vm309, %v295
      %313 = vst.msk [vmem:[%s213 + $0x18] sm:$0xff] %vm309, %v296
      %314 = vst.msk [vmem:[%s213 + $0x20] sm:$0xff] %vm309, %v297
      %315 = vst.msk [vmem:[%s213 + $0x28] sm:$0xff] %vm309, %v298
      %316 = vst.msk [vmem:[%s213 + $0x30] sm:$0xff] %vm309, %v299
      %317 = vst.msk [vmem:[%s213 + $0x38] sm:$0xff] %vm309, %v300
      %318 = vst.msk [vmem:[%s213 + $0x40] sm:$0xff] %vm309, %v301
      %319 = vst.msk [vmem:[%s213 + $0x48] sm:$0xff] %vm309, %v302
      %320 = vst.msk [vmem:[%s213 + $0x50] sm:$0xff] %vm309, %v303
      %321 = vst.msk [vmem:[%s213 + $0x58] sm:$0xff] %vm309, %v304
      %322 = vst.msk [vmem:[%s213 + $0x60] sm:$0xff] %vm309, %v305
      %323 = vst.msk [vmem:[%s213 + $0x68] sm:$0xff] %vm309, %v306
      %324 = vst.msk [vmem:[%s213 + $0x70] sm:$0xff] %vm309, %v307
      %325 = vst.msk [vmem:[%s213 + $0x78] sm:$0xff] %vm309, %v308
      %s326 = smul.u32 8, %s19
      %p327 = scmp.lt.s32.totalorder %s18, 1
      %s328 = scalar_select %p327, %s18, 1
      %p329 = scmp.lt.s32.totalorder %s326, 15
      %s330 = scalar_select %p329, %s326, 15
      %s331 = smul.addr %s330, 2
      %s332 = smul.addr %s328, 32
      %s333 = sadd.s32 %s331, %s332
      %s334 = smul.addr %s333, 8
      %s335 = scalar_lea.vmem %s3, %s334
      // Predicated region
      $region33: #{_lambda_.7} parent=31 // pred_check
        %p336 = pneg %p116
      $region34: #{_lambda_.7} parent=31 // pred_check_branch
        %338 = sbr.rel (%p336) target = $region36
      $region35: #{_lambda_.7} parent=31 // pred_region
        %s339 = smul.u32 8, %s19
      $region36: #{_lambda_.7} parent=31 // pred_fallthru
        _
    $region32: #{_lambda_.7} parent=5 // pred_fallthru
      _
    %p340 = scmp.le.s32.totalorder 2, %s9
    // Predicated region
    $region37: #{_lambda_.7} parent=5 // pred_check
      %p341 = pneg %p340
    $region38: #{_lambda_.7} parent=5 // pred_check_branch
      %343 = sbr.rel (%p341) target = $region40
    $region39: #{_lambda_.7} parent=5 // pred_region
      %s344 = ssub.s32 %s9, 2
      // Predicated region
      $region41: #{_lambda_.7} parent=39 // pred_check
        %p345 = pneg %p122
      $region42: #{_lambda_.7} parent=39 // pred_check_branch
        %347 = sbr.rel (%p345) target = $region44
      $region43: #{_lambda_.7} parent=39 // pred_region
        %s348 = smul.u32 8, %s21
        %p349 = scmp.lt.s32.totalorder %s20, 1
        %s350 = scalar_select %p349, %s20, 1
        %p351 = scmp.lt.s32.totalorder %s348, 15
        %s352 = scalar_select %p351, %s348, 15
        %s353 = smul.addr %s352, 2
        %s354 = smul.addr %s350, 32
        %s355 = sadd.s32 %s353, %s354
        %s356 = smul.addr %s355, 8
        %s357 = scalar_lea.vmem %s3, %s356
      $region44: #{_lambda_.7} parent=39 // pred_fallthru
        _
    $region40: #{_lambda_.7} parent=5 // pred_fallthru
      _
  $region6: #{_lambda_.7} parent=0 // loop_footer
    %s13 = sadd.s32 1, %s9
  $region7: #{_lambda_.7} parent=0 // loop_footer_branch
    %8 = sbr.rel target = $region3
  $region8: #{_lambda_.7} parent=0 // loop_exit
    _

// kernel: _lambda_.6
$region0: #{_lambda_.6}
  #allocation0 [shape = 'u32[]', space=smem, size = 0x4, offset = 0x4, fixed_abs, tag = 'smem constant byte address 0x4 - core index']
  #allocation1 [shape = 'u32[144,128]{1,0:T(1,128)}', space=vmem, size = 0x12000, scoped, tag = 'internal scratch']
  #allocation2 [shape = 'f32[18,18,4]{2,1,0:T(8,128)}', space=vmem, size = 0x36000, scoped, tag = 'scratch operand']
  #allocation3 [shape = 'bf16[16,16,36]{2,1,0:T(16,128)(2,1)}', space=vmem, size = 0x10000, scoped, tag = 'scratch operand']
  %s0 = inlined_call_operand.vmem [shape: bf16[2,16,16,4], index: 0, kind: input, shape index: {}]
  %s1 = inlined_call_operand.vmem [shape: f32[1,4], index: 1, kind: input, shape index: {}]
  %s2 = inlined_call_operand.vmem [shape: f32[1,4], index: 2, kind: input, shape index: {}]
  %s3 = inlined_call_operand.vmem [shape: bf16[36,4], index: 3, kind: input, shape index: {}]
  %s4 = inlined_call_operand.vmem [shape: f32[1,4], index: 4, kind: input, shape index: {}]
  %s5 = inlined_call_operand.vmem [shape: bf16[2,16,16,4], index: 5, kind: output, shape index: {0}]
  %s6 = inlined_call_operand.vmem [shape: f32[2,2,4], index: 6, kind: output, shape index: {1}]
  %7 = xla_tuple %s5, %s6
  %s8 = sld [smem:[#allocation0]]
  $region61: #{_lambda_.6} parent=0
    _
  %s10 = ssub.s32 1, %s8
  %s11 = scalar_select 0, %s10, %s8
  loop: start=0, step=1, limit=4
  $region2: #{_lambda_.6} parent=0 // loop_pre_header
    _
  $region3: #{_lambda_.6} parent=0 // loop_header
    %s13 = sphi 0, %s17
    %p14 = scmp.ge.s32.totalorder %s13, 4
    %s23 = sphi 0, %s25
    %s26 = sphi 0, %s23
    %s27 = sphi 0, %s26
    %s43 = sphi 0, %s27
    %s47 = sphi 0, %s47
    %s49 = sphi 0, %s47
    %s50 = sphi 0, %s49
    %s64 = sphi 0, %s50
    %s68 = sphi 0, %s68
    %s70 = sphi 0, %s68
    %s71 = sphi 0, %s70
    %s85 = sphi 0, %s71
    %s89 = sphi 0, %s89
    %s91 = sphi 0, %s89
    %s92 = sphi 0, %s91
    %s106 = sphi 0, %s92
    %s110 = sphi 0, %s110
    %s112 = sphi 0, %s110
    %s113 = sphi 0, %s112
    %s127 = sphi 0, %s113
    %s133 = sphi 0, %s135
    %s136 = sphi 0, %s133
    %s137 = sphi 0, %s136
    %s153 = sphi 0, %s137
    %s159 = sphi 0, %s161
    %s162 = sphi 0, %s159
    %s163 = sphi 0, %s162
    %s179 = sphi 0, %s163
  $region4: #{_lambda_.6} parent=0 // loop_header_branch
    %16 = sbr.rel (%p14) target = $region8
  $region5: #{_lambda_.6} parent=0 // loop_body
    %s18 = ssub.s32 %s13, 1
    %s19 = ssub.s32 %s13, 2
    %s20 = sadd.s32 %s13, 1
    %s21 = ssub.s32 %s13, %s20
    %p22 = scmp.eq.s32.totalorder %s21, 0
    %s24 = sadd.s32 %s23, 1
    %s25 = scalar_select %p22, %s23, %s24
    %p28 = pneg %p22
    %p29 = scmp.eq.s32.totalorder %s13, 1
    %p30 = por %p28, %p29
    %p31 = scmp.ne.s32.totalorder %s23, %s26
    %p32 = scmp.eq.s32.totalorder %s13, 0
    %p33 = por %p31, %p32
    %p34 = scmp.ne.s32.totalorder %s23, %s26
    %p35 = scmp.eq.s32.totalorder %s18, 1
    %p36 = por %p34, %p35
    %p37 = scmp.ne.s32.totalorder %s26, %s27
    %p38 = scmp.eq.s32.totalorder %s18, 0
    %p39 = por %p37, %p38
    %p40 = scmp.ne.s32.totalorder %s26, %s27
    %p41 = scmp.eq.s32.totalorder %s19, 1
    %p42 = por %p40, %p41
    %p44 = scmp.ne.s32.totalorder %s27, %s43
    %p45 = scmp.eq.s32.totalorder %s19, 0
    %p46 = por %p44, %p45
    %s48 = sadd.s32 %s47, 1
    %p51 = scmp.eq.s32.totalorder %s13, 1
    %p52 = scmp.ne.s32.totalorder %s47, %s49
    %p53 = scmp.eq.s32.totalorder %s13, 0
    %p54 = por %p52, %p53
    %p55 = scmp.ne.s32.totalorder %s47, %s49
    %p56 = scmp.eq.s32.totalorder %s18, 1
    %p57 = por %p55, %p56
    %p58 = scmp.ne.s32.totalorder %s49, %s50
    %p59 = scmp.eq.s32.totalorder %s18, 0
    %p60 = por %p58, %p59
    %p61 = scmp.ne.s32.totalorder %s49, %s50
    %p62 = scmp.eq.s32.totalorder %s19, 1
    %p63 = por %p61, %p62
    %p65 = scmp.ne.s32.totalorder %s50, %s64
    %p66 = scmp.eq.s32.totalorder %s19, 0
    %p67 = por %p65, %p66
    %s69 = sadd.s32 %s68, 1
    %p72 = scmp.eq.s32.totalorder %s13, 1
    %p73 = scmp.ne.s32.totalorder %s68, %s70
    %p74 = scmp.eq.s32.totalorder %s13, 0
    %p75 = por %p73, %p74
    %p76 = scmp.ne.s32.totalorder %s68, %s70
    %p77 = scmp.eq.s32.totalorder %s18, 1
    %p78 = por %p76, %p77
    %p79 = scmp.ne.s32.totalorder %s70, %s71
    %p80 = scmp.eq.s32.totalorder %s18, 0
    %p81 = por %p79, %p80
    %p82 = scmp.ne.s32.totalorder %s70, %s71
    %p83 = scmp.eq.s32.totalorder %s19, 1
    %p84 = por %p82, %p83
    %p86 = scmp.ne.s32.totalorder %s71, %s85
    %p87 = scmp.eq.s32.totalorder %s19, 0
    %p88 = por %p86, %p87
    %s90 = sadd.s32 %s89, 1
    %p93 = scmp.eq.s32.totalorder %s13, 1
    %p94 = scmp.ne.s32.totalorder %s89, %s91
    %p95 = scmp.eq.s32.totalorder %s13, 0
    %p96 = por %p94, %p95
    %p97 = scmp.ne.s32.totalorder %s89, %s91
    %p98 = scmp.eq.s32.totalorder %s18, 1
    %p99 = por %p97, %p98
    %p100 = scmp.ne.s32.totalorder %s91, %s92
    %p101 = scmp.eq.s32.totalorder %s18, 0
    %p102 = por %p100, %p101
    %p103 = scmp.ne.s32.totalorder %s91, %s92
    %p104 = scmp.eq.s32.totalorder %s19, 1
    %p105 = por %p103, %p104
    %p107 = scmp.ne.s32.totalorder %s92, %s106
    %p108 = scmp.eq.s32.totalorder %s19, 0
    %p109 = por %p107, %p108
    %s111 = sadd.s32 %s110, 1
    %p114 = scmp.eq.s32.totalorder %s13, 1
    %p115 = scmp.ne.s32.totalorder %s110, %s112
    %p116 = scmp.eq.s32.totalorder %s13, 0
    %p117 = por %p115, %p116
    %p118 = scmp.ne.s32.totalorder %s110, %s112
    %p119 = scmp.eq.s32.totalorder %s18, 1
    %p120 = por %p118, %p119
    %p121 = scmp.ne.s32.totalorder %s112, %s113
    %p122 = scmp.eq.s32.totalorder %s18, 0
    %p123 = por %p121, %p122
    %p124 = scmp.ne.s32.totalorder %s112, %s113
    %p125 = scmp.eq.s32.totalorder %s19, 1
    %p126 = por %p124, %p125
    %p128 = scmp.ne.s32.totalorder %s113, %s127
    %p129 = scmp.eq.s32.totalorder %s19, 0
    %p130 = por %p128, %p129
    %s131 = ssub.s32 %s13, %s20
    %p132 = scmp.eq.s32.totalorder %s131, 0
    %s134 = sadd.s32 %s133, 1
    %s135 = scalar_select %p132, %s133, %s134
    %p138 = pneg %p132
    %p139 = scmp.eq.s32.totalorder %s13, 1
    %p140 = por %p138, %p139
    %p141 = scmp.ne.s32.totalorder %s133, %s136
    %p142 = scmp.eq.s32.totalorder %s13, 0
    %p143 = por %p141, %p142
    %p144 = scmp.ne.s32.totalorder %s133, %s136
    %p145 = scmp.eq.s32.totalorder %s18, 1
    %p146 = por %p144, %p145
    %p147 = scmp.ne.s32.totalorder %s136, %s137
    %p148 = scmp.eq.s32.totalorder %s18, 0
    %p149 = por %p147, %p148
    %p150 = scmp.ne.s32.totalorder %s136, %s137
    %p151 = scmp.eq.s32.totalorder %s19, 1
    %p152 = por %p150, %p151
    %p154 = scmp.ne.s32.totalorder %s137, %s153
    %p155 = scmp.eq.s32.totalorder %s19, 0
    %p156 = por %p154, %p155
    %s157 = ssub.s32 %s13, %s20
    %p158 = scmp.eq.s32.totalorder %s157, 0
    %s160 = sadd.s32 %s159, 1
    %s161 = scalar_select %p158, %s159, %s160
    %p164 = pneg %p158
    %p165 = scmp.eq.s32.totalorder %s13, 1
    %p166 = por %p164, %p165
    %p167 = scmp.ne.s32.totalorder %s159, %s162
    %p168 = scmp.eq.s32.totalorder %s13, 0
    %p169 = por %p167, %p168
    %p170 = scmp.ne.s32.totalorder %s159, %s162
    %p171 = scmp.eq.s32.totalorder %s18, 1
    %p172 = por %p170, %p171
    %p173 = scmp.ne.s32.totalorder %s162, %s163
    %p174 = scmp.eq.s32.totalorder %s18, 0
    %p175 = por %p173, %p174
    %p176 = scmp.ne.s32.totalorder %s162, %s163
    %p177 = scmp.eq.s32.totalorder %s19, 1
    %p178 = por %p176, %p177
    %p180 = scmp.ne.s32.totalorder %s163, %s179
    %p181 = scmp.eq.s32.totalorder %s19, 0
    %p182 = por %p180, %p181
    %p183 = scmp.le.s32.totalorder 1, %s13
    %p184 = scmp.lt.s32.totalorder %s13, 3
    %p185 = pnand %p183, %p184
    %p186 = pneg %p185
    // Predicated region
    $region9: #{_lambda_.6} parent=5 // pred_check
      _
    $region10: #{_lambda_.6} parent=5 // pred_check_branch
      %188 = sbr.rel (%p185) target = $region12
    $region11: #{_lambda_.6} parent=5 // pred_region
      %s189 = ssub.s32 %s13, 1
      // Predicated region
      $region13: #{_lambda_.6} parent=11 // pred_check
        %p190 = pneg %p60
      $region14: #{_lambda_.6} parent=11 // pred_check_branch
        %192 = sbr.rel (%p190) target = $region16
      $region15: #{_lambda_.6} parent=11 // pred_region
        _
      $region16: #{_lambda_.6} parent=11 // pred_fallthru
        _
      // Predicated region
      $region17: #{_lambda_.6} parent=11 // pred_check
        %p193 = pneg %p81
      $region18: #{_lambda_.6} parent=11 // pred_check_branch
        %195 = sbr.rel (%p193) target = $region20
      $region19: #{_lambda_.6} parent=11 // pred_region
        _
      $region20: #{_lambda_.6} parent=11 // pred_fallthru
        _
      // Predicated region
      $region21: #{_lambda_.6} parent=11 // pred_check
        %p196 = pneg %p102
      $region22: #{_lambda_.6} parent=11 // pred_check_branch
        %198 = sbr.rel (%p196) target = $region24
      $region23: #{_lambda_.6} parent=11 // pred_region
        _
      $region24: #{_lambda_.6} parent=11 // pred_fallthru
        _
      // Predicated region
      $region25: #{_lambda_.6} parent=11 // pred_check
        %p199 = pneg %p123
      $region26: #{_lambda_.6} parent=11 // pred_check_branch
        %201 = sbr.rel (%p199) target = $region28
      $region27: #{_lambda_.6} parent=11 // pred_region
        _
      $region28: #{_lambda_.6} parent=11 // pred_fallthru
        _
    $region12: #{_lambda_.6} parent=5 // pred_fallthru
      _
    %p202 = scmp.lt.s32.totalorder %s13, 2
    // Predicated region
    $region29: #{_lambda_.6} parent=5 // pred_check
      %p203 = pneg %p202
    $region30: #{_lambda_.6} parent=5 // pred_check_branch
      %205 = sbr.rel (%p203) target = $region32
    $region31: #{_lambda_.6} parent=5 // pred_region
      // Predicated region
      $region33: #{_lambda_.6} parent=31 // pred_check
        %p206 = pneg %p33
      $region34: #{_lambda_.6} parent=31 // pred_check_branch
        %208 = sbr.rel (%p206) target = $region36
      $region35: #{_lambda_.6} parent=31 // pred_region
        %p209 = scmp.lt.s32.totalorder %s13, 1
        %s210 = scalar_select %p209, %s13, 1
        %s211 = smul.addr %s210, 32
        %s212 = smul.addr %s211, 4
        %s213 = scalar_lea.vmem %s0, %s212
      $region36: #{_lambda_.6} parent=31 // pred_fallthru
        _
    $region32: #{_lambda_.6} parent=5 // pred_fallthru
      _
    %p214 = scmp.le.s32.totalorder 1, %s13
    %p215 = scmp.lt.s32.totalorder %s13, 3
    %p216 = pnand %p214, %p215
    %p217 = pneg %p216
    // Predicated region
    $region37: #{_lambda_.6} parent=5 // pred_check
      _
    $region38: #{_lambda_.6} parent=5 // pred_check_branch
      %219 = sbr.rel (%p216) target = $region40
    $region39: #{_lambda_.6} parent=5 // pred_region
      %s220 = ssub.s32 %s13, 1
      %p221 = scmp.lt.s32.totalorder %s18, 1
      %s222 = scalar_select %p221, %s18, 1
      %s223 = smul.addr %s222, 32
      %s224 = smul.addr %s223, 4
      %s225 = scalar_lea.vmem %s0, %s224
      %p226 = pneg %p39
      %p227 = pneg %p36
      %p228 = pneg %p60
      %p229 = pneg %p57
      %p230 = pneg %p81
      %p231 = pneg %p78
      %p232 = pneg %p102
      %p233 = pneg %p99
      %p234 = pneg %p123
      %p235 = pneg %p120
      %p236 = pneg %p149
      %p237 = pneg %p146
      %p238 = scmp.lt.s32.totalorder %s18, 1
      %s239 = scalar_select %p238, %s18, 1
      %s240 = smul.addr %s239, 32
      %s241 = smul.addr %s240, 4
      %s242 = scalar_lea.vmem %s5, %s241
      %p243 = pneg %p175
      %p244 = pneg %p172
      %p245 = scmp.lt.s32.totalorder %s18, 1
      %s246 = scalar_select %p245, %s18, 1
      %s247 = smul.addr %s246, 2
      %s248 = scalar_lea.vmem %s6, %s247
      %p249 = scmp.lt.s32.totalorder %s18, 1
      %s250 = scalar_select %p249, %s18, 1
      %s251 = smul.addr %s250, 32
      %s252 = smul.addr %s251, 4
      %s253 = scalar_lea.vmem %s0, %s252
      %p254 = scmp.lt.s32.totalorder %s18, 1
      %s255 = scalar_select %p254, %s18, 1
      %s256 = smul.addr %s255, 32
      %s257 = smul.addr %s256, 4
      %s258 = scalar_lea.vmem %s5, %s257
      %p259 = scmp.lt.s32.totalorder %s18, 1
      %s260 = scalar_select %p259, %s18, 1
      %s261 = smul.addr %s260, 2
      %s262 = scalar_lea.vmem %s6, %s261
      %vm264 = vcmask 31744
      %265 = vst.msk [vmem:[#allocation2] sm:$0xff] %vm264, 0.0
      %266 = vst.msk [vmem:[#allocation2 + $0x8] sm:$0xff] %vm264, 0.0
      %vm267 = vcmask 25600
      %268 = vst.msk [vmem:[#allocation2 + $0x10] sm:$0x3] %vm267, 0.0
      %s269 = scalar_lea.vmem [#allocation2], 408
      %270 = vst.msk [vmem:[%s269] sm:$0xff] %vm264, 0.0
      %271 = vst.msk [vmem:[%s269 + $0x8] sm:$0xff] %vm264, 0.0
      %272 = vst.msk [vmem:[%s269 + $0x10] sm:$0x3] %vm267, 0.0
      %vm273 = vcmask 24576
      %274 = vst.msk [vmem:[#allocation2] sm:$0x1] %vm273, 0.0
      %275 = vst.msk [vmem:[#allocation2 + $0x18] sm:$0x1] %vm273, 0.0
      %276 = vst.msk [vmem:[#allocation2 + $0x30] sm:$0x1] %vm273, 0.0
      %277 = vst.msk [vmem:[#allocation2 + $0x48] sm:$0x1] %vm273, 0.0
      %278 = vst.msk [vmem:[#allocation2 + $0x60] sm:$0x1] %vm273, 0.0
      %279 = vst.msk [vmem:[#allocation2 + $0x78] sm:$0x1] %vm273, 0.0
      %280 = vst.msk [vmem:[#allocation2 + $0x90] sm:$0x1] %vm273, 0.0
      %281 = vst.msk [vmem:[#allocation2 + $0xa8] sm:$0x1] %vm273, 0.0
      %282 = vst.msk [vmem:[#allocation2 + $0xc0] sm:$0x1] %vm273, 0.0
      %283 = vst.msk [vmem:[#allocation2 + $0xd8] sm:$0x1] %vm273, 0.0
      %284 = vst.msk [vmem:[#allocation2 + $0xf0] sm:$0x1] %vm273, 0.0
      %285 = vst.msk [vmem:[#allocation2 + $0x108] sm:$0x1] %vm273, 0.0
      %286 = vst.msk [vmem:[#allocation2 + $0x120] sm:$0x1] %vm273, 0.0
      %287 = vst.msk [vmem:[#allocation2 + $0x138] sm:$0x1] %vm273, 0.0
      %288 = vst.msk [vmem:[#allocation2 + $0x150] sm:$0x1] %vm273, 0.0
      %289 = vst.msk [vmem:[#allocation2 + $0x168] sm:$0x1] %vm273, 0.0
      %290 = vst.msk [vmem:[#allocation2 + $0x180] sm:$0x1] %vm273, 0.0
      %291 = vst.msk [vmem:[#allocation2 + $0x198] sm:$0x1] %vm273, 0.0
      %292 = vst.msk [vmem:[#allocation2 + $0x11] sm:$0x1] %vm273, 0.0
      %293 = vst.msk [vmem:[#allocation2 + $0x29] sm:$0x1] %vm273, 0.0
      %294 = vst.msk [vmem:[#allocation2 + $0x41] sm:$0x1] %vm273, 0.0
      %295 = vst.msk [vmem:[#allocation2 + $0x59] sm:$0x1] %vm273, 0.0
      %296 = vst.msk [vmem:[#allocation2 + $0x71] sm:$0x1] %vm273, 0.0
      %297 = vst.msk [vmem:[#allocation2 + $0x89] sm:$0x1] %vm273, 0.0
      %298 = vst.msk [vmem:[#allocation2 + $0xa1] sm:$0x1] %vm273, 0.0
      %299 = vst.msk [vmem:[#allocation2 + $0xb9] sm:$0x1] %vm273, 0.0
      %300 = vst.msk [vmem:[#allocation2 + $0xd1] sm:$0x1] %vm273, 0.0
      %301 = vst.msk [vmem:[#allocation2 + $0xe9] sm:$0x1] %vm273, 0.0
      %302 = vst.msk [vmem:[#allocation2 + $0x101] sm:$0x1] %vm273, 0.0
      %303 = vst.msk [vmem:[#allocation2 + $0x119] sm:$0x1] %vm273, 0.0
      %304 = vst.msk [vmem:[#allocation2 + $0x131] sm:$0x1] %vm273, 0.0
      %305 = vst.msk [vmem:[#allocation2 + $0x149] sm:$0x1] %vm273, 0.0
      %306 = vst.msk [vmem:[#allocation2 + $0x161] sm:$0x1] %vm273, 0.0
      %307 = vst.msk [vmem:[#allocation2 + $0x179] sm:$0x1] %vm273, 0.0
      %308 = vst.msk [vmem:[#allocation2 + $0x191] sm:$0x1] %vm273, 0.0
      %309 = vst.msk [vmem:[#allocation2 + $0x1a9] sm:$0x1] %vm273, 0.0
      %v310 = vld [vmem:[%s253] sm:$0xf]
      %v311 = vld [vmem:[%s253 + $0x4] sm:$0xf]
      %v312 = vld [vmem:[%s253 + $0x8] sm:$0xf]
      %v313 = vld [vmem:[%s253 + $0xc] sm:$0xf]
      %v314 = vld [vmem:[%s253 + $0x10] sm:$0xf]
      %v315 = vld [vmem:[%s253 + $0x14] sm:$0xf]
      %v316 = vld [vmem:[%s253 + $0x18] sm:$0xf]
      %v317 = vld [vmem:[%s253 + $0x1c] sm:$0xf]
      %v318 = vld [vmem:[%s253 + $0x20] sm:$0xf]
      %v319 = vld [vmem:[%s253 + $0x24] sm:$0xf]
      %v320 = vld [vmem:[%s253 + $0x28] sm:$0xf]
      %v321 = vld [vmem:[%s253 + $0x2c] sm:$0xf]
      %v322 = vld [vmem:[%s253 + $0x30] sm:$0xf]
      %v323 = vld [vmem:[%s253 + $0x34] sm:$0xf]
      %v324 = vld [vmem:[%s253 + $0x38] sm:$0xf]
      %v325 = vld [vmem:[%s253 + $0x3c] sm:$0xf]
      %v326 = vld [vmem:[%s253 + $0x40] sm:$0xf]
      %v327 = vld [vmem:[%s253 + $0x44] sm:$0xf]
      %v328 = vld [vmem:[%s253 + $0x48] sm:$0xf]
      %v329 = vld [vmem:[%s253 + $0x4c] sm:$0xf]
      %v330 = vld [vmem:[%s253 + $0x50] sm:$0xf]
      %v331 = vld [vmem:[%s253 + $0x54] sm:$0xf]
      %v332 = vld [vmem:[%s253 + $0x58] sm:$0xf]
      %v333 = vld [vmem:[%s253 + $0x5c] sm:$0xf]
      %v334 = vld [vmem:[%s253 + $0x60] sm:$0xf]
      %v335 = vld [vmem:[%s253 + $0x64] sm:$0xf]
      %v336 = vld [vmem:[%s253 + $0x68] sm:$0xf]
      %v337 = vld [vmem:[%s253 + $0x6c] sm:$0xf]
      %v338 = vld [vmem:[%s253 + $0x70] sm:$0xf]
      %v339 = vld [vmem:[%s253 + $0x74] sm:$0xf]
      %v340 = vld [vmem:[%s253 + $0x78] sm:$0xf]
      %v341 = vld [vmem:[%s253 + $0x7c] sm:$0xf]
      %v342 = vunpack.c.l.bf16 %v310
      %v343 = vunpack.c.l.bf16 %v311
      %v344 = vunpack.c.l.bf16 %v312
      %v345 = vunpack.c.l.bf16 %v313
      %v346 = vunpack.c.l.bf16 %v314
      %v347 = vunpack.c.l.bf16 %v315
      %v348 = vunpack.c.l.bf16 %v316
      %v349 = vunpack.c.l.bf16 %v317
      %v350 = vunpack.c.l.bf16 %v318
      %v351 = vunpack.c.l.bf16 %v319
      %v352 = vunpack.c.l.bf16 %v320
      %v353 = vunpack.c.l.bf16 %v321
      %v354 = vunpack.c.l.bf16 %v322
      %v355 = vunpack.c.l.bf16 %v323
      %v356 = vunpack.c.l.bf16 %v324
      %v357 = vunpack.c.l.bf16 %v325
      %v358 = vunpack.c.l.bf16 %v326
      %v359 = vunpack.c.l.bf16 %v327
      %v360 = vunpack.c.l.bf16 %v328
      %v361 = vunpack.c.l.bf16 %v329
      %v362 = vunpack.c.l.bf16 %v330
      %v363 = vunpack.c.l.bf16 %v331
      %v364 = vunpack.c.l.bf16 %v332
      %v365 = vunpack.c.l.bf16 %v333
      %v366 = vunpack.c.l.bf16 %v334
      %v367 = vunpack.c.l.bf16 %v335
      %v368 = vunpack.c.l.bf16 %v336
      %v369 = vunpack.c.l.bf16 %v337
      %v370 = vunpack.c.l.bf16 %v338
      %v371 = vunpack.c.l.bf16 %v339
      %v372 = vunpack.c.l.bf16 %v340
      %v373 = vunpack.c.l.bf16 %v341
      %v374 = vld [vmem:[%s1] sm:$0x1]
      %v376 = vlaneseq
      %v377 = vshrl.u32 %v376, 7
      %v378 = vsub.s32 0, %v377
      %v379 = vrot.slane %v374, %v378
      %v381 = vmul.f32 %v342, %v379
      %v382 = vmul.f32 %v343, %v379
      %v383 = vmul.f32 %v344, %v379
      %v384 = vmul.f32 %v345, %v379
      %v385 = vmul.f32 %v346, %v379
      %v386 = vmul.f32 %v347, %v379
      %v387 = vmul.f32 %v348, %v379
      %v388 = vmul.f32 %v349, %v379
      %v389 = vmul.f32 %v350, %v379
      %v390 = vmul.f32 %v351, %v379
      %v391 = vmul.f32 %v352, %v379
      %v392 = vmul.f32 %v353, %v379
      %v393 = vmul.f32 %v354, %v379
      %v394 = vmul.f32 %v355, %v379
      %v395 = vmul.f32 %v356, %v379
      %v396 = vmul.f32 %v357, %v379
      %v397 = vmul.f32 %v358, %v379
      %v398 = vmul.f32 %v359, %v379
      %v399 = vmul.f32 %v360, %v379
      %v400 = vmul.f32 %v361, %v379
      %v401 = vmul.f32 %v362, %v379
      %v402 = vmul.f32 %v363, %v379
      %v403 = vmul.f32 %v364, %v379
      %v404 = vmul.f32 %v365, %v379
      %v405 = vmul.f32 %v366, %v379
      %v406 = vmul.f32 %v367, %v379
      %v407 = vmul.f32 %v368, %v379
      %v408 = vmul.f32 %v369, %v379
      %v409 = vmul.f32 %v370, %v379
      %v410 = vmul.f32 %v371, %v379
      %v411 = vmul.f32 %v372, %v379
      %v412 = vmul.f32 %v373, %v379
      %v413 = vld [vmem:[%s2] sm:$0x1]
      %v415 = vlaneseq
      %v416 = vshrl.u32 %v415, 7
      %v417 = vsub.s32 0, %v416
      %v418 = vrot.slane %v413, %v417
      %v420 = vadd.f32 %v381, %v418
      %v421 = vadd.f32 %v382, %v418
      %v422 = vadd.f32 %v383, %v418
      %v423 = vadd.f32 %v384, %v418
      %v424 = vadd.f32 %v385, %v418
      %v425 = vadd.f32 %v386, %v418
      %v426 = vadd.f32 %v387, %v418
      %v427 = vadd.f32 %v388, %v418
      %v428 = vadd.f32 %v389, %v418
      %v429 = vadd.f32 %v390, %v418
      %v430 = vadd.f32 %v391, %v418
      %v431 = vadd.f32 %v392, %v418
      %v432 = vadd.f32 %v393, %v418
      %v433 = vadd.f32 %v394, %v418
      %v434 = vadd.f32 %v395, %v418
      %v435 = vadd.f32 %v396, %v418
      %v436 = vadd.f32 %v397, %v418
      %v437 = vadd.f32 %v398, %v418
      %v438 = vadd.f32 %v399, %v418
      %v439 = vadd.f32 %v400, %v418
      %v440 = vadd.f32 %v401, %v418
      %v441 = vadd.f32 %v402, %v418
      %v442 = vadd.f32 %v403, %v418
      %v443 = vadd.f32 %v404, %v418
      %v444 = vadd.f32 %v405, %v418
      %v445 = vadd.f32 %v406, %v418
      %v446 = vadd.f32 %v407, %v418
      %v447 = vadd.f32 %v408, %v418
      %v448 = vadd.f32 %v409, %v418
      %v449 = vadd.f32 %v410, %v418
      %v450 = vadd.f32 %v411, %v418
      %v451 = vadd.f32 %v412, %v418
      %v452 = vmax.f32 %v420, 0.0
      %v453 = vmax.f32 %v421, 0.0
      %v454 = vmax.f32 %v422, 0.0
      %v455 = vmax.f32 %v423, 0.0
      %v456 = vmax.f32 %v424, 0.0
      %v457 = vmax.f32 %v425, 0.0
      %v458 = vmax.f32 %v426, 0.0
      %v459 = vmax.f32 %v427, 0.0
      %v460 = vmax.f32 %v428, 0.0
      %v461 = vmax.f32 %v429, 0.0
      %v462 = vmax.f32 %v430, 0.0
      %v463 = vmax.f32 %v431, 0.0
      %v464 = vmax.f32 %v432, 0.0
      %v465 = vmax.f32 %v433, 0.0
      %v466 = vmax.f32 %v434, 0.0
      %v467 = vmax.f32 %v435, 0.0
      %v468 = vmax.f32 %v436, 0.0
      %v469 = vmax.f32 %v437, 0.0
      %v470 = vmax.f32 %v438, 0.0
      %v471 = vmax.f32 %v439, 0.0
      %v472 = vmax.f32 %v440, 0.0
      %v473 = vmax.f32 %v441, 0.0
      %v474 = vmax.f32 %v442, 0.0
      %v475 = vmax.f32 %v443, 0.0
      %v476 = vmax.f32 %v444, 0.0
      %v477 = vmax.f32 %v445, 0.0
      %v478 = vmax.f32 %v446, 0.0
      %v479 = vmax.f32 %v447, 0.0
      %v480 = vmax.f32 %v448, 0.0
      %v481 = vmax.f32 %v449, 0.0
      %v482 = vmax.f32 %v450, 0.0
      %v483 = vmax.f32 %v451, 0.0
      %s484 = scalar_lea.vmem [#allocation2], 24
      %485 = vst.msk [vmem:[%s484 + $0x1] sm:$0xff] %vm264, %v452
      %486 = vst.msk [vmem:[%s484 + $0x9] sm:$0xff] %vm264, %v453
      %487 = vst.msk [vmem:[%s484 + $0x19] sm:$0xff] %vm264, %v454
      %488 = vst.msk [vmem:[%s484 + $0x21] sm:$0xff] %vm264, %v455
      %489 = vst.msk [vmem:[%s484 + $0x31] sm:$0xff] %vm264, %v456
      %490 = vst.msk [vmem:[%s484 + $0x39] sm:$0xff] %vm264, %v457
      %491 = vst.msk [vmem:[%s484 + $0x49] sm:$0xff] %vm264, %v458
      %492 = vst.msk [vmem:[%s484 + $0x51] sm:$0xff] %vm264, %v459
      %493 = vst.msk [vmem:[%s484 + $0x61] sm:$0xff] %vm264, %v460
      %494 = vst.msk [vmem:[%s484 + $0x69] sm:$0xff] %vm264, %v461
      %495 = vst.msk [vmem:[%s484 + $0x79] sm:$0xff] %vm264, %v462
      %496 = vst.msk [vmem:[%s484 + $0x81] sm:$0xff] %vm264, %v463
      %497 = vst.msk [vmem:[%s484 + $0x91] sm:$0xff] %vm264, %v464
      %498 = vst.msk [vmem:[%s484 + $0x99] sm:$0xff] %vm264, %v465
      %499 = vst.msk [vmem:[%s484 + $0xa9] sm:$0xff] %vm264, %v466
      %500 = vst.msk [vmem:[%s484 + $0xb1] sm:$0xff] %vm264, %v467
      %501 = vst.msk [vmem:[%s484 + $0xc1] sm:$0xff] %vm264, %v468
      %502 = vst.msk [vmem:[%s484 + $0xc9] sm:$0xff] %vm264, %v469
      %503 = vst.msk [vmem:[%s484 + $0xd9] sm:$0xff] %vm264, %v470
      %504 = vst.msk [vmem:[%s484 + $0xe1] sm:$0xff] %vm264, %v471
      %505 = vst.msk [vmem:[%s484 + $0xf1] sm:$0xff] %vm264, %v472
      %506 = vst.msk [vmem:[%s484 + $0xf9] sm:$0xff] %vm264, %v473
      %507 = vst.msk [vmem:[%s484 + $0x109] sm:$0xff] %vm264, %v474
      %508 = vst.msk [vmem:[%s484 + $0x111] sm:$0xff] %vm264, %v475
      %509 = vst.msk [vmem:[%s484 + $0x121] sm:$0xff] %vm264, %v476
      %510 = vst.msk [vmem:[%s484 + $0x129] sm:$0xff] %vm264, %v477
      %511 = vst.msk [vmem:[%s484 + $0x139] sm:$0xff] %vm264, %v478
      %512 = vst.msk [vmem:[%s484 + $0x141] sm:$0xff] %vm264, %v479
      %513 = vst.msk [vmem:[%s484 + $0x151] sm:$0xff] %vm264, %v480
      %514 = vst.msk [vmem:[%s484 + $0x159] sm:$0xff] %vm264, %v481
      %515 = vst.msk [vmem:[%s484 + $0x169] sm:$0xff] %vm264, %v482
      %516 = vst.msk [vmem:[%s484 + $0x171] sm:$0xff] %vm264, %v483
      %v517 = vld [vmem:[#allocation2] sm:$0xff]
      %v518 = vld [vmem:[#allocation2 + $0x8] sm:$0xff]
      %v519 = vld [vmem:[#allocation2 + $0x18] sm:$0xff]
      %v520 = vld [vmem:[#allocation2 + $0x20] sm:$0xff]
      %v521 = vld [vmem:[#allocation2 + $0x30] sm:$0xff]
      %v522 = vld [vmem:[#allocation2 + $0x38] sm:$0xff]
      %v523 = vld [vmem:[#allocation2 + $0x48] sm:$0xff]
      %v524 = vld [vmem:[#allocation2 + $0x50] sm:$0xff]
      %v525 = vld [vmem:[#allocation2 + $0x60] sm:$0xff]
      %v526 = vld [vmem:[#allocation2 + $0x68] sm:$0xff]
      %v527 = vld [vmem:[#allocation2 + $0x78] sm:$0xff]
      %v528 = vld [vmem:[#allocation2 + $0x80] sm:$0xff]
      %v529 = vld [vmem:[#allocation2 + $0x90] sm:$0xff]
      %v530 = vld [vmem:[#allocation2 + $0x98] sm:$0xff]
      %v531 = vld [vmem:[#allocation2 + $0xa8] sm:$0xff]
      %v532 = vld [vmem:[#allocation2 + $0xb0] sm:$0xff]
      %v533 = vld [vmem:[#allocation2 + $0xc0] sm:$0xff]
      %v534 = vld [vmem:[#allocation2 + $0xc8] sm:$0xff]
      %v535 = vld [vmem:[#allocation2 + $0xd8] sm:$0xff]
      %v536 = vld [vmem:[#allocation2 + $0xe0] sm:$0xff]
      %v537 = vld [vmem:[#allocation2 + $0xf0] sm:$0xff]
      %v538 = vld [vmem:[#allocation2 + $0xf8] sm:$0xff]
      %v539 = vld [vmem:[#allocation2 + $0x108] sm:$0xff]
      %v540 = vld [vmem:[#allocation2 + $0x110] sm:$0xff]
      %v541 = vld [vmem:[#allocation2 + $0x120] sm:$0xff]
      %v542 = vld [vmem:[#allocation2 + $0x128] sm:$0xff]
      %v543 = vld [vmem:[#allocation2 + $0x138] sm:$0xff]
      %v544 = vld [vmem:[#allocation2 + $0x140] sm:$0xff]
      %v545 = vld [vmem:[#allocation2 + $0x150] sm:$0xff]
      %v546 = vld [vmem:[#allocation2 + $0x158] sm:$0xff]
      %v547 = vld [vmem:[#allocation2 + $0x168] sm:$0xff]
      %v548 = vld [vmem:[#allocation2 + $0x170] sm:$0xff]
      %v549 = vpack.c.bf16 %v518, %v517
      %v550 = vpack.c.bf16 %v520, %v519
      %v551 = vpack.c.bf16 %v522, %v521
      %v552 = vpack.c.bf16 %v524, %v523
      %v553 = vpack.c.bf16 %v526, %v525
      %v554 = vpack.c.bf16 %v528, %v527
      %v555 = vpack.c.bf16 %v530, %v529
      %v556 = vpack.c.bf16 %v532, %v531
      %v557 = vpack.c.bf16 %v534, %v533
      %v558 = vpack.c.bf16 %v536, %v535
      %v559 = vpack.c.bf16 %v538, %v537
      %v560 = vpack.c.bf16 %v540, %v539
      %v561 = vpack.c.bf16 %v542, %v541
      %v562 = vpack.c.bf16 %v544, %v543
      %v563 = vpack.c.bf16 %v546, %v545
      %v564 = vpack.c.bf16 %v548, %v547
      %565 = vst.msk [vmem:[#allocation3] sm:$0xff] %vm264, %v549
      %566 = vst.msk [vmem:[#allocation3 + $0x8] sm:$0xff] %vm264, %v550
      %567 = vst.msk [vmem:[#allocation3 + $0x10] sm:$0xff] %vm264, %v551
      %568 = vst.msk [vmem:[#allocation3 + $0x18] sm:$0xff] %vm264, %v552
      %569 = vst.msk [vmem:[#allocation3 + $0x20] sm:$0xff] %vm264, %v553
      %570 = vst.msk [vmem:[#allocation3 + $0x28] sm:$0xff] %vm264, %v554
      %571 = vst.msk [vmem:[#allocation3 + $0x30] sm:$0xff] %vm264, %v555
      %572 = vst.msk [vmem:[#allocation3 + $0x38] sm:$0xff] %vm264, %v556
      %573 = vst.msk [vmem:[#allocation3 + $0x40] sm:$0xff] %vm264, %v557
      %574 = vst.msk [vmem:[#allocation3 + $0x48] sm:$0xff] %vm264, %v558
      %575 = vst.msk [vmem:[#allocation3 + $0x50] sm:$0xff] %vm264, %v559
      %576 = vst.msk [vmem:[#allocation3 + $0x58] sm:$0xff] %vm264, %v560
      %577 = vst.msk [vmem:[#allocation3 + $0x60] sm:$0xff] %vm264, %v561
      %578 = vst.msk [vmem:[#allocation3 + $0x68] sm:$0xff] %vm264, %v562
      %579 = vst.msk [vmem:[#allocation3 + $0x70] sm:$0xff] %vm264, %v563
      %580 = vst.msk [vmem:[#allocation3 + $0x78] sm:$0xff] %vm264, %v564
      %v581 = vld [vmem:[#allocation2 + $0x1] sm:$0xff]
      %v582 = vld [vmem:[#allocation2 + $0x9] sm:$0xff]
      %v583 = vld [vmem:[#allocation2 + $0x19] sm:$0xff]
      %v584 = vld [vmem:[#allocation2 + $0x21] sm:$0xff]
      %v585 = vld [vmem:[#allocation2 + $0x31] sm:$0xff]
      %v586 = vld [vmem:[#allocation2 + $0x39] sm:$0xff]
      %v587 = vld [vmem:[#allocation2 + $0x49] sm:$0xff]
      %v588 = vld [vmem:[#allocation2 + $0x51] sm:$0xff]
      %v589 = vld [vmem:[#allocation2 + $0x61] sm:$0xff]
      %v590 = vld [vmem:[#allocation2 + $0x69] sm:$0xff]
      %v591 = vld [vmem:[#allocation2 + $0x79] sm:$0xff]
      %v592 = vld [vmem:[#allocation2 + $0x81] sm:$0xff]
      %v593 = vld [vmem:[#allocation2 + $0x91] sm:$0xff]
      %v594 = vld [vmem:[#allocation2 + $0x99] sm:$0xff]
      %v595 = vld [vmem:[#allocation2 + $0xa9] sm:$0xff]
      %v596 = vld [vmem:[#allocation2 + $0xb1] sm:$0xff]
      %v597 = vld [vmem:[#allocation2 + $0xc1] sm:$0xff]
      %v598 = vld [vmem:[#allocation2 + $0xc9] sm:$0xff]
      %v599 = vld [vmem:[#allocation2 + $0xd9] sm:$0xff]
      %v600 = vld [vmem:[#allocation2 + $0xe1] sm:$0xff]
      %v601 = vld [vmem:[#allocation2 + $0xf1] sm:$0xff]
      %v602 = vld [vmem:[#allocation2 + $0xf9] sm:$0xff]
      %v603 = vld [vmem:[#allocation2 + $0x109] sm:$0xff]
      %v604 = vld [vmem:[#allocation2 + $0x111] sm:$0xff]
      %v605 = vld [vmem:[#allocation2 + $0x121] sm:$0xff]
      %v606 = vld [vmem:[#allocation2 + $0x129] sm:$0xff]
      %v607 = vld [vmem:[#allocation2 + $0x139] sm:$0xff]
      %v608 = vld [vmem:[#allocation2 + $0x141] sm:$0xff]
      %v609 = vld [vmem:[#allocation2 + $0x151] sm:$0xff]
      %v610 = vld [vmem:[#allocation2 + $0x159] sm:$0xff]
      %v611 = vld [vmem:[#allocation2 + $0x169] sm:$0xff]
      %v612 = vld [vmem:[#allocation2 + $0x171] sm:$0xff]
      %v613 = vpack.c.bf16 %v582, %v581
      %v614 = vpack.c.bf16 %v584, %v583
      %v615 = vpack.c.bf16 %v586, %v585
      %v616 = vpack.c.bf16 %v588, %v587
      %v617 = vpack.c.bf16 %v590, %v589
      %v618 = vpack.c.bf16 %v592, %v591
      %v619 = vpack.c.bf16 %v594, %v593
      %v620 = vpack.c.bf16 %v596, %v595
      %v621 = vpack.c.bf16 %v598, %v597
      %v622 = vpack.c.bf16 %v600, %v599
      %v623 = vpack.c.bf16 %v602, %v601
      %v624 = vpack.c.bf16 %v604, %v603
      %v625 = vpack.c.bf16 %v606, %v605
      %v626 = vpack.c.bf16 %v608, %v607
      %v627 = vpack.c.bf16 %v610, %v609
      %v628 = vpack.c.bf16 %v612, %v611
      %645 = vrot.lane.b32.xlu0 %v613, 4
      %v646 = vpop.permute.xlu0 %645
      %647 = vrot.lane.b32.xlu0 %v614, 4
      %v648 = vpop.permute.xlu0 %647
      %649 = vrot.lane.b32.xlu0 %v615, 4
      %v650 = vpop.permute.xlu0 %649
      %651 = vrot.lane.b32.xlu0 %v616, 4
      %v652 = vpop.permute.xlu0 %651
      %653 = vrot.lane.b32.xlu0 %v617, 4
      %v654 = vpop.permute.xlu0 %653
      %655 = vrot.lane.b32.xlu0 %v618, 4
      %v656 = vpop.permute.xlu0 %655
      %657 = vrot.lane.b32.xlu0 %v619, 4
      %v658 = vpop.permute.xlu0 %657
      %659 = vrot.lane.b32.xlu0 %v620, 4
      %v660 = vpop.permute.xlu0 %659
      %661 = vrot.lane.b32.xlu0 %v621, 4
      %v662 = vpop.permute.xlu0 %661
      %663 = vrot.lane.b32.xlu0 %v622, 4
      %v664 = vpop.permute.xlu0 %663
      %665 = vrot.lane.b32.xlu0 %v623, 4
      %v666 = vpop.permute.xlu0 %665
      %667 = vrot.lane.b32.xlu0 %v624, 4
      %v668 = vpop.permute.xlu0 %667
      %669 = vrot.lane.b32.xlu0 %v625, 4
      %v670 = vpop.permute.xlu0 %669
      %671 = vrot.lane.b32.xlu0 %v626, 4
      %v672 = vpop.permute.xlu0 %671
      %673 = vrot.lane.b32.xlu0 %v627, 4
      %v674 = vpop.permute.xlu0 %673
      %675 = vrot.lane.b32.xlu0 %v628, 4
      %v676 = vpop.permute.xlu0 %675
      %vm693 = vcmask 64544
      %694 = vst.msk [vmem:[#allocation3] sm:$0xff] %vm693, %v646
      %695 = vst.msk [vmem:[#allocation3 + $0x8] sm:$0xff] %vm693, %v648
      %696 = vst.msk [vmem:[#allocation3 + $0x10] sm:$0xff] %vm693, %v650
      %697 = vst.msk [vmem:[#allocation3 + $0x18] sm:$0xff] %vm693, %v652
      %698 = vst.msk [vmem:[#allocation3 + $0x20] sm:$0xff] %vm693, %v654
      %699 = vst.msk [vmem:[#allocation3 + $0x28] sm:$0xff] %vm693, %v656
      %700 = vst.msk [vmem:[#allocation3 + $0x30] sm:$0xff] %vm693, %v658
      %701 = vst.msk [vmem:[#allocation3 + $0x38] sm:$0xff] %vm693, %v660
      %702 = vst.msk [vmem:[#allocation3 + $0x40] sm:$0xff] %vm693, %v662
      %703 = vst.msk [vmem:[#allocation3 + $0x48] sm:$0xff] %vm693, %v664
      %704 = vst.msk [vmem:[#allocation3 + $0x50] sm:$0xff] %vm693, %v666
      %705 = vst.msk [vmem:[#allocation3 + $0x58] sm:$0xff] %vm693, %v668
      %706 = vst.msk [vmem:[#allocation3 + $0x60] sm:$0xff] %vm693, %v670
      %707 = vst.msk [vmem:[#allocation3 + $0x68] sm:$0xff] %vm693, %v672
      %708 = vst.msk [vmem:[#allocation3 + $0x70] sm:$0xff] %vm693, %v674
      %709 = vst.msk [vmem:[#allocation3 + $0x78] sm:$0xff] %vm693, %v676
      %v710 = vld [vmem:[#allocation2 + $0x2] sm:$0xff]
      %v711 = vld [vmem:[#allocation2 + $0xa] sm:$0xff]
      %v712 = vld [vmem:[#allocation2 + $0x1a] sm:$0xff]
      %v713 = vld [vmem:[#allocation2 + $0x22] sm:$0xff]
      %v714 = vld [vmem:[#allocation2 + $0x32] sm:$0xff]
      %v715 = vld [vmem:[#allocation2 + $0x3a] sm:$0xff]
      %v716 = vld [vmem:[#allocation2 + $0x4a] sm:$0xff]
      %v717 = vld [vmem:[#allocation2 + $0x52] sm:$0xff]
      %v718 = vld [vmem:[#allocation2 + $0x62] sm:$0xff]
      %v719 = vld [vmem:[#allocation2 + $0x6a] sm:$0xff]
      %v720 = vld [vmem:[#allocation2 + $0x7a] sm:$0xff]
      %v721 = vld [vmem:[#allocation2 + $0x82] sm:$0xff]
      %v722 = vld [vmem:[#allocation2 + $0x92] sm:$0xff]
      %v723 = vld [vmem:[#allocation2 + $0x9a] sm:$0xff]
      %v724 = vld [vmem:[#allocation2 + $0xaa] sm:$0xff]
      %v725 = vld [vmem:[#allocation2 + $0xb2] sm:$0xff]
      %v726 = vld [vmem:[#allocation2 + $0xc2] sm:$0xff]
      %v727 = vld [vmem:[#allocation2 + $0xca] sm:$0xff]
      %v728 = vld [vmem:[#allocation2 + $0xda] sm:$0xff]
      %v729 = vld [vmem:[#allocation2 + $0xe2] sm:$0xff]
      %v730 = vld [vmem:[#allocation2 + $0xf2] sm:$0xff]
      %v731 = vld [vmem:[#allocation2 + $0xfa] sm:$0xff]
      %v732 = vld [vmem:[#allocation2 + $0x10a] sm:$0xff]
      %v733 = vld [vmem:[#allocation2 + $0x112] sm:$0xff]
      %v734 = vld [vmem:[#allocation2 + $0x122] sm:$0xff]
      %v735 = vld [vmem:[#allocation2 + $0x12a] sm:$0xff]
      %v736 = vld [vmem:[#allocation2 + $0x13a] sm:$0xff]
      %v737 = vld [vmem:[#allocation2 + $0x142] sm:$0xff]
      %v738 = vld [vmem:[#allocation2 + $0x152] sm:$0xff]
      %v739 = vld [vmem:[#allocation2 + $0x15a] sm:$0xff]
      %v740 = vld [vmem:[#allocation2 + $0x16a] sm:$0xff]
      %v741 = vld [vmem:[#allocation2 + $0x172] sm:$0xff]
      %v742 = vpack.c.bf16 %v711, %v710
      %v743 = vpack.c.bf16 %v713, %v712
      %v744 = vpack.c.bf16 %v715, %v714
      %v745 = vpack.c.bf16 %v717, %v716
      %v746 = vpack.c.bf16 %v719, %v718
      %v747 = vpack.c.bf16 %v721, %v720
      %v748 = vpack.c.bf16 %v723, %v722
      %v749 = vpack.c.bf16 %v725, %v724
      %v750 = vpack.c.bf16 %v727, %v726
      %v751 = vpack.c.bf16 %v729, %v728
      %v752 = vpack.c.bf16 %v731, %v730
      %v753 = vpack.c.bf16 %v733, %v732
      %v754 = vpack.c.bf16 %v735, %v734
      %v755 = vpack.c.bf16 %v737, %v736
      %v756 = vpack.c.bf16 %v739, %v738
      %v757 = vpack.c.bf16 %v741, %v740
      %774 = vrot.lane.b32.xlu0 %v742, 8
      %v775 = vpop.permute.xlu0 %774
      %776 = vrot.lane.b32.xlu0 %v743, 8
      %v777 = vpop.permute.xlu0 %776
      %778 = vrot.lane.b32.xlu0 %v744, 8
      %v779 = vpop.permute.xlu0 %778
      %780 = vrot.lane.b32.xlu0 %v745, 8
      %v781 = vpop.permute.xlu0 %780
      %782 = vrot.lane.b32.xlu0 %v746, 8
      %v783 = vpop.permute.xlu0 %782
      %784 = vrot.lane.b32.xlu0 %v747, 8
      %v785 = vpop.permute.xlu0 %784
      %786 = vrot.lane.b32.xlu0 %v748, 8
      %v787 = vpop.permute.xlu0 %786
      %788 = vrot.lane.b32.xlu0 %v749, 8
      %v789 = vpop.permute.xlu0 %788
      %790 = vrot.lane.b32.xlu0 %v750, 8
      %v791 = vpop.permute.xlu0 %790
      %792 = vrot.lane.b32.xlu0 %v751, 8
      %v793 = vpop.permute.xlu0 %792
      %794 = vrot.lane.b32.xlu0 %v752, 8
      %v795 = vpop.permute.xlu0 %794
      %796 = vrot.lane.b32.xlu0 %v753, 8
      %v797 = vpop.permute.xlu0 %796
      %798 = vrot.lane.b32.xlu0 %v754, 8
      %v799 = vpop.permute.xlu0 %798
      %800 = vrot.lane.b32.xlu0 %v755, 8
      %v801 = vpop.permute.xlu0 %800
      %802 = vrot.lane.b32.xlu0 %v756, 8
      %v803 = vpop.permute.xlu0 %802
      %804 = vrot.lane.b32.xlu0 %v757, 8
      %v805 = vpop.permute.xlu0 %804
      %vm822 = vcmask 97344
      %823 = vst.msk [vmem:[#allocation3] sm:$0xff] %vm822, %v775
      %824 = vst.msk [vmem:[#allocation3 + $0x8] sm:$0xff] %vm822, %v777
      %825 = vst.msk [vmem:[#allocation3 + $0x10] sm:$0xff] %vm822, %v779
      %826 = vst.msk [vmem:[#allocation3 + $0x18] sm:$0xff] %vm822, %v781
      %827 = vst.msk [vmem:[#allocation3 + $0x20] sm:$0xff] %vm822, %v783
      %828 = vst.msk [vmem:[#allocation3 + $0x28] sm:$0xff] %vm822, %v785
      %829 = vst.msk [vmem:[#allocation3 + $0x30] sm:$0xff] %vm822, %v787
      %830 = vst.msk [vmem:[#allocation3 + $0x38] sm:$0xff] %vm822, %v789
      %831 = vst.msk [vmem:[#allocation3 + $0x40] sm:$0xff] %vm822, %v791
      %832 = vst.msk [vmem:[#allocation3 + $0x48] sm:$0xff] %vm822, %v793
      %833 = vst.msk [vmem:[#allocation3 + $0x50] sm:$0xff] %vm822, %v795
      %834 = vst.msk [vmem:[#allocation3 + $0x58] sm:$0xff] %vm822, %v797
      %835 = vst.msk [vmem:[#allocation3 + $0x60] sm:$0xff] %vm822, %v799
      %836 = vst.msk [vmem:[#allocation3 + $0x68] sm:$0xff] %vm822, %v801
      %837 = vst.msk [vmem:[#allocation3 + $0x70] sm:$0xff] %vm822, %v803
      %838 = vst.msk [vmem:[#allocation3 + $0x78] sm:$0xff] %vm822, %v805
      %v839 = vld [vmem:[%s484] sm:$0xff]
      %v840 = vld [vmem:[%s484 + $0x8] sm:$0xff]
      %v841 = vld [vmem:[%s484 + $0x18] sm:$0xff]
      %v842 = vld [vmem:[%s484 + $0x20] sm:$0xff]
      %v843 = vld [vmem:[%s484 + $0x30] sm:$0xff]
      %v844 = vld [vmem:[%s484 + $0x38] sm:$0xff]
      %v845 = vld [vmem:[%s484 + $0x48] sm:$0xff]
      %v846 = vld [vmem:[%s484 + $0x50] sm:$0xff]
      %v847 = vld [vmem:[%s484 + $0x60] sm:$0xff]
      %v848 = vld [vmem:[%s484 + $0x68] sm:$0xff]
      %v849 = vld [vmem:[%s484 + $0x78] sm:$0xff]
      %v850 = vld [vmem:[%s484 + $0x80] sm:$0xff]
      %v851 = vld [vmem:[%s484 + $0x90] sm:$0xff]
      %v852 = vld [vmem:[%s484 + $0x98] sm:$0xff]
      %v853 = vld [vmem:[%s484 + $0xa8] sm:$0xff]
      %v854 = vld [vmem:[%s484 + $0xb0] sm:$0xff]
      %v855 = vld [vmem:[%s484 + $0xc0] sm:$0xff]
      %v856 = vld [vmem:[%s484 + $0xc8] sm:$0xff]
      %v857 = vld [vmem:[%s484 + $0xd8] sm:$0xff]
      %v858 = vld [vmem:[%s484 + $0xe0] sm:$0xff]
      %v859 = vld [vmem:[%s484 + $0xf0] sm:$0xff]
      %v860 = vld [vmem:[%s484 + $0xf8] sm:$0xff]
      %v861 = vld [vmem:[%s484 + $0x108] sm:$0xff]
      %v862 = vld [vmem:[%s484 + $0x110] sm:$0xff]
      %v863 = vld [vmem:[%s484 + $0x120] sm:$0xff]
      %v864 = vld [vmem:[%s484 + $0x128] sm:$0xff]
      %v865 = vld [vmem:[%s484 + $0x138] sm:$0xff]
      %v866 = vld [vmem:[%s484 + $0x140] sm:$0xff]
      %v867 = vld [vmem:[%s484 + $0x150] sm:$0xff]
      %v868 = vld [vmem:[%s484 + $0x158] sm:$0xff]
      %v869 = vld [vmem:[%s484 + $0x168] sm:$0xff]
      %v870 = vld [vmem:[%s484 + $0x170] sm:$0xff]
      %v871 = vpack.c.bf16 %v840, %v839
      %v872 = vpack.c.bf16 %v842, %v841
      %v873 = vpack.c.bf16 %v844, %v843
      %v874 = vpack.c.bf16 %v846, %v845
      %v875 = vpack.c.bf16 %v848, %v847
      %v876 = vpack.c.bf16 %v850, %v849
      %v877 = vpack.c.bf16 %v852, %v851
      %v878 = vpack.c.bf16 %v854, %v853
      %v879 = vpack.c.bf16 %v856, %v855
      %v880 = vpack.c.bf16 %v858, %v857
      %v881 = vpack.c.bf16 %v860, %v859
      %v882 = vpack.c.bf16 %v862, %v861
      %v883 = vpack.c.bf16 %v864, %v863
      %v884 = vpack.c.bf16 %v866, %v865
      %v885 = vpack.c.bf16 %v868, %v867
      %v886 = vpack.c.bf16 %v870, %v869
      %903 = vrot.lane.b32.xlu0 %v871, 12
      %v904 = vpop.permute.xlu0 %903
      %905 = vrot.lane.b32.xlu0 %v872, 12
      %v906 = vpop.permute.xlu0 %905
      %907 = vrot.lane.b32.xlu0 %v873, 12
      %v908 = vpop.permute.xlu0 %907
      %909 = vrot.lane.b32.xlu0 %v874, 12
      %v910 = vpop.permute.xlu0 %909
      %911 = vrot.lane.b32.xlu0 %v875, 12
      %v912 = vpop.permute.xlu0 %911
      %913 = vrot.lane.b32.xlu0 %v876, 12
      %v914 = vpop.permute.xlu0 %913
      %915 = vrot.lane.b32.xlu0 %v877, 12
      %v916 = vpop.permute.xlu0 %915
      %917 = vrot.lane.b32.xlu0 %v878, 12
      %v918 = vpop.permute.xlu0 %917
      %919 = vrot.lane.b32.xlu0 %v879, 12
      %v920 = vpop.permute.xlu0 %919
      %921 = vrot.lane.b32.xlu0 %v880, 12
      %v922 = vpop.permute.xlu0 %921
      %923 = vrot.lane.b32.xlu0 %v881, 12
      %v924 = vpop.permute.xlu0 %923
      %925 = vrot.lane.b32.xlu0 %v882, 12
      %v926 = vpop.permute.xlu0 %925
      %927 = vrot.lane.b32.xlu0 %v883, 12
      %v928 = vpop.permute.xlu0 %927
      %929 = vrot.lane.b32.xlu0 %v884, 12
      %v930 = vpop.permute.xlu0 %929
      %931 = vrot.lane.b32.xlu0 %v885, 12
      %v932 = vpop.permute.xlu0 %931
      %933 = vrot.lane.b32.xlu0 %v886, 12
      %v934 = vpop.permute.xlu0 %933
      %vm951 = vcmask 130144
      %952 = vst.msk [vmem:[#allocation3] sm:$0xff] %vm951, %v904
      %953 = vst.msk [vmem:[#allocation3 + $0x8] sm:$0xff] %vm951, %v906
      %954 = vst.msk [vmem:[#allocation3 + $0x10] sm:$0xff] %vm951, %v908
      %955 = vst.msk [vmem:[#allocation3 + $0x18] sm:$0xff] %vm951, %v910
      %956 = vst.msk [vmem:[#allocation3 + $0x20] sm:$0xff] %vm951, %v912
      %957 = vst.msk [vmem:[#allocation3 + $0x28] sm:$0xff] %vm951, %v914
      %958 = vst.msk [vmem:[#allocation3 + $0x30] sm:$0xff] %vm951, %v916
      %959 = vst.msk [vmem:[#allocation3 + $0x38] sm:$0xff] %vm951, %v918
      %960 = vst.msk [vmem:[#allocation3 + $0x40] sm:$0xff] %vm951, %v920
      %961 = vst.msk [vmem:[#allocation3 + $0x48] sm:$0xff] %vm951, %v922
      %962 = vst.msk [vmem:[#allocation3 + $0x50] sm:$0xff] %vm951, %v924
      %963 = vst.msk [vmem:[#allocation3 + $0x58] sm:$0xff] %vm951, %v926
      %964 = vst.msk [vmem:[#allocation3 + $0x60] sm:$0xff] %vm951, %v928
      %965 = vst.msk [vmem:[#allocation3 + $0x68] sm:$0xff] %vm951, %v930
      %966 = vst.msk [vmem:[#allocation3 + $0x70] sm:$0xff] %vm951, %v932
      %967 = vst.msk [vmem:[#allocation3 + $0x78] sm:$0xff] %vm951, %v934
      %v968 = vld [vmem:[%s484 + $0x1] sm:$0xff]
      %v969 = vld [vmem:[%s484 + $0x9] sm:$0xff]
      %v970 = vld [vmem:[%s484 + $0x19] sm:$0xff]
      %v971 = vld [vmem:[%s484 + $0x21] sm:$0xff]
      %v972 = vld [vmem:[%s484 + $0x31] sm:$0xff]
      %v973 = vld [vmem:[%s484 + $0x39] sm:$0xff]
      %v974 = vld [vmem:[%s484 + $0x49] sm:$0xff]
      %v975 = vld [vmem:[%s484 + $0x51] sm:$0xff]
      %v976 = vld [vmem:[%s484 + $0x61] sm:$0xff]
      %v977 = vld [vmem:[%s484 + $0x69] sm:$0xff]
      %v978 = vld [vmem:[%s484 + $0x79] sm:$0xff]
      %v979 = vld [vmem:[%s484 + $0x81] sm:$0xff]
      %v980 = vld [vmem:[%s484 + $0x91] sm:$0xff]
      %v981 = vld [vmem:[%s484 + $0x99] sm:$0xff]
      %v982 = vld [vmem:[%s484 + $0xa9] sm:$0xff]
      %v983 = vld [vmem:[%s484 + $0xb1] sm:$0xff]
      %v984 = vld [vmem:[%s484 + $0xc1] sm:$0xff]
      %v985 = vld [vmem:[%s484 + $0xc9] sm:$0xff]
      %v986 = vld [vmem:[%s484 + $0xd9] sm:$0xff]
      %v987 = vld [vmem:[%s484 + $0xe1] sm:$0xff]
      %v988 = vld [vmem:[%s484 + $0xf1] sm:$0xff]
      %v989 = vld [vmem:[%s484 + $0xf9] sm:$0xff]
      %v990 = vld [vmem:[%s484 + $0x109] sm:$0xff]
      %v991 = vld [vmem:[%s484 + $0x111] sm:$0xff]
      %v992 = vld [vmem:[%s484 + $0x121] sm:$0xff]
      %v993 = vld [vmem:[%s484 + $0x129] sm:$0xff]
      %v994 = vld [vmem:[%s484 + $0x139] sm:$0xff]
      %v995 = vld [vmem:[%s484 + $0x141] sm:$0xff]
      %v996 = vld [vmem:[%s484 + $0x151] sm:$0xff]
      %v997 = vld [vmem:[%s484 + $0x159] sm:$0xff]
      %v998 = vld [vmem:[%s484 + $0x169] sm:$0xff]
      %v999 = vld [vmem:[%s484 + $0x171] sm:$0xff]
      %v1000 = vpack.c.bf16 %v969, %v968
      %v1001 = vpack.c.bf16 %v971, %v970
      %v1002 = vpack.c.bf16 %v973, %v972
      %v1003 = vpack.c.bf16 %v975, %v974
      %v1004 = vpack.c.bf16 %v977, %v976
      %v1005 = vpack.c.bf16 %v979, %v978
      %v1006 = vpack.c.bf16 %v981, %v980
      %v1007 = vpack.c.bf16 %v983, %v982
      %v1008 = vpack.c.bf16 %v985, %v984
      %v1009 = vpack.c.bf16 %v987, %v986
      %v1010 = vpack.c.bf16 %v989, %v988
      %v1011 = vpack.c.bf16 %v991, %v990
      %v1012 = vpack.c.bf16 %v993, %v992
      %v1013 = vpack.c.bf16 %v995, %v994
      %v1014 = vpack.c.bf16 %v997, %v996
      %v1015 = vpack.c.bf16 %v999, %v998
      %1032 = vrot.lane.b32.xlu0 %v1000, 16
      %v1033 = vpop.permute.xlu0 %1032
      %1034 = vrot.lane.b32.xlu0 %v1001, 16
      %v1035 = vpop.permute.xlu0 %1034
      %1036 = vrot.lane.b32.xlu0 %v1002, 16
      %v1037 = vpop.permute.xlu0 %1036
      %1038 = vrot.lane.b32.xlu0 %v1003, 16
      %v1039 = vpop.permute.xlu0 %1038
      %1040 = vrot.lane.b32.xlu0 %v1004, 16
      %v1041 = vpop.permute.xlu0 %1040
      %1042 = vrot.lane.b32.xlu0 %v1005, 16
      %v1043 = vpop.permute.xlu0 %1042
      %1044 = vrot.lane.b32.xlu0 %v1006, 16
      %v1045 = vpop.permute.xlu0 %1044
      %1046 = vrot.lane.b32.xlu0 %v1007, 16
      %v1047 = vpop.permute.xlu0 %1046
      %1048 = vrot.lane.b32.xlu0 %v1008, 16
      %v1049 = vpop.permute.xlu0 %1048
      %1050 = vrot.lane.b32.xlu0 %v1009, 16
      %v1051 = vpop.permute.xlu0 %1050
      %1052 = vrot.lane.b32.xlu0 %v1010, 16
      %v1053 = vpop.permute.xlu0 %1052
      %1054 = vrot.lane.b32.xlu0 %v1011, 16
      %v1055 = vpop.permute.xlu0 %1054
      %1056 = vrot.lane.b32.xlu0 %v1012, 16
      %v1057 = vpop.permute.xlu0 %1056
      %1058 = vrot.lane.b32.xlu0 %v1013, 16
      %v1059 = vpop.permute.xlu0 %1058
      %1060 = vrot.lane.b32.xlu0 %v1014, 16
      %v1061 = vpop.permute.xlu0 %1060
      %1062 = vrot.lane.b32.xlu0 %v1015, 16
      %v1063 = vpop.permute.xlu0 %1062
      %vm1080 = vcmask 162944
      %1081 = vst.msk [vmem:[#allocation3] sm:$0xff] %vm1080, %v1033
      %1082 = vst.msk [vmem:[#allocation3 + $0x8] sm:$0xff] %vm1080, %v1035
      %1083 = vst.msk [vmem:[#allocation3 + $0x10] sm:$0xff] %vm1080, %v1037
      %1084 = vst.msk [vmem:[#allocation3 + $0x18] sm:$0xff] %vm1080, %v1039
      %1085 = vst.msk [vmem:[#allocation3 + $0x20] sm:$0xff] %vm1080, %v1041
      %1086 = vst.msk [vmem:[#allocation3 + $0x28] sm:$0xff] %vm1080, %v1043
      %1087 = vst.msk [vmem:[#allocation3 + $0x30] sm:$0xff] %vm1080, %v1045
      %1088 = vst.msk [vmem:[#allocation3 + $0x38] sm:$0xff] %vm1080, %v1047
      %1089 = vst.msk [vmem:[#allocation3 + $0x40] sm:$0xff] %vm1080, %v1049
      %1090 = vst.msk [vmem:[#allocation3 + $0x48] sm:$0xff] %vm1080, %v1051
      %1091 = vst.msk [vmem:[#allocation3 + $0x50] sm:$0xff] %vm1080, %v1053
      %1092 = vst.msk [vmem:[#allocation3 + $0x58] sm:$0xff] %vm1080, %v1055
      %1093 = vst.msk [vmem:[#allocation3 + $0x60] sm:$0xff] %vm1080, %v1057
      %1094 = vst.msk [vmem:[#allocation3 + $0x68] sm:$0xff] %vm1080, %v1059
      %1095 = vst.msk [vmem:[#allocation3 + $0x70] sm:$0xff] %vm1080, %v1061
      %1096 = vst.msk [vmem:[#allocation3 + $0x78] sm:$0xff] %vm1080, %v1063
      %v1097 = vld [vmem:[%s484 + $0x2] sm:$0xff]
      %v1098 = vld [vmem:[%s484 + $0xa] sm:$0xff]
      %v1099 = vld [vmem:[%s484 + $0x1a] sm:$0xff]
      %v1100 = vld [vmem:[%s484 + $0x22] sm:$0xff]
      %v1101 = vld [vmem:[%s484 + $0x32] sm:$0xff]
      %v1102 = vld [vmem:[%s484 + $0x3a] sm:$0xff]
      %v1103 = vld [vmem:[%s484 + $0x4a] sm:$0xff]
      %v1104 = vld [vmem:[%s484 + $0x52] sm:$0xff]
      %v1105 = vld [vmem:[%s484 + $0x62] sm:$0xff]
      %v1106 = vld [vmem:[%s484 + $0x6a] sm:$0xff]
      %v1107 = vld [vmem:[%s484 + $0x7a] sm:$0xff]
      %v1108 = vld [vmem:[%s484 + $0x82] sm:$0xff]
      %v1109 = vld [vmem:[%s484 + $0x92] sm:$0xff]
      %v1110 = vld [vmem:[%s484 + $0x9a] sm:$0xff]
      %v1111 = vld [vmem:[%s484 + $0xaa] sm:$0xff]
      %v1112 = vld [vmem:[%s484 + $0xb2] sm:$0xff]
      %v1113 = vld [vmem:[%s484 + $0xc2] sm:$0xff]
      %v1114 = vld [vmem:[%s484 + $0xca] sm:$0xff]
      %v1115 = vld [vmem:[%s484 + $0xda] sm:$0xff]
      %v1116 = vld [vmem:[%s484 + $0xe2] sm:$0xff]
      %v1117 = vld [vmem:[%s484 + $0xf2] sm:$0xff]
      %v1118 = vld [vmem:[%s484 + $0xfa] sm:$0xff]
      %v1119 = vld [vmem:[%s484 + $0x10a] sm:$0xff]
      %v1120 = vld [vmem:[%s484 + $0x112] sm:$0xff]
      %v1121 = vld [vmem:[%s484 + $0x122] sm:$0xff]
      %v1122 = vld [vmem:[%s484 + $0x12a] sm:$0xff]
      %v1123 = vld [vmem:[%s484 + $0x13a] sm:$0xff]
      %v1124 = vld [vmem:[%s484 + $0x142] sm:$0xff]
      %v1125 = vld [vmem:[%s484 + $0x152] sm:$0xff]
      %v1126 = vld [vmem:[%s484 + $0x15a] sm:$0xff]
      %v1127 = vld [vmem:[%s484 + $0x16a] sm:$0xff]
      %v1128 = vld [vmem:[%s484 + $0x172] sm:$0xff]
      %v1129 = vpack.c.bf16 %v1098, %v1097
      %v1130 = vpack.c.bf16 %v1100, %v1099
      %v1131 = vpack.c.bf16 %v1102, %v1101
      %v1132 = vpack.c.bf16 %v1104, %v1103
      %v1133 = vpack.c.bf16 %v1106, %v1105
      %v1134 = vpack.c.bf16 %v1108, %v1107
      %v1135 = vpack.c.bf16 %v1110, %v1109
      %v1136 = vpack.c.bf16 %v1112, %v1111
      %v1137 = vpack.c.bf16 %v1114, %v1113
      %v1138 = vpack.c.bf16 %v1116, %v1115
      %v1139 = vpack.c.bf16 %v1118, %v1117
      %v1140 = vpack.c.bf16 %v1120, %v1119
      %v1141 = vpack.c.bf16 %v1122, %v1121
      %v1142 = vpack.c.bf16 %v1124, %v1123
      %v1143 = vpack.c.bf16 %v1126, %v1125
      %v1144 = vpack.c.bf16 %v1128, %v1127
      %1161 = vrot.lane.b32.xlu0 %v1129, 20
      %v1162 = vpop.permute.xlu0 %1161
      %1163 = vrot.lane.b32.xlu0 %v1130, 20
      %v1164 = vpop.permute.xlu0 %1163
      %1165 = vrot.lane.b32.xlu0 %v1131, 20
      %v1166 = vpop.permute.xlu0 %1165
      %1167 = vrot.lane.b32.xlu0 %v1132, 20
      %v1168 = vpop.permute.xlu0 %1167
      %1169 = vrot.lane.b32.xlu0 %v1133, 20
      %v1170 = vpop.permute.xlu0 %1169
      %1171 = vrot.lane.b32.xlu0 %v1134, 20
      %v1172 = vpop.permute.xlu0 %1171
      %1173 = vrot.lane.b32.xlu0 %v1135, 20
      %v1174 = vpop.permute.xlu0 %1173
      %1175 = vrot.lane.b32.xlu0 %v1136, 20
      %v1176 = vpop.permute.xlu0 %1175
      %1177 = vrot.lane.b32.xlu0 %v1137, 20
      %v1178 = vpop.permute.xlu0 %1177
      %1179 = vrot.lane.b32.xlu0 %v1138, 20
      %v1180 = vpop.permute.xlu0 %1179
      %1181 = vrot.lane.b32.xlu0 %v1139, 20
      %v1182 = vpop.permute.xlu0 %1181
      %1183 = vrot.lane.b32.xlu0 %v1140, 20
      %v1184 = vpop.permute.xlu0 %1183
      %1185 = vrot.lane.b32.xlu0 %v1141, 20
      %v1186 = vpop.permute.xlu0 %1185
      %1187 = vrot.lane.b32.xlu0 %v1142, 20
      %v1188 = vpop.permute.xlu0 %1187
      %1189 = vrot.lane.b32.xlu0 %v1143, 20
      %v1190 = vpop.permute.xlu0 %1189
      %1191 = vrot.lane.b32.xlu0 %v1144, 20
      %v1192 = vpop.permute.xlu0 %1191
      %vm1209 = vcmask 195744
      %1210 = vst.msk [vmem:[#allocation3] sm:$0xff] %vm1209, %v1162
      %1211 = vst.msk [vmem:[#allocation3 + $0x8] sm:$0xff] %vm1209, %v1164
      %1212 = vst.msk [vmem:[#allocation3 + $0x10] sm:$0xff] %vm1209, %v1166
      %1213 = vst.msk [vmem:[#allocation3 + $0x18] sm:$0xff] %vm1209, %v1168
      %1214 = vst.msk [vmem:[#allocation3 + $0x20] sm:$0xff] %vm1209, %v1170
      %1215 = vst.msk [vmem:[#allocation3 + $0x28] sm:$0xff] %vm1209, %v1172
      %1216 = vst.msk [vmem:[#allocation3 + $0x30] sm:$0xff] %vm1209, %v1174
      %1217 = vst.msk [vmem:[#allocation3 + $0x38] sm:$0xff] %vm1209, %v1176
      %1218 = vst.msk [vmem:[#allocation3 + $0x40] sm:$0xff] %vm1209, %v1178
      %1219 = vst.msk [vmem:[#allocation3 + $0x48] sm:$0xff] %vm1209, %v1180
      %1220 = vst.msk [vmem:[#allocation3 + $0x50] sm:$0xff] %vm1209, %v1182
      %1221 = vst.msk [vmem:[#allocation3 + $0x58] sm:$0xff] %vm1209, %v1184
      %1222 = vst.msk [vmem:[#allocation3 + $0x60] sm:$0xff] %vm1209, %v1186
      %1223 = vst.msk [vmem:[#allocation3 + $0x68] sm:$0xff] %vm1209, %v1188
      %1224 = vst.msk [vmem:[#allocation3 + $0x70] sm:$0xff] %vm1209, %v1190
      %1225 = vst.msk [vmem:[#allocation3 + $0x78] sm:$0xff] %vm1209, %v1192
      %s1226 = scalar_lea.vmem [#allocation2], 48
      %v1227 = vld [vmem:[%s1226] sm:$0xff]
      %v1228 = vld [vmem:[%s1226 + $0x8] sm:$0xff]
      %v1229 = vld [vmem:[%s1226 + $0x18] sm:$0xff]
      %v1230 = vld [vmem:[%s1226 + $0x20] sm:$0xff]
      %v1231 = vld [vmem:[%s1226 + $0x30] sm:$0xff]
      %v1232 = vld [vmem:[%s1226 + $0x38] sm:$0xff]
      %v1233 = vld [vmem:[%s1226 + $0x48] sm:$0xff]
      %v1234 = vld [vmem:[%s1226 + $0x50] sm:$0xff]
      %v1235 = vld [vmem:[%s1226 + $0x60] sm:$0xff]
      %v1236 = vld [vmem:[%s1226 + $0x68] sm:$0xff]
      %v1237 = vld [vmem:[%s1226 + $0x78] sm:$0xff]
      %v1238 = vld [vmem:[%s1226 + $0x80] sm:$0xff]
      %v1239 = vld [vmem:[%s1226 + $0x90] sm:$0xff]
      %v1240 = vld [vmem:[%s1226 + $0x98] sm:$0xff]
      %v1241 = vld [vmem:[%s1226 + $0xa8] sm:$0xff]
      %v1242 = vld [vmem:[%s1226 + $0xb0] sm:$0xff]
      %v1243 = vld [vmem:[%s1226 + $0xc0] sm:$0xff]
      %v1244 = vld [vmem:[%s1226 + $0xc8] sm:$0xff]
      %v1245 = vld [vmem:[%s1226 + $0xd8] sm:$0xff]
      %v1246 = vld [vmem:[%s1226 + $0xe0] sm:$0xff]
      %v1247 = vld [vmem:[%s1226 + $0xf0] sm:$0xff]
      %v1248 = vld [vmem:[%s1226 + $0xf8] sm:$0xff]
      %v1249 = vld [vmem:[%s1226 + $0x108] sm:$0xff]
      %v1250 = vld [vmem:[%s1226 + $0x110] sm:$0xff]
      %v1251 = vld [vmem:[%s1226 + $0x120] sm:$0xff]
      %v1252 = vld [vmem:[%s1226 + $0x128] sm:$0xff]
      %v1253 = vld [vmem:[%s1226 + $0x138] sm:$0xff]
      %v1254 = vld [vmem:[%s1226 + $0x140] sm:$0xff]
      %v1255 = vld [vmem:[%s1226 + $0x150] sm:$0xff]
      %v1256 = vld [vmem:[%s1226 + $0x158] sm:$0xff]
      %v1257 = vld [vmem:[%s1226 + $0x168] sm:$0xff]
      %v1258 = vld [vmem:[%s1226 + $0x170] sm:$0xff]
      %v1259 = vpack.c.bf16 %v1228, %v1227
      %v1260 = vpack.c.bf16 %v1230, %v1229
      %v1261 = vpack.c.bf16 %v1232, %v1231
      %v1262 = vpack.c.bf16 %v1234, %v1233
      %v1263 = vpack.c.bf16 %v1236, %v1235
      %v1264 = vpack.c.bf16 %v1238, %v1237
      %v1265 = vpack.c.bf16 %v1240, %v1239
      %v1266 = vpack.c.bf16 %v1242, %v1241
      %v1267 = vpack.c.bf16 %v1244, %v1243
      %v1268 = vpack.c.bf16 %v1246, %v1245
      %v1269 = vpack.c.bf16 %v1248, %v1247
      %v1270 = vpack.c.bf16 %v1250, %v1249
      %v1271 = vpack.c.bf16 %v1252, %v1251
      %v1272 = vpack.c.bf16 %v1254, %v1253
      %v1273 = vpack.c.bf16 %v1256, %v1255
      %v1274 = vpack.c.bf16 %v1258, %v1257
      %1291 = vrot.lane.b32.xlu0 %v1259, 24
      %v1292 = vpop.permute.xlu0 %1291
      %1293 = vrot.lane.b32.xlu0 %v1260, 24
      %v1294 = vpop.permute.xlu0 %1293
      %1295 = vrot.lane.b32.xlu0 %v1261, 24
      %v1296 = vpop.permute.xlu0 %1295
      %1297 = vrot.lane.b32.xlu0 %v1262, 24
      %v1298 = vpop.permute.xlu0 %1297
      %1299 = vrot.lane.b32.xlu0 %v1263, 24
      %v1300 = vpop.permute.xlu0 %1299
      %1301 = vrot.lane.b32.xlu0 %v1264, 24
      %v1302 = vpop.permute.xlu0 %1301
      %1303 = vrot.lane.b32.xlu0 %v1265, 24
      %v1304 = vpop.permute.xlu0 %1303
      %1305 = vrot.lane.b32.xlu0 %v1266, 24
      %v1306 = vpop.permute.xlu0 %1305
      %1307 = vrot.lane.b32.xlu0 %v1267, 24
      %v1308 = vpop.permute.xlu0 %1307
      %1309 = vrot.lane.b32.xlu0 %v1268, 24
      %v1310 = vpop.permute.xlu0 %1309
      %1311 = vrot.lane.b32.xlu0 %v1269, 24
      %v1312 = vpop.permute.xlu0 %1311
      %1313 = vrot.lane.b32.xlu0 %v1270, 24
      %v1314 = vpop.permute.xlu0 %1313
      %1315 = vrot.lane.b32.xlu0 %v1271, 24
      %v1316 = vpop.permute.xlu0 %1315
      %1317 = vrot.lane.b32.xlu0 %v1272, 24
      %v1318 = vpop.permute.xlu0 %1317
      %1319 = vrot.lane.b32.xlu0 %v1273, 24
      %v1320 = vpop.permute.xlu0 %1319
      %1321 = vrot.lane.b32.xlu0 %v1274, 24
      %v1322 = vpop.permute.xlu0 %1321
      %vm1339 = vcmask 228544
      %1340 = vst.msk [vmem:[#allocation3] sm:$0xff] %vm1339, %v1292
      %1341 = vst.msk [vmem:[#allocation3 + $0x8] sm:$0xff] %vm1339, %v1294
      %1342 = vst.msk [vmem:[#allocation3 + $0x10] sm:$0xff] %vm1339, %v1296
      %1343 = vst.msk [vmem:[#allocation3 + $0x18] sm:$0xff] %vm1339, %v1298
      %1344 = vst.msk [vmem:[#allocation3 + $0x20] sm:$0xff] %vm1339, %v1300
      %1345 = vst.msk [vmem:[#allocation3 + $0x28] sm:$0xff] %vm1339, %v1302
      %1346 = vst.msk [vmem:[#allocation3 + $0x30] sm:$0xff] %vm1339, %v1304
      %1347 = vst.msk [vmem:[#allocation3 + $0x38] sm:$0xff] %vm1339, %v1306
      %1348 = vst.msk [vmem:[#allocation3 + $0x40] sm:$0xff] %vm1339, %v1308
      %1349 = vst.msk [vmem:[#allocation3 + $0x48] sm:$0xff] %vm1339, %v1310
      %1350 = vst.msk [vmem:[#allocation3 + $0x50] sm:$0xff] %vm1339, %v1312
      %1351 = vst.msk [vmem:[#allocation3 + $0x58] sm:$0xff] %vm1339, %v1314
      %1352 = vst.msk [vmem:[#allocation3 + $0x60] sm:$0xff] %vm1339, %v1316
      %1353 = vst.msk [vmem:[#allocation3 + $0x68] sm:$0xff] %vm1339, %v1318
      %1354 = vst.msk [vmem:[#allocation3 + $0x70] sm:$0xff] %vm1339, %v1320
      %1355 = vst.msk [vmem:[#allocation3 + $0x78] sm:$0xff] %vm1339, %v1322
      %v1356 = vld [vmem:[%s1226 + $0x1] sm:$0xff]
      %v1357 = vld [vmem:[%s1226 + $0x9] sm:$0xff]
      %v1358 = vld [vmem:[%s1226 + $0x19] sm:$0xff]
      %v1359 = vld [vmem:[%s1226 + $0x21] sm:$0xff]
      %v1360 = vld [vmem:[%s1226 + $0x31] sm:$0xff]
      %v1361 = vld [vmem:[%s1226 + $0x39] sm:$0xff]
      %v1362 = vld [vmem:[%s1226 + $0x49] sm:$0xff]
      %v1363 = vld [vmem:[%s1226 + $0x51] sm:$0xff]
      %v1364 = vld [vmem:[%s1226 + $0x61] sm:$0xff]
      %v1365 = vld [vmem:[%s1226 + $0x69] sm:$0xff]
      %v1366 = vld [vmem:[%s1226 + $0x79] sm:$0xff]
      %v1367 = vld [vmem:[%s1226 + $0x81] sm:$0xff]
      %v1368 = vld [vmem:[%s1226 + $0x91] sm:$0xff]
      %v1369 = vld [vmem:[%s1226 + $0x99] sm:$0xff]
      %v1370 = vld [vmem:[%s1226 + $0xa9] sm:$0xff]
      %v1371 = vld [vmem:[%s1226 + $0xb1] sm:$0xff]
      %v1372 = vld [vmem:[%s1226 + $0xc1] sm:$0xff]
      %v1373 = vld [vmem:[%s1226 + $0xc9] sm:$0xff]
      %v1374 = vld [vmem:[%s1226 + $0xd9] sm:$0xff]
      %v1375 = vld [vmem:[%s1226 + $0xe1] sm:$0xff]
      %v1376 = vld [vmem:[%s1226 + $0xf1] sm:$0xff]
      %v1377 = vld [vmem:[%s1226 + $0xf9] sm:$0xff]
      %v1378 = vld [vmem:[%s1226 + $0x109] sm:$0xff]
      %v1379 = vld [vmem:[%s1226 + $0x111] sm:$0xff]
      %v1380 = vld [vmem:[%s1226 + $0x121] sm:$0xff]
      %v1381 = vld [vmem:[%s1226 + $0x129] sm:$0xff]
      %v1382 = vld [vmem:[%s1226 + $0x139] sm:$0xff]
      %v1383 = vld [vmem:[%s1226 + $0x141] sm:$0xff]
      %v1384 = vld [vmem:[%s1226 + $0x151] sm:$0xff]
      %v1385 = vld [vmem:[%s1226 + $0x159] sm:$0xff]
      %v1386 = vld [vmem:[%s1226 + $0x169] sm:$0xff]
      %v1387 = vld [vmem:[%s1226 + $0x171] sm:$0xff]
      %v1388 = vpack.c.bf16 %v1357, %v1356
      %v1389 = vpack.c.bf16 %v1359, %v1358
      %v1390 = vpack.c.bf16 %v1361, %v1360
      %v1391 = vpack.c.bf16 %v1363, %v1362
      %v1392 = vpack.c.bf16 %v1365, %v1364
      %v1393 = vpack.c.bf16 %v1367, %v1366
      %v1394 = vpack.c.bf16 %v1369, %v1368
      %v1395 = vpack.c.bf16 %v1371, %v1370
      %v1396 = vpack.c.bf16 %v1373, %v1372
      %v1397 = vpack.c.bf16 %v1375, %v1374
      %v1398 = vpack.c.bf16 %v1377, %v1376
      %v1399 = vpack.c.bf16 %v1379, %v1378
      %v1400 = vpack.c.bf16 %v1381, %v1380
      %v1401 = vpack.c.bf16 %v1383, %v1382
      %v1402 = vpack.c.bf16 %v1385, %v1384
      %v1403 = vpack.c.bf16 %v1387, %v1386
      %1420 = vrot.lane.b32.xlu0 %v1388, 28
      %v1421 = vpop.permute.xlu0 %1420
      %1422 = vrot.lane.b32.xlu0 %v1389, 28
      %v1423 = vpop.permute.xlu0 %1422
      %1424 = vrot.lane.b32.xlu0 %v1390, 28
      %v1425 = vpop.permute.xlu0 %1424
      %1426 = vrot.lane.b32.xlu0 %v1391, 28
      %v1427 = vpop.permute.xlu0 %1426
      %1428 = vrot.lane.b32.xlu0 %v1392, 28
      %v1429 = vpop.permute.xlu0 %1428
      %1430 = vrot.lane.b32.xlu0 %v1393, 28
      %v1431 = vpop.permute.xlu0 %1430
      %1432 = vrot.lane.b32.xlu0 %v1394, 28
      %v1433 = vpop.permute.xlu0 %1432
      %1434 = vrot.lane.b32.xlu0 %v1395, 28
      %v1435 = vpop.permute.xlu0 %1434
      %1436 = vrot.lane.b32.xlu0 %v1396, 28
      %v1437 = vpop.permute.xlu0 %1436
      %1438 = vrot.lane.b32.xlu0 %v1397, 28
      %v1439 = vpop.permute.xlu0 %1438
      %1440 = vrot.lane.b32.xlu0 %v1398, 28
      %v1441 = vpop.permute.xlu0 %1440
      %1442 = vrot.lane.b32.xlu0 %v1399, 28
      %v1443 = vpop.permute.xlu0 %1442
      %1444 = vrot.lane.b32.xlu0 %v1400, 28
      %v1445 = vpop.permute.xlu0 %1444
      %1446 = vrot.lane.b32.xlu0 %v1401, 28
      %v1447 = vpop.permute.xlu0 %1446
      %1448 = vrot.lane.b32.xlu0 %v1402, 28
      %v1449 = vpop.permute.xlu0 %1448
      %1450 = vrot.lane.b32.xlu0 %v1403, 28
      %v1451 = vpop.permute.xlu0 %1450
      %vm1468 = vcmask 261344
      %1469 = vst.msk [vmem:[#allocation3] sm:$0xff] %vm1468, %v1421
      %1470 = vst.msk [vmem:[#allocation3 + $0x8] sm:$0xff] %vm1468, %v1423
      %1471 = vst.msk [vmem:[#allocation3 + $0x10] sm:$0xff] %vm1468, %v1425
      %1472 = vst.msk [vmem:[#allocation3 + $0x18] sm:$0xff] %vm1468, %v1427
      %1473 = vst.msk [vmem:[#allocation3 + $0x20] sm:$0xff] %vm1468, %v1429
      %1474 = vst.msk [vmem:[#allocation3 + $0x28] sm:$0xff] %vm1468, %v1431
      %1475 = vst.msk [vmem:[#allocation3 + $0x30] sm:$0xff] %vm1468, %v1433
      %1476 = vst.msk [vmem:[#allocation3 + $0x38] sm:$0xff] %vm1468, %v1435
      %1477 = vst.msk [vmem:[#allocation3 + $0x40] sm:$0xff] %vm1468, %v1437
      %1478 = vst.msk [vmem:[#allocation3 + $0x48] sm:$0xff] %vm1468, %v1439
      %1479 = vst.msk [vmem:[#allocation3 + $0x50] sm:$0xff] %vm1468, %v1441
      %1480 = vst.msk [vmem:[#allocation3 + $0x58] sm:$0xff] %vm1468, %v1443
      %1481 = vst.msk [vmem:[#allocation3 + $0x60] sm:$0xff] %vm1468, %v1445
      %1482 = vst.msk [vmem:[#allocation3 + $0x68] sm:$0xff] %vm1468, %v1447
      %1483 = vst.msk [vmem:[#allocation3 + $0x70] sm:$0xff] %vm1468, %v1449
      %1484 = vst.msk [vmem:[#allocation3 + $0x78] sm:$0xff] %vm1468, %v1451
      %v1485 = vld [vmem:[%s1226 + $0x2] sm:$0xff]
      %v1486 = vld [vmem:[%s1226 + $0xa] sm:$0xff]
      %v1487 = vld [vmem:[%s1226 + $0x1a] sm:$0xff]
      %v1488 = vld [vmem:[%s1226 + $0x22] sm:$0xff]
      %v1489 = vld [vmem:[%s1226 + $0x32] sm:$0xff]
      %v1490 = vld [vmem:[%s1226 + $0x3a] sm:$0xff]
      %v1491 = vld [vmem:[%s1226 + $0x4a] sm:$0xff]
      %v1492 = vld [vmem:[%s1226 + $0x52] sm:$0xff]
      %v1493 = vld [vmem:[%s1226 + $0x62] sm:$0xff]
      %v1494 = vld [vmem:[%s1226 + $0x6a] sm:$0xff]
      %v1495 = vld [vmem:[%s1226 + $0x7a] sm:$0xff]
      %v1496 = vld [vmem:[%s1226 + $0x82] sm:$0xff]
      %v1497 = vld [vmem:[%s1226 + $0x92] sm:$0xff]
      %v1498 = vld [vmem:[%s1226 + $0x9a] sm:$0xff]
      %v1499 = vld [vmem:[%s1226 + $0xaa] sm:$0xff]
      %v1500 = vld [vmem:[%s1226 + $0xb2] sm:$0xff]
      %v1501 = vld [vmem:[%s1226 + $0xc2] sm:$0xff]
      %v1502 = vld [vmem:[%s1226 + $0xca] sm:$0xff]
      %v1503 = vld [vmem:[%s1226 + $0xda] sm:$0xff]
      %v1504 = vld [vmem:[%s1226 + $0xe2] sm:$0xff]
      %v1505 = vld [vmem:[%s1226 + $0xf2] sm:$0xff]
      %v1506 = vld [vmem:[%s1226 + $0xfa] sm:$0xff]
      %v1507 = vld [vmem:[%s1226 + $0x10a] sm:$0xff]
      %v1508 = vld [vmem:[%s1226 + $0x112] sm:$0xff]
      %v1509 = vld [vmem:[%s1226 + $0x122] sm:$0xff]
      %v1510 = vld [vmem:[%s1226 + $0x12a] sm:$0xff]
      %v1511 = vld [vmem:[%s1226 + $0x13a] sm:$0xff]
      %v1512 = vld [vmem:[%s1226 + $0x142] sm:$0xff]
      %v1513 = vld [vmem:[%s1226 + $0x152] sm:$0xff]
      %v1514 = vld [vmem:[%s1226 + $0x15a] sm:$0xff]
      %v1515 = vld [vmem:[%s1226 + $0x16a] sm:$0xff]
      %v1516 = vld [vmem:[%s1226 + $0x172] sm:$0xff]
      %v1517 = vpack.c.bf16 %v1486, %v1485
      %v1518 = vpack.c.bf16 %v1488, %v1487
      %v1519 = vpack.c.bf16 %v1490, %v1489
      %v1520 = vpack.c.bf16 %v1492, %v1491
      %v1521 = vpack.c.bf16 %v1494, %v1493
      %v1522 = vpack.c.bf16 %v1496, %v1495
      %v1523 = vpack.c.bf16 %v1498, %v1497
      %v1524 = vpack.c.bf16 %v1500, %v1499
      %v1525 = vpack.c.bf16 %v1502, %v1501
      %v1526 = vpack.c.bf16 %v1504, %v1503
      %v1527 = vpack.c.bf16 %v1506, %v1505
      %v1528 = vpack.c.bf16 %v1508, %v1507
      %v1529 = vpack.c.bf16 %v1510, %v1509
      %v1530 = vpack.c.bf16 %v1512, %v1511
      %v1531 = vpack.c.bf16 %v1514, %v1513
      %v1532 = vpack.c.bf16 %v1516, %v1515
      %1549 = vrot.lane.b32.xlu0 %v1517, 32
      %v1550 = vpop.permute.xlu0 %1549
      %1551 = vrot.lane.b32.xlu0 %v1518, 32
      %v1552 = vpop.permute.xlu0 %1551
      %1553 = vrot.lane.b32.xlu0 %v1519, 32
      %v1554 = vpop.permute.xlu0 %1553
      %1555 = vrot.lane.b32.xlu0 %v1520, 32
      %v1556 = vpop.permute.xlu0 %1555
      %1557 = vrot.lane.b32.xlu0 %v1521, 32
      %v1558 = vpop.permute.xlu0 %1557
      %1559 = vrot.lane.b32.xlu0 %v1522, 32
      %v1560 = vpop.permute.xlu0 %1559
      %1561 = vrot.lane.b32.xlu0 %v1523, 32
      %v1562 = vpop.permute.xlu0 %1561
      %1563 = vrot.lane.b32.xlu0 %v1524, 32
      %v1564 = vpop.permute.xlu0 %1563
      %1565 = vrot.lane.b32.xlu0 %v1525, 32
      %v1566 = vpop.permute.xlu0 %1565
      %1567 = vrot.lane.b32.xlu0 %v1526, 32
      %v1568 = vpop.permute.xlu0 %1567
      %1569 = vrot.lane.b32.xlu0 %v1527, 32
      %v1570 = vpop.permute.xlu0 %1569
      %1571 = vrot.lane.b32.xlu0 %v1528, 32
      %v1572 = vpop.permute.xlu0 %1571
      %1573 = vrot.lane.b32.xlu0 %v1529, 32
      %v1574 = vpop.permute.xlu0 %1573
      %1575 = vrot.lane.b32.xlu0 %v1530, 32
      %v1576 = vpop.permute.xlu0 %1575
      %1577 = vrot.lane.b32.xlu0 %v1531, 32
      %v1578 = vpop.permute.xlu0 %1577
      %1579 = vrot.lane.b32.xlu0 %v1532, 32
      %v1580 = vpop.permute.xlu0 %1579
      %vm1597 = vcmask 294144
      %1598 = vst.msk [vmem:[#allocation3] sm:$0xff] %vm1597, %v1550
      %1599 = vst.msk [vmem:[#allocation3 + $0x8] sm:$0xff] %vm1597, %v1552
      %1600 = vst.msk [vmem:[#allocation3 + $0x10] sm:$0xff] %vm1597, %v1554
      %1601 = vst.msk [vmem:[#allocation3 + $0x18] sm:$0xff] %vm1597, %v1556
      %1602 = vst.msk [vmem:[#allocation3 + $0x20] sm:$0xff] %vm1597, %v1558
      %1603 = vst.msk [vmem:[#allocation3 + $0x28] sm:$0xff] %vm1597, %v1560
      %1604 = vst.msk [vmem:[#allocation3 + $0x30] sm:$0xff] %vm1597, %v1562
      %1605 = vst.msk [vmem:[#allocation3 + $0x38] sm:$0xff] %vm1597, %v1564
      %1606 = vst.msk [vmem:[#allocation3 + $0x40] sm:$0xff] %vm1597, %v1566
      %1607 = vst.msk [vmem:[#allocation3 + $0x48] sm:$0xff] %vm1597, %v1568
      %1608 = vst.msk [vmem:[#allocation3 + $0x50] sm:$0xff] %vm1597, %v1570
      %1609 = vst.msk [vmem:[#allocation3 + $0x58] sm:$0xff] %vm1597, %v1572
      %1610 = vst.msk [vmem:[#allocation3 + $0x60] sm:$0xff] %vm1597, %v1574
      %1611 = vst.msk [vmem:[#allocation3 + $0x68] sm:$0xff] %vm1597, %v1576
      %1612 = vst.msk [vmem:[#allocation3 + $0x70] sm:$0xff] %vm1597, %v1578
      %1613 = vst.msk [vmem:[#allocation3 + $0x78] sm:$0xff] %vm1597, %v1580
      %v1614 = vld [vmem:[#allocation3] sm:$0xff]
      %v1615 = vld [vmem:[#allocation3 + $0x8] sm:$0xff]
      %v1616 = vld [vmem:[#allocation3 + $0x10] sm:$0xff]
      %v1617 = vld [vmem:[#allocation3 + $0x18] sm:$0xff]
      %v1618 = vld [vmem:[#allocation3 + $0x20] sm:$0xff]
      %v1619 = vld [vmem:[#allocation3 + $0x28] sm:$0xff]
      %v1620 = vld [vmem:[#allocation3 + $0x30] sm:$0xff]
      %v1621 = vld [vmem:[#allocation3 + $0x38] sm:$0xff]
      %v1622 = vld [vmem:[#allocation3 + $0x40] sm:$0xff]
      %v1623 = vld [vmem:[#allocation3 + $0x48] sm:$0xff]
      %v1624 = vld [vmem:[#allocation3 + $0x50] sm:$0xff]
      %v1625 = vld [vmem:[#allocation3 + $0x58] sm:$0xff]
      %v1626 = vld [vmem:[#allocation3 + $0x60] sm:$0xff]
      %v1627 = vld [vmem:[#allocation3 + $0x68] sm:$0xff]
      %v1628 = vld [vmem:[#allocation3 + $0x70] sm:$0xff]
      %v1629 = vld [vmem:[#allocation3 + $0x78] sm:$0xff]
      %v1630 = vld [vmem:[%s3] sm:$0xf]
      %v1631 = vld [vmem:[%s3 + $0x4] sm:$0xf]
      %v1632 = vld [vmem:[%s3 + $0x8] sm:$0xf]
      %v1633 = vld [vmem:[%s3 + $0xc] sm:$0xf]
      %v1634 = vld [vmem:[%s3 + $0x10] sm:$0x3]
      %v1635 = vld [vmem:[%s4] sm:$0x1]
      %v1637 = vlaneseq
      %v1638 = vshrl.u32 %v1637, 7
      %v1639 = vsub.s32 0, %v1638
      %v1640 = vrot.slane %v1635, %v1639
      %v1647 = vunpack.c.l.b16 %v1630
      %v1648 = vunpack.c.l.b16 %v1631
      %v1649 = vunpack.c.l.b16 %v1632
      %v1650 = vunpack.c.l.b16 %v1633
      %v1651 = vunpack.c.l.b16 %v1634
      %v1652 = vpack.c.b16 %v1648, %v1647
      %v1653 = vpack.c.b16 %v1650, %v1649
      %v1654 = vpack.c.b16 %v1651, %v1651
      %vm1657 = vcmask 293888
      %v1659 = vsel %vm1657, %v1614, 0
      %v1662 = vsel %vm1657, %v1615, 0
      %v1665 = vsel %vm1657, %v1616, 0
      %v1668 = vsel %vm1657, %v1617, 0
      %v1671 = vsel %vm1657, %v1618, 0
      %v1674 = vsel %vm1657, %v1619, 0
      %v1677 = vsel %vm1657, %v1620, 0
      %v1680 = vsel %vm1657, %v1621, 0
      %v1683 = vsel %vm1657, %v1622, 0
      %v1686 = vsel %vm1657, %v1623, 0
      %v1689 = vsel %vm1657, %v1624, 0
      %v1692 = vsel %vm1657, %v1625, 0
      %v1695 = vsel %vm1657, %v1626, 0
      %v1698 = vsel %vm1657, %v1627, 0
      %v1701 = vsel %vm1657, %v1628, 0
      %v1704 = vsel %vm1657, %v1629, 0
      %vm1706 = vcmask 1041408
      %v1708 = vsel %vm1706, %v1654, 0
      %1710 = vmatprep.subr.bf16.mxu0 0
      %1711 = vmatpush1.bf16.msra.mxu0 %v1652
      %1712 = vmatprep.subr.bf16.mxu0 0
      %1713 = vmatpush1.bf16.msra.mxu0 %v1653
      %1714 = vmatprep.subr.bf16.mxu0 0
      %1715 = vmatpush1.bf16.msra.mxu0 %v1708
      %1716 = vmatprep.subr.bf16.mxu0 0
      %1717 = vmatpush1.bf16.msra.mxu0 0
      %1718 = vmatprep.subr.bf16.mxu0 0
      %1719 = vmatpush1.bf16.msra.mxu0 0
      %1720 = vmatprep.subr.bf16.mxu0 0
      %1721 = vmatpush1.bf16.msra.mxu0 0
      %1722 = vmatprep.subr.bf16.mxu0 0
      %1723 = vmatpush1.bf16.msra.mxu0 0
      %1724 = vmatprep.subr.bf16.mxu0 0
      %1725 = vmatpush1.bf16.msra.mxu0 0
      %1726 = vmatprep.subr.bf16.mxu0 0
      %1727 = vmatpush1.bf16.msra.mxu0 0
      %1728 = vmatprep.subr.bf16.mxu0 0
      %1729 = vmatpush1.bf16.msra.mxu0 0
      %1730 = vmatprep.subr.bf16.mxu0 0
      %1731 = vmatpush1.bf16.msra.mxu0 0
      %1732 = vmatprep.subr.bf16.mxu0 0
      %1733 = vmatpush1.bf16.msra.mxu0 0
      %1734 = vmatprep.subr.bf16.mxu0 0
      %1735 = vmatpush1.bf16.msra.mxu0 0
      %1736 = vmatprep.subr.bf16.mxu0 0
      %1737 = vmatpush1.bf16.msra.mxu0 0
      %1738 = vmatprep.subr.bf16.mxu0 0
      %1739 = vmatpush1.bf16.msra.mxu0 0
      %1740 = vmatprep.subr.bf16.mxu0 0
      %1741 = vmatpush1.bf16.msra.mxu0 0
      %1742 = vmatprep.mubr.bf16.mxu0 0
      %1743 = vmatmul.mubr.bf16.gmra.mrb[0].mxu0 %v1659
      %v1744 = vpop.f32.mrb[0].mxu0
      %v1745 = vadd.f32 %v1640, %v1744
      %v1746 = vpop.f32.mrb[0].mxu0
      %v1747 = vpop.f32.mrb[0].mxu0
      %v1748 = vadd.f32 %v1640, %v1747
      %v1749 = vpop.f32.mrb[0].mxu0
      %1750 = vmatprep.mubr.bf16.mxu0 0
      %1751 = vmatmul.mubr.bf16.gmra.mrb[0].mxu0 %v1662
      %v1752 = vpop.f32.mrb[0].mxu0
      %v1753 = vadd.f32 %v1640, %v1752
      %v1754 = vpop.f32.mrb[0].mxu0
      %v1755 = vpop.f32.mrb[0].mxu0
      %v1756 = vadd.f32 %v1640, %v1755
      %v1757 = vpop.f32.mrb[0].mxu0
      %1758 = vmatprep.mubr.bf16.mxu0 0
      %1759 = vmatmul.mubr.bf16.gmra.mrb[0].mxu0 %v1665
      %v1760 = vpop.f32.mrb[0].mxu0
      %v1761 = vadd.f32 %v1640, %v1760
      %v1762 = vpop.f32.mrb[0].mxu0
      %v1763 = vpop.f32.mrb[0].mxu0
      %v1764 = vadd.f32 %v1640, %v1763
      %v1765 = vpop.f32.mrb[0].mxu0
      %1766 = vmatprep.mubr.bf16.mxu0 0
      %1767 = vmatmul.mubr.bf16.gmra.mrb[0].mxu0 %v1668
      %v1768 = vpop.f32.mrb[0].mxu0
      %v1769 = vadd.f32 %v1640, %v1768
      %v1770 = vpop.f32.mrb[0].mxu0
      %v1771 = vpop.f32.mrb[0].mxu0
      %v1772 = vadd.f32 %v1640, %v1771
      %v1773 = vpop.f32.mrb[0].mxu0
      %1774 = vmatprep.mubr.bf16.mxu0 0
      %1775 = vmatmul.mubr.bf16.gmra.mrb[0].mxu0 %v1671
      %v1776 = vpop.f32.mrb[0].mxu0
      %v1777 = vadd.f32 %v1640, %v1776
      %v1778 = vpop.f32.mrb[0].mxu0
      %v1779 = vpop.f32.mrb[0].mxu0
      %v1780 = vadd.f32 %v1640, %v1779
      %v1781 = vpop.f32.mrb[0].mxu0
      %1782 = vmatprep.mubr.bf16.mxu0 0
      %1783 = vmatmul.mubr.bf16.gmra.mrb[0].mxu0 %v1674
      %v1784 = vpop.f32.mrb[0].mxu0
      %v1785 = vadd.f32 %v1640, %v1784
      %v1786 = vpop.f32.mrb[0].mxu0
      %v1787 = vpop.f32.mrb[0].mxu0
      %v1788 = vadd.f32 %v1640, %v1787
      %v1789 = vpop.f32.mrb[0].mxu0
      %1790 = vmatprep.mubr.bf16.mxu0 0
      %1791 = vmatmul.mubr.bf16.gmra.mrb[0].mxu0 %v1677
      %v1792 = vpop.f32.mrb[0].mxu0
      %v1793 = vadd.f32 %v1640, %v1792
      %v1794 = vpop.f32.mrb[0].mxu0
      %v1795 = vpop.f32.mrb[0].mxu0
      %v1796 = vadd.f32 %v1640, %v1795
      %v1797 = vpop.f32.mrb[0].mxu0
      %1798 = vmatprep.mubr.bf16.mxu0 0
      %1799 = vmatmul.mubr.bf16.gmra.mrb[0].mxu0 %v1680
      %v1800 = vpop.f32.mrb[0].mxu0
      %v1801 = vadd.f32 %v1640, %v1800
      %v1802 = vpop.f32.mrb[0].mxu0
      %v1803 = vpop.f32.mrb[0].mxu0
      %v1804 = vadd.f32 %v1640, %v1803
      %v1805 = vpop.f32.mrb[0].mxu0
      %1806 = vmatprep.mubr.bf16.mxu0 0
      %1807 = vmatmul.mubr.bf16.gmra.mrb[0].mxu0 %v1683
      %v1808 = vpop.f32.mrb[0].mxu0
      %v1809 = vadd.f32 %v1640, %v1808
      %v1810 = vpop.f32.mrb[0].mxu0
      %v1811 = vpop.f32.mrb[0].mxu0
      %v1812 = vadd.f32 %v1640, %v1811
      %v1813 = vpop.f32.mrb[0].mxu0
      %1814 = vmatprep.mubr.bf16.mxu0 0
      %1815 = vmatmul.mubr.bf16.gmra.mrb[0].mxu0 %v1686
      %v1816 = vpop.f32.mrb[0].mxu0
      %v1817 = vadd.f32 %v1640, %v1816
      %v1818 = vpop.f32.mrb[0].mxu0
      %v1819 = vpop.f32.mrb[0].mxu0
      %v1820 = vadd.f32 %v1640, %v1819
      %v1821 = vpop.f32.mrb[0].mxu0
      %1822 = vmatprep.mubr.bf16.mxu0 0
      %1823 = vmatmul.mubr.bf16.gmra.mrb[0].mxu0 %v1689
      %v1824 = vpop.f32.mrb[0].mxu0
      %v1825 = vadd.f32 %v1640, %v1824
      %v1826 = vpop.f32.mrb[0].mxu0
      %v1827 = vpop.f32.mrb[0].mxu0
      %v1828 = vadd.f32 %v1640, %v1827
      %v1829 = vpop.f32.mrb[0].mxu0
      %1830 = vmatprep.mubr.bf16.mxu0 0
      %1831 = vmatmul.mubr.bf16.gmra.mrb[0].mxu0 %v1692
      %v1832 = vpop.f32.mrb[0].mxu0
      %v1833 = vadd.f32 %v1640, %v1832
      %v1834 = vpop.f32.mrb[0].mxu0
      %v1835 = vpop.f32.mrb[0].mxu0
      %v1836 = vadd.f32 %v1640, %v1835
      %v1837 = vpop.f32.mrb[0].mxu0
      %1838 = vmatprep.mubr.bf16.mxu0 0
      %1839 = vmatmul.mubr.bf16.gmra.mrb[0].mxu0 %v1695
      %v1840 = vpop.f32.mrb[0].mxu0
      %v1841 = vadd.f32 %v1640, %v1840
      %v1842 = vpop.f32.mrb[0].mxu0
      %v1843 = vpop.f32.mrb[0].mxu0
      %v1844 = vadd.f32 %v1640, %v1843
      %v1845 = vpop.f32.mrb[0].mxu0
      %1846 = vmatprep.mubr.bf16.mxu0 0
      %1847 = vmatmul.mubr.bf16.gmra.mrb[0].mxu0 %v1698
      %v1848 = vpop.f32.mrb[0].mxu0
      %v1849 = vadd.f32 %v1640, %v1848
      %v1850 = vpop.f32.mrb[0].mxu0
      %v1851 = vpop.f32.mrb[0].mxu0
      %v1852 = vadd.f32 %v1640, %v1851
      %v1853 = vpop.f32.mrb[0].mxu0
      %1854 = vmatprep.mubr.bf16.mxu0 0
      %1855 = vmatmul.mubr.bf16.gmra.mrb[0].mxu0 %v1701
      %v1856 = vpop.f32.mrb[0].mxu0
      %v1857 = vadd.f32 %v1640, %v1856
      %v1858 = vpop.f32.mrb[0].mxu0
      %v1859 = vpop.f32.mrb[0].mxu0
      %v1860 = vadd.f32 %v1640, %v1859
      %v1861 = vpop.f32.mrb[0].mxu0
      %1862 = vmatprep.mubr.bf16.mxu0 0
      %1863 = vmatmul.mubr.bf16.gmra.mrb[0].mxu0 %v1704
      %v1864 = vpop.f32.mrb[0].mxu0
      %v1865 = vadd.f32 %v1640, %v1864
      %v1866 = vpop.f32.mrb[0].mxu0
      %v1867 = vpop.f32.mrb[0].mxu0
      %v1868 = vadd.f32 %v1640, %v1867
      %v1869 = vpop.f32.mrb[0].mxu0
      %1870 = vdwg.mxu0
      %v1871 = vsel %vm264, %v1745, 0.0
      %v1872 = vsel %vm264, %v1748, 0.0
      %v1873 = vadd.f32 %v1871, %v1872
      %v1874 = vsel %vm264, %v1753, 0.0
      %v1875 = vadd.f32 %v1873, %v1874
      %v1876 = vsel %vm264, %v1756, 0.0
      %v1877 = vadd.f32 %v1875, %v1876
      %v1878 = vsel %vm264, %v1761, 0.0
      %v1879 = vadd.f32 %v1877, %v1878
      %v1880 = vsel %vm264, %v1764, 0.0
      %v1881 = vadd.f32 %v1879, %v1880
      %v1882 = vsel %vm264, %v1769, 0.0
      %v1883 = vadd.f32 %v1881, %v1882
      %v1884 = vsel %vm264, %v1772, 0.0
      %v1885 = vadd.f32 %v1883, %v1884
      %v1886 = vsel %vm264, %v1777, 0.0
      %v1887 = vadd.f32 %v1885, %v1886
      %v1888 = vsel %vm264, %v1780, 0.0
      %v1889 = vadd.f32 %v1887, %v1888
      %v1890 = vsel %vm264, %v1785, 0.0
      %v1891 = vadd.f32 %v1889, %v1890
      %v1892 = vsel %vm264, %v1788, 0.0
      %v1893 = vadd.f32 %v1891, %v1892
      %v1894 = vsel %vm264, %v1793, 0.0
      %v1895 = vadd.f32 %v1893, %v1894
      %v1896 = vsel %vm264, %v1796, 0.0
      %v1897 = vadd.f32 %v1895, %v1896
      %v1898 = vsel %vm264, %v1801, 0.0
      %v1899 = vadd.f32 %v1897, %v1898
      %v1900 = vsel %vm264, %v1804, 0.0
      %v1901 = vadd.f32 %v1899, %v1900
      %v1902 = vsel %vm264, %v1809, 0.0
      %v1903 = vadd.f32 %v1901, %v1902
      %v1904 = vsel %vm264, %v1812, 0.0
      %v1905 = vadd.f32 %v1903, %v1904
      %v1906 = vsel %vm264, %v1817, 0.0
      %v1907 = vadd.f32 %v1905, %v1906
      %v1908 = vsel %vm264, %v1820, 0.0
      %v1909 = vadd.f32 %v1907, %v1908
      %v1910 = vsel %vm264, %v1825, 0.0
      %v1911 = vadd.f32 %v1909, %v1910
      %v1912 = vsel %vm264, %v1828, 0.0
      %v1913 = vadd.f32 %v1911, %v1912
      %v1914 = vsel %vm264, %v1833, 0.0
      %v1915 = vadd.f32 %v1913, %v1914
      %v1916 = vsel %vm264, %v1836, 0.0
      %v1917 = vadd.f32 %v1915, %v1916
      %v1918 = vsel %vm264, %v1841, 0.0
      %v1919 = vadd.f32 %v1917, %v1918
      %v1920 = vsel %vm264, %v1844, 0.0
      %v1921 = vadd.f32 %v1919, %v1920
      %v1922 = vsel %vm264, %v1849, 0.0
      %v1923 = vadd.f32 %v1921, %v1922
      %v1924 = vsel %vm264, %v1852, 0.0
      %v1925 = vadd.f32 %v1923, %v1924
      %v1926 = vsel %vm264, %v1857, 0.0
      %v1927 = vadd.f32 %v1925, %v1926
      %v1928 = vsel %vm264, %v1860, 0.0
      %v1929 = vadd.f32 %v1927, %v1928
      %v1930 = vsel %vm264, %v1865, 0.0
      %v1931 = vadd.f32 %v1929, %v1930
      %v1932 = vsel %vm264, %v1868, 0.0
      %v1933 = vadd.f32 %v1931, %v1932
      %v1934 = vrot.slane %v1933, 4
      %v1935 = vadd.f32 %v1933, %v1934
      %v1936 = vrot.slane %v1935, 2
      %v1937 = vadd.f32 %v1935, %v1936
      %v1938 = vrot.slane %v1937, 1
      %v1939 = vadd.f32 %v1937, %v1938
      %v1940 = vmul.f32 %v1745, %v1745
      %v1941 = vmul.f32 %v1748, %v1748
      %v1942 = vmul.f32 %v1753, %v1753
      %v1943 = vmul.f32 %v1756, %v1756
      %v1944 = vmul.f32 %v1761, %v1761
      %v1945 = vmul.f32 %v1764, %v1764
      %v1946 = vmul.f32 %v1769, %v1769
      %v1947 = vmul.f32 %v1772, %v1772
      %v1948 = vmul.f32 %v1777, %v1777
      %v1949 = vmul.f32 %v1780, %v1780
      %v1950 = vmul.f32 %v1785, %v1785
      %v1951 = vmul.f32 %v1788, %v1788
      %v1952 = vmul.f32 %v1793, %v1793
      %v1953 = vmul.f32 %v1796, %v1796
      %v1954 = vmul.f32 %v1801, %v1801
      %v1955 = vmul.f32 %v1804, %v1804
      %v1956 = vmul.f32 %v1809, %v1809
      %v1957 = vmul.f32 %v1812, %v1812
      %v1958 = vmul.f32 %v1817, %v1817
      %v1959 = vmul.f32 %v1820, %v1820
      %v1960 = vmul.f32 %v1825, %v1825
      %v1961 = vmul.f32 %v1828, %v1828
      %v1962 = vmul.f32 %v1833, %v1833
      %v1963 = vmul.f32 %v1836, %v1836
      %v1964 = vmul.f32 %v1841, %v1841
      %v1965 = vmul.f32 %v1844, %v1844
      %v1966 = vmul.f32 %v1849, %v1849
      %v1967 = vmul.f32 %v1852, %v1852
      %v1968 = vmul.f32 %v1857, %v1857
      %v1969 = vmul.f32 %v1860, %v1860
      %v1970 = vmul.f32 %v1865, %v1865
      %v1971 = vmul.f32 %v1868, %v1868
      %v1972 = vsel %vm264, %v1940, 0.0
      %v1973 = vsel %vm264, %v1941, 0.0
      %v1974 = vadd.f32 %v1972, %v1973
      %v1975 = vsel %vm264, %v1942, 0.0
      %v1976 = vadd.f32 %v1974, %v1975
      %v1977 = vsel %vm264, %v1943, 0.0
      %v1978 = vadd.f32 %v1976, %v1977
      %v1979 = vsel %vm264, %v1944, 0.0
      %v1980 = vadd.f32 %v1978, %v1979
      %v1981 = vsel %vm264, %v1945, 0.0
      %v1982 = vadd.f32 %v1980, %v1981
      %v1983 = vsel %vm264, %v1946, 0.0
      %v1984 = vadd.f32 %v1982, %v1983
      %v1985 = vsel %vm264, %v1947, 0.0
      %v1986 = vadd.f32 %v1984, %v1985
      %v1987 = vsel %vm264, %v1948, 0.0
      %v1988 = vadd.f32 %v1986, %v1987
      %v1989 = vsel %vm264, %v1949, 0.0
      %v1990 = vadd.f32 %v1988, %v1989
      %v1991 = vsel %vm264, %v1950, 0.0
      %v1992 = vadd.f32 %v1990, %v1991
      %v1993 = vsel %vm264, %v1951, 0.0
      %v1994 = vadd.f32 %v1992, %v1993
      %v1995 = vsel %vm264, %v1952, 0.0
      %v1996 = vadd.f32 %v1994, %v1995
      %v1997 = vsel %vm264, %v1953, 0.0
      %v1998 = vadd.f32 %v1996, %v1997
      %v1999 = vsel %vm264, %v1954, 0.0
      %v2000 = vadd.f32 %v1998, %v1999
      %v2001 = vsel %vm264, %v1955, 0.0
      %v2002 = vadd.f32 %v2000, %v2001
      %v2003 = vsel %vm264, %v1956, 0.0
      %v2004 = vadd.f32 %v2002, %v2003
      %v2005 = vsel %vm264, %v1957, 0.0
      %v2006 = vadd.f32 %v2004, %v2005
      %v2007 = vsel %vm264, %v1958, 0.0
      %v2008 = vadd.f32 %v2006, %v2007
      %v2009 = vsel %vm264, %v1959, 0.0
      %v2010 = vadd.f32 %v2008, %v2009
      %v2011 = vsel %vm264, %v1960, 0.0
      %v2012 = vadd.f32 %v2010, %v2011
      %v2013 = vsel %vm264, %v1961, 0.0
      %v2014 = vadd.f32 %v2012, %v2013
      %v2015 = vsel %vm264, %v1962, 0.0
      %v2016 = vadd.f32 %v2014, %v2015
      %v2017 = vsel %vm264, %v1963, 0.0
      %v2018 = vadd.f32 %v2016, %v2017
      %v2019 = vsel %vm264, %v1964, 0.0
      %v2020 = vadd.f32 %v2018, %v2019
      %v2021 = vsel %vm264, %v1965, 0.0
      %v2022 = vadd.f32 %v2020, %v2021
      %v2023 = vsel %vm264, %v1966, 0.0
      %v2024 = vadd.f32 %v2022, %v2023
      %v2025 = vsel %vm264, %v1967, 0.0
      %v2026 = vadd.f32 %v2024, %v2025
      %v2027 = vsel %vm264, %v1968, 0.0
      %v2028 = vadd.f32 %v2026, %v2027
      %v2029 = vsel %vm264, %v1969, 0.0
      %v2030 = vadd.f32 %v2028, %v2029
      %v2031 = vsel %vm264, %v1970, 0.0
      %v2032 = vadd.f32 %v2030, %v2031
      %v2033 = vsel %vm264, %v1971, 0.0
      %v2034 = vadd.f32 %v2032, %v2033
      %v2035 = vrot.slane %v2034, 4
      %v2036 = vadd.f32 %v2034, %v2035
      %v2037 = vrot.slane %v2036, 2
      %v2038 = vadd.f32 %v2036, %v2037
      %v2039 = vrot.slane %v2038, 1
      %v2040 = vadd.f32 %v2038, %v2039
      %vm2041 = vcmask 1040384
      %v2042 = vsel %vm2041, %v1939, %v2040
      %2043 = vst.msk [vmem:[%s262] sm:$0x3] %vm267, %v2042
      %v2044 = vpack.c.bf16 %v1748, %v1745
      %v2045 = vpack.c.bf16 %v1756, %v1753
      %v2046 = vpack.c.bf16 %v1764, %v1761
      %v2047 = vpack.c.bf16 %v1772, %v1769
      %v2048 = vpack.c.bf16 %v1780, %v1777
      %v2049 = vpack.c.bf16 %v1788, %v1785
      %v2050 = vpack.c.bf16 %v1796, %v1793
      %v2051 = vpack.c.bf16 %v1804, %v1801
      %v2052 = vpack.c.bf16 %v1812, %v1809
      %v2053 = vpack.c.bf16 %v1820, %v1817
      %v2054 = vpack.c.bf16 %v1828, %v1825
      %v2055 = vpack.c.bf16 %v1836, %v1833
      %v2056 = vpack.c.bf16 %v1844, %v1841
      %v2057 = vpack.c.bf16 %v1852, %v1849
      %v2058 = vpack.c.bf16 %v1860, %v1857
      %v2059 = vpack.c.bf16 %v1868, %v1865
      %v2076 = vunpack.c.l.b16 %v2044
      %v2077 = vunpack.c.h.b16 %v2044
      %v2078 = vunpack.c.l.b16 %v2045
      %v2079 = vunpack.c.h.b16 %v2045
      %v2080 = vunpack.c.l.b16 %v2046
      %v2081 = vunpack.c.h.b16 %v2046
      %v2082 = vunpack.c.l.b16 %v2047
      %v2083 = vunpack.c.h.b16 %v2047
      %v2084 = vunpack.c.l.b16 %v2048
      %v2085 = vunpack.c.h.b16 %v2048
      %v2086 = vunpack.c.l.b16 %v2049
      %v2087 = vunpack.c.h.b16 %v2049
      %v2088 = vunpack.c.l.b16 %v2050
      %v2089 = vunpack.c.h.b16 %v2050
      %v2090 = vunpack.c.l.b16 %v2051
      %v2091 = vunpack.c.h.b16 %v2051
      %v2092 = vunpack.c.l.b16 %v2052
      %v2093 = vunpack.c.h.b16 %v2052
      %v2094 = vunpack.c.l.b16 %v2053
      %v2095 = vunpack.c.h.b16 %v2053
      %v2096 = vunpack.c.l.b16 %v2054
      %v2097 = vunpack.c.h.b16 %v2054
      %v2098 = vunpack.c.l.b16 %v2055
      %v2099 = vunpack.c.h.b16 %v2055
      %v2100 = vunpack.c.l.b16 %v2056
      %v2101 = vunpack.c.h.b16 %v2056
      %v2102 = vunpack.c.l.b16 %v2057
      %v2103 = vunpack.c.h.b16 %v2057
      %v2104 = vunpack.c.l.b16 %v2058
      %v2105 = vunpack.c.h.b16 %v2058
      %v2106 = vunpack.c.l.b16 %v2059
      %v2107 = vunpack.c.h.b16 %v2059
      %v2108 = vpack.c.b16 %v2076, %v2076
      %v2109 = vpack.c.b16 %v2077, %v2077
      %v2110 = vpack.c.b16 %v2078, %v2078
      %v2111 = vpack.c.b16 %v2079, %v2079
      %v2112 = vpack.c.b16 %v2080, %v2080
      %v2113 = vpack.c.b16 %v2081, %v2081
      %v2114 = vpack.c.b16 %v2082, %v2082
      %v2115 = vpack.c.b16 %v2083, %v2083
      %v2116 = vpack.c.b16 %v2084, %v2084
      %v2117 = vpack.c.b16 %v2085, %v2085
      %v2118 = vpack.c.b16 %v2086, %v2086
      %v2119 = vpack.c.b16 %v2087, %v2087
      %v2120 = vpack.c.b16 %v2088, %v2088
      %v2121 = vpack.c.b16 %v2089, %v2089
      %v2122 = vpack.c.b16 %v2090, %v2090
      %v2123 = vpack.c.b16 %v2091, %v2091
      %v2124 = vpack.c.b16 %v2092, %v2092
      %v2125 = vpack.c.b16 %v2093, %v2093
      %v2126 = vpack.c.b16 %v2094, %v2094
      %v2127 = vpack.c.b16 %v2095, %v2095
      %v2128 = vpack.c.b16 %v2096, %v2096
      %v2129 = vpack.c.b16 %v2097, %v2097
      %v2130 = vpack.c.b16 %v2098, %v2098
      %v2131 = vpack.c.b16 %v2099, %v2099
      %v2132 = vpack.c.b16 %v2100, %v2100
      %v2133 = vpack.c.b16 %v2101, %v2101
      %v2134 = vpack.c.b16 %v2102, %v2102
      %v2135 = vpack.c.b16 %v2103, %v2103
      %v2136 = vpack.c.b16 %v2104, %v2104
      %v2137 = vpack.c.b16 %v2105, %v2105
      %v2138 = vpack.c.b16 %v2106, %v2106
      %v2139 = vpack.c.b16 %v2107, %v2107
      %vm2172 = vcmask 27648
      %2173 = vst.msk [vmem:[%s258] sm:$0xf] %vm2172, %v2108
      %2174 = vst.msk [vmem:[%s258 + $0x4] sm:$0xf] %vm2172, %v2109
      %2175 = vst.msk [vmem:[%s258 + $0x8] sm:$0xf] %vm2172, %v2110
      %2176 = vst.msk [vmem:[%s258 + $0xc] sm:$0xf] %vm2172, %v2111
      %2177 = vst.msk [vmem:[%s258 + $0x10] sm:$0xf] %vm2172, %v2112
      %2178 = vst.msk [vmem:[%s258 + $0x14] sm:$0xf] %vm2172, %v2113
      %2179 = vst.msk [vmem:[%s258 + $0x18] sm:$0xf] %vm2172, %v2114
      %2180 = vst.msk [vmem:[%s258 + $0x1c] sm:$0xf] %vm2172, %v2115
      %2181 = vst.msk [vmem:[%s258 + $0x20] sm:$0xf] %vm2172, %v2116
      %2182 = vst.msk [vmem:[%s258 + $0x24] sm:$0xf] %vm2172, %v2117
      %2183 = vst.msk [vmem:[%s258 + $0x28] sm:$0xf] %vm2172, %v2118
      %2184 = vst.msk [vmem:[%s258 + $0x2c] sm:$0xf] %vm2172, %v2119
      %2185 = vst.msk [vmem:[%s258 + $0x30] sm:$0xf] %vm2172, %v2120
      %2186 = vst.msk [vmem:[%s258 + $0x34] sm:$0xf] %vm2172, %v2121
      %2187 = vst.msk [vmem:[%s258 + $0x38] sm:$0xf] %vm2172, %v2122
      %2188 = vst.msk [vmem:[%s258 + $0x3c] sm:$0xf] %vm2172, %v2123
      %2189 = vst.msk [vmem:[%s258 + $0x40] sm:$0xf] %vm2172, %v2124
      %2190 = vst.msk [vmem:[%s258 + $0x44] sm:$0xf] %vm2172, %v2125
      %2191 = vst.msk [vmem:[%s258 + $0x48] sm:$0xf] %vm2172, %v2126
      %2192 = vst.msk [vmem:[%s258 + $0x4c] sm:$0xf] %vm2172, %v2127
      %2193 = vst.msk [vmem:[%s258 + $0x50] sm:$0xf] %vm2172, %v2128
      %2194 = vst.msk [vmem:[%s258 + $0x54] sm:$0xf] %vm2172, %v2129
      %2195 = vst.msk [vmem:[%s258 + $0x58] sm:$0xf] %vm2172, %v2130
      %2196 = vst.msk [vmem:[%s258 + $0x5c] sm:$0xf] %vm2172, %v2131
      %2197 = vst.msk [vmem:[%s258 + $0x60] sm:$0xf] %vm2172, %v2132
      %2198 = vst.msk [vmem:[%s258 + $0x64] sm:$0xf] %vm2172, %v2133
      %2199 = vst.msk [vmem:[%s258 + $0x68] sm:$0xf] %vm2172, %v2134
      %2200 = vst.msk [vmem:[%s258 + $0x6c] sm:$0xf] %vm2172, %v2135
      %2201 = vst.msk [vmem:[%s258 + $0x70] sm:$0xf] %vm2172, %v2136
      %2202 = vst.msk [vmem:[%s258 + $0x74] sm:$0xf] %vm2172, %v2137
      %2203 = vst.msk [vmem:[%s258 + $0x78] sm:$0xf] %vm2172, %v2138
      %2204 = vst.msk [vmem:[%s258 + $0x7c] sm:$0xf] %vm2172, %v2139
      %p2205 = scmp.lt.s32.totalorder %s18, 1
      %s2206 = scalar_select %p2205, %s18, 1
      %s2207 = smul.addr %s2206, 32
      %s2208 = smul.addr %s2207, 4
      %s2209 = scalar_lea.vmem %s5, %s2208
      %p2210 = scmp.lt.s32.totalorder %s18, 1
      %s2211 = scalar_select %p2210, %s18, 1
      %s2212 = smul.addr %s2211, 2
      %s2213 = scalar_lea.vmem %s6, %s2212
      // Predicated region
      $region41: #{_lambda_.6} parent=39 // pred_check
        %p2214 = pneg %p146
      $region42: #{_lambda_.6} parent=39 // pred_check_branch
        %2216 = sbr.rel (%p2214) target = $region44
      $region43: #{_lambda_.6} parent=39 // pred_region
        _
      $region44: #{_lambda_.6} parent=39 // pred_fallthru
        _
      // Predicated region
      $region45: #{_lambda_.6} parent=39 // pred_check
        %p2217 = pneg %p172
      $region46: #{_lambda_.6} parent=39 // pred_check_branch
        %2219 = sbr.rel (%p2217) target = $region48
      $region47: #{_lambda_.6} parent=39 // pred_region
        _
      $region48: #{_lambda_.6} parent=39 // pred_fallthru
        _
    $region40: #{_lambda_.6} parent=5 // pred_fallthru
      _
    %p2220 = scmp.le.s32.totalorder 2, %s13
    // Predicated region
    $region49: #{_lambda_.6} parent=5 // pred_check
      %p2221 = pneg %p2220
    $region50: #{_lambda_.6} parent=5 // pred_check_branch
      %2223 = sbr.rel (%p2221) target = $region52
    $region51: #{_lambda_.6} parent=5 // pred_region
      %s2224 = ssub.s32 %s13, 2
      // Predicated region
      $region53: #{_lambda_.6} parent=51 // pred_check
        %p2225 = pneg %p152
      $region54: #{_lambda_.6} parent=51 // pred_check_branch
        %2227 = sbr.rel (%p2225) target = $region56
      $region55: #{_lambda_.6} parent=51 // pred_region
        %p2228 = scmp.lt.s32.totalorder %s19, 1
        %s2229 = scalar_select %p2228, %s19, 1
        %s2230 = smul.addr %s2229, 32
        %s2231 = smul.addr %s2230, 4
        %s2232 = scalar_lea.vmem %s5, %s2231
      $region56: #{_lambda_.6} parent=51 // pred_fallthru
        _
      // Predicated region
      $region57: #{_lambda_.6} parent=51 // pred_check
        %p2233 = pneg %p178
      $region58: #{_lambda_.6} parent=51 // pred_check_branch
        %2235 = sbr.rel (%p2233) target = $region60
      $region59: #{_lambda_.6} parent=51 // pred_region
        %p2236 = scmp.lt.s32.totalorder %s19, 1
        %s2237 = scalar_select %p2236, %s19, 1
        %s2238 = smul.addr %s2237, 2
        %s2239 = scalar_lea.vmem %s6, %s2238
      $region60: #{_lambda_.6} parent=51 // pred_fallthru
        _
    $region52: #{_lambda_.6} parent=5 // pred_fallthru
      _
  $region6: #{_lambda_.6} parent=0 // loop_footer
    %s17 = sadd.s32 1, %s13
  $region7: #{_lambda_.6} parent=0 // loop_footer_branch
    %12 = sbr.rel target = $region3
  $region8: #{_lambda_.6} parent=0 // loop_exit
    _

// kernel: _lambda_.5
$region0: #{_lambda_.5}
  #allocation0 [shape = 'u32[]', space=smem, size = 0x4, offset = 0x4, fixed_abs, tag = 'smem constant byte address 0x4 - core index']
  #allocation1 [shape = 'u32[144,128]{1,0:T(1,128)}', space=vmem, size = 0x12000, scoped, tag = 'internal scratch']
  #allocation2 [shape = 'f32[18,18,8]{2,1,0:T(8,128)}', space=vmem, size = 0x36000, scoped, tag = 'scratch operand']
  #allocation3 [shape = 'bf16[16,16,72]{2,1,0:T(16,128)(2,1)}', space=vmem, size = 0x10000, scoped, tag = 'scratch operand']
  %s0 = inlined_call_operand.vmem [shape: f32[2,16,16,4], index: 0, kind: input, shape index: {}]
  %s1 = inlined_call_operand.vmem [shape: bf16[2,16,16,4], index: 1, kind: input, shape index: {}]
  %s2 = inlined_call_operand.vmem [shape: f32[1,8], index: 2, kind: input, shape index: {}]
  %s3 = inlined_call_operand.vmem [shape: f32[1,8], index: 3, kind: input, shape index: {}]
  %s4 = inlined_call_operand.vmem [shape: bf16[72,4], index: 4, kind: input, shape index: {}]
  %s5 = inlined_call_operand.vmem [shape: f32[1,4], index: 5, kind: input, shape index: {}]
  %s6 = inlined_call_operand.vmem [shape: bf16[2,16,16,4], index: 6, kind: output, shape index: {0}]
  %s7 = inlined_call_operand.vmem [shape: f32[2,2,4], index: 7, kind: output, shape index: {1}]
  %8 = xla_tuple %s6, %s7
  %s9 = sld [smem:[#allocation0]]
  $region65: #{_lambda_.5} parent=0
    _
  %s11 = ssub.s32 1, %s9
  %s12 = scalar_select 0, %s11, %s9
  loop: start=0, step=1, limit=4
  $region2: #{_lambda_.5} parent=0 // loop_pre_header
    _
  $region3: #{_lambda_.5} parent=0 // loop_header
    %s14 = sphi 0, %s18
    %p15 = scmp.ge.s32.totalorder %s14, 4
    %s24 = sphi 0, %s26
    %s27 = sphi 0, %s24
    %s28 = sphi 0, %s27
    %s44 = sphi 0, %s28
    %s50 = sphi 0, %s52
    %s53 = sphi 0, %s50
    %s54 = sphi 0, %s53
    %s70 = sphi 0, %s54
    %s74 = sphi 0, %s74
    %s76 = sphi 0, %s74
    %s77 = sphi 0, %s76
    %s91 = sphi 0, %s77
    %s95 = sphi 0, %s95
    %s97 = sphi 0, %s95
    %s98 = sphi 0, %s97
    %s112 = sphi 0, %s98
    %s116 = sphi 0, %s116
    %s118 = sphi 0, %s116
    %s119 = sphi 0, %s118
    %s133 = sphi 0, %s119
    %s137 = sphi 0, %s137
    %s139 = sphi 0, %s137
    %s140 = sphi 0, %s139
    %s154 = sphi 0, %s140
    %s160 = sphi 0, %s162
    %s163 = sphi 0, %s160
    %s164 = sphi 0, %s163
    %s180 = sphi 0, %s164
    %s186 = sphi 0, %s188
    %s189 = sphi 0, %s186
    %s190 = sphi 0, %s189
    %s206 = sphi 0, %s190
  $region4: #{_lambda_.5} parent=0 // loop_header_branch
    %17 = sbr.rel (%p15) target = $region8
  $region5: #{_lambda_.5} parent=0 // loop_body
    %s19 = ssub.s32 %s14, 1
    %s20 = ssub.s32 %s14, 2
    %s21 = sadd.s32 %s14, 1
    %s22 = ssub.s32 %s14, %s21
    %p23 = scmp.eq.s32.totalorder %s22, 0
    %s25 = sadd.s32 %s24, 1
    %s26 = scalar_select %p23, %s24, %s25
    %p29 = pneg %p23
    %p30 = scmp.eq.s32.totalorder %s14, 1
    %p31 = por %p29, %p30
    %p32 = scmp.ne.s32.totalorder %s24, %s27
    %p33 = scmp.eq.s32.totalorder %s14, 0
    %p34 = por %p32, %p33
    %p35 = scmp.ne.s32.totalorder %s24, %s27
    %p36 = scmp.eq.s32.totalorder %s19, 1
    %p37 = por %p35, %p36
    %p38 = scmp.ne.s32.totalorder %s27, %s28
    %p39 = scmp.eq.s32.totalorder %s19, 0
    %p40 = por %p38, %p39
    %p41 = scmp.ne.s32.totalorder %s27, %s28
    %p42 = scmp.eq.s32.totalorder %s20, 1
    %p43 = por %p41, %p42
    %p45 = scmp.ne.s32.totalorder %s28, %s44
    %p46 = scmp.eq.s32.totalorder %s20, 0
    %p47 = por %p45, %p46
    %s48 = ssub.s32 %s14, %s21
    %p49 = scmp.eq.s32.totalorder %s48, 0
    %s51 = sadd.s32 %s50, 1
    %s52 = scalar_select %p49, %s50, %s51
    %p55 = pneg %p49
    %p56 = scmp.eq.s32.totalorder %s14, 1
    %p57 = por %p55, %p56
    %p58 = scmp.ne.s32.totalorder %s50, %s53
    %p59 = scmp.eq.s32.totalorder %s14, 0
    %p60 = por %p58, %p59
    %p61 = scmp.ne.s32.totalorder %s50, %s53
    %p62 = scmp.eq.s32.totalorder %s19, 1
    %p63 = por %p61, %p62
    %p64 = scmp.ne.s32.totalorder %s53, %s54
    %p65 = scmp.eq.s32.totalorder %s19, 0
    %p66 = por %p64, %p65
    %p67 = scmp.ne.s32.totalorder %s53, %s54
    %p68 = scmp.eq.s32.totalorder %s20, 1
    %p69 = por %p67, %p68
    %p71 = scmp.ne.s32.totalorder %s54, %s70
    %p72 = scmp.eq.s32.totalorder %s20, 0
    %p73 = por %p71, %p72
    %s75 = sadd.s32 %s74, 1
    %p78 = scmp.eq.s32.totalorder %s14, 1
    %p79 = scmp.ne.s32.totalorder %s74, %s76
    %p80 = scmp.eq.s32.totalorder %s14, 0
    %p81 = por %p79, %p80
    %p82 = scmp.ne.s32.totalorder %s74, %s76
    %p83 = scmp.eq.s32.totalorder %s19, 1
    %p84 = por %p82, %p83
    %p85 = scmp.ne.s32.totalorder %s76, %s77
    %p86 = scmp.eq.s32.totalorder %s19, 0
    %p87 = por %p85, %p86
    %p88 = scmp.ne.s32.totalorder %s76, %s77
    %p89 = scmp.eq.s32.totalorder %s20, 1
    %p90 = por %p88, %p89
    %p92 = scmp.ne.s32.totalorder %s77, %s91
    %p93 = scmp.eq.s32.totalorder %s20, 0
    %p94 = por %p92, %p93
    %s96 = sadd.s32 %s95, 1
    %p99 = scmp.eq.s32.totalorder %s14, 1
    %p100 = scmp.ne.s32.totalorder %s95, %s97
    %p101 = scmp.eq.s32.totalorder %s14, 0
    %p102 = por %p100, %p101
    %p103 = scmp.ne.s32.totalorder %s95, %s97
    %p104 = scmp.eq.s32.totalorder %s19, 1
    %p105 = por %p103, %p104
    %p106 = scmp.ne.s32.totalorder %s97, %s98
    %p107 = scmp.eq.s32.totalorder %s19, 0
    %p108 = por %p106, %p107
    %p109 = scmp.ne.s32.totalorder %s97, %s98
    %p110 = scmp.eq.s32.totalorder %s20, 1
    %p111 = por %p109, %p110
    %p113 = scmp.ne.s32.totalorder %s98, %s112
    %p114 = scmp.eq.s32.totalorder %s20, 0
    %p115 = por %p113, %p114
    %s117 = sadd.s32 %s116, 1
    %p120 = scmp.eq.s32.totalorder %s14, 1
    %p121 = scmp.ne.s32.totalorder %s116, %s118
    %p122 = scmp.eq.s32.totalorder %s14, 0
    %p123 = por %p121, %p122
    %p124 = scmp.ne.s32.totalorder %s116, %s118
    %p125 = scmp.eq.s32.totalorder %s19, 1
    %p126 = por %p124, %p125
    %p127 = scmp.ne.s32.totalorder %s118, %s119
    %p128 = scmp.eq.s32.totalorder %s19, 0
    %p129 = por %p127, %p128
    %p130 = scmp.ne.s32.totalorder %s118, %s119
    %p131 = scmp.eq.s32.totalorder %s20, 1
    %p132 = por %p130, %p131
    %p134 = scmp.ne.s32.totalorder %s119, %s133
    %p135 = scmp.eq.s32.totalorder %s20, 0
    %p136 = por %p134, %p135
    %s138 = sadd.s32 %s137, 1
    %p141 = scmp.eq.s32.totalorder %s14, 1
    %p142 = scmp.ne.s32.totalorder %s137, %s139
    %p143 = scmp.eq.s32.totalorder %s14, 0
    %p144 = por %p142, %p143
    %p145 = scmp.ne.s32.totalorder %s137, %s139
    %p146 = scmp.eq.s32.totalorder %s19, 1
    %p147 = por %p145, %p146
    %p148 = scmp.ne.s32.totalorder %s139, %s140
    %p149 = scmp.eq.s32.totalorder %s19, 0
    %p150 = por %p148, %p149
    %p151 = scmp.ne.s32.totalorder %s139, %s140
    %p152 = scmp.eq.s32.totalorder %s20, 1
    %p153 = por %p151, %p152
    %p155 = scmp.ne.s32.totalorder %s140, %s154
    %p156 = scmp.eq.s32.totalorder %s20, 0
    %p157 = por %p155, %p156
    %s158 = ssub.s32 %s14, %s21
    %p159 = scmp.eq.s32.totalorder %s158, 0
    %s161 = sadd.s32 %s160, 1
    %s162 = scalar_select %p159, %s160, %s161
    %p165 = pneg %p159
    %p166 = scmp.eq.s32.totalorder %s14, 1
    %p167 = por %p165, %p166
    %p168 = scmp.ne.s32.totalorder %s160, %s163
    %p169 = scmp.eq.s32.totalorder %s14, 0
    %p170 = por %p168, %p169
    %p171 = scmp.ne.s32.totalorder %s160, %s163
    %p172 = scmp.eq.s32.totalorder %s19, 1
    %p173 = por %p171, %p172
    %p174 = scmp.ne.s32.totalorder %s163, %s164
    %p175 = scmp.eq.s32.totalorder %s19, 0
    %p176 = por %p174, %p175
    %p177 = scmp.ne.s32.totalorder %s163, %s164
    %p178 = scmp.eq.s32.totalorder %s20, 1
    %p179 = por %p177, %p178
    %p181 = scmp.ne.s32.totalorder %s164, %s180
    %p182 = scmp.eq.s32.totalorder %s20, 0
    %p183 = por %p181, %p182
    %s184 = ssub.s32 %s14, %s21
    %p185 = scmp.eq.s32.totalorder %s184, 0
    %s187 = sadd.s32 %s186, 1
    %s188 = scalar_select %p185, %s186, %s187
    %p191 = pneg %p185
    %p192 = scmp.eq.s32.totalorder %s14, 1
    %p193 = por %p191, %p192
    %p194 = scmp.ne.s32.totalorder %s186, %s189
    %p195 = scmp.eq.s32.totalorder %s14, 0
    %p196 = por %p194, %p195
    %p197 = scmp.ne.s32.totalorder %s186, %s189
    %p198 = scmp.eq.s32.totalorder %s19, 1
    %p199 = por %p197, %p198
    %p200 = scmp.ne.s32.totalorder %s189, %s190
    %p201 = scmp.eq.s32.totalorder %s19, 0
    %p202 = por %p200, %p201
    %p203 = scmp.ne.s32.totalorder %s189, %s190
    %p204 = scmp.eq.s32.totalorder %s20, 1
    %p205 = por %p203, %p204
    %p207 = scmp.ne.s32.totalorder %s190, %s206
    %p208 = scmp.eq.s32.totalorder %s20, 0
    %p209 = por %p207, %p208
    %p210 = scmp.le.s32.totalorder 1, %s14
    %p211 = scmp.lt.s32.totalorder %s14, 3
    %p212 = pnand %p210, %p211
    %p213 = pneg %p212
    // Predicated region
    $region9: #{_lambda_.5} parent=5 // pred_check
      _
    $region10: #{_lambda_.5} parent=5 // pred_check_branch
      %215 = sbr.rel (%p212) target = $region12
    $region11: #{_lambda_.5} parent=5 // pred_region
      %s216 = ssub.s32 %s14, 1
      // Predicated region
      $region13: #{_lambda_.5} parent=11 // pred_check
        %p217 = pneg %p87
      $region14: #{_lambda_.5} parent=11 // pred_check_branch
        %219 = sbr.rel (%p217) target = $region16
      $region15: #{_lambda_.5} parent=11 // pred_region
        _
      $region16: #{_lambda_.5} parent=11 // pred_fallthru
        _
      // Predicated region
      $region17: #{_lambda_.5} parent=11 // pred_check
        %p220 = pneg %p108
      $region18: #{_lambda_.5} parent=11 // pred_check_branch
        %222 = sbr.rel (%p220) target = $region20
      $region19: #{_lambda_.5} parent=11 // pred_region
        _
      $region20: #{_lambda_.5} parent=11 // pred_fallthru
        _
      // Predicated region
      $region21: #{_lambda_.5} parent=11 // pred_check
        %p223 = pneg %p129
      $region22: #{_lambda_.5} parent=11 // pred_check_branch
        %225 = sbr.rel (%p223) target = $region24
      $region23: #{_lambda_.5} parent=11 // pred_region
        _
      $region24: #{_lambda_.5} parent=11 // pred_fallthru
        _
      // Predicated region
      $region25: #{_lambda_.5} parent=11 // pred_check
        %p226 = pneg %p150
      $region26: #{_lambda_.5} parent=11 // pred_check_branch
        %228 = sbr.rel (%p226) target = $region28
      $region27: #{_lambda_.5} parent=11 // pred_region
        _
      $region28: #{_lambda_.5} parent=11 // pred_fallthru
        _
    $region12: #{_lambda_.5} parent=5 // pred_fallthru
      _
    %p229 = scmp.lt.s32.totalorder %s14, 2
    // Predicated region
    $region29: #{_lambda_.5} parent=5 // pred_check
      %p230 = pneg %p229
    $region30: #{_lambda_.5} parent=5 // pred_check_branch
      %232 = sbr.rel (%p230) target = $region32
    $region31: #{_lambda_.5} parent=5 // pred_region
      // Predicated region
      $region33: #{_lambda_.5} parent=31 // pred_check
        %p233 = pneg %p34
      $region34: #{_lambda_.5} parent=31 // pred_check_branch
        %235 = sbr.rel (%p233) target = $region36
      $region35: #{_lambda_.5} parent=31 // pred_region
        %p236 = scmp.lt.s32.totalorder %s14, 1
        %s237 = scalar_select %p236, %s14, 1
        %s238 = smul.addr %s237, 32
        %s239 = smul.addr %s238, 8
        %s240 = scalar_lea.vmem %s0, %s239
      $region36: #{_lambda_.5} parent=31 // pred_fallthru
        _
      // Predicated region
      $region37: #{_lambda_.5} parent=31 // pred_check
        %p241 = pneg %p60
      $region38: #{_lambda_.5} parent=31 // pred_check_branch
        %243 = sbr.rel (%p241) target = $region40
      $region39: #{_lambda_.5} parent=31 // pred_region
        %p244 = scmp.lt.s32.totalorder %s14, 1
        %s245 = scalar_select %p244, %s14, 1
        %s246 = smul.addr %s245, 32
        %s247 = smul.addr %s246, 4
        %s248 = scalar_lea.vmem %s1, %s247
      $region40: #{_lambda_.5} parent=31 // pred_fallthru
        _
    $region32: #{_lambda_.5} parent=5 // pred_fallthru
      _
    %p249 = scmp.le.s32.totalorder 1, %s14
    %p250 = scmp.lt.s32.totalorder %s14, 3
    %p251 = pnand %p249, %p250
    %p252 = pneg %p251
    // Predicated region
    $region41: #{_lambda_.5} parent=5 // pred_check
      _
    $region42: #{_lambda_.5} parent=5 // pred_check_branch
      %254 = sbr.rel (%p251) target = $region44
    $region43: #{_lambda_.5} parent=5 // pred_region
      %s255 = ssub.s32 %s14, 1
      %p256 = scmp.lt.s32.totalorder %s19, 1
      %s257 = scalar_select %p256, %s19, 1
      %s258 = smul.addr %s257, 32
      %s259 = smul.addr %s258, 8
      %s260 = scalar_lea.vmem %s0, %s259
      %p261 = pneg %p40
      %p262 = pneg %p37
      %p263 = scmp.lt.s32.totalorder %s19, 1
      %s264 = scalar_select %p263, %s19, 1
      %s265 = smul.addr %s264, 32
      %s266 = smul.addr %s265, 4
      %s267 = scalar_lea.vmem %s1, %s266
      %p268 = pneg %p66
      %p269 = pneg %p63
      %p270 = pneg %p87
      %p271 = pneg %p84
      %p272 = pneg %p108
      %p273 = pneg %p105
      %p274 = pneg %p129
      %p275 = pneg %p126
      %p276 = pneg %p150
      %p277 = pneg %p147
      %p278 = pneg %p176
      %p279 = pneg %p173
      %p280 = scmp.lt.s32.totalorder %s19, 1
      %s281 = scalar_select %p280, %s19, 1
      %s282 = smul.addr %s281, 32
      %s283 = smul.addr %s282, 4
      %s284 = scalar_lea.vmem %s6, %s283
      %p285 = pneg %p202
      %p286 = pneg %p199
      %p287 = scmp.lt.s32.totalorder %s19, 1
      %s288 = scalar_select %p287, %s19, 1
      %s289 = smul.addr %s288, 2
      %s290 = scalar_lea.vmem %s7, %s289
      %p291 = scmp.lt.s32.totalorder %s19, 1
      %s292 = scalar_select %p291, %s19, 1
      %s293 = smul.addr %s292, 32
      %s294 = smul.addr %s293, 8
      %s295 = scalar_lea.vmem %s0, %s294
      %p296 = scmp.lt.s32.totalorder %s19, 1
      %s297 = scalar_select %p296, %s19, 1
      %s298 = smul.addr %s297, 32
      %s299 = smul.addr %s298, 4
      %s300 = scalar_lea.vmem %s1, %s299
      %p301 = scmp.lt.s32.totalorder %s19, 1
      %s302 = scalar_select %p301, %s19, 1
      %s303 = smul.addr %s302, 32
      %s304 = smul.addr %s303, 4
      %s305 = scalar_lea.vmem %s6, %s304
      %p306 = scmp.lt.s32.totalorder %s19, 1
      %s307 = scalar_select %p306, %s19, 1
      %s308 = smul.addr %s307, 2
      %s309 = scalar_lea.vmem %s7, %s308
      %vm311 = vcmask 64512
      %312 = vst.msk [vmem:[#allocation2] sm:$0xff] %vm311, 0.0
      %313 = vst.msk [vmem:[#allocation2 + $0x8] sm:$0xff] %vm311, 0.0
      %vm314 = vcmask 58368
      %315 = vst.msk [vmem:[#allocation2 + $0x10] sm:$0x3] %vm314, 0.0
      %s316 = scalar_lea.vmem [#allocation2], 408
      %317 = vst.msk [vmem:[%s316] sm:$0xff] %vm311, 0.0
      %318 = vst.msk [vmem:[%s316 + $0x8] sm:$0xff] %vm311, 0.0
      %319 = vst.msk [vmem:[%s316 + $0x10] sm:$0x3] %vm314, 0.0
      %vm320 = vcmask 57344
      %321 = vst.msk [vmem:[#allocation2] sm:$0x1] %vm320, 0.0
      %322 = vst.msk [vmem:[#allocation2 + $0x18] sm:$0x1] %vm320, 0.0
      %323 = vst.msk [vmem:[#allocation2 + $0x30] sm:$0x1] %vm320, 0.0
      %324 = vst.msk [vmem:[#allocation2 + $0x48] sm:$0x1] %vm320, 0.0
      %325 = vst.msk [vmem:[#allocation2 + $0x60] sm:$0x1] %vm320, 0.0
      %326 = vst.msk [vmem:[#allocation2 + $0x78] sm:$0x1] %vm320, 0.0
      %327 = vst.msk [vmem:[#allocation2 + $0x90] sm:$0x1] %vm320, 0.0
      %328 = vst.msk [vmem:[#allocation2 + $0xa8] sm:$0x1] %vm320, 0.0
      %329 = vst.msk [vmem:[#allocation2 + $0xc0] sm:$0x1] %vm320, 0.0
      %330 = vst.msk [vmem:[#allocation2 + $0xd8] sm:$0x1] %vm320, 0.0
      %331 = vst.msk [vmem:[#allocation2 + $0xf0] sm:$0x1] %vm320, 0.0
      %332 = vst.msk [vmem:[#allocation2 + $0x108] sm:$0x1] %vm320, 0.0
      %333 = vst.msk [vmem:[#allocation2 + $0x120] sm:$0x1] %vm320, 0.0
      %334 = vst.msk [vmem:[#allocation2 + $0x138] sm:$0x1] %vm320, 0.0
      %335 = vst.msk [vmem:[#allocation2 + $0x150] sm:$0x1] %vm320, 0.0
      %336 = vst.msk [vmem:[#allocation2 + $0x168] sm:$0x1] %vm320, 0.0
      %337 = vst.msk [vmem:[#allocation2 + $0x180] sm:$0x1] %vm320, 0.0
      %338 = vst.msk [vmem:[#allocation2 + $0x198] sm:$0x1] %vm320, 0.0
      %339 = vst.msk [vmem:[#allocation2 + $0x11] sm:$0x1] %vm320, 0.0
      %340 = vst.msk [vmem:[#allocation2 + $0x29] sm:$0x1] %vm320, 0.0
      %341 = vst.msk [vmem:[#allocation2 + $0x41] sm:$0x1] %vm320, 0.0
      %342 = vst.msk [vmem:[#allocation2 + $0x59] sm:$0x1] %vm320, 0.0
      %343 = vst.msk [vmem:[#allocation2 + $0x71] sm:$0x1] %vm320, 0.0
      %344 = vst.msk [vmem:[#allocation2 + $0x89] sm:$0x1] %vm320, 0.0
      %345 = vst.msk [vmem:[#allocation2 + $0xa1] sm:$0x1] %vm320, 0.0
      %346 = vst.msk [vmem:[#allocation2 + $0xb9] sm:$0x1] %vm320, 0.0
      %347 = vst.msk [vmem:[#allocation2 + $0xd1] sm:$0x1] %vm320, 0.0
      %348 = vst.msk [vmem:[#allocation2 + $0xe9] sm:$0x1] %vm320, 0.0
      %349 = vst.msk [vmem:[#allocation2 + $0x101] sm:$0x1] %vm320, 0.0
      %350 = vst.msk [vmem:[#allocation2 + $0x119] sm:$0x1] %vm320, 0.0
      %351 = vst.msk [vmem:[#allocation2 + $0x131] sm:$0x1] %vm320, 0.0
      %352 = vst.msk [vmem:[#allocation2 + $0x149] sm:$0x1] %vm320, 0.0
      %353 = vst.msk [vmem:[#allocation2 + $0x161] sm:$0x1] %vm320, 0.0
      %354 = vst.msk [vmem:[#allocation2 + $0x179] sm:$0x1] %vm320, 0.0
      %355 = vst.msk [vmem:[#allocation2 + $0x191] sm:$0x1] %vm320, 0.0
      %356 = vst.msk [vmem:[#allocation2 + $0x1a9] sm:$0x1] %vm320, 0.0
      %v357 = vld [vmem:[%s295] sm:$0xff]
      %v358 = vld [vmem:[%s295 + $0x8] sm:$0xff]
      %v359 = vld [vmem:[%s295 + $0x10] sm:$0xff]
      %v360 = vld [vmem:[%s295 + $0x18] sm:$0xff]
      %v361 = vld [vmem:[%s295 + $0x20] sm:$0xff]
      %v362 = vld [vmem:[%s295 + $0x28] sm:$0xff]
      %v363 = vld [vmem:[%s295 + $0x30] sm:$0xff]
      %v364 = vld [vmem:[%s295 + $0x38] sm:$0xff]
      %v365 = vld [vmem:[%s295 + $0x40] sm:$0xff]
      %v366 = vld [vmem:[%s295 + $0x48] sm:$0xff]
      %v367 = vld [vmem:[%s295 + $0x50] sm:$0xff]
      %v368 = vld [vmem:[%s295 + $0x58] sm:$0xff]
      %v369 = vld [vmem:[%s295 + $0x60] sm:$0xff]
      %v370 = vld [vmem:[%s295 + $0x68] sm:$0xff]
      %v371 = vld [vmem:[%s295 + $0x70] sm:$0xff]
      %v372 = vld [vmem:[%s295 + $0x78] sm:$0xff]
      %v373 = vld [vmem:[%s295 + $0x80] sm:$0xff]
      %v374 = vld [vmem:[%s295 + $0x88] sm:$0xff]
      %v375 = vld [vmem:[%s295 + $0x90] sm:$0xff]
      %v376 = vld [vmem:[%s295 + $0x98] sm:$0xff]
      %v377 = vld [vmem:[%s295 + $0xa0] sm:$0xff]
      %v378 = vld [vmem:[%s295 + $0xa8] sm:$0xff]
      %v379 = vld [vmem:[%s295 + $0xb0] sm:$0xff]
      %v380 = vld [vmem:[%s295 + $0xb8] sm:$0xff]
      %v381 = vld [vmem:[%s295 + $0xc0] sm:$0xff]
      %v382 = vld [vmem:[%s295 + $0xc8] sm:$0xff]
      %v383 = vld [vmem:[%s295 + $0xd0] sm:$0xff]
      %v384 = vld [vmem:[%s295 + $0xd8] sm:$0xff]
      %v385 = vld [vmem:[%s295 + $0xe0] sm:$0xff]
      %v386 = vld [vmem:[%s295 + $0xe8] sm:$0xff]
      %v387 = vld [vmem:[%s295 + $0xf0] sm:$0xff]
      %v388 = vld [vmem:[%s295 + $0xf8] sm:$0xff]
      %v389 = vld [vmem:[%s2] sm:$0x1]
      %v391 = vlaneseq
      %v392 = vshrl.u32 %v391, 7
      %v393 = vsub.s32 0, %v392
      %v394 = vrot.slane %v389, %v393
      %v396 = vmul.f32 %v357, %v394
      %v397 = vmul.f32 %v358, %v394
      %v398 = vmul.f32 %v359, %v394
      %v399 = vmul.f32 %v360, %v394
      %v400 = vmul.f32 %v361, %v394
      %v401 = vmul.f32 %v362, %v394
      %v402 = vmul.f32 %v363, %v394
      %v403 = vmul.f32 %v364, %v394
      %v404 = vmul.f32 %v365, %v394
      %v405 = vmul.f32 %v366, %v394
      %v406 = vmul.f32 %v367, %v394
      %v407 = vmul.f32 %v368, %v394
      %v408 = vmul.f32 %v369, %v394
      %v409 = vmul.f32 %v370, %v394
      %v410 = vmul.f32 %v371, %v394
      %v411 = vmul.f32 %v372, %v394
      %v412 = vmul.f32 %v373, %v394
      %v413 = vmul.f32 %v374, %v394
      %v414 = vmul.f32 %v375, %v394
      %v415 = vmul.f32 %v376, %v394
      %v416 = vmul.f32 %v377, %v394
      %v417 = vmul.f32 %v378, %v394
      %v418 = vmul.f32 %v379, %v394
      %v419 = vmul.f32 %v380, %v394
      %v420 = vmul.f32 %v381, %v394
      %v421 = vmul.f32 %v382, %v394
      %v422 = vmul.f32 %v383, %v394
      %v423 = vmul.f32 %v384, %v394
      %v424 = vmul.f32 %v385, %v394
      %v425 = vmul.f32 %v386, %v394
      %v426 = vmul.f32 %v387, %v394
      %v427 = vmul.f32 %v388, %v394
      %v428 = vld [vmem:[%s3] sm:$0x1]
      %v430 = vlaneseq
      %v431 = vshrl.u32 %v430, 7
      %v432 = vsub.s32 0, %v431
      %v433 = vrot.slane %v428, %v432
      %v435 = vadd.f32 %v396, %v433
      %v436 = vadd.f32 %v397, %v433
      %v437 = vadd.f32 %v398, %v433
      %v438 = vadd.f32 %v399, %v433
      %v439 = vadd.f32 %v400, %v433
      %v440 = vadd.f32 %v401, %v433
      %v441 = vadd.f32 %v402, %v433
      %v442 = vadd.f32 %v403, %v433
      %v443 = vadd.f32 %v404, %v433
      %v444 = vadd.f32 %v405, %v433
      %v445 = vadd.f32 %v406, %v433
      %v446 = vadd.f32 %v407, %v433
      %v447 = vadd.f32 %v408, %v433
      %v448 = vadd.f32 %v409, %v433
      %v449 = vadd.f32 %v410, %v433
      %v450 = vadd.f32 %v411, %v433
      %v451 = vadd.f32 %v412, %v433
      %v452 = vadd.f32 %v413, %v433
      %v453 = vadd.f32 %v414, %v433
      %v454 = vadd.f32 %v415, %v433
      %v455 = vadd.f32 %v416, %v433
      %v456 = vadd.f32 %v417, %v433
      %v457 = vadd.f32 %v418, %v433
      %v458 = vadd.f32 %v419, %v433
      %v459 = vadd.f32 %v420, %v433
      %v460 = vadd.f32 %v421, %v433
      %v461 = vadd.f32 %v422, %v433
      %v462 = vadd.f32 %v423, %v433
      %v463 = vadd.f32 %v424, %v433
      %v464 = vadd.f32 %v425, %v433
      %v465 = vadd.f32 %v426, %v433
      %v466 = vadd.f32 %v427, %v433
      %v467 = vmax.f32 %v435, 0.0
      %v468 = vmax.f32 %v436, 0.0
      %v469 = vmax.f32 %v437, 0.0
      %v470 = vmax.f32 %v438, 0.0
      %v471 = vmax.f32 %v439, 0.0
      %v472 = vmax.f32 %v440, 0.0
      %v473 = vmax.f32 %v441, 0.0
      %v474 = vmax.f32 %v442, 0.0
      %v475 = vmax.f32 %v443, 0.0
      %v476 = vmax.f32 %v444, 0.0
      %v477 = vmax.f32 %v445, 0.0
      %v478 = vmax.f32 %v446, 0.0
      %v479 = vmax.f32 %v447, 0.0
      %v480 = vmax.f32 %v448, 0.0
      %v481 = vmax.f32 %v449, 0.0
      %v482 = vmax.f32 %v450, 0.0
      %v483 = vmax.f32 %v451, 0.0
      %v484 = vmax.f32 %v452, 0.0
      %v485 = vmax.f32 %v453, 0.0
      %v486 = vmax.f32 %v454, 0.0
      %v487 = vmax.f32 %v455, 0.0
      %v488 = vmax.f32 %v456, 0.0
      %v489 = vmax.f32 %v457, 0.0
      %v490 = vmax.f32 %v458, 0.0
      %v491 = vmax.f32 %v459, 0.0
      %v492 = vmax.f32 %v460, 0.0
      %v493 = vmax.f32 %v461, 0.0
      %v494 = vmax.f32 %v462, 0.0
      %v495 = vmax.f32 %v463, 0.0
      %v496 = vmax.f32 %v464, 0.0
      %v497 = vmax.f32 %v465, 0.0
      %v498 = vmax.f32 %v466, 0.0
      %s499 = scalar_lea.vmem [#allocation2], 24
      %vm500 = vcmask 31744
      %501 = vst.msk [vmem:[%s499 + $0x1] sm:$0xff] %vm500, %v467
      %502 = vst.msk [vmem:[%s499 + $0x9] sm:$0xff] %vm500, %v468
      %503 = vst.msk [vmem:[%s499 + $0x19] sm:$0xff] %vm500, %v469
      %504 = vst.msk [vmem:[%s499 + $0x21] sm:$0xff] %vm500, %v470
      %505 = vst.msk [vmem:[%s499 + $0x31] sm:$0xff] %vm500, %v471
      %506 = vst.msk [vmem:[%s499 + $0x39] sm:$0xff] %vm500, %v472
      %507 = vst.msk [vmem:[%s499 + $0x49] sm:$0xff] %vm500, %v473
      %508 = vst.msk [vmem:[%s499 + $0x51] sm:$0xff] %vm500, %v474
      %509 = vst.msk [vmem:[%s499 + $0x61] sm:$0xff] %vm500, %v475
      %510 = vst.msk [vmem:[%s499 + $0x69] sm:$0xff] %vm500, %v476
      %511 = vst.msk [vmem:[%s499 + $0x79] sm:$0xff] %vm500, %v477
      %512 = vst.msk [vmem:[%s499 + $0x81] sm:$0xff] %vm500, %v478
      %513 = vst.msk [vmem:[%s499 + $0x91] sm:$0xff] %vm500, %v479
      %514 = vst.msk [vmem:[%s499 + $0x99] sm:$0xff] %vm500, %v480
      %515 = vst.msk [vmem:[%s499 + $0xa9] sm:$0xff] %vm500, %v481
      %516 = vst.msk [vmem:[%s499 + $0xb1] sm:$0xff] %vm500, %v482
      %517 = vst.msk [vmem:[%s499 + $0xc1] sm:$0xff] %vm500, %v483
      %518 = vst.msk [vmem:[%s499 + $0xc9] sm:$0xff] %vm500, %v484
      %519 = vst.msk [vmem:[%s499 + $0xd9] sm:$0xff] %vm500, %v485
      %520 = vst.msk [vmem:[%s499 + $0xe1] sm:$0xff] %vm500, %v486
      %521 = vst.msk [vmem:[%s499 + $0xf1] sm:$0xff] %vm500, %v487
      %522 = vst.msk [vmem:[%s499 + $0xf9] sm:$0xff] %vm500, %v488
      %523 = vst.msk [vmem:[%s499 + $0x109] sm:$0xff] %vm500, %v489
      %524 = vst.msk [vmem:[%s499 + $0x111] sm:$0xff] %vm500, %v490
      %525 = vst.msk [vmem:[%s499 + $0x121] sm:$0xff] %vm500, %v491
      %526 = vst.msk [vmem:[%s499 + $0x129] sm:$0xff] %vm500, %v492
      %527 = vst.msk [vmem:[%s499 + $0x139] sm:$0xff] %vm500, %v493
      %528 = vst.msk [vmem:[%s499 + $0x141] sm:$0xff] %vm500, %v494
      %529 = vst.msk [vmem:[%s499 + $0x151] sm:$0xff] %vm500, %v495
      %530 = vst.msk [vmem:[%s499 + $0x159] sm:$0xff] %vm500, %v496
      %531 = vst.msk [vmem:[%s499 + $0x169] sm:$0xff] %vm500, %v497
      %532 = vst.msk [vmem:[%s499 + $0x171] sm:$0xff] %vm500, %v498
      %v533 = vld [vmem:[%s300] sm:$0xf]
      %v534 = vld [vmem:[%s300 + $0x4] sm:$0xf]
      %v535 = vld [vmem:[%s300 + $0x8] sm:$0xf]
      %v536 = vld [vmem:[%s300 + $0xc] sm:$0xf]
      %v537 = vld [vmem:[%s300 + $0x10] sm:$0xf]
      %v538 = vld [vmem:[%s300 + $0x14] sm:$0xf]
      %v539 = vld [vmem:[%s300 + $0x18] sm:$0xf]
      %v540 = vld [vmem:[%s300 + $0x1c] sm:$0xf]
      %v541 = vld [vmem:[%s300 + $0x20] sm:$0xf]
      %v542 = vld [vmem:[%s300 + $0x24] sm:$0xf]
      %v543 = vld [vmem:[%s300 + $0x28] sm:$0xf]
      %v544 = vld [vmem:[%s300 + $0x2c] sm:$0xf]
      %v545 = vld [vmem:[%s300 + $0x30] sm:$0xf]
      %v546 = vld [vmem:[%s300 + $0x34] sm:$0xf]
      %v547 = vld [vmem:[%s300 + $0x38] sm:$0xf]
      %v548 = vld [vmem:[%s300 + $0x3c] sm:$0xf]
      %v549 = vld [vmem:[%s300 + $0x40] sm:$0xf]
      %v550 = vld [vmem:[%s300 + $0x44] sm:$0xf]
      %v551 = vld [vmem:[%s300 + $0x48] sm:$0xf]
      %v552 = vld [vmem:[%s300 + $0x4c] sm:$0xf]
      %v553 = vld [vmem:[%s300 + $0x50] sm:$0xf]
      %v554 = vld [vmem:[%s300 + $0x54] sm:$0xf]
      %v555 = vld [vmem:[%s300 + $0x58] sm:$0xf]
      %v556 = vld [vmem:[%s300 + $0x5c] sm:$0xf]
      %v557 = vld [vmem:[%s300 + $0x60] sm:$0xf]
      %v558 = vld [vmem:[%s300 + $0x64] sm:$0xf]
      %v559 = vld [vmem:[%s300 + $0x68] sm:$0xf]
      %v560 = vld [vmem:[%s300 + $0x6c] sm:$0xf]
      %v561 = vld [vmem:[%s300 + $0x70] sm:$0xf]
      %v562 = vld [vmem:[%s300 + $0x74] sm:$0xf]
      %v563 = vld [vmem:[%s300 + $0x78] sm:$0xf]
      %v564 = vld [vmem:[%s300 + $0x7c] sm:$0xf]
      %v565 = vunpack.c.l.bf16 %v533
      %v566 = vunpack.c.l.bf16 %v534
      %v567 = vunpack.c.l.bf16 %v535
      %v568 = vunpack.c.l.bf16 %v536
      %v569 = vunpack.c.l.bf16 %v537
      %v570 = vunpack.c.l.bf16 %v538
      %v571 = vunpack.c.l.bf16 %v539
      %v572 = vunpack.c.l.bf16 %v540
      %v573 = vunpack.c.l.bf16 %v541
      %v574 = vunpack.c.l.bf16 %v542
      %v575 = vunpack.c.l.bf16 %v543
      %v576 = vunpack.c.l.bf16 %v544
      %v577 = vunpack.c.l.bf16 %v545
      %v578 = vunpack.c.l.bf16 %v546
      %v579 = vunpack.c.l.bf16 %v547
      %v580 = vunpack.c.l.bf16 %v548
      %v581 = vunpack.c.l.bf16 %v549
      %v582 = vunpack.c.l.bf16 %v550
      %v583 = vunpack.c.l.bf16 %v551
      %v584 = vunpack.c.l.bf16 %v552
      %v585 = vunpack.c.l.bf16 %v553
      %v586 = vunpack.c.l.bf16 %v554
      %v587 = vunpack.c.l.bf16 %v555
      %v588 = vunpack.c.l.bf16 %v556
      %v589 = vunpack.c.l.bf16 %v557
      %v590 = vunpack.c.l.bf16 %v558
      %v591 = vunpack.c.l.bf16 %v559
      %v592 = vunpack.c.l.bf16 %v560
      %v593 = vunpack.c.l.bf16 %v561
      %v594 = vunpack.c.l.bf16 %v562
      %v595 = vunpack.c.l.bf16 %v563
      %v596 = vunpack.c.l.bf16 %v564
      %v597 = vld [vmem:[%s2] sm:$0x1]
      %v599 = vlaneseq
      %v600 = vshrl.u32 %v599, 7
      %v601 = vsub.s32 0, %v600
      %v602 = vrot.slane %v597, %v601
      %603 = vrot.lane.b32.xlu0 %v602, 124
      %v604 = vpop.permute.xlu0 %603
      %v606 = vmul.f32 %v565, %v604
      %v607 = vmul.f32 %v566, %v604
      %v608 = vmul.f32 %v567, %v604
      %v609 = vmul.f32 %v568, %v604
      %v610 = vmul.f32 %v569, %v604
      %v611 = vmul.f32 %v570, %v604
      %v612 = vmul.f32 %v571, %v604
      %v613 = vmul.f32 %v572, %v604
      %v614 = vmul.f32 %v573, %v604
      %v615 = vmul.f32 %v574, %v604
      %v616 = vmul.f32 %v575, %v604
      %v617 = vmul.f32 %v576, %v604
      %v618 = vmul.f32 %v577, %v604
      %v619 = vmul.f32 %v578, %v604
      %v620 = vmul.f32 %v579, %v604
      %v621 = vmul.f32 %v580, %v604
      %v622 = vmul.f32 %v581, %v604
      %v623 = vmul.f32 %v582, %v604
      %v624 = vmul.f32 %v583, %v604
      %v625 = vmul.f32 %v584, %v604
      %v626 = vmul.f32 %v585, %v604
      %v627 = vmul.f32 %v586, %v604
      %v628 = vmul.f32 %v587, %v604
      %v629 = vmul.f32 %v588, %v604
      %v630 = vmul.f32 %v589, %v604
      %v631 = vmul.f32 %v590, %v604
      %v632 = vmul.f32 %v591, %v604
      %v633 = vmul.f32 %v592, %v604
      %v634 = vmul.f32 %v593, %v604
      %v635 = vmul.f32 %v594, %v604
      %v636 = vmul.f32 %v595, %v604
      %v637 = vmul.f32 %v596, %v604
      %v638 = vld [vmem:[%s3] sm:$0x1]
      %v640 = vlaneseq
      %v641 = vshrl.u32 %v640, 7
      %v642 = vsub.s32 0, %v641
      %v643 = vrot.slane %v638, %v642
      %644 = vrot.lane.b32.xlu0 %v643, 124
      %v645 = vpop.permute.xlu0 %644
      %v647 = vadd.f32 %v606, %v645
      %v648 = vadd.f32 %v607, %v645
      %v649 = vadd.f32 %v608, %v645
      %v650 = vadd.f32 %v609, %v645
      %v651 = vadd.f32 %v610, %v645
      %v652 = vadd.f32 %v611, %v645
      %v653 = vadd.f32 %v612, %v645
      %v654 = vadd.f32 %v613, %v645
      %v655 = vadd.f32 %v614, %v645
      %v656 = vadd.f32 %v615, %v645
      %v657 = vadd.f32 %v616, %v645
      %v658 = vadd.f32 %v617, %v645
      %v659 = vadd.f32 %v618, %v645
      %v660 = vadd.f32 %v619, %v645
      %v661 = vadd.f32 %v620, %v645
      %v662 = vadd.f32 %v621, %v645
      %v663 = vadd.f32 %v622, %v645
      %v664 = vadd.f32 %v623, %v645
      %v665 = vadd.f32 %v624, %v645
      %v666 = vadd.f32 %v625, %v645
      %v667 = vadd.f32 %v626, %v645
      %v668 = vadd.f32 %v627, %v645
      %v669 = vadd.f32 %v628, %v645
      %v670 = vadd.f32 %v629, %v645
      %v671 = vadd.f32 %v630, %v645
      %v672 = vadd.f32 %v631, %v645
      %v673 = vadd.f32 %v632, %v645
      %v674 = vadd.f32 %v633, %v645
      %v675 = vadd.f32 %v634, %v645
      %v676 = vadd.f32 %v635, %v645
      %v677 = vadd.f32 %v636, %v645
      %v678 = vadd.f32 %v637, %v645
      %v679 = vmax.f32 %v647, 0.0
      %v680 = vmax.f32 %v648, 0.0
      %v681 = vmax.f32 %v649, 0.0
      %v682 = vmax.f32 %v650, 0.0
      %v683 = vmax.f32 %v651, 0.0
      %v684 = vmax.f32 %v652, 0.0
      %v685 = vmax.f32 %v653, 0.0
      %v686 = vmax.f32 %v654, 0.0
      %v687 = vmax.f32 %v655, 0.0
      %v688 = vmax.f32 %v656, 0.0
      %v689 = vmax.f32 %v657, 0.0
      %v690 = vmax.f32 %v658, 0.0
      %v691 = vmax.f32 %v659, 0.0
      %v692 = vmax.f32 %v660, 0.0
      %v693 = vmax.f32 %v661, 0.0
      %v694 = vmax.f32 %v662, 0.0
      %v695 = vmax.f32 %v663, 0.0
      %v696 = vmax.f32 %v664, 0.0
      %v697 = vmax.f32 %v665, 0.0
      %v698 = vmax.f32 %v666, 0.0
      %v699 = vmax.f32 %v667, 0.0
      %v700 = vmax.f32 %v668, 0.0
      %v701 = vmax.f32 %v669, 0.0
      %v702 = vmax.f32 %v670, 0.0
      %v703 = vmax.f32 %v671, 0.0
      %v704 = vmax.f32 %v672, 0.0
      %v705 = vmax.f32 %v673, 0.0
      %v706 = vmax.f32 %v674, 0.0
      %v707 = vmax.f32 %v675, 0.0
      %v708 = vmax.f32 %v676, 0.0
      %v709 = vmax.f32 %v677, 0.0
      %v710 = vmax.f32 %v678, 0.0
      %743 = vrot.lane.b32.xlu0 %v679, 4
      %v744 = vpop.permute.xlu0 %743
      %745 = vrot.lane.b32.xlu0 %v680, 4
      %v746 = vpop.permute.xlu0 %745
      %747 = vrot.lane.b32.xlu0 %v681, 4
      %v748 = vpop.permute.xlu0 %747
      %749 = vrot.lane.b32.xlu0 %v682, 4
      %v750 = vpop.permute.xlu0 %749
      %751 = vrot.lane.b32.xlu0 %v683, 4
      %v752 = vpop.permute.xlu0 %751
      %753 = vrot.lane.b32.xlu0 %v684, 4
      %v754 = vpop.permute.xlu0 %753
      %755 = vrot.lane.b32.xlu0 %v685, 4
      %v756 = vpop.permute.xlu0 %755
      %757 = vrot.lane.b32.xlu0 %v686, 4
      %v758 = vpop.permute.xlu0 %757
      %759 = vrot.lane.b32.xlu0 %v687, 4
      %v760 = vpop.permute.xlu0 %759
      %761 = vrot.lane.b32.xlu0 %v688, 4
      %v762 = vpop.permute.xlu0 %761
      %763 = vrot.lane.b32.xlu0 %v689, 4
      %v764 = vpop.permute.xlu0 %763
      %765 = vrot.lane.b32.xlu0 %v690, 4
      %v766 = vpop.permute.xlu0 %765
      %767 = vrot.lane.b32.xlu0 %v691, 4
      %v768 = vpop.permute.xlu0 %767
      %769 = vrot.lane.b32.xlu0 %v692, 4
      %v770 = vpop.permute.xlu0 %769
      %771 = vrot.lane.b32.xlu0 %v693, 4
      %v772 = vpop.permute.xlu0 %771
      %773 = vrot.lane.b32.xlu0 %v694, 4
      %v774 = vpop.permute.xlu0 %773
      %775 = vrot.lane.b32.xlu0 %v695, 4
      %v776 = vpop.permute.xlu0 %775
      %777 = vrot.lane.b32.xlu0 %v696, 4
      %v778 = vpop.permute.xlu0 %777
      %779 = vrot.lane.b32.xlu0 %v697, 4
      %v780 = vpop.permute.xlu0 %779
      %781 = vrot.lane.b32.xlu0 %v698, 4
      %v782 = vpop.permute.xlu0 %781
      %783 = vrot.lane.b32.xlu0 %v699, 4
      %v784 = vpop.permute.xlu0 %783
      %785 = vrot.lane.b32.xlu0 %v700, 4
      %v786 = vpop.permute.xlu0 %785
      %787 = vrot.lane.b32.xlu0 %v701, 4
      %v788 = vpop.permute.xlu0 %787
      %789 = vrot.lane.b32.xlu0 %v702, 4
      %v790 = vpop.permute.xlu0 %789
      %791 = vrot.lane.b32.xlu0 %v703, 4
      %v792 = vpop.permute.xlu0 %791
      %793 = vrot.lane.b32.xlu0 %v704, 4
      %v794 = vpop.permute.xlu0 %793
      %795 = vrot.lane.b32.xlu0 %v705, 4
      %v796 = vpop.permute.xlu0 %795
      %797 = vrot.lane.b32.xlu0 %v706, 4
      %v798 = vpop.permute.xlu0 %797
      %799 = vrot.lane.b32.xlu0 %v707, 4
      %v800 = vpop.permute.xlu0 %799
      %801 = vrot.lane.b32.xlu0 %v708, 4
      %v802 = vpop.permute.xlu0 %801
      %803 = vrot.lane.b32.xlu0 %v709, 4
      %v804 = vpop.permute.xlu0 %803
      %805 = vrot.lane.b32.xlu0 %v710, 4
      %v806 = vpop.permute.xlu0 %805
      %vm839 = vcmask 64544
      %840 = vst.msk [vmem:[%s499 + $0x1] sm:$0xff] %vm839, %v744
      %841 = vst.msk [vmem:[%s499 + $0x9] sm:$0xff] %vm839, %v746
      %842 = vst.msk [vmem:[%s499 + $0x19] sm:$0xff] %vm839, %v748
      %843 = vst.msk [vmem:[%s499 + $0x21] sm:$0xff] %vm839, %v750
      %844 = vst.msk [vmem:[%s499 + $0x31] sm:$0xff] %vm839, %v752
      %845 = vst.msk [vmem:[%s499 + $0x39] sm:$0xff] %vm839, %v754
      %846 = vst.msk [vmem:[%s499 + $0x49] sm:$0xff] %vm839, %v756
      %847 = vst.msk [vmem:[%s499 + $0x51] sm:$0xff] %vm839, %v758
      %848 = vst.msk [vmem:[%s499 + $0x61] sm:$0xff] %vm839, %v760
      %849 = vst.msk [vmem:[%s499 + $0x69] sm:$0xff] %vm839, %v762
      %850 = vst.msk [vmem:[%s499 + $0x79] sm:$0xff] %vm839, %v764
      %851 = vst.msk [vmem:[%s499 + $0x81] sm:$0xff] %vm839, %v766
      %852 = vst.msk [vmem:[%s499 + $0x91] sm:$0xff] %vm839, %v768
      %853 = vst.msk [vmem:[%s499 + $0x99] sm:$0xff] %vm839, %v770
      %854 = vst.msk [vmem:[%s499 + $0xa9] sm:$0xff] %vm839, %v772
      %855 = vst.msk [vmem:[%s499 + $0xb1] sm:$0xff] %vm839, %v774
      %856 = vst.msk [vmem:[%s499 + $0xc1] sm:$0xff] %vm839, %v776
      %857 = vst.msk [vmem:[%s499 + $0xc9] sm:$0xff] %vm839, %v778
      %858 = vst.msk [vmem:[%s499 + $0xd9] sm:$0xff] %vm839, %v780
      %859 = vst.msk [vmem:[%s499 + $0xe1] sm:$0xff] %vm839, %v782
      %860 = vst.msk [vmem:[%s499 + $0xf1] sm:$0xff] %vm839, %v784
      %861 = vst.msk [vmem:[%s499 + $0xf9] sm:$0xff] %vm839, %v786
      %862 = vst.msk [vmem:[%s499 + $0x109] sm:$0xff] %vm839, %v788
      %863 = vst.msk [vmem:[%s499 + $0x111] sm:$0xff] %vm839, %v790
      %864 = vst.msk [vmem:[%s499 + $0x121] sm:$0xff] %vm839, %v792
      %865 = vst.msk [vmem:[%s499 + $0x129] sm:$0xff] %vm839, %v794
      %866 = vst.msk [vmem:[%s499 + $0x139] sm:$0xff] %vm839, %v796
      %867 = vst.msk [vmem:[%s499 + $0x141] sm:$0xff] %vm839, %v798
      %868 = vst.msk [vmem:[%s499 + $0x151] sm:$0xff] %vm839, %v800
      %869 = vst.msk [vmem:[%s499 + $0x159] sm:$0xff] %vm839, %v802
      %870 = vst.msk [vmem:[%s499 + $0x169] sm:$0xff] %vm839, %v804
      %871 = vst.msk [vmem:[%s499 + $0x171] sm:$0xff] %vm839, %v806
      %v872 = vld [vmem:[#allocation2] sm:$0xff]
      %v873 = vld [vmem:[#allocation2 + $0x8] sm:$0xff]
      %v874 = vld [vmem:[#allocation2 + $0x18] sm:$0xff]
      %v875 = vld [vmem:[#allocation2 + $0x20] sm:$0xff]
      %v876 = vld [vmem:[#allocation2 + $0x30] sm:$0xff]
      %v877 = vld [vmem:[#allocation2 + $0x38] sm:$0xff]
      %v878 = vld [vmem:[#allocation2 + $0x48] sm:$0xff]
      %v879 = vld [vmem:[#allocation2 + $0x50] sm:$0xff]
      %v880 = vld [vmem:[#allocation2 + $0x60] sm:$0xff]
      %v881 = vld [vmem:[#allocation2 + $0x68] sm:$0xff]
      %v882 = vld [vmem:[#allocation2 + $0x78] sm:$0xff]
      %v883 = vld [vmem:[#allocation2 + $0x80] sm:$0xff]
      %v884 = vld [vmem:[#allocation2 + $0x90] sm:$0xff]
      %v885 = vld [vmem:[#allocation2 + $0x98] sm:$0xff]
      %v886 = vld [vmem:[#allocation2 + $0xa8] sm:$0xff]
      %v887 = vld [vmem:[#allocation2 + $0xb0] sm:$0xff]
      %v888 = vld [vmem:[#allocation2 + $0xc0] sm:$0xff]
      %v889 = vld [vmem:[#allocation2 + $0xc8] sm:$0xff]
      %v890 = vld [vmem:[#allocation2 + $0xd8] sm:$0xff]
      %v891 = vld [vmem:[#allocation2 + $0xe0] sm:$0xff]
      %v892 = vld [vmem:[#allocation2 + $0xf0] sm:$0xff]
      %v893 = vld [vmem:[#allocation2 + $0xf8] sm:$0xff]
      %v894 = vld [vmem:[#allocation2 + $0x108] sm:$0xff]
      %v895 = vld [vmem:[#allocation2 + $0x110] sm:$0xff]
      %v896 = vld [vmem:[#allocation2 + $0x120] sm:$0xff]
      %v897 = vld [vmem:[#allocation2 + $0x128] sm:$0xff]
      %v898 = vld [vmem:[#allocation2 + $0x138] sm:$0xff]
      %v899 = vld [vmem:[#allocation2 + $0x140] sm:$0xff]
      %v900 = vld [vmem:[#allocation2 + $0x150] sm:$0xff]
      %v901 = vld [vmem:[#allocation2 + $0x158] sm:$0xff]
      %v902 = vld [vmem:[#allocation2 + $0x168] sm:$0xff]
      %v903 = vld [vmem:[#allocation2 + $0x170] sm:$0xff]
      %v904 = vpack.c.bf16 %v873, %v872
      %v905 = vpack.c.bf16 %v875, %v874
      %v906 = vpack.c.bf16 %v877, %v876
      %v907 = vpack.c.bf16 %v879, %v878
      %v908 = vpack.c.bf16 %v881, %v880
      %v909 = vpack.c.bf16 %v883, %v882
      %v910 = vpack.c.bf16 %v885, %v884
      %v911 = vpack.c.bf16 %v887, %v886
      %v912 = vpack.c.bf16 %v889, %v888
      %v913 = vpack.c.bf16 %v891, %v890
      %v914 = vpack.c.bf16 %v893, %v892
      %v915 = vpack.c.bf16 %v895, %v894
      %v916 = vpack.c.bf16 %v897, %v896
      %v917 = vpack.c.bf16 %v899, %v898
      %v918 = vpack.c.bf16 %v901, %v900
      %v919 = vpack.c.bf16 %v903, %v902
      %920 = vst.msk [vmem:[#allocation3] sm:$0xff] %vm311, %v904
      %921 = vst.msk [vmem:[#allocation3 + $0x8] sm:$0xff] %vm311, %v905
      %922 = vst.msk [vmem:[#allocation3 + $0x10] sm:$0xff] %vm311, %v906
      %923 = vst.msk [vmem:[#allocation3 + $0x18] sm:$0xff] %vm311, %v907
      %924 = vst.msk [vmem:[#allocation3 + $0x20] sm:$0xff] %vm311, %v908
      %925 = vst.msk [vmem:[#allocation3 + $0x28] sm:$0xff] %vm311, %v909
      %926 = vst.msk [vmem:[#allocation3 + $0x30] sm:$0xff] %vm311, %v910
      %927 = vst.msk [vmem:[#allocation3 + $0x38] sm:$0xff] %vm311, %v911
      %928 = vst.msk [vmem:[#allocation3 + $0x40] sm:$0xff] %vm311, %v912
      %929 = vst.msk [vmem:[#allocation3 + $0x48] sm:$0xff] %vm311, %v913
      %930 = vst.msk [vmem:[#allocation3 + $0x50] sm:$0xff] %vm311, %v914
      %931 = vst.msk [vmem:[#allocation3 + $0x58] sm:$0xff] %vm311, %v915
      %932 = vst.msk [vmem:[#allocation3 + $0x60] sm:$0xff] %vm311, %v916
      %933 = vst.msk [vmem:[#allocation3 + $0x68] sm:$0xff] %vm311, %v917
      %934 = vst.msk [vmem:[#allocation3 + $0x70] sm:$0xff] %vm311, %v918
      %935 = vst.msk [vmem:[#allocation3 + $0x78] sm:$0xff] %vm311, %v919
      %v936 = vld [vmem:[#allocation2 + $0x1] sm:$0xff]
      %v937 = vld [vmem:[#allocation2 + $0x9] sm:$0xff]
      %v938 = vld [vmem:[#allocation2 + $0x19] sm:$0xff]
      %v939 = vld [vmem:[#allocation2 + $0x21] sm:$0xff]
      %v940 = vld [vmem:[#allocation2 + $0x31] sm:$0xff]
      %v941 = vld [vmem:[#allocation2 + $0x39] sm:$0xff]
      %v942 = vld [vmem:[#allocation2 + $0x49] sm:$0xff]
      %v943 = vld [vmem:[#allocation2 + $0x51] sm:$0xff]
      %v944 = vld [vmem:[#allocation2 + $0x61] sm:$0xff]
      %v945 = vld [vmem:[#allocation2 + $0x69] sm:$0xff]
      %v946 = vld [vmem:[#allocation2 + $0x79] sm:$0xff]
      %v947 = vld [vmem:[#allocation2 + $0x81] sm:$0xff]
      %v948 = vld [vmem:[#allocation2 + $0x91] sm:$0xff]
      %v949 = vld [vmem:[#allocation2 + $0x99] sm:$0xff]
      %v950 = vld [vmem:[#allocation2 + $0xa9] sm:$0xff]
      %v951 = vld [vmem:[#allocation2 + $0xb1] sm:$0xff]
      %v952 = vld [vmem:[#allocation2 + $0xc1] sm:$0xff]
      %v953 = vld [vmem:[#allocation2 + $0xc9] sm:$0xff]
      %v954 = vld [vmem:[#allocation2 + $0xd9] sm:$0xff]
      %v955 = vld [vmem:[#allocation2 + $0xe1] sm:$0xff]
      %v956 = vld [vmem:[#allocation2 + $0xf1] sm:$0xff]
      %v957 = vld [vmem:[#allocation2 + $0xf9] sm:$0xff]
      %v958 = vld [vmem:[#allocation2 + $0x109] sm:$0xff]
      %v959 = vld [vmem:[#allocation2 + $0x111] sm:$0xff]
      %v960 = vld [vmem:[#allocation2 + $0x121] sm:$0xff]
      %v961 = vld [vmem:[#allocation2 + $0x129] sm:$0xff]
      %v962 = vld [vmem:[#allocation2 + $0x139] sm:$0xff]
      %v963 = vld [vmem:[#allocation2 + $0x141] sm:$0xff]
      %v964 = vld [vmem:[#allocation2 + $0x151] sm:$0xff]
      %v965 = vld [vmem:[#allocation2 + $0x159] sm:$0xff]
      %v966 = vld [vmem:[#allocation2 + $0x169] sm:$0xff]
      %v967 = vld [vmem:[#allocation2 + $0x171] sm:$0xff]
      %v968 = vpack.c.bf16 %v937, %v936
      %v969 = vpack.c.bf16 %v939, %v938
      %v970 = vpack.c.bf16 %v941, %v940
      %v971 = vpack.c.bf16 %v943, %v942
      %v972 = vpack.c.bf16 %v945, %v944
      %v973 = vpack.c.bf16 %v947, %v946
      %v974 = vpack.c.bf16 %v949, %v948
      %v975 = vpack.c.bf16 %v951, %v950
      %v976 = vpack.c.bf16 %v953, %v952
      %v977 = vpack.c.bf16 %v955, %v954
      %v978 = vpack.c.bf16 %v957, %v956
      %v979 = vpack.c.bf16 %v959, %v958
      %v980 = vpack.c.bf16 %v961, %v960
      %v981 = vpack.c.bf16 %v963, %v962
      %v982 = vpack.c.bf16 %v965, %v964
      %v983 = vpack.c.bf16 %v967, %v966
      %1000 = vrot.lane.b32.xlu0 %v968, 8
      %v1001 = vpop.permute.xlu0 %1000
      %1002 = vrot.lane.b32.xlu0 %v969, 8
      %v1003 = vpop.permute.xlu0 %1002
      %1004 = vrot.lane.b32.xlu0 %v970, 8
      %v1005 = vpop.permute.xlu0 %1004
      %1006 = vrot.lane.b32.xlu0 %v971, 8
      %v1007 = vpop.permute.xlu0 %1006
      %1008 = vrot.lane.b32.xlu0 %v972, 8
      %v1009 = vpop.permute.xlu0 %1008
      %1010 = vrot.lane.b32.xlu0 %v973, 8
      %v1011 = vpop.permute.xlu0 %1010
      %1012 = vrot.lane.b32.xlu0 %v974, 8
      %v1013 = vpop.permute.xlu0 %1012
      %1014 = vrot.lane.b32.xlu0 %v975, 8
      %v1015 = vpop.permute.xlu0 %1014
      %1016 = vrot.lane.b32.xlu0 %v976, 8
      %v1017 = vpop.permute.xlu0 %1016
      %1018 = vrot.lane.b32.xlu0 %v977, 8
      %v1019 = vpop.permute.xlu0 %1018
      %1020 = vrot.lane.b32.xlu0 %v978, 8
      %v1021 = vpop.permute.xlu0 %1020
      %1022 = vrot.lane.b32.xlu0 %v979, 8
      %v1023 = vpop.permute.xlu0 %1022
      %1024 = vrot.lane.b32.xlu0 %v980, 8
      %v1025 = vpop.permute.xlu0 %1024
      %1026 = vrot.lane.b32.xlu0 %v981, 8
      %v1027 = vpop.permute.xlu0 %1026
      %1028 = vrot.lane.b32.xlu0 %v982, 8
      %v1029 = vpop.permute.xlu0 %1028
      %1030 = vrot.lane.b32.xlu0 %v983, 8
      %v1031 = vpop.permute.xlu0 %1030
      %vm1048 = vcmask 130112
      %1049 = vst.msk [vmem:[#allocation3] sm:$0xff] %vm1048, %v1001
      %1050 = vst.msk [vmem:[#allocation3 + $0x8] sm:$0xff] %vm1048, %v1003
      %1051 = vst.msk [vmem:[#allocation3 + $0x10] sm:$0xff] %vm1048, %v1005
      %1052 = vst.msk [vmem:[#allocation3 + $0x18] sm:$0xff] %vm1048, %v1007
      %1053 = vst.msk [vmem:[#allocation3 + $0x20] sm:$0xff] %vm1048, %v1009
      %1054 = vst.msk [vmem:[#allocation3 + $0x28] sm:$0xff] %vm1048, %v1011
      %1055 = vst.msk [vmem:[#allocation3 + $0x30] sm:$0xff] %vm1048, %v1013
      %1056 = vst.msk [vmem:[#allocation3 + $0x38] sm:$0xff] %vm1048, %v1015
      %1057 = vst.msk [vmem:[#allocation3 + $0x40] sm:$0xff] %vm1048, %v1017
      %1058 = vst.msk [vmem:[#allocation3 + $0x48] sm:$0xff] %vm1048, %v1019
      %1059 = vst.msk [vmem:[#allocation3 + $0x50] sm:$0xff] %vm1048, %v1021
      %1060 = vst.msk [vmem:[#allocation3 + $0x58] sm:$0xff] %vm1048, %v1023
      %1061 = vst.msk [vmem:[#allocation3 + $0x60] sm:$0xff] %vm1048, %v1025
      %1062 = vst.msk [vmem:[#allocation3 + $0x68] sm:$0xff] %vm1048, %v1027
      %1063 = vst.msk [vmem:[#allocation3 + $0x70] sm:$0xff] %vm1048, %v1029
      %1064 = vst.msk [vmem:[#allocation3 + $0x78] sm:$0xff] %vm1048, %v1031
      %v1065 = vld [vmem:[#allocation2 + $0x2] sm:$0xff]
      %v1066 = vld [vmem:[#allocation2 + $0xa] sm:$0xff]
      %v1067 = vld [vmem:[#allocation2 + $0x1a] sm:$0xff]
      %v1068 = vld [vmem:[#allocation2 + $0x22] sm:$0xff]
      %v1069 = vld [vmem:[#allocation2 + $0x32] sm:$0xff]
      %v1070 = vld [vmem:[#allocation2 + $0x3a] sm:$0xff]
      %v1071 = vld [vmem:[#allocation2 + $0x4a] sm:$0xff]
      %v1072 = vld [vmem:[#allocation2 + $0x52] sm:$0xff]
      %v1073 = vld [vmem:[#allocation2 + $0x62] sm:$0xff]
      %v1074 = vld [vmem:[#allocation2 + $0x6a] sm:$0xff]
      %v1075 = vld [vmem:[#allocation2 + $0x7a] sm:$0xff]
      %v1076 = vld [vmem:[#allocation2 + $0x82] sm:$0xff]
      %v1077 = vld [vmem:[#allocation2 + $0x92] sm:$0xff]
      %v1078 = vld [vmem:[#allocation2 + $0x9a] sm:$0xff]
      %v1079 = vld [vmem:[#allocation2 + $0xaa] sm:$0xff]
      %v1080 = vld [vmem:[#allocation2 + $0xb2] sm:$0xff]
      %v1081 = vld [vmem:[#allocation2 + $0xc2] sm:$0xff]
      %v1082 = vld [vmem:[#allocation2 + $0xca] sm:$0xff]
      %v1083 = vld [vmem:[#allocation2 + $0xda] sm:$0xff]
      %v1084 = vld [vmem:[#allocation2 + $0xe2] sm:$0xff]
      %v1085 = vld [vmem:[#allocation2 + $0xf2] sm:$0xff]
      %v1086 = vld [vmem:[#allocation2 + $0xfa] sm:$0xff]
      %v1087 = vld [vmem:[#allocation2 + $0x10a] sm:$0xff]
      %v1088 = vld [vmem:[#allocation2 + $0x112] sm:$0xff]
      %v1089 = vld [vmem:[#allocation2 + $0x122] sm:$0xff]
      %v1090 = vld [vmem:[#allocation2 + $0x12a] sm:$0xff]
      %v1091 = vld [vmem:[#allocation2 + $0x13a] sm:$0xff]
      %v1092 = vld [vmem:[#allocation2 + $0x142] sm:$0xff]
      %v1093 = vld [vmem:[#allocation2 + $0x152] sm:$0xff]
      %v1094 = vld [vmem:[#allocation2 + $0x15a] sm:$0xff]
      %v1095 = vld [vmem:[#allocation2 + $0x16a] sm:$0xff]
      %v1096 = vld [vmem:[#allocation2 + $0x172] sm:$0xff]
      %v1097 = vpack.c.bf16 %v1066, %v1065
      %v1098 = vpack.c.bf16 %v1068, %v1067
      %v1099 = vpack.c.bf16 %v1070, %v1069
      %v1100 = vpack.c.bf16 %v1072, %v1071
      %v1101 = vpack.c.bf16 %v1074, %v1073
      %v1102 = vpack.c.bf16 %v1076, %v1075
      %v1103 = vpack.c.bf16 %v1078, %v1077
      %v1104 = vpack.c.bf16 %v1080, %v1079
      %v1105 = vpack.c.bf16 %v1082, %v1081
      %v1106 = vpack.c.bf16 %v1084, %v1083
      %v1107 = vpack.c.bf16 %v1086, %v1085
      %v1108 = vpack.c.bf16 %v1088, %v1087
      %v1109 = vpack.c.bf16 %v1090, %v1089
      %v1110 = vpack.c.bf16 %v1092, %v1091
      %v1111 = vpack.c.bf16 %v1094, %v1093
      %v1112 = vpack.c.bf16 %v1096, %v1095
      %1129 = vrot.lane.b32.xlu0 %v1097, 16
      %v1130 = vpop.permute.xlu0 %1129
      %1131 = vrot.lane.b32.xlu0 %v1098, 16
      %v1132 = vpop.permute.xlu0 %1131
      %1133 = vrot.lane.b32.xlu0 %v1099, 16
      %v1134 = vpop.permute.xlu0 %1133
      %1135 = vrot.lane.b32.xlu0 %v1100, 16
      %v1136 = vpop.permute.xlu0 %1135
      %1137 = vrot.lane.b32.xlu0 %v1101, 16
      %v1138 = vpop.permute.xlu0 %1137
      %1139 = vrot.lane.b32.xlu0 %v1102, 16
      %v1140 = vpop.permute.xlu0 %1139
      %1141 = vrot.lane.b32.xlu0 %v1103, 16
      %v1142 = vpop.permute.xlu0 %1141
      %1143 = vrot.lane.b32.xlu0 %v1104, 16
      %v1144 = vpop.permute.xlu0 %1143
      %1145 = vrot.lane.b32.xlu0 %v1105, 16
      %v1146 = vpop.permute.xlu0 %1145
      %1147 = vrot.lane.b32.xlu0 %v1106, 16
      %v1148 = vpop.permute.xlu0 %1147
      %1149 = vrot.lane.b32.xlu0 %v1107, 16
      %v1150 = vpop.permute.xlu0 %1149
      %1151 = vrot.lane.b32.xlu0 %v1108, 16
      %v1152 = vpop.permute.xlu0 %1151
      %1153 = vrot.lane.b32.xlu0 %v1109, 16
      %v1154 = vpop.permute.xlu0 %1153
      %1155 = vrot.lane.b32.xlu0 %v1110, 16
      %v1156 = vpop.permute.xlu0 %1155
      %1157 = vrot.lane.b32.xlu0 %v1111, 16
      %v1158 = vpop.permute.xlu0 %1157
      %1159 = vrot.lane.b32.xlu0 %v1112, 16
      %v1160 = vpop.permute.xlu0 %1159
      %vm1177 = vcmask 195712
      %1178 = vst.msk [vmem:[#allocation3] sm:$0xff] %vm1177, %v1130
      %1179 = vst.msk [vmem:[#allocation3 + $0x8] sm:$0xff] %vm1177, %v1132
      %1180 = vst.msk [vmem:[#allocation3 + $0x10] sm:$0xff] %vm1177, %v1134
      %1181 = vst.msk [vmem:[#allocation3 + $0x18] sm:$0xff] %vm1177, %v1136
      %1182 = vst.msk [vmem:[#allocation3 + $0x20] sm:$0xff] %vm1177, %v1138
      %1183 = vst.msk [vmem:[#allocation3 + $0x28] sm:$0xff] %vm1177, %v1140
      %1184 = vst.msk [vmem:[#allocation3 + $0x30] sm:$0xff] %vm1177, %v1142
      %1185 = vst.msk [vmem:[#allocation3 + $0x38] sm:$0xff] %vm1177, %v1144
      %1186 = vst.msk [vmem:[#allocation3 + $0x40] sm:$0xff] %vm1177, %v1146
      %1187 = vst.msk [vmem:[#allocation3 + $0x48] sm:$0xff] %vm1177, %v1148
      %1188 = vst.msk [vmem:[#allocation3 + $0x50] sm:$0xff] %vm1177, %v1150
      %1189 = vst.msk [vmem:[#allocation3 + $0x58] sm:$0xff] %vm1177, %v1152
      %1190 = vst.msk [vmem:[#allocation3 + $0x60] sm:$0xff] %vm1177, %v1154
      %1191 = vst.msk [vmem:[#allocation3 + $0x68] sm:$0xff] %vm1177, %v1156
      %1192 = vst.msk [vmem:[#allocation3 + $0x70] sm:$0xff] %vm1177, %v1158
      %1193 = vst.msk [vmem:[#allocation3 + $0x78] sm:$0xff] %vm1177, %v1160
      %v1194 = vld [vmem:[%s499] sm:$0xff]
      %v1195 = vld [vmem:[%s499 + $0x8] sm:$0xff]
      %v1196 = vld [vmem:[%s499 + $0x18] sm:$0xff]
      %v1197 = vld [vmem:[%s499 + $0x20] sm:$0xff]
      %v1198 = vld [vmem:[%s499 + $0x30] sm:$0xff]
      %v1199 = vld [vmem:[%s499 + $0x38] sm:$0xff]
      %v1200 = vld [vmem:[%s499 + $0x48] sm:$0xff]
      %v1201 = vld [vmem:[%s499 + $0x50] sm:$0xff]
      %v1202 = vld [vmem:[%s499 + $0x60] sm:$0xff]
      %v1203 = vld [vmem:[%s499 + $0x68] sm:$0xff]
      %v1204 = vld [vmem:[%s499 + $0x78] sm:$0xff]
      %v1205 = vld [vmem:[%s499 + $0x80] sm:$0xff]
      %v1206 = vld [vmem:[%s499 + $0x90] sm:$0xff]
      %v1207 = vld [vmem:[%s499 + $0x98] sm:$0xff]
      %v1208 = vld [vmem:[%s499 + $0xa8] sm:$0xff]
      %v1209 = vld [vmem:[%s499 + $0xb0] sm:$0xff]
      %v1210 = vld [vmem:[%s499 + $0xc0] sm:$0xff]
      %v1211 = vld [vmem:[%s499 + $0xc8] sm:$0xff]
      %v1212 = vld [vmem:[%s499 + $0xd8] sm:$0xff]
      %v1213 = vld [vmem:[%s499 + $0xe0] sm:$0xff]
      %v1214 = vld [vmem:[%s499 + $0xf0] sm:$0xff]
      %v1215 = vld [vmem:[%s499 + $0xf8] sm:$0xff]
      %v1216 = vld [vmem:[%s499 + $0x108] sm:$0xff]
      %v1217 = vld [vmem:[%s499 + $0x110] sm:$0xff]
      %v1218 = vld [vmem:[%s499 + $0x120] sm:$0xff]
      %v1219 = vld [vmem:[%s499 + $0x128] sm:$0xff]
      %v1220 = vld [vmem:[%s499 + $0x138] sm:$0xff]
      %v1221 = vld [vmem:[%s499 + $0x140] sm:$0xff]
      %v1222 = vld [vmem:[%s499 + $0x150] sm:$0xff]
      %v1223 = vld [vmem:[%s499 + $0x158] sm:$0xff]
      %v1224 = vld [vmem:[%s499 + $0x168] sm:$0xff]
      %v1225 = vld [vmem:[%s499 + $0x170] sm:$0xff]
      %v1226 = vpack.c.bf16 %v1195, %v1194
      %v1227 = vpack.c.bf16 %v1197, %v1196
      %v1228 = vpack.c.bf16 %v1199, %v1198
      %v1229 = vpack.c.bf16 %v1201, %v1200
      %v1230 = vpack.c.bf16 %v1203, %v1202
      %v1231 = vpack.c.bf16 %v1205, %v1204
      %v1232 = vpack.c.bf16 %v1207, %v1206
      %v1233 = vpack.c.bf16 %v1209, %v1208
      %v1234 = vpack.c.bf16 %v1211, %v1210
      %v1235 = vpack.c.bf16 %v1213, %v1212
      %v1236 = vpack.c.bf16 %v1215, %v1214
      %v1237 = vpack.c.bf16 %v1217, %v1216
      %v1238 = vpack.c.bf16 %v1219, %v1218
      %v1239 = vpack.c.bf16 %v1221, %v1220
      %v1240 = vpack.c.bf16 %v1223, %v1222
      %v1241 = vpack.c.bf16 %v1225, %v1224
      %1258 = vrot.lane.b32.xlu0 %v1226, 24
      %v1259 = vpop.permute.xlu0 %1258
      %1260 = vrot.lane.b32.xlu0 %v1227, 24
      %v1261 = vpop.permute.xlu0 %1260
      %1262 = vrot.lane.b32.xlu0 %v1228, 24
      %v1263 = vpop.permute.xlu0 %1262
      %1264 = vrot.lane.b32.xlu0 %v1229, 24
      %v1265 = vpop.permute.xlu0 %1264
      %1266 = vrot.lane.b32.xlu0 %v1230, 24
      %v1267 = vpop.permute.xlu0 %1266
      %1268 = vrot.lane.b32.xlu0 %v1231, 24
      %v1269 = vpop.permute.xlu0 %1268
      %1270 = vrot.lane.b32.xlu0 %v1232, 24
      %v1271 = vpop.permute.xlu0 %1270
      %1272 = vrot.lane.b32.xlu0 %v1233, 24
      %v1273 = vpop.permute.xlu0 %1272
      %1274 = vrot.lane.b32.xlu0 %v1234, 24
      %v1275 = vpop.permute.xlu0 %1274
      %1276 = vrot.lane.b32.xlu0 %v1235, 24
      %v1277 = vpop.permute.xlu0 %1276
      %1278 = vrot.lane.b32.xlu0 %v1236, 24
      %v1279 = vpop.permute.xlu0 %1278
      %1280 = vrot.lane.b32.xlu0 %v1237, 24
      %v1281 = vpop.permute.xlu0 %1280
      %1282 = vrot.lane.b32.xlu0 %v1238, 24
      %v1283 = vpop.permute.xlu0 %1282
      %1284 = vrot.lane.b32.xlu0 %v1239, 24
      %v1285 = vpop.permute.xlu0 %1284
      %1286 = vrot.lane.b32.xlu0 %v1240, 24
      %v1287 = vpop.permute.xlu0 %1286
      %1288 = vrot.lane.b32.xlu0 %v1241, 24
      %v1289 = vpop.permute.xlu0 %1288
      %vm1306 = vcmask 261312
      %1307 = vst.msk [vmem:[#allocation3] sm:$0xff] %vm1306, %v1259
      %1308 = vst.msk [vmem:[#allocation3 + $0x8] sm:$0xff] %vm1306, %v1261
      %1309 = vst.msk [vmem:[#allocation3 + $0x10] sm:$0xff] %vm1306, %v1263
      %1310 = vst.msk [vmem:[#allocation3 + $0x18] sm:$0xff] %vm1306, %v1265
      %1311 = vst.msk [vmem:[#allocation3 + $0x20] sm:$0xff] %vm1306, %v1267
      %1312 = vst.msk [vmem:[#allocation3 + $0x28] sm:$0xff] %vm1306, %v1269
      %1313 = vst.msk [vmem:[#allocation3 + $0x30] sm:$0xff] %vm1306, %v1271
      %1314 = vst.msk [vmem:[#allocation3 + $0x38] sm:$0xff] %vm1306, %v1273
      %1315 = vst.msk [vmem:[#allocation3 + $0x40] sm:$0xff] %vm1306, %v1275
      %1316 = vst.msk [vmem:[#allocation3 + $0x48] sm:$0xff] %vm1306, %v1277
      %1317 = vst.msk [vmem:[#allocation3 + $0x50] sm:$0xff] %vm1306, %v1279
      %1318 = vst.msk [vmem:[#allocation3 + $0x58] sm:$0xff] %vm1306, %v1281
      %1319 = vst.msk [vmem:[#allocation3 + $0x60] sm:$0xff] %vm1306, %v1283
      %1320 = vst.msk [vmem:[#allocation3 + $0x68] sm:$0xff] %vm1306, %v1285
      %1321 = vst.msk [vmem:[#allocation3 + $0x70] sm:$0xff] %vm1306, %v1287
      %1322 = vst.msk [vmem:[#allocation3 + $0x78] sm:$0xff] %vm1306, %v1289
      %v1323 = vld [vmem:[%s499 + $0x1] sm:$0xff]
      %v1324 = vld [vmem:[%s499 + $0x9] sm:$0xff]
      %v1325 = vld [vmem:[%s499 + $0x19] sm:$0xff]
      %v1326 = vld [vmem:[%s499 + $0x21] sm:$0xff]
      %v1327 = vld [vmem:[%s499 + $0x31] sm:$0xff]
      %v1328 = vld [vmem:[%s499 + $0x39] sm:$0xff]
      %v1329 = vld [vmem:[%s499 + $0x49] sm:$0xff]
      %v1330 = vld [vmem:[%s499 + $0x51] sm:$0xff]
      %v1331 = vld [vmem:[%s499 + $0x61] sm:$0xff]
      %v1332 = vld [vmem:[%s499 + $0x69] sm:$0xff]
      %v1333 = vld [vmem:[%s499 + $0x79] sm:$0xff]
      %v1334 = vld [vmem:[%s499 + $0x81] sm:$0xff]
      %v1335 = vld [vmem:[%s499 + $0x91] sm:$0xff]
      %v1336 = vld [vmem:[%s499 + $0x99] sm:$0xff]
      %v1337 = vld [vmem:[%s499 + $0xa9] sm:$0xff]
      %v1338 = vld [vmem:[%s499 + $0xb1] sm:$0xff]
      %v1339 = vld [vmem:[%s499 + $0xc1] sm:$0xff]
      %v1340 = vld [vmem:[%s499 + $0xc9] sm:$0xff]
      %v1341 = vld [vmem:[%s499 + $0xd9] sm:$0xff]
      %v1342 = vld [vmem:[%s499 + $0xe1] sm:$0xff]
      %v1343 = vld [vmem:[%s499 + $0xf1] sm:$0xff]
      %v1344 = vld [vmem:[%s499 + $0xf9] sm:$0xff]
      %v1345 = vld [vmem:[%s499 + $0x109] sm:$0xff]
      %v1346 = vld [vmem:[%s499 + $0x111] sm:$0xff]
      %v1347 = vld [vmem:[%s499 + $0x121] sm:$0xff]
      %v1348 = vld [vmem:[%s499 + $0x129] sm:$0xff]
      %v1349 = vld [vmem:[%s499 + $0x139] sm:$0xff]
      %v1350 = vld [vmem:[%s499 + $0x141] sm:$0xff]
      %v1351 = vld [vmem:[%s499 + $0x151] sm:$0xff]
      %v1352 = vld [vmem:[%s499 + $0x159] sm:$0xff]
      %v1353 = vld [vmem:[%s499 + $0x169] sm:$0xff]
      %v1354 = vld [vmem:[%s499 + $0x171] sm:$0xff]
      %v1355 = vpack.c.bf16 %v1324, %v1323
      %v1356 = vpack.c.bf16 %v1326, %v1325
      %v1357 = vpack.c.bf16 %v1328, %v1327
      %v1358 = vpack.c.bf16 %v1330, %v1329
      %v1359 = vpack.c.bf16 %v1332, %v1331
      %v1360 = vpack.c.bf16 %v1334, %v1333
      %v1361 = vpack.c.bf16 %v1336, %v1335
      %v1362 = vpack.c.bf16 %v1338, %v1337
      %v1363 = vpack.c.bf16 %v1340, %v1339
      %v1364 = vpack.c.bf16 %v1342, %v1341
      %v1365 = vpack.c.bf16 %v1344, %v1343
      %v1366 = vpack.c.bf16 %v1346, %v1345
      %v1367 = vpack.c.bf16 %v1348, %v1347
      %v1368 = vpack.c.bf16 %v1350, %v1349
      %v1369 = vpack.c.bf16 %v1352, %v1351
      %v1370 = vpack.c.bf16 %v1354, %v1353
      %1387 = vrot.lane.b32.xlu0 %v1355, 32
      %v1388 = vpop.permute.xlu0 %1387
      %1389 = vrot.lane.b32.xlu0 %v1356, 32
      %v1390 = vpop.permute.xlu0 %1389
      %1391 = vrot.lane.b32.xlu0 %v1357, 32
      %v1392 = vpop.permute.xlu0 %1391
      %1393 = vrot.lane.b32.xlu0 %v1358, 32
      %v1394 = vpop.permute.xlu0 %1393
      %1395 = vrot.lane.b32.xlu0 %v1359, 32
      %v1396 = vpop.permute.xlu0 %1395
      %1397 = vrot.lane.b32.xlu0 %v1360, 32
      %v1398 = vpop.permute.xlu0 %1397
      %1399 = vrot.lane.b32.xlu0 %v1361, 32
      %v1400 = vpop.permute.xlu0 %1399
      %1401 = vrot.lane.b32.xlu0 %v1362, 32
      %v1402 = vpop.permute.xlu0 %1401
      %1403 = vrot.lane.b32.xlu0 %v1363, 32
      %v1404 = vpop.permute.xlu0 %1403
      %1405 = vrot.lane.b32.xlu0 %v1364, 32
      %v1406 = vpop.permute.xlu0 %1405
      %1407 = vrot.lane.b32.xlu0 %v1365, 32
      %v1408 = vpop.permute.xlu0 %1407
      %1409 = vrot.lane.b32.xlu0 %v1366, 32
      %v1410 = vpop.permute.xlu0 %1409
      %1411 = vrot.lane.b32.xlu0 %v1367, 32
      %v1412 = vpop.permute.xlu0 %1411
      %1413 = vrot.lane.b32.xlu0 %v1368, 32
      %v1414 = vpop.permute.xlu0 %1413
      %1415 = vrot.lane.b32.xlu0 %v1369, 32
      %v1416 = vpop.permute.xlu0 %1415
      %1417 = vrot.lane.b32.xlu0 %v1370, 32
      %v1418 = vpop.permute.xlu0 %1417
      %vm1435 = vcmask 326912
      %1436 = vst.msk [vmem:[#allocation3] sm:$0xff] %vm1435, %v1388
      %1437 = vst.msk [vmem:[#allocation3 + $0x8] sm:$0xff] %vm1435, %v1390
      %1438 = vst.msk [vmem:[#allocation3 + $0x10] sm:$0xff] %vm1435, %v1392
      %1439 = vst.msk [vmem:[#allocation3 + $0x18] sm:$0xff] %vm1435, %v1394
      %1440 = vst.msk [vmem:[#allocation3 + $0x20] sm:$0xff] %vm1435, %v1396
      %1441 = vst.msk [vmem:[#allocation3 + $0x28] sm:$0xff] %vm1435, %v1398
      %1442 = vst.msk [vmem:[#allocation3 + $0x30] sm:$0xff] %vm1435, %v1400
      %1443 = vst.msk [vmem:[#allocation3 + $0x38] sm:$0xff] %vm1435, %v1402
      %1444 = vst.msk [vmem:[#allocation3 + $0x40] sm:$0xff] %vm1435, %v1404
      %1445 = vst.msk [vmem:[#allocation3 + $0x48] sm:$0xff] %vm1435, %v1406
      %1446 = vst.msk [vmem:[#allocation3 + $0x50] sm:$0xff] %vm1435, %v1408
      %1447 = vst.msk [vmem:[#allocation3 + $0x58] sm:$0xff] %vm1435, %v1410
      %1448 = vst.msk [vmem:[#allocation3 + $0x60] sm:$0xff] %vm1435, %v1412
      %1449 = vst.msk [vmem:[#allocation3 + $0x68] sm:$0xff] %vm1435, %v1414
      %1450 = vst.msk [vmem:[#allocation3 + $0x70] sm:$0xff] %vm1435, %v1416
      %1451 = vst.msk [vmem:[#allocation3 + $0x78] sm:$0xff] %vm1435, %v1418
      %v1452 = vld [vmem:[%s499 + $0x2] sm:$0xff]
      %v1453 = vld [vmem:[%s499 + $0xa] sm:$0xff]
      %v1454 = vld [vmem:[%s499 + $0x1a] sm:$0xff]
      %v1455 = vld [vmem:[%s499 + $0x22] sm:$0xff]
      %v1456 = vld [vmem:[%s499 + $0x32] sm:$0xff]
      %v1457 = vld [vmem:[%s499 + $0x3a] sm:$0xff]
      %v1458 = vld [vmem:[%s499 + $0x4a] sm:$0xff]
      %v1459 = vld [vmem:[%s499 + $0x52] sm:$0xff]
      %v1460 = vld [vmem:[%s499 + $0x62] sm:$0xff]
      %v1461 = vld [vmem:[%s499 + $0x6a] sm:$0xff]
      %v1462 = vld [vmem:[%s499 + $0x7a] sm:$0xff]
      %v1463 = vld [vmem:[%s499 + $0x82] sm:$0xff]
      %v1464 = vld [vmem:[%s499 + $0x92] sm:$0xff]
      %v1465 = vld [vmem:[%s499 + $0x9a] sm:$0xff]
      %v1466 = vld [vmem:[%s499 + $0xaa] sm:$0xff]
      %v1467 = vld [vmem:[%s499 + $0xb2] sm:$0xff]
      %v1468 = vld [vmem:[%s499 + $0xc2] sm:$0xff]
      %v1469 = vld [vmem:[%s499 + $0xca] sm:$0xff]
      %v1470 = vld [vmem:[%s499 + $0xda] sm:$0xff]
      %v1471 = vld [vmem:[%s499 + $0xe2] sm:$0xff]
      %v1472 = vld [vmem:[%s499 + $0xf2] sm:$0xff]
      %v1473 = vld [vmem:[%s499 + $0xfa] sm:$0xff]
      %v1474 = vld [vmem:[%s499 + $0x10a] sm:$0xff]
      %v1475 = vld [vmem:[%s499 + $0x112] sm:$0xff]
      %v1476 = vld [vmem:[%s499 + $0x122] sm:$0xff]
      %v1477 = vld [vmem:[%s499 + $0x12a] sm:$0xff]
      %v1478 = vld [vmem:[%s499 + $0x13a] sm:$0xff]
      %v1479 = vld [vmem:[%s499 + $0x142] sm:$0xff]
      %v1480 = vld [vmem:[%s499 + $0x152] sm:$0xff]
      %v1481 = vld [vmem:[%s499 + $0x15a] sm:$0xff]
      %v1482 = vld [vmem:[%s499 + $0x16a] sm:$0xff]
      %v1483 = vld [vmem:[%s499 + $0x172] sm:$0xff]
      %v1484 = vpack.c.bf16 %v1453, %v1452
      %v1485 = vpack.c.bf16 %v1455, %v1454
      %v1486 = vpack.c.bf16 %v1457, %v1456
      %v1487 = vpack.c.bf16 %v1459, %v1458
      %v1488 = vpack.c.bf16 %v1461, %v1460
      %v1489 = vpack.c.bf16 %v1463, %v1462
      %v1490 = vpack.c.bf16 %v1465, %v1464
      %v1491 = vpack.c.bf16 %v1467, %v1466
      %v1492 = vpack.c.bf16 %v1469, %v1468
      %v1493 = vpack.c.bf16 %v1471, %v1470
      %v1494 = vpack.c.bf16 %v1473, %v1472
      %v1495 = vpack.c.bf16 %v1475, %v1474
      %v1496 = vpack.c.bf16 %v1477, %v1476
      %v1497 = vpack.c.bf16 %v1479, %v1478
      %v1498 = vpack.c.bf16 %v1481, %v1480
      %v1499 = vpack.c.bf16 %v1483, %v1482
      %1516 = vrot.lane.b32.xlu0 %v1484, 40
      %v1517 = vpop.permute.xlu0 %1516
      %1518 = vrot.lane.b32.xlu0 %v1485, 40
      %v1519 = vpop.permute.xlu0 %1518
      %1520 = vrot.lane.b32.xlu0 %v1486, 40
      %v1521 = vpop.permute.xlu0 %1520
      %1522 = vrot.lane.b32.xlu0 %v1487, 40
      %v1523 = vpop.permute.xlu0 %1522
      %1524 = vrot.lane.b32.xlu0 %v1488, 40
      %v1525 = vpop.permute.xlu0 %1524
      %1526 = vrot.lane.b32.xlu0 %v1489, 40
      %v1527 = vpop.permute.xlu0 %1526
      %1528 = vrot.lane.b32.xlu0 %v1490, 40
      %v1529 = vpop.permute.xlu0 %1528
      %1530 = vrot.lane.b32.xlu0 %v1491, 40
      %v1531 = vpop.permute.xlu0 %1530
      %1532 = vrot.lane.b32.xlu0 %v1492, 40
      %v1533 = vpop.permute.xlu0 %1532
      %1534 = vrot.lane.b32.xlu0 %v1493, 40
      %v1535 = vpop.permute.xlu0 %1534
      %1536 = vrot.lane.b32.xlu0 %v1494, 40
      %v1537 = vpop.permute.xlu0 %1536
      %1538 = vrot.lane.b32.xlu0 %v1495, 40
      %v1539 = vpop.permute.xlu0 %1538
      %1540 = vrot.lane.b32.xlu0 %v1496, 40
      %v1541 = vpop.permute.xlu0 %1540
      %1542 = vrot.lane.b32.xlu0 %v1497, 40
      %v1543 = vpop.permute.xlu0 %1542
      %1544 = vrot.lane.b32.xlu0 %v1498, 40
      %v1545 = vpop.permute.xlu0 %1544
      %1546 = vrot.lane.b32.xlu0 %v1499, 40
      %v1547 = vpop.permute.xlu0 %1546
      %vm1564 = vcmask 392512
      %1565 = vst.msk [vmem:[#allocation3] sm:$0xff] %vm1564, %v1517
      %1566 = vst.msk [vmem:[#allocation3 + $0x8] sm:$0xff] %vm1564, %v1519
      %1567 = vst.msk [vmem:[#allocation3 + $0x10] sm:$0xff] %vm1564, %v1521
      %1568 = vst.msk [vmem:[#allocation3 + $0x18] sm:$0xff] %vm1564, %v1523
      %1569 = vst.msk [vmem:[#allocation3 + $0x20] sm:$0xff] %vm1564, %v1525
      %1570 = vst.msk [vmem:[#allocation3 + $0x28] sm:$0xff] %vm1564, %v1527
      %1571 = vst.msk [vmem:[#allocation3 + $0x30] sm:$0xff] %vm1564, %v1529
      %1572 = vst.msk [vmem:[#allocation3 + $0x38] sm:$0xff] %vm1564, %v1531
      %1573 = vst.msk [vmem:[#allocation3 + $0x40] sm:$0xff] %vm1564, %v1533
      %1574 = vst.msk [vmem:[#allocation3 + $0x48] sm:$0xff] %vm1564, %v1535
      %1575 = vst.msk [vmem:[#allocation3 + $0x50] sm:$0xff] %vm1564, %v1537
      %1576 = vst.msk [vmem:[#allocation3 + $0x58] sm:$0xff] %vm1564, %v1539
      %1577 = vst.msk [vmem:[#allocation3 + $0x60] sm:$0xff] %vm1564, %v1541
      %1578 = vst.msk [vmem:[#allocation3 + $0x68] sm:$0xff] %vm1564, %v1543
      %1579 = vst.msk [vmem:[#allocation3 + $0x70] sm:$0xff] %vm1564, %v1545
      %1580 = vst.msk [vmem:[#allocation3 + $0x78] sm:$0xff] %vm1564, %v1547
      %s1581 = scalar_lea.vmem [#allocation2], 48
      %v1582 = vld [vmem:[%s1581] sm:$0xff]
      %v1583 = vld [vmem:[%s1581 + $0x8] sm:$0xff]
      %v1584 = vld [vmem:[%s1581 + $0x18] sm:$0xff]
      %v1585 = vld [vmem:[%s1581 + $0x20] sm:$0xff]
      %v1586 = vld [vmem:[%s1581 + $0x30] sm:$0xff]
      %v1587 = vld [vmem:[%s1581 + $0x38] sm:$0xff]
      %v1588 = vld [vmem:[%s1581 + $0x48] sm:$0xff]
      %v1589 = vld [vmem:[%s1581 + $0x50] sm:$0xff]
      %v1590 = vld [vmem:[%s1581 + $0x60] sm:$0xff]
      %v1591 = vld [vmem:[%s1581 + $0x68] sm:$0xff]
      %v1592 = vld [vmem:[%s1581 + $0x78] sm:$0xff]
      %v1593 = vld [vmem:[%s1581 + $0x80] sm:$0xff]
      %v1594 = vld [vmem:[%s1581 + $0x90] sm:$0xff]
      %v1595 = vld [vmem:[%s1581 + $0x98] sm:$0xff]
      %v1596 = vld [vmem:[%s1581 + $0xa8] sm:$0xff]
      %v1597 = vld [vmem:[%s1581 + $0xb0] sm:$0xff]
      %v1598 = vld [vmem:[%s1581 + $0xc0] sm:$0xff]
      %v1599 = vld [vmem:[%s1581 + $0xc8] sm:$0xff]
      %v1600 = vld [vmem:[%s1581 + $0xd8] sm:$0xff]
      %v1601 = vld [vmem:[%s1581 + $0xe0] sm:$0xff]
      %v1602 = vld [vmem:[%s1581 + $0xf0] sm:$0xff]
      %v1603 = vld [vmem:[%s1581 + $0xf8] sm:$0xff]
      %v1604 = vld [vmem:[%s1581 + $0x108] sm:$0xff]
      %v1605 = vld [vmem:[%s1581 + $0x110] sm:$0xff]
      %v1606 = vld [vmem:[%s1581 + $0x120] sm:$0xff]
      %v1607 = vld [vmem:[%s1581 + $0x128] sm:$0xff]
      %v1608 = vld [vmem:[%s1581 + $0x138] sm:$0xff]
      %v1609 = vld [vmem:[%s1581 + $0x140] sm:$0xff]
      %v1610 = vld [vmem:[%s1581 + $0x150] sm:$0xff]
      %v1611 = vld [vmem:[%s1581 + $0x158] sm:$0xff]
      %v1612 = vld [vmem:[%s1581 + $0x168] sm:$0xff]
      %v1613 = vld [vmem:[%s1581 + $0x170] sm:$0xff]
      %v1614 = vpack.c.bf16 %v1583, %v1582
      %v1615 = vpack.c.bf16 %v1585, %v1584
      %v1616 = vpack.c.bf16 %v1587, %v1586
      %v1617 = vpack.c.bf16 %v1589, %v1588
      %v1618 = vpack.c.bf16 %v1591, %v1590
      %v1619 = vpack.c.bf16 %v1593, %v1592
      %v1620 = vpack.c.bf16 %v1595, %v1594
      %v1621 = vpack.c.bf16 %v1597, %v1596
      %v1622 = vpack.c.bf16 %v1599, %v1598
      %v1623 = vpack.c.bf16 %v1601, %v1600
      %v1624 = vpack.c.bf16 %v1603, %v1602
      %v1625 = vpack.c.bf16 %v1605, %v1604
      %v1626 = vpack.c.bf16 %v1607, %v1606
      %v1627 = vpack.c.bf16 %v1609, %v1608
      %v1628 = vpack.c.bf16 %v1611, %v1610
      %v1629 = vpack.c.bf16 %v1613, %v1612
      %1646 = vrot.lane.b32.xlu0 %v1614, 48
      %v1647 = vpop.permute.xlu0 %1646
      %1648 = vrot.lane.b32.xlu0 %v1615, 48
      %v1649 = vpop.permute.xlu0 %1648
      %1650 = vrot.lane.b32.xlu0 %v1616, 48
      %v1651 = vpop.permute.xlu0 %1650
      %1652 = vrot.lane.b32.xlu0 %v1617, 48
      %v1653 = vpop.permute.xlu0 %1652
      %1654 = vrot.lane.b32.xlu0 %v1618, 48
      %v1655 = vpop.permute.xlu0 %1654
      %1656 = vrot.lane.b32.xlu0 %v1619, 48
      %v1657 = vpop.permute.xlu0 %1656
      %1658 = vrot.lane.b32.xlu0 %v1620, 48
      %v1659 = vpop.permute.xlu0 %1658
      %1660 = vrot.lane.b32.xlu0 %v1621, 48
      %v1661 = vpop.permute.xlu0 %1660
      %1662 = vrot.lane.b32.xlu0 %v1622, 48
      %v1663 = vpop.permute.xlu0 %1662
      %1664 = vrot.lane.b32.xlu0 %v1623, 48
      %v1665 = vpop.permute.xlu0 %1664
      %1666 = vrot.lane.b32.xlu0 %v1624, 48
      %v1667 = vpop.permute.xlu0 %1666
      %1668 = vrot.lane.b32.xlu0 %v1625, 48
      %v1669 = vpop.permute.xlu0 %1668
      %1670 = vrot.lane.b32.xlu0 %v1626, 48
      %v1671 = vpop.permute.xlu0 %1670
      %1672 = vrot.lane.b32.xlu0 %v1627, 48
      %v1673 = vpop.permute.xlu0 %1672
      %1674 = vrot.lane.b32.xlu0 %v1628, 48
      %v1675 = vpop.permute.xlu0 %1674
      %1676 = vrot.lane.b32.xlu0 %v1629, 48
      %v1677 = vpop.permute.xlu0 %1676
      %vm1694 = vcmask 458112
      %1695 = vst.msk [vmem:[#allocation3] sm:$0xff] %vm1694, %v1647
      %1696 = vst.msk [vmem:[#allocation3 + $0x8] sm:$0xff] %vm1694, %v1649
      %1697 = vst.msk [vmem:[#allocation3 + $0x10] sm:$0xff] %vm1694, %v1651
      %1698 = vst.msk [vmem:[#allocation3 + $0x18] sm:$0xff] %vm1694, %v1653
      %1699 = vst.msk [vmem:[#allocation3 + $0x20] sm:$0xff] %vm1694, %v1655
      %1700 = vst.msk [vmem:[#allocation3 + $0x28] sm:$0xff] %vm1694, %v1657
      %1701 = vst.msk [vmem:[#allocation3 + $0x30] sm:$0xff] %vm1694, %v1659
      %1702 = vst.msk [vmem:[#allocation3 + $0x38] sm:$0xff] %vm1694, %v1661
      %1703 = vst.msk [vmem:[#allocation3 + $0x40] sm:$0xff] %vm1694, %v1663
      %1704 = vst.msk [vmem:[#allocation3 + $0x48] sm:$0xff] %vm1694, %v1665
      %1705 = vst.msk [vmem:[#allocation3 + $0x50] sm:$0xff] %vm1694, %v1667
      %1706 = vst.msk [vmem:[#allocation3 + $0x58] sm:$0xff] %vm1694, %v1669
      %1707 = vst.msk [vmem:[#allocation3 + $0x60] sm:$0xff] %vm1694, %v1671
      %1708 = vst.msk [vmem:[#allocation3 + $0x68] sm:$0xff] %vm1694, %v1673
      %1709 = vst.msk [vmem:[#allocation3 + $0x70] sm:$0xff] %vm1694, %v1675
      %1710 = vst.msk [vmem:[#allocation3 + $0x78] sm:$0xff] %vm1694, %v1677
      %v1711 = vld [vmem:[%s1581 + $0x1] sm:$0xff]
      %v1712 = vld [vmem:[%s1581 + $0x9] sm:$0xff]
      %v1713 = vld [vmem:[%s1581 + $0x19] sm:$0xff]
      %v1714 = vld [vmem:[%s1581 + $0x21] sm:$0xff]
      %v1715 = vld [vmem:[%s1581 + $0x31] sm:$0xff]
      %v1716 = vld [vmem:[%s1581 + $0x39] sm:$0xff]
      %v1717 = vld [vmem:[%s1581 + $0x49] sm:$0xff]
      %v1718 = vld [vmem:[%s1581 + $0x51] sm:$0xff]
      %v1719 = vld [vmem:[%s1581 + $0x61] sm:$0xff]
      %v1720 = vld [vmem:[%s1581 + $0x69] sm:$0xff]
      %v1721 = vld [vmem:[%s1581 + $0x79] sm:$0xff]
      %v1722 = vld [vmem:[%s1581 + $0x81] sm:$0xff]
      %v1723 = vld [vmem:[%s1581 + $0x91] sm:$0xff]
      %v1724 = vld [vmem:[%s1581 + $0x99] sm:$0xff]
      %v1725 = vld [vmem:[%s1581 + $0xa9] sm:$0xff]
      %v1726 = vld [vmem:[%s1581 + $0xb1] sm:$0xff]
      %v1727 = vld [vmem:[%s1581 + $0xc1] sm:$0xff]
      %v1728 = vld [vmem:[%s1581 + $0xc9] sm:$0xff]
      %v1729 = vld [vmem:[%s1581 + $0xd9] sm:$0xff]
      %v1730 = vld [vmem:[%s1581 + $0xe1] sm:$0xff]
      %v1731 = vld [vmem:[%s1581 + $0xf1] sm:$0xff]
      %v1732 = vld [vmem:[%s1581 + $0xf9] sm:$0xff]
      %v1733 = vld [vmem:[%s1581 + $0x109] sm:$0xff]
      %v1734 = vld [vmem:[%s1581 + $0x111] sm:$0xff]
      %v1735 = vld [vmem:[%s1581 + $0x121] sm:$0xff]
      %v1736 = vld [vmem:[%s1581 + $0x129] sm:$0xff]
      %v1737 = vld [vmem:[%s1581 + $0x139] sm:$0xff]
      %v1738 = vld [vmem:[%s1581 + $0x141] sm:$0xff]
      %v1739 = vld [vmem:[%s1581 + $0x151] sm:$0xff]
      %v1740 = vld [vmem:[%s1581 + $0x159] sm:$0xff]
      %v1741 = vld [vmem:[%s1581 + $0x169] sm:$0xff]
      %v1742 = vld [vmem:[%s1581 + $0x171] sm:$0xff]
      %v1743 = vpack.c.bf16 %v1712, %v1711
      %v1744 = vpack.c.bf16 %v1714, %v1713
      %v1745 = vpack.c.bf16 %v1716, %v1715
      %v1746 = vpack.c.bf16 %v1718, %v1717
      %v1747 = vpack.c.bf16 %v1720, %v1719
      %v1748 = vpack.c.bf16 %v1722, %v1721
      %v1749 = vpack.c.bf16 %v1724, %v1723
      %v1750 = vpack.c.bf16 %v1726, %v1725
      %v1751 = vpack.c.bf16 %v1728, %v1727
      %v1752 = vpack.c.bf16 %v1730, %v1729
      %v1753 = vpack.c.bf16 %v1732, %v1731
      %v1754 = vpack.c.bf16 %v1734, %v1733
      %v1755 = vpack.c.bf16 %v1736, %v1735
      %v1756 = vpack.c.bf16 %v1738, %v1737
      %v1757 = vpack.c.bf16 %v1740, %v1739
      %v1758 = vpack.c.bf16 %v1742, %v1741
      %1775 = vrot.lane.b32.xlu0 %v1743, 56
      %v1776 = vpop.permute.xlu0 %1775
      %1777 = vrot.lane.b32.xlu0 %v1744, 56
      %v1778 = vpop.permute.xlu0 %1777
      %1779 = vrot.lane.b32.xlu0 %v1745, 56
      %v1780 = vpop.permute.xlu0 %1779
      %1781 = vrot.lane.b32.xlu0 %v1746, 56
      %v1782 = vpop.permute.xlu0 %1781
      %1783 = vrot.lane.b32.xlu0 %v1747, 56
      %v1784 = vpop.permute.xlu0 %1783
      %1785 = vrot.lane.b32.xlu0 %v1748, 56
      %v1786 = vpop.permute.xlu0 %1785
      %1787 = vrot.lane.b32.xlu0 %v1749, 56
      %v1788 = vpop.permute.xlu0 %1787
      %1789 = vrot.lane.b32.xlu0 %v1750, 56
      %v1790 = vpop.permute.xlu0 %1789
      %1791 = vrot.lane.b32.xlu0 %v1751, 56
      %v1792 = vpop.permute.xlu0 %1791
      %1793 = vrot.lane.b32.xlu0 %v1752, 56
      %v1794 = vpop.permute.xlu0 %1793
      %1795 = vrot.lane.b32.xlu0 %v1753, 56
      %v1796 = vpop.permute.xlu0 %1795
      %1797 = vrot.lane.b32.xlu0 %v1754, 56
      %v1798 = vpop.permute.xlu0 %1797
      %1799 = vrot.lane.b32.xlu0 %v1755, 56
      %v1800 = vpop.permute.xlu0 %1799
      %1801 = vrot.lane.b32.xlu0 %v1756, 56
      %v1802 = vpop.permute.xlu0 %1801
      %1803 = vrot.lane.b32.xlu0 %v1757, 56
      %v1804 = vpop.permute.xlu0 %1803
      %1805 = vrot.lane.b32.xlu0 %v1758, 56
      %v1806 = vpop.permute.xlu0 %1805
      %vm1823 = vcmask 523712
      %1824 = vst.msk [vmem:[#allocation3] sm:$0xff] %vm1823, %v1776
      %1825 = vst.msk [vmem:[#allocation3 + $0x8] sm:$0xff] %vm1823, %v1778
      %1826 = vst.msk [vmem:[#allocation3 + $0x10] sm:$0xff] %vm1823, %v1780
      %1827 = vst.msk [vmem:[#allocation3 + $0x18] sm:$0xff] %vm1823, %v1782
      %1828 = vst.msk [vmem:[#allocation3 + $0x20] sm:$0xff] %vm1823, %v1784
      %1829 = vst.msk [vmem:[#allocation3 + $0x28] sm:$0xff] %vm1823, %v1786
      %1830 = vst.msk [vmem:[#allocation3 + $0x30] sm:$0xff] %vm1823, %v1788
      %1831 = vst.msk [vmem:[#allocation3 + $0x38] sm:$0xff] %vm1823, %v1790
      %1832 = vst.msk [vmem:[#allocation3 + $0x40] sm:$0xff] %vm1823, %v1792
      %1833 = vst.msk [vmem:[#allocation3 + $0x48] sm:$0xff] %vm1823, %v1794
      %1834 = vst.msk [vmem:[#allocation3 + $0x50] sm:$0xff] %vm1823, %v1796
      %1835 = vst.msk [vmem:[#allocation3 + $0x58] sm:$0xff] %vm1823, %v1798
      %1836 = vst.msk [vmem:[#allocation3 + $0x60] sm:$0xff] %vm1823, %v1800
      %1837 = vst.msk [vmem:[#allocation3 + $0x68] sm:$0xff] %vm1823, %v1802
      %1838 = vst.msk [vmem:[#allocation3 + $0x70] sm:$0xff] %vm1823, %v1804
      %1839 = vst.msk [vmem:[#allocation3 + $0x78] sm:$0xff] %vm1823, %v1806
      %v1840 = vld [vmem:[%s1581 + $0x2] sm:$0xff]
      %v1841 = vld [vmem:[%s1581 + $0xa] sm:$0xff]
      %v1842 = vld [vmem:[%s1581 + $0x1a] sm:$0xff]
      %v1843 = vld [vmem:[%s1581 + $0x22] sm:$0xff]
      %v1844 = vld [vmem:[%s1581 + $0x32] sm:$0xff]
      %v1845 = vld [vmem:[%s1581 + $0x3a] sm:$0xff]
      %v1846 = vld [vmem:[%s1581 + $0x4a] sm:$0xff]
      %v1847 = vld [vmem:[%s1581 + $0x52] sm:$0xff]
      %v1848 = vld [vmem:[%s1581 + $0x62] sm:$0xff]
      %v1849 = vld [vmem:[%s1581 + $0x6a] sm:$0xff]
      %v1850 = vld [vmem:[%s1581 + $0x7a] sm:$0xff]
      %v1851 = vld [vmem:[%s1581 + $0x82] sm:$0xff]
      %v1852 = vld [vmem:[%s1581 + $0x92] sm:$0xff]
      %v1853 = vld [vmem:[%s1581 + $0x9a] sm:$0xff]
      %v1854 = vld [vmem:[%s1581 + $0xaa] sm:$0xff]
      %v1855 = vld [vmem:[%s1581 + $0xb2] sm:$0xff]
      %v1856 = vld [vmem:[%s1581 + $0xc2] sm:$0xff]
      %v1857 = vld [vmem:[%s1581 + $0xca] sm:$0xff]
      %v1858 = vld [vmem:[%s1581 + $0xda] sm:$0xff]
      %v1859 = vld [vmem:[%s1581 + $0xe2] sm:$0xff]
      %v1860 = vld [vmem:[%s1581 + $0xf2] sm:$0xff]
      %v1861 = vld [vmem:[%s1581 + $0xfa] sm:$0xff]
      %v1862 = vld [vmem:[%s1581 + $0x10a] sm:$0xff]
      %v1863 = vld [vmem:[%s1581 + $0x112] sm:$0xff]
      %v1864 = vld [vmem:[%s1581 + $0x122] sm:$0xff]
      %v1865 = vld [vmem:[%s1581 + $0x12a] sm:$0xff]
      %v1866 = vld [vmem:[%s1581 + $0x13a] sm:$0xff]
      %v1867 = vld [vmem:[%s1581 + $0x142] sm:$0xff]
      %v1868 = vld [vmem:[%s1581 + $0x152] sm:$0xff]
      %v1869 = vld [vmem:[%s1581 + $0x15a] sm:$0xff]
      %v1870 = vld [vmem:[%s1581 + $0x16a] sm:$0xff]
      %v1871 = vld [vmem:[%s1581 + $0x172] sm:$0xff]
      %v1872 = vpack.c.bf16 %v1841, %v1840
      %v1873 = vpack.c.bf16 %v1843, %v1842
      %v1874 = vpack.c.bf16 %v1845, %v1844
      %v1875 = vpack.c.bf16 %v1847, %v1846
      %v1876 = vpack.c.bf16 %v1849, %v1848
      %v1877 = vpack.c.bf16 %v1851, %v1850
      %v1878 = vpack.c.bf16 %v1853, %v1852
      %v1879 = vpack.c.bf16 %v1855, %v1854
      %v1880 = vpack.c.bf16 %v1857, %v1856
      %v1881 = vpack.c.bf16 %v1859, %v1858
      %v1882 = vpack.c.bf16 %v1861, %v1860
      %v1883 = vpack.c.bf16 %v1863, %v1862
      %v1884 = vpack.c.bf16 %v1865, %v1864
      %v1885 = vpack.c.bf16 %v1867, %v1866
      %v1886 = vpack.c.bf16 %v1869, %v1868
      %v1887 = vpack.c.bf16 %v1871, %v1870
      %1904 = vrot.lane.b32.xlu0 %v1872, 64
      %v1905 = vpop.permute.xlu0 %1904
      %1906 = vrot.lane.b32.xlu0 %v1873, 64
      %v1907 = vpop.permute.xlu0 %1906
      %1908 = vrot.lane.b32.xlu0 %v1874, 64
      %v1909 = vpop.permute.xlu0 %1908
      %1910 = vrot.lane.b32.xlu0 %v1875, 64
      %v1911 = vpop.permute.xlu0 %1910
      %1912 = vrot.lane.b32.xlu0 %v1876, 64
      %v1913 = vpop.permute.xlu0 %1912
      %1914 = vrot.lane.b32.xlu0 %v1877, 64
      %v1915 = vpop.permute.xlu0 %1914
      %1916 = vrot.lane.b32.xlu0 %v1878, 64
      %v1917 = vpop.permute.xlu0 %1916
      %1918 = vrot.lane.b32.xlu0 %v1879, 64
      %v1919 = vpop.permute.xlu0 %1918
      %1920 = vrot.lane.b32.xlu0 %v1880, 64
      %v1921 = vpop.permute.xlu0 %1920
      %1922 = vrot.lane.b32.xlu0 %v1881, 64
      %v1923 = vpop.permute.xlu0 %1922
      %1924 = vrot.lane.b32.xlu0 %v1882, 64
      %v1925 = vpop.permute.xlu0 %1924
      %1926 = vrot.lane.b32.xlu0 %v1883, 64
      %v1927 = vpop.permute.xlu0 %1926
      %1928 = vrot.lane.b32.xlu0 %v1884, 64
      %v1929 = vpop.permute.xlu0 %1928
      %1930 = vrot.lane.b32.xlu0 %v1885, 64
      %v1931 = vpop.permute.xlu0 %1930
      %1932 = vrot.lane.b32.xlu0 %v1886, 64
      %v1933 = vpop.permute.xlu0 %1932
      %1934 = vrot.lane.b32.xlu0 %v1887, 64
      %v1935 = vpop.permute.xlu0 %1934
      %vm1952 = vcmask 589312
      %1953 = vst.msk [vmem:[#allocation3] sm:$0xff] %vm1952, %v1905
      %1954 = vst.msk [vmem:[#allocation3 + $0x8] sm:$0xff] %vm1952, %v1907
      %1955 = vst.msk [vmem:[#allocation3 + $0x10] sm:$0xff] %vm1952, %v1909
      %1956 = vst.msk [vmem:[#allocation3 + $0x18] sm:$0xff] %vm1952, %v1911
      %1957 = vst.msk [vmem:[#allocation3 + $0x20] sm:$0xff] %vm1952, %v1913
      %1958 = vst.msk [vmem:[#allocation3 + $0x28] sm:$0xff] %vm1952, %v1915
      %1959 = vst.msk [vmem:[#allocation3 + $0x30] sm:$0xff] %vm1952, %v1917
      %1960 = vst.msk [vmem:[#allocation3 + $0x38] sm:$0xff] %vm1952, %v1919
      %1961 = vst.msk [vmem:[#allocation3 + $0x40] sm:$0xff] %vm1952, %v1921
      %1962 = vst.msk [vmem:[#allocation3 + $0x48] sm:$0xff] %vm1952, %v1923
      %1963 = vst.msk [vmem:[#allocation3 + $0x50] sm:$0xff] %vm1952, %v1925
      %1964 = vst.msk [vmem:[#allocation3 + $0x58] sm:$0xff] %vm1952, %v1927
      %1965 = vst.msk [vmem:[#allocation3 + $0x60] sm:$0xff] %vm1952, %v1929
      %1966 = vst.msk [vmem:[#allocation3 + $0x68] sm:$0xff] %vm1952, %v1931
      %1967 = vst.msk [vmem:[#allocation3 + $0x70] sm:$0xff] %vm1952, %v1933
      %1968 = vst.msk [vmem:[#allocation3 + $0x78] sm:$0xff] %vm1952, %v1935
      %v1969 = vld [vmem:[#allocation3] sm:$0xff]
      %v1970 = vld [vmem:[#allocation3 + $0x8] sm:$0xff]
      %v1971 = vld [vmem:[#allocation3 + $0x10] sm:$0xff]
      %v1972 = vld [vmem:[#allocation3 + $0x18] sm:$0xff]
      %v1973 = vld [vmem:[#allocation3 + $0x20] sm:$0xff]
      %v1974 = vld [vmem:[#allocation3 + $0x28] sm:$0xff]
      %v1975 = vld [vmem:[#allocation3 + $0x30] sm:$0xff]
      %v1976 = vld [vmem:[#allocation3 + $0x38] sm:$0xff]
      %v1977 = vld [vmem:[#allocation3 + $0x40] sm:$0xff]
      %v1978 = vld [vmem:[#allocation3 + $0x48] sm:$0xff]
      %v1979 = vld [vmem:[#allocation3 + $0x50] sm:$0xff]
      %v1980 = vld [vmem:[#allocation3 + $0x58] sm:$0xff]
      %v1981 = vld [vmem:[#allocation3 + $0x60] sm:$0xff]
      %v1982 = vld [vmem:[#allocation3 + $0x68] sm:$0xff]
      %v1983 = vld [vmem:[#allocation3 + $0x70] sm:$0xff]
      %v1984 = vld [vmem:[#allocation3 + $0x78] sm:$0xff]
      %v1985 = vld [vmem:[%s4] sm:$0xf]
      %v1986 = vld [vmem:[%s4 + $0x4] sm:$0xf]
      %v1987 = vld [vmem:[%s4 + $0x8] sm:$0xf]
      %v1988 = vld [vmem:[%s4 + $0xc] sm:$0xf]
      %v1989 = vld [vmem:[%s4 + $0x10] sm:$0xf]
      %v1990 = vld [vmem:[%s4 + $0x14] sm:$0xf]
      %v1991 = vld [vmem:[%s4 + $0x18] sm:$0xf]
      %v1992 = vld [vmem:[%s4 + $0x1c] sm:$0xf]
      %v1993 = vld [vmem:[%s4 + $0x20] sm:$0xf]
      %v1994 = vld [vmem:[%s5] sm:$0x1]
      %v1996 = vlaneseq
      %v1997 = vshrl.u32 %v1996, 7
      %v1998 = vsub.s32 0, %v1997
      %v1999 = vrot.slane %v1994, %v1998
      %v2010 = vunpack.c.l.b16 %v1985
      %v2011 = vunpack.c.l.b16 %v1986
      %v2012 = vunpack.c.l.b16 %v1987
      %v2013 = vunpack.c.l.b16 %v1988
      %v2014 = vunpack.c.l.b16 %v1989
      %v2015 = vunpack.c.l.b16 %v1990
      %v2016 = vunpack.c.l.b16 %v1991
      %v2017 = vunpack.c.l.b16 %v1992
      %v2018 = vunpack.c.l.b16 %v1993
      %v2019 = vpack.c.b16 %v2011, %v2010
      %v2020 = vpack.c.b16 %v2013, %v2012
      %v2021 = vpack.c.b16 %v2015, %v2014
      %v2022 = vpack.c.b16 %v2017, %v2016
      %v2023 = vpack.c.b16 %v2018, %v2018
      %vm2028 = vcmask 588800
      %v2030 = vsel %vm2028, %v1969, 0
      %v2033 = vsel %vm2028, %v1970, 0
      %v2036 = vsel %vm2028, %v1971, 0
      %v2039 = vsel %vm2028, %v1972, 0
      %v2042 = vsel %vm2028, %v1973, 0
      %v2045 = vsel %vm2028, %v1974, 0
      %v2048 = vsel %vm2028, %v1975, 0
      %v2051 = vsel %vm2028, %v1976, 0
      %v2054 = vsel %vm2028, %v1977, 0
      %v2057 = vsel %vm2028, %v1978, 0
      %v2060 = vsel %vm2028, %v1979, 0
      %v2063 = vsel %vm2028, %v1980, 0
      %v2066 = vsel %vm2028, %v1981, 0
      %v2069 = vsel %vm2028, %v1982, 0
      %v2072 = vsel %vm2028, %v1983, 0
      %v2075 = vsel %vm2028, %v1984, 0
      %vm2077 = vcmask 1043456
      %v2079 = vsel %vm2077, %v2023, 0
      %2081 = vmatprep.subr.bf16.mxu0 0
      %2082 = vmatpush1.bf16.msra.mxu0 %v2019
      %2083 = vmatprep.subr.bf16.mxu0 0
      %2084 = vmatpush1.bf16.msra.mxu0 %v2020
      %2085 = vmatprep.subr.bf16.mxu0 0
      %2086 = vmatpush1.bf16.msra.mxu0 %v2021
      %2087 = vmatprep.subr.bf16.mxu0 0
      %2088 = vmatpush1.bf16.msra.mxu0 %v2022
      %2089 = vmatprep.subr.bf16.mxu0 0
      %2090 = vmatpush1.bf16.msra.mxu0 %v2079
      %2091 = vmatprep.subr.bf16.mxu0 0
      %2092 = vmatpush1.bf16.msra.mxu0 0
      %2093 = vmatprep.subr.bf16.mxu0 0
      %2094 = vmatpush1.bf16.msra.mxu0 0
      %2095 = vmatprep.subr.bf16.mxu0 0
      %2096 = vmatpush1.bf16.msra.mxu0 0
      %2097 = vmatprep.subr.bf16.mxu0 0
      %2098 = vmatpush1.bf16.msra.mxu0 0
      %2099 = vmatprep.subr.bf16.mxu0 0
      %2100 = vmatpush1.bf16.msra.mxu0 0
      %2101 = vmatprep.subr.bf16.mxu0 0
      %2102 = vmatpush1.bf16.msra.mxu0 0
      %2103 = vmatprep.subr.bf16.mxu0 0
      %2104 = vmatpush1.bf16.msra.mxu0 0
      %2105 = vmatprep.subr.bf16.mxu0 0
      %2106 = vmatpush1.bf16.msra.mxu0 0
      %2107 = vmatprep.subr.bf16.mxu0 0
      %2108 = vmatpush1.bf16.msra.mxu0 0
      %2109 = vmatprep.subr.bf16.mxu0 0
      %2110 = vmatpush1.bf16.msra.mxu0 0
      %2111 = vmatprep.subr.bf16.mxu0 0
      %2112 = vmatpush1.bf16.msra.mxu0 0
      %2113 = vmatprep.mubr.bf16.mxu0 0
      %2114 = vmatmul.mubr.bf16.gmra.mrb[0].mxu0 %v2030
      %v2115 = vpop.f32.mrb[0].mxu0
      %v2116 = vadd.f32 %v1999, %v2115
      %v2117 = vpop.f32.mrb[0].mxu0
      %v2118 = vpop.f32.mrb[0].mxu0
      %v2119 = vadd.f32 %v1999, %v2118
      %v2120 = vpop.f32.mrb[0].mxu0
      %2121 = vmatprep.mubr.bf16.mxu0 0
      %2122 = vmatmul.mubr.bf16.gmra.mrb[0].mxu0 %v2033
      %v2123 = vpop.f32.mrb[0].mxu0
      %v2124 = vadd.f32 %v1999, %v2123
      %v2125 = vpop.f32.mrb[0].mxu0
      %v2126 = vpop.f32.mrb[0].mxu0
      %v2127 = vadd.f32 %v1999, %v2126
      %v2128 = vpop.f32.mrb[0].mxu0
      %2129 = vmatprep.mubr.bf16.mxu0 0
      %2130 = vmatmul.mubr.bf16.gmra.mrb[0].mxu0 %v2036
      %v2131 = vpop.f32.mrb[0].mxu0
      %v2132 = vadd.f32 %v1999, %v2131
      %v2133 = vpop.f32.mrb[0].mxu0
      %v2134 = vpop.f32.mrb[0].mxu0
      %v2135 = vadd.f32 %v1999, %v2134
      %v2136 = vpop.f32.mrb[0].mxu0
      %2137 = vmatprep.mubr.bf16.mxu0 0
      %2138 = vmatmul.mubr.bf16.gmra.mrb[0].mxu0 %v2039
      %v2139 = vpop.f32.mrb[0].mxu0
      %v2140 = vadd.f32 %v1999, %v2139
      %v2141 = vpop.f32.mrb[0].mxu0
      %v2142 = vpop.f32.mrb[0].mxu0
      %v2143 = vadd.f32 %v1999, %v2142
      %v2144 = vpop.f32.mrb[0].mxu0
      %2145 = vmatprep.mubr.bf16.mxu0 0
      %2146 = vmatmul.mubr.bf16.gmra.mrb[0].mxu0 %v2042
      %v2147 = vpop.f32.mrb[0].mxu0
      %v2148 = vadd.f32 %v1999, %v2147
      %v2149 = vpop.f32.mrb[0].mxu0
      %v2150 = vpop.f32.mrb[0].mxu0
      %v2151 = vadd.f32 %v1999, %v2150
      %v2152 = vpop.f32.mrb[0].mxu0
      %2153 = vmatprep.mubr.bf16.mxu0 0
      %2154 = vmatmul.mubr.bf16.gmra.mrb[0].mxu0 %v2045
      %v2155 = vpop.f32.mrb[0].mxu0
      %v2156 = vadd.f32 %v1999, %v2155
      %v2157 = vpop.f32.mrb[0].mxu0
      %v2158 = vpop.f32.mrb[0].mxu0
      %v2159 = vadd.f32 %v1999, %v2158
      %v2160 = vpop.f32.mrb[0].mxu0
      %2161 = vmatprep.mubr.bf16.mxu0 0
      %2162 = vmatmul.mubr.bf16.gmra.mrb[0].mxu0 %v2048
      %v2163 = vpop.f32.mrb[0].mxu0
      %v2164 = vadd.f32 %v1999, %v2163
      %v2165 = vpop.f32.mrb[0].mxu0
      %v2166 = vpop.f32.mrb[0].mxu0
      %v2167 = vadd.f32 %v1999, %v2166
      %v2168 = vpop.f32.mrb[0].mxu0
      %2169 = vmatprep.mubr.bf16.mxu0 0
      %2170 = vmatmul.mubr.bf16.gmra.mrb[0].mxu0 %v2051
      %v2171 = vpop.f32.mrb[0].mxu0
      %v2172 = vadd.f32 %v1999, %v2171
      %v2173 = vpop.f32.mrb[0].mxu0
      %v2174 = vpop.f32.mrb[0].mxu0
      %v2175 = vadd.f32 %v1999, %v2174
      %v2176 = vpop.f32.mrb[0].mxu0
      %2177 = vmatprep.mubr.bf16.mxu0 0
      %2178 = vmatmul.mubr.bf16.gmra.mrb[0].mxu0 %v2054
      %v2179 = vpop.f32.mrb[0].mxu0
      %v2180 = vadd.f32 %v1999, %v2179
      %v2181 = vpop.f32.mrb[0].mxu0
      %v2182 = vpop.f32.mrb[0].mxu0
      %v2183 = vadd.f32 %v1999, %v2182
      %v2184 = vpop.f32.mrb[0].mxu0
      %2185 = vmatprep.mubr.bf16.mxu0 0
      %2186 = vmatmul.mubr.bf16.gmra.mrb[0].mxu0 %v2057
      %v2187 = vpop.f32.mrb[0].mxu0
      %v2188 = vadd.f32 %v1999, %v2187
      %v2189 = vpop.f32.mrb[0].mxu0
      %v2190 = vpop.f32.mrb[0].mxu0
      %v2191 = vadd.f32 %v1999, %v2190
      %v2192 = vpop.f32.mrb[0].mxu0
      %2193 = vmatprep.mubr.bf16.mxu0 0
      %2194 = vmatmul.mubr.bf16.gmra.mrb[0].mxu0 %v2060
      %v2195 = vpop.f32.mrb[0].mxu0
      %v2196 = vadd.f32 %v1999, %v2195
      %v2197 = vpop.f32.mrb[0].mxu0
      %v2198 = vpop.f32.mrb[0].mxu0
      %v2199 = vadd.f32 %v1999, %v2198
      %v2200 = vpop.f32.mrb[0].mxu0
      %2201 = vmatprep.mubr.bf16.mxu0 0
      %2202 = vmatmul.mubr.bf16.gmra.mrb[0].mxu0 %v2063
      %v2203 = vpop.f32.mrb[0].mxu0
      %v2204 = vadd.f32 %v1999, %v2203
      %v2205 = vpop.f32.mrb[0].mxu0
      %v2206 = vpop.f32.mrb[0].mxu0
      %v2207 = vadd.f32 %v1999, %v2206
      %v2208 = vpop.f32.mrb[0].mxu0
      %2209 = vmatprep.mubr.bf16.mxu0 0
      %2210 = vmatmul.mubr.bf16.gmra.mrb[0].mxu0 %v2066
      %v2211 = vpop.f32.mrb[0].mxu0
      %v2212 = vadd.f32 %v1999, %v2211
      %v2213 = vpop.f32.mrb[0].mxu0
      %v2214 = vpop.f32.mrb[0].mxu0
      %v2215 = vadd.f32 %v1999, %v2214
      %v2216 = vpop.f32.mrb[0].mxu0
      %2217 = vmatprep.mubr.bf16.mxu0 0
      %2218 = vmatmul.mubr.bf16.gmra.mrb[0].mxu0 %v2069
      %v2219 = vpop.f32.mrb[0].mxu0
      %v2220 = vadd.f32 %v1999, %v2219
      %v2221 = vpop.f32.mrb[0].mxu0
      %v2222 = vpop.f32.mrb[0].mxu0
      %v2223 = vadd.f32 %v1999, %v2222
      %v2224 = vpop.f32.mrb[0].mxu0
      %2225 = vmatprep.mubr.bf16.mxu0 0
      %2226 = vmatmul.mubr.bf16.gmra.mrb[0].mxu0 %v2072
      %v2227 = vpop.f32.mrb[0].mxu0
      %v2228 = vadd.f32 %v1999, %v2227
      %v2229 = vpop.f32.mrb[0].mxu0
      %v2230 = vpop.f32.mrb[0].mxu0
      %v2231 = vadd.f32 %v1999, %v2230
      %v2232 = vpop.f32.mrb[0].mxu0
      %2233 = vmatprep.mubr.bf16.mxu0 0
      %2234 = vmatmul.mubr.bf16.gmra.mrb[0].mxu0 %v2075
      %v2235 = vpop.f32.mrb[0].mxu0
      %v2236 = vadd.f32 %v1999, %v2235
      %v2237 = vpop.f32.mrb[0].mxu0
      %v2238 = vpop.f32.mrb[0].mxu0
      %v2239 = vadd.f32 %v1999, %v2238
      %v2240 = vpop.f32.mrb[0].mxu0
      %2241 = vdwg.mxu0
      %v2242 = vsel %vm500, %v2116, 0.0
      %v2243 = vsel %vm500, %v2119, 0.0
      %v2244 = vadd.f32 %v2242, %v2243
      %v2245 = vsel %vm500, %v2124, 0.0
      %v2246 = vadd.f32 %v2244, %v2245
      %v2247 = vsel %vm500, %v2127, 0.0
      %v2248 = vadd.f32 %v2246, %v2247
      %v2249 = vsel %vm500, %v2132, 0.0
      %v2250 = vadd.f32 %v2248, %v2249
      %v2251 = vsel %vm500, %v2135, 0.0
      %v2252 = vadd.f32 %v2250, %v2251
      %v2253 = vsel %vm500, %v2140, 0.0
      %v2254 = vadd.f32 %v2252, %v2253
      %v2255 = vsel %vm500, %v2143, 0.0
      %v2256 = vadd.f32 %v2254, %v2255
      %v2257 = vsel %vm500, %v2148, 0.0
      %v2258 = vadd.f32 %v2256, %v2257
      %v2259 = vsel %vm500, %v2151, 0.0
      %v2260 = vadd.f32 %v2258, %v2259
      %v2261 = vsel %vm500, %v2156, 0.0
      %v2262 = vadd.f32 %v2260, %v2261
      %v2263 = vsel %vm500, %v2159, 0.0
      %v2264 = vadd.f32 %v2262, %v2263
      %v2265 = vsel %vm500, %v2164, 0.0
      %v2266 = vadd.f32 %v2264, %v2265
      %v2267 = vsel %vm500, %v2167, 0.0
      %v2268 = vadd.f32 %v2266, %v2267
      %v2269 = vsel %vm500, %v2172, 0.0
      %v2270 = vadd.f32 %v2268, %v2269
      %v2271 = vsel %vm500, %v2175, 0.0
      %v2272 = vadd.f32 %v2270, %v2271
      %v2273 = vsel %vm500, %v2180, 0.0
      %v2274 = vadd.f32 %v2272, %v2273
      %v2275 = vsel %vm500, %v2183, 0.0
      %v2276 = vadd.f32 %v2274, %v2275
      %v2277 = vsel %vm500, %v2188, 0.0
      %v2278 = vadd.f32 %v2276, %v2277
      %v2279 = vsel %vm500, %v2191, 0.0
      %v2280 = vadd.f32 %v2278, %v2279
      %v2281 = vsel %vm500, %v2196, 0.0
      %v2282 = vadd.f32 %v2280, %v2281
      %v2283 = vsel %vm500, %v2199, 0.0
      %v2284 = vadd.f32 %v2282, %v2283
      %v2285 = vsel %vm500, %v2204, 0.0
      %v2286 = vadd.f32 %v2284, %v2285
      %v2287 = vsel %vm500, %v2207, 0.0
      %v2288 = vadd.f32 %v2286, %v2287
      %v2289 = vsel %vm500, %v2212, 0.0
      %v2290 = vadd.f32 %v2288, %v2289
      %v2291 = vsel %vm500, %v2215, 0.0
      %v2292 = vadd.f32 %v2290, %v2291
      %v2293 = vsel %vm500, %v2220, 0.0
      %v2294 = vadd.f32 %v2292, %v2293
      %v2295 = vsel %vm500, %v2223, 0.0
      %v2296 = vadd.f32 %v2294, %v2295
      %v2297 = vsel %vm500, %v2228, 0.0
      %v2298 = vadd.f32 %v2296, %v2297
      %v2299 = vsel %vm500, %v2231, 0.0
      %v2300 = vadd.f32 %v2298, %v2299
      %v2301 = vsel %vm500, %v2236, 0.0
      %v2302 = vadd.f32 %v2300, %v2301
      %v2303 = vsel %vm500, %v2239, 0.0
      %v2304 = vadd.f32 %v2302, %v2303
      %v2305 = vrot.slane %v2304, 4
      %v2306 = vadd.f32 %v2304, %v2305
      %v2307 = vrot.slane %v2306, 2
      %v2308 = vadd.f32 %v2306, %v2307
      %v2309 = vrot.slane %v2308, 1
      %v2310 = vadd.f32 %v2308, %v2309
      %v2311 = vmul.f32 %v2116, %v2116
      %v2312 = vmul.f32 %v2119, %v2119
      %v2313 = vmul.f32 %v2124, %v2124
      %v2314 = vmul.f32 %v2127, %v2127
      %v2315 = vmul.f32 %v2132, %v2132
      %v2316 = vmul.f32 %v2135, %v2135
      %v2317 = vmul.f32 %v2140, %v2140
      %v2318 = vmul.f32 %v2143, %v2143
      %v2319 = vmul.f32 %v2148, %v2148
      %v2320 = vmul.f32 %v2151, %v2151
      %v2321 = vmul.f32 %v2156, %v2156
      %v2322 = vmul.f32 %v2159, %v2159
      %v2323 = vmul.f32 %v2164, %v2164
      %v2324 = vmul.f32 %v2167, %v2167
      %v2325 = vmul.f32 %v2172, %v2172
      %v2326 = vmul.f32 %v2175, %v2175
      %v2327 = vmul.f32 %v2180, %v2180
      %v2328 = vmul.f32 %v2183, %v2183
      %v2329 = vmul.f32 %v2188, %v2188
      %v2330 = vmul.f32 %v2191, %v2191
      %v2331 = vmul.f32 %v2196, %v2196
      %v2332 = vmul.f32 %v2199, %v2199
      %v2333 = vmul.f32 %v2204, %v2204
      %v2334 = vmul.f32 %v2207, %v2207
      %v2335 = vmul.f32 %v2212, %v2212
      %v2336 = vmul.f32 %v2215, %v2215
      %v2337 = vmul.f32 %v2220, %v2220
      %v2338 = vmul.f32 %v2223, %v2223
      %v2339 = vmul.f32 %v2228, %v2228
      %v2340 = vmul.f32 %v2231, %v2231
      %v2341 = vmul.f32 %v2236, %v2236
      %v2342 = vmul.f32 %v2239, %v2239
      %v2343 = vsel %vm500, %v2311, 0.0
      %v2344 = vsel %vm500, %v2312, 0.0
      %v2345 = vadd.f32 %v2343, %v2344
      %v2346 = vsel %vm500, %v2313, 0.0
      %v2347 = vadd.f32 %v2345, %v2346
      %v2348 = vsel %vm500, %v2314, 0.0
      %v2349 = vadd.f32 %v2347, %v2348
      %v2350 = vsel %vm500, %v2315, 0.0
      %v2351 = vadd.f32 %v2349, %v2350
      %v2352 = vsel %vm500, %v2316, 0.0
      %v2353 = vadd.f32 %v2351, %v2352
      %v2354 = vsel %vm500, %v2317, 0.0
      %v2355 = vadd.f32 %v2353, %v2354
      %v2356 = vsel %vm500, %v2318, 0.0
      %v2357 = vadd.f32 %v2355, %v2356
      %v2358 = vsel %vm500, %v2319, 0.0
      %v2359 = vadd.f32 %v2357, %v2358
      %v2360 = vsel %vm500, %v2320, 0.0
      %v2361 = vadd.f32 %v2359, %v2360
      %v2362 = vsel %vm500, %v2321, 0.0
      %v2363 = vadd.f32 %v2361, %v2362
      %v2364 = vsel %vm500, %v2322, 0.0
      %v2365 = vadd.f32 %v2363, %v2364
      %v2366 = vsel %vm500, %v2323, 0.0
      %v2367 = vadd.f32 %v2365, %v2366
      %v2368 = vsel %vm500, %v2324, 0.0
      %v2369 = vadd.f32 %v2367, %v2368
      %v2370 = vsel %vm500, %v2325, 0.0
      %v2371 = vadd.f32 %v2369, %v2370
      %v2372 = vsel %vm500, %v2326, 0.0
      %v2373 = vadd.f32 %v2371, %v2372
      %v2374 = vsel %vm500, %v2327, 0.0
      %v2375 = vadd.f32 %v2373, %v2374
      %v2376 = vsel %vm500, %v2328, 0.0
      %v2377 = vadd.f32 %v2375, %v2376
      %v2378 = vsel %vm500, %v2329, 0.0
      %v2379 = vadd.f32 %v2377, %v2378
      %v2380 = vsel %vm500, %v2330, 0.0
      %v2381 = vadd.f32 %v2379, %v2380
      %v2382 = vsel %vm500, %v2331, 0.0
      %v2383 = vadd.f32 %v2381, %v2382
      %v2384 = vsel %vm500, %v2332, 0.0
      %v2385 = vadd.f32 %v2383, %v2384
      %v2386 = vsel %vm500, %v2333, 0.0
      %v2387 = vadd.f32 %v2385, %v2386
      %v2388 = vsel %vm500, %v2334, 0.0
      %v2389 = vadd.f32 %v2387, %v2388
      %v2390 = vsel %vm500, %v2335, 0.0
      %v2391 = vadd.f32 %v2389, %v2390
      %v2392 = vsel %vm500, %v2336, 0.0
      %v2393 = vadd.f32 %v2391, %v2392
      %v2394 = vsel %vm500, %v2337, 0.0
      %v2395 = vadd.f32 %v2393, %v2394
      %v2396 = vsel %vm500, %v2338, 0.0
      %v2397 = vadd.f32 %v2395, %v2396
      %v2398 = vsel %vm500, %v2339, 0.0
      %v2399 = vadd.f32 %v2397, %v2398
      %v2400 = vsel %vm500, %v2340, 0.0
      %v2401 = vadd.f32 %v2399, %v2400
      %v2402 = vsel %vm500, %v2341, 0.0
      %v2403 = vadd.f32 %v2401, %v2402
      %v2404 = vsel %vm500, %v2342, 0.0
      %v2405 = vadd.f32 %v2403, %v2404
      %v2406 = vrot.slane %v2405, 4
      %v2407 = vadd.f32 %v2405, %v2406
      %v2408 = vrot.slane %v2407, 2
      %v2409 = vadd.f32 %v2407, %v2408
      %v2410 = vrot.slane %v2409, 1
      %v2411 = vadd.f32 %v2409, %v2410
      %vm2412 = vcmask 1040384
      %v2413 = vsel %vm2412, %v2310, %v2411
      %vm2414 = vcmask 25600
      %2415 = vst.msk [vmem:[%s309] sm:$0x3] %vm2414, %v2413
      %v2416 = vpack.c.bf16 %v2119, %v2116
      %v2417 = vpack.c.bf16 %v2127, %v2124
      %v2418 = vpack.c.bf16 %v2135, %v2132
      %v2419 = vpack.c.bf16 %v2143, %v2140
      %v2420 = vpack.c.bf16 %v2151, %v2148
      %v2421 = vpack.c.bf16 %v2159, %v2156
      %v2422 = vpack.c.bf16 %v2167, %v2164
      %v2423 = vpack.c.bf16 %v2175, %v2172
      %v2424 = vpack.c.bf16 %v2183, %v2180
      %v2425 = vpack.c.bf16 %v2191, %v2188
      %v2426 = vpack.c.bf16 %v2199, %v2196
      %v2427 = vpack.c.bf16 %v2207, %v2204
      %v2428 = vpack.c.bf16 %v2215, %v2212
      %v2429 = vpack.c.bf16 %v2223, %v2220
      %v2430 = vpack.c.bf16 %v2231, %v2228
      %v2431 = vpack.c.bf16 %v2239, %v2236
      %v2448 = vunpack.c.l.b16 %v2416
      %v2449 = vunpack.c.h.b16 %v2416
      %v2450 = vunpack.c.l.b16 %v2417
      %v2451 = vunpack.c.h.b16 %v2417
      %v2452 = vunpack.c.l.b16 %v2418
      %v2453 = vunpack.c.h.b16 %v2418
      %v2454 = vunpack.c.l.b16 %v2419
      %v2455 = vunpack.c.h.b16 %v2419
      %v2456 = vunpack.c.l.b16 %v2420
      %v2457 = vunpack.c.h.b16 %v2420
      %v2458 = vunpack.c.l.b16 %v2421
      %v2459 = vunpack.c.h.b16 %v2421
      %v2460 = vunpack.c.l.b16 %v2422
      %v2461 = vunpack.c.h.b16 %v2422
      %v2462 = vunpack.c.l.b16 %v2423
      %v2463 = vunpack.c.h.b16 %v2423
      %v2464 = vunpack.c.l.b16 %v2424
      %v2465 = vunpack.c.h.b16 %v2424
      %v2466 = vunpack.c.l.b16 %v2425
      %v2467 = vunpack.c.h.b16 %v2425
      %v2468 = vunpack.c.l.b16 %v2426
      %v2469 = vunpack.c.h.b16 %v2426
      %v2470 = vunpack.c.l.b16 %v2427
      %v2471 = vunpack.c.h.b16 %v2427
      %v2472 = vunpack.c.l.b16 %v2428
      %v2473 = vunpack.c.h.b16 %v2428
      %v2474 = vunpack.c.l.b16 %v2429
      %v2475 = vunpack.c.h.b16 %v2429
      %v2476 = vunpack.c.l.b16 %v2430
      %v2477 = vunpack.c.h.b16 %v2430
      %v2478 = vunpack.c.l.b16 %v2431
      %v2479 = vunpack.c.h.b16 %v2431
      %v2480 = vpack.c.b16 %v2448, %v2448
      %v2481 = vpack.c.b16 %v2449, %v2449
      %v2482 = vpack.c.b16 %v2450, %v2450
      %v2483 = vpack.c.b16 %v2451, %v2451
      %v2484 = vpack.c.b16 %v2452, %v2452
      %v2485 = vpack.c.b16 %v2453, %v2453
      %v2486 = vpack.c.b16 %v2454, %v2454
      %v2487 = vpack.c.b16 %v2455, %v2455
      %v2488 = vpack.c.b16 %v2456, %v2456
      %v2489 = vpack.c.b16 %v2457, %v2457
      %v2490 = vpack.c.b16 %v2458, %v2458
      %v2491 = vpack.c.b16 %v2459, %v2459
      %v2492 = vpack.c.b16 %v2460, %v2460
      %v2493 = vpack.c.b16 %v2461, %v2461
      %v2494 = vpack.c.b16 %v2462, %v2462
      %v2495 = vpack.c.b16 %v2463, %v2463
      %v2496 = vpack.c.b16 %v2464, %v2464
      %v2497 = vpack.c.b16 %v2465, %v2465
      %v2498 = vpack.c.b16 %v2466, %v2466
      %v2499 = vpack.c.b16 %v2467, %v2467
      %v2500 = vpack.c.b16 %v2468, %v2468
      %v2501 = vpack.c.b16 %v2469, %v2469
      %v2502 = vpack.c.b16 %v2470, %v2470
      %v2503 = vpack.c.b16 %v2471, %v2471
      %v2504 = vpack.c.b16 %v2472, %v2472
      %v2505 = vpack.c.b16 %v2473, %v2473
      %v2506 = vpack.c.b16 %v2474, %v2474
      %v2507 = vpack.c.b16 %v2475, %v2475
      %v2508 = vpack.c.b16 %v2476, %v2476
      %v2509 = vpack.c.b16 %v2477, %v2477
      %v2510 = vpack.c.b16 %v2478, %v2478
      %v2511 = vpack.c.b16 %v2479, %v2479
      %vm2544 = vcmask 27648
      %2545 = vst.msk [vmem:[%s305] sm:$0xf] %vm2544, %v2480
      %2546 = vst.msk [vmem:[%s305 + $0x4] sm:$0xf] %vm2544, %v2481
      %2547 = vst.msk [vmem:[%s305 + $0x8] sm:$0xf] %vm2544, %v2482
      %2548 = vst.msk [vmem:[%s305 + $0xc] sm:$0xf] %vm2544, %v2483
      %2549 = vst.msk [vmem:[%s305 + $0x10] sm:$0xf] %vm2544, %v2484
      %2550 = vst.msk [vmem:[%s305 + $0x14] sm:$0xf] %vm2544, %v2485
      %2551 = vst.msk [vmem:[%s305 + $0x18] sm:$0xf] %vm2544, %v2486
      %2552 = vst.msk [vmem:[%s305 + $0x1c] sm:$0xf] %vm2544, %v2487
      %2553 = vst.msk [vmem:[%s305 + $0x20] sm:$0xf] %vm2544, %v2488
      %2554 = vst.msk [vmem:[%s305 + $0x24] sm:$0xf] %vm2544, %v2489
      %2555 = vst.msk [vmem:[%s305 + $0x28] sm:$0xf] %vm2544, %v2490
      %2556 = vst.msk [vmem:[%s305 + $0x2c] sm:$0xf] %vm2544, %v2491
      %2557 = vst.msk [vmem:[%s305 + $0x30] sm:$0xf] %vm2544, %v2492
      %2558 = vst.msk [vmem:[%s305 + $0x34] sm:$0xf] %vm2544, %v2493
      %2559 = vst.msk [vmem:[%s305 + $0x38] sm:$0xf] %vm2544, %v2494
      %2560 = vst.msk [vmem:[%s305 + $0x3c] sm:$0xf] %vm2544, %v2495
      %2561 = vst.msk [vmem:[%s305 + $0x40] sm:$0xf] %vm2544, %v2496
      %2562 = vst.msk [vmem:[%s305 + $0x44] sm:$0xf] %vm2544, %v2497
      %2563 = vst.msk [vmem:[%s305 + $0x48] sm:$0xf] %vm2544, %v2498
      %2564 = vst.msk [vmem:[%s305 + $0x4c] sm:$0xf] %vm2544, %v2499
      %2565 = vst.msk [vmem:[%s305 + $0x50] sm:$0xf] %vm2544, %v2500
      %2566 = vst.msk [vmem:[%s305 + $0x54] sm:$0xf] %vm2544, %v2501
      %2567 = vst.msk [vmem:[%s305 + $0x58] sm:$0xf] %vm2544, %v2502
      %2568 = vst.msk [vmem:[%s305 + $0x5c] sm:$0xf] %vm2544, %v2503
      %2569 = vst.msk [vmem:[%s305 + $0x60] sm:$0xf] %vm2544, %v2504
      %2570 = vst.msk [vmem:[%s305 + $0x64] sm:$0xf] %vm2544, %v2505
      %2571 = vst.msk [vmem:[%s305 + $0x68] sm:$0xf] %vm2544, %v2506
      %2572 = vst.msk [vmem:[%s305 + $0x6c] sm:$0xf] %vm2544, %v2507
      %2573 = vst.msk [vmem:[%s305 + $0x70] sm:$0xf] %vm2544, %v2508
      %2574 = vst.msk [vmem:[%s305 + $0x74] sm:$0xf] %vm2544, %v2509
      %2575 = vst.msk [vmem:[%s305 + $0x78] sm:$0xf] %vm2544, %v2510
      %2576 = vst.msk [vmem:[%s305 + $0x7c] sm:$0xf] %vm2544, %v2511
      %p2577 = scmp.lt.s32.totalorder %s19, 1
      %s2578 = scalar_select %p2577, %s19, 1
      %s2579 = smul.addr %s2578, 32
      %s2580 = smul.addr %s2579, 4
      %s2581 = scalar_lea.vmem %s6, %s2580
      %p2582 = scmp.lt.s32.totalorder %s19, 1
      %s2583 = scalar_select %p2582, %s19, 1
      %s2584 = smul.addr %s2583, 2
      %s2585 = scalar_lea.vmem %s7, %s2584
      // Predicated region
      $region45: #{_lambda_.5} parent=43 // pred_check
        %p2586 = pneg %p173
      $region46: #{_lambda_.5} parent=43 // pred_check_branch
        %2588 = sbr.rel (%p2586) target = $region48
      $region47: #{_lambda_.5} parent=43 // pred_region
        _
      $region48: #{_lambda_.5} parent=43 // pred_fallthru
        _
      // Predicated region
      $region49: #{_lambda_.5} parent=43 // pred_check
        %p2589 = pneg %p199
      $region50: #{_lambda_.5} parent=43 // pred_check_branch
        %2591 = sbr.rel (%p2589) target = $region52
      $region51: #{_lambda_.5} parent=43 // pred_region
        _
      $region52: #{_lambda_.5} parent=43 // pred_fallthru
        _
    $region44: #{_lambda_.5} parent=5 // pred_fallthru
      _
    %p2592 = scmp.le.s32.totalorder 2, %s14
    // Predicated region
    $region53: #{_lambda_.5} parent=5 // pred_check
      %p2593 = pneg %p2592
    $region54: #{_lambda_.5} parent=5 // pred_check_branch
      %2595 = sbr.rel (%p2593) target = $region56
    $region55: #{_lambda_.5} parent=5 // pred_region
      %s2596 = ssub.s32 %s14, 2
      // Predicated region
      $region57: #{_lambda_.5} parent=55 // pred_check
        %p2597 = pneg %p179
      $region58: #{_lambda_.5} parent=55 // pred_check_branch
        %2599 = sbr.rel (%p2597) target = $region60
      $region59: #{_lambda_.5} parent=55 // pred_region
        %p2600 = scmp.lt.s32.totalorder %s20, 1
        %s2601 = scalar_select %p2600, %s20, 1
        %s2602 = smul.addr %s2601, 32
        %s2603 = smul.addr %s2602, 4
        %s2604 = scalar_lea.vmem %s6, %s2603
      $region60: #{_lambda_.5} parent=55 // pred_fallthru
        _
      // Predicated region
      $region61: #{_lambda_.5} parent=55 // pred_check
        %p2605 = pneg %p205
      $region62: #{_lambda_.5} parent=55 // pred_check_branch
        %2607 = sbr.rel (%p2605) target = $region64
      $region63: #{_lambda_.5} parent=55 // pred_region
        %p2608 = scmp.lt.s32.totalorder %s20, 1
        %s2609 = scalar_select %p2608, %s20, 1
        %s2610 = smul.addr %s2609, 2
        %s2611 = scalar_lea.vmem %s7, %s2610
      $region64: #{_lambda_.5} parent=55 // pred_fallthru
        _
    $region56: #{_lambda_.5} parent=5 // pred_fallthru
      _
  $region6: #{_lambda_.5} parent=0 // loop_footer
    %s18 = sadd.s32 1, %s14
  $region7: #{_lambda_.5} parent=0 // loop_footer_branch
    %13 = sbr.rel target = $region3
  $region8: #{_lambda_.5} parent=0 // loop_exit
    _

</llo_original>
